<compile_context>
chip_gen: v6e
topology: v6e:2x2x1
jax: 0.10.0
libtpu: 0.0.40
codegen_flags: <defaults>
</compile_context>

<pallas_src>
import jax
import jax.numpy as jnp
from jax import lax
from jax.experimental import pallas as pl
from jax.experimental.pallas import tpu as pltpu

LOOKUP_WINDOW = 101   # must be odd (matches module default)
OUTPUT_DIM = 32       # fc output dim (module's optional nn.Linear)
NUM_BINS = 512
LPAD = 128            # lane-aligned lookup-window pad (101 -> 128)
TQ = 128              # query-axis tile for the similarity kernel


def _pick_f(hw):
    # Frames per grid step for the histogram kernel, capped so the bf16
    # one-hot intermediates (plus their int32 iotas) stay well under the
    # scoped-VMEM limit (matters mainly on v7x: 64 MiB physical).
    for f in (32, 16, 8):
        est = 7 * (4 * f * f * hw + 128 * f * hw)
        if est <= 20 * 1024 * 1024:
            return f
    return 8


def _hist_kernel(gb_ref, o_ref):
    """512-bin color histograms for F frames via one MXU matmul.

    gb_ref: (1, 1, F*HW) int32, value = bin + (frame_within_block << 9)
    o_ref : (4F, 128) f32; row 4f+h, col k = L2-normalized count of bin
            h*128 + k of frame f (per-frame normalization).
    """
    four_f = o_ref.shape[0]
    g = gb_ref[0]                              # (1, F*HW) int32
    fhw = g.shape[-1]
    hi = g >> 7                                # 4*frame + (bin >> 7), in [0, 4F)
    lo = g & 127                               # bin & 127,            in [0, 128)

    # Block-diagonal-over-frames one-hots, contraction (F*HW) on the lane axis.
    hi1h = (lax.broadcasted_iota(jnp.int32, (four_f, fhw), 0) == hi
            ).astype(jnp.bfloat16)             # (4F, FHW)
    lo1h = (lax.broadcasted_iota(jnp.int32, (128, fhw), 0) == lo
            ).astype(jnp.bfloat16)             # (128, FHW)
    counts = jnp.einsum('rc,kc->rk', hi1h, lo1h,
                        preferred_element_type=jnp.float32)   # (4F, 128) exact

    # Per-frame L2 norm: sum of squares over each group of 4 rows, broadcast
    # back to the group via a tiny 0/1 matmul (exact at HIGHEST precision).
    sq = counts * counts
    gi = lax.broadcasted_iota(jnp.int32, (four_f, four_f), 0) >> 2
    gj = lax.broadcasted_iota(jnp.int32, (four_f, four_f), 1) >> 2
    p = (gi == gj).astype(jnp.float32)                         # (4F, 4F)
    ss = jnp.sum(jnp.dot(p, sq, preferred_element_type=jnp.float32,
                         precision=lax.Precision.HIGHEST),
                 axis=1, keepdims=True)                        # (4F, 1)
    o_ref[...] = counts * lax.rsqrt(jnp.maximum(ss, 1e-24))    # F.normalize(p=2)


def _sim_fc_kernel(xq_ref, ka_ref, kb_ref, w_ref, b_ref, o_ref):
    """Banded self-similarity + lookup window + fc + relu for one (b, q-tile).

    xq_ref: (1, TQ, 512)  query histograms, rows [q*TQ, (q+1)*TQ) of batch b
    ka_ref: (1, TQ, 512)  pre-padded keys, rows [q*TQ, (q+1)*TQ)
    kb_ref: (1, TQ, 512)  pre-padded keys, rows [(q+1)*TQ, (q+2)*TQ)
    w_ref : (LPAD, D)     fc weight^T, rows >= lookup_window are zero
    b_ref : (1, D)        fc bias
    o_ref : (1, TQ, D)
    """
    tq = xq_ref.shape[1]
    lpad = w_ref.shape[0]

    keys = jnp.concatenate([ka_ref[0], kb_ref[0]], axis=0)       # (2*TQ, 512)
    sim = jnp.einsum('qd,kd->qk', xq_ref[0], keys,
                     preferred_element_type=jnp.float32,
                     precision=lax.Precision.HIGH)                # (TQ, 2*TQ)

    # Diagonal band: band[i, l] = sim[i, i + l], l in [0, LPAD).
    # Columns l >= lookup_window hold leftover finite sim values; they hit the
    # zero rows of w_ref (do NOT remove that zero padding).
    cw = lpad + 8
    parts = [sim[8 * g:8 * g + 8, 8 * g:8 * g + cw] for g in range(tq // 8)]
    coarse = jnp.concatenate(parts, axis=0)                       # (TQ, LPAD+8)
    rmod = lax.broadcasted_iota(jnp.int32, (tq, lpad), 0) & 7     # row % 8
    band = coarse[:, 0:lpad]
    for r in range(1, 8):
        band = jnp.where(rmod == r, coarse[:, r:r + lpad], band)  # (TQ, LPAD)

    y = jnp.dot(band, w_ref[...], preferred_element_type=jnp.float32,
                precision=lax.Precision.HIGH) + b_ref[...]
    o_ref[0] = jnp.maximum(y, 0.0)                                # relu(fc(band))


def color_histograms_forward(frames, fc_weight, fc_bias,
                             lookup_window=LOOKUP_WINDOW):
    """frames: [B, T, H, W, 3] uint8/int; fc_weight: [D, L]; fc_bias: [D]."""
    B, T, H, W, C = frames.shape
    assert C == 3
    assert lookup_window % 2 == 1, "`lookup_window` must be odd integer"
    # TODO(synk): lookup_window > 128 would need >2 key blocks per query tile.
    assert lookup_window <= LPAD
    N, HW = B * T, H * W
    D = fc_weight.shape[0]
    half = (lookup_window - 1) // 2

    # --- XLA-side bin precompute (cheap, fuses; no int32 RGB frames shipped) ---
    f = frames.reshape(N, HW, 3).astype(jnp.int32)
    bins = ((f[..., 0] >> 5) << 6) + ((f[..., 1] >> 5) << 3) + (f[..., 2] >> 5)

    # --- kernel 1: per-frame normalized 512-bin histogram, F frames / step ---
    F = _pick_f(HW)
    N_pad = -(-N // F) * F
    if N_pad != N:
        bins = jnp.pad(bins, ((0, N_pad - N), (0, 0)))
    local = (jnp.arange(N_pad, dtype=jnp.int32) % F) << 9          # frame prefix
    gbins = (bins + local[:, None]).reshape(N_pad // F, 1, F * HW)

    hist4 = pl.pallas_call(
        _hist_kernel,
        out_shape=jax.ShapeDtypeStruct((4 * N_pad, 128), jnp.float32),
        grid=(N_pad // F,),
        in_specs=[pl.BlockSpec((1, 1, F * HW), lambda i: (i, 0, 0))],
        out_specs=pl.BlockSpec((4 * F, 128), lambda i: (i, 0)),
        compiler_params=pltpu.CompilerParams(
            dimension_semantics=("parallel",),
            vmem_limit_bytes=40 * 1024 * 1024),
    )(gbins)
    # (4N, 128) -> (N, 512): bin = 128*hi + lo, row-major -> free XLA reshape.
    # Padded frames (rows >= N) have nonzero histograms: keep the [:N] slice.
    x = hist4.reshape(N_pad, NUM_BINS)[:N].reshape(B, T, NUM_BINS)

    # --- kernel 2: band-limited similarities + lookup window + fc + relu ---
    T_pad = -(-T // TQ) * TQ
    xq = x if T_pad == T else jnp.pad(x, ((0, 0), (0, T_pad - T), (0, 0)))
    # Pre-padded keys: `half` zero rows in front emulate F.pad of the similarity
    # matrix; tail zeros bring the length to T_pad + LPAD (a multiple of TQ).
    keys = jnp.pad(x, ((0, 0), (half, T_pad + LPAD - half - T), (0, 0)))
    w_t = jnp.zeros((LPAD, D), jnp.float32).at[:lookup_window, :].set(
        jnp.asarray(fc_weight, jnp.float32).T)
    bias2d = jnp.asarray(fc_bias, jnp.float32).reshape(1, D)

    out = pl.pallas_call(
        _sim_fc_kernel,
        out_shape=jax.ShapeDtypeStruct((B, T_pad, D), jnp.float32),
        grid=(B, T_pad // TQ),
        in_specs=[
            pl.BlockSpec((1, TQ, NUM_BINS), lambda b, q: (b, q, 0)),      # queries
            pl.BlockSpec((1, TQ, NUM_BINS), lambda b, q: (b, q, 0)),      # keys lo
            pl.BlockSpec((1, TQ, NUM_BINS), lambda b, q: (b, q + 1, 0)),  # keys hi
            pl.BlockSpec((LPAD, D), lambda b, q: (0, 0)),
            pl.BlockSpec((1, D), lambda b, q: (0, 0)),
        ],
        out_specs=pl.BlockSpec((1, TQ, D), lambda b, q: (b, q, 0)),
        compiler_params=pltpu.CompilerParams(
            dimension_semantics=("parallel", "parallel"),
            vmem_limit_bytes=32 * 1024 * 1024),
    )(xq, keys, keys, w_t, bias2d)
    return out[:, :T]


def reference_forward(frames, fc_weight, fc_bias, lookup_window):
    """Pure-JAX reference mirroring the PyTorch module semantics."""
    B, T, H, W, C = frames.shape
    f = frames.reshape(B * T, H * W, 3).astype(jnp.int32)
    r, g, b = f[..., 0] >> 5, f[..., 1] >> 5, f[..., 2] >> 5
    bins = (r << 6) + (g << 3) + b
    onehot = jax.nn.one_hot(bins, NUM_BINS, dtype=jnp.float32)
    hist = onehot.sum(axis=1)
    hist = hist / jnp.maximum(
        jnp.linalg.norm(hist, axis=1, keepdims=True), 1e-12)
    x = hist.reshape(B, T, NUM_BINS)
    sim = jnp.einsum("btd,bsd->bts", x, x, precision=lax.Precision.HIGHEST)
    half = (lookup_window - 1) // 2
    padded = jnp.pad(sim, ((0, 0), (0, 0), (half, half)))
    t = jnp.arange(T)[:, None]
    l = jnp.arange(lookup_window)[None, :]
    band = padded[:, t, t + l]                            # (B, T, L)
    y = band @ fc_weight.T + fc_bias
    return jnp.maximum(y, 0.0)


if __name__ == "__main__":
    key = jax.random.PRNGKey(0)
    k1, k2, k3 = jax.random.split(key, 3)

    B, T, H, W = 2, 8, 16, 16
    frames = jax.random.randint(k1, (B, T, H, W, 3), 0, 256,
                                dtype=jnp.int32).astype(jnp.uint8)
    # deterministic synthetic fc params (nn.Linear(lookup_window, output_dim))
    fc_weight = jax.random.normal(k2, (OUTPUT_DIM, LOOKUP_WINDOW),
                                  jnp.float32) * 0.05
    fc_bias = jax.random.normal(k3, (OUTPUT_DIM,), jnp.float32) * 0.01

    out = color_histograms_forward(frames, fc_weight, fc_bias)
    out = jax.block_until_ready(out)

    ref = reference_forward(frames, fc_weight, fc_bias, LOOKUP_WINDOW)
    assert out.shape == (B, T, OUTPUT_DIM), out.shape
    assert bool(jnp.allclose(out, ref, atol=1e-3, rtol=1e-3)), float(
        jnp.max(jnp.abs(out - ref)))
    print("KERNEL_OK")
</pallas_src>

<mosaic_0001>
module attributes {stable_mosaic.version = 11 : i64} {
  func.func @_hist_kernel(%arg0: i32, %arg1: memref<1x1x8192xi32, #tpu.memory_space<vmem>>, %arg2: memref<128x128xf32, #tpu.memory_space<vmem>>) attributes {dimension_semantics = [#tpu.dimension_semantics<parallel>], iteration_bounds = array<i64: 1>, scalar_prefetch = 0 : i64, scratch_operands = 0 : i64, tpu.core_type = #tpu.core_type<tc>, window_params = [{transform_indices = @transform_0, window_bounds = array<i64: 1, 1, 8192>}, {transform_indices = @transform_1, window_bounds = array<i64: 128, 128>}]} {
    %c0 = arith.constant 0 : index
    %c0_0 = arith.constant 0 : index
    %c0_1 = arith.constant 0 : index
    %0 = vector.load %arg1[%c0, %c0_0, %c0_1] : memref<1x1x8192xi32, #tpu.memory_space<vmem>>, vector<1x1x8192xi32>
    %1 = vector.shape_cast %0 : vector<1x1x8192xi32> to vector<1x8192xi32>
    %c7_i32 = arith.constant 7 : i32
    %2 = vector.broadcast %c7_i32 : i32 to vector<1x8192xi32>
    %3 = arith.shrsi %1, %2 : vector<1x8192xi32>
    %c127_i32 = arith.constant 127 : i32
    %4 = vector.broadcast %c127_i32 : i32 to vector<1x8192xi32>
    %5 = arith.andi %1, %4 : vector<1x8192xi32>
    %6 = tpu.iota {dimensions = array<i32: 0>} : vector<128x8192xi32>
    %7 = vector.broadcast %3 : vector<1x8192xi32> to vector<128x8192xi32>
    %8 = arith.cmpi eq, %6, %7 : vector<128x8192xi32>
    %9 = arith.extui %8 : vector<128x8192xi1> to vector<128x8192xi32>
    %10 = arith.sitofp %9 : vector<128x8192xi32> to vector<128x8192xf32>
    %11 = arith.truncf %10 : vector<128x8192xf32> to vector<128x8192xbf16>
    %12 = tpu.iota {dimensions = array<i32: 0>} : vector<128x8192xi32>
    %13 = vector.broadcast %5 : vector<1x8192xi32> to vector<128x8192xi32>
    %14 = arith.cmpi eq, %12, %13 : vector<128x8192xi32>
    %15 = arith.extui %14 : vector<128x8192xi1> to vector<128x8192xi32>
    %16 = arith.sitofp %15 : vector<128x8192xi32> to vector<128x8192xf32>
    %17 = arith.truncf %16 : vector<128x8192xf32> to vector<128x8192xbf16>
    "tpu.trace_start"() <{level = 10 : i32, message = "rc,kc->rk"}> : () -> ()
    %cst = arith.constant dense<0.000000e+00> : vector<128x128xf32>
    %18 = tpu.matmul %11, %17, %cst {dimension_numbers = #tpu.dot_dimension_numbers<[1], [1], [0], [0], [0, 0, 1, 0], [], []>} : vector<128x8192xbf16>, vector<128x8192xbf16>, vector<128x128xf32> -> vector<128x128xf32>
    "tpu.trace_stop"() : () -> ()
    %19 = arith.mulf %18, %18 : vector<128x128xf32>
    %20 = tpu.iota {dimensions = array<i32: 0>} : vector<128x128xi32>
    %c2_i32 = arith.constant 2 : i32
    %21 = vector.broadcast %c2_i32 : i32 to vector<128x128xi32>
    %22 = arith.shrsi %20, %21 : vector<128x128xi32>
    %23 = tpu.iota {dimensions = array<i32: 1>} : vector<128x128xi32>
    %c2_i32_2 = arith.constant 2 : i32
    %24 = vector.broadcast %c2_i32_2 : i32 to vector<128x128xi32>
    %25 = arith.shrsi %23, %24 : vector<128x128xi32>
    %26 = arith.cmpi eq, %22, %25 : vector<128x128xi32>
    %27 = arith.extui %26 : vector<128x128xi1> to vector<128x128xi32>
    %28 = arith.sitofp %27 : vector<128x128xi32> to vector<128x128xf32>
    %cst_3 = arith.constant dense<0.000000e+00> : vector<128x128xf32>
    %29 = tpu.matmul %28, %19, %cst_3 {dimension_numbers = #tpu.dot_dimension_numbers<[1], [0], [0], [1], [0, 0, 1, 1], [], []>, precision = #tpu.contract_precision<fp32>} : vector<128x128xf32>, vector<128x128xf32>, vector<128x128xf32> -> vector<128x128xf32>
    %cst_4 = arith.constant dense<0.000000e+00> : vector<128xf32>
    %30 = vector.multi_reduction <add>, %29, %cst_4 [1] : vector<128x128xf32> to vector<128xf32>
    %31 = vector.shape_cast %30 : vector<128xf32> to vector<128x1xf32>
    %cst_5 = arith.constant 1.000000e-24 : f32
    %32 = vector.broadcast %cst_5 : f32 to vector<128x1xf32>
    %33 = arith.maximumf %31, %32 : vector<128x1xf32>
    %34 = math.rsqrt %33 : vector<128x1xf32>
    %35 = vector.broadcast %34 : vector<128x1xf32> to vector<128x128xf32>
    %36 = arith.mulf %18, %35 : vector<128x128xf32>
    %c0_6 = arith.constant 0 : index
    %c0_7 = arith.constant 0 : index
    %37 = vector.load %arg2[%c0_6, %c0_7] : memref<128x128xf32, #tpu.memory_space<vmem>>, vector<128x128xf32>
    tpu.vector_store %arg2[%c0_6, %c0_7], %36 {strides = array<i32>} : memref<128x128xf32, #tpu.memory_space<vmem>>, vector<128x128xf32>,
    return
  }
  func.func @transform_0(%arg0: i32) -> (i32, i32, i32) {
    %c0_i32 = arith.constant 0 : i32
    %c0_i32_0 = arith.constant 0 : i32
    %c0_i32_1 = arith.constant 0 : i32
    return %arg0, %c0_i32, %c0_i32_0 : i32, i32, i32
  }
  func.func @transform_1(%arg0: i32) -> (i32, i32) {
    %c0_i32 = arith.constant 0 : i32
    %c0_i32_0 = arith.constant 0 : i32
    return %arg0, %c0_i32 : i32, i32
  }
}

</mosaic_0001>

<llo_original>
// kernel: tpu_custom_call.1
$region0: #{tpu_custom_call.1}
  #allocation0 [shape = 'u32[]', space=smem, size = 0x4, offset = 0x4, fixed_abs, tag = 'smem constant byte address 0x4 - core index']
  #allocation1 [shape = 'u32[144,128]{1,0:T(1,128)}', space=vmem, size = 0x12000, scoped, tag = 'internal scratch']
  %s0 = inlined_call_operand.hbm [shape: s32[1,1,8192], index: 0, kind: input, shape index: {}]
  %s1 = inlined_call_operand.hbm [shape: f32[128,128], index: 1, kind: output, shape index: {}]
  %s2 = sld [smem:[#allocation0]]
  $region18: #{tpu_custom_call.1} parent=0
    _
  %s4 = ssub.s32 1, %s2
  %s5 = scalar_select 0, %s4, %s2
  $region1: #{tpu_custom_call.1} parent=0
    #allocation2 [shape = 'u8[32768]{0}', space=vmem, size = 0x8000, scoped, tag = 'input window, operand 0, single buffered']
    #allocation3 [shape = 's32[1]{0}', space=sflag, size = 0x4, scoped, tag = 'scoped memory for tpu_custom_call.1']
    #allocation4 [shape = 's32[1]{0}', space=sflag, size = 0x4, scoped, tag = 'scoped memory for tpu_custom_call.1']
    #allocation5 [shape = 'u8[65536]{0}', space=vmem, size = 0x10000, scoped, tag = 'output window, operand 0, single buffered']
    %6 = vsyncpa [#allocation3], 0
    %7 = vsyncpa [#allocation4], 0
    // Predicated region
    $region2: #{tpu_custom_call.1} parent=1 // pred_check
      _
    $region3: #{tpu_custom_call.1} parent=1 // pred_check_branch
      %9 = sbr.rel (0) target = $region5
    $region4: #{tpu_custom_call.1} parent=1 // pred_region
      %s11 = ssub.s32 1024, 1024
      %12 = vsyncadd [#allocation3], %s11
      %s14 = sshll.u32 [#allocation2], 4
      %s15 = int_to_ptr.vmem [resolvable:$true] %s14
      %17 = dma.hbm_to_vmem [thread:$0]  %s0, 1024, %s15, [#allocation3]
    $region5: #{tpu_custom_call.1} parent=1 // pred_fallthru
      _
    // Predicated region
    $region6: #{tpu_custom_call.1} parent=1 // pred_check
      _
    $region7: #{tpu_custom_call.1} parent=1 // pred_check_branch
      %19 = sbr.rel (0) target = $region9
    $region8: #{tpu_custom_call.1} parent=1 // pred_region
      %20 = dma.done [#allocation3], 1024
    $region9: #{tpu_custom_call.1} parent=1 // pred_fallthru
      _
    %v22 = vld [vmem:[#allocation2] sm:$0xff]
    %v23 = vld [vmem:[#allocation2 + $0x8] sm:$0xff]
    %v24 = vld [vmem:[#allocation2 + $0x10] sm:$0xff]
    %v25 = vld [vmem:[#allocation2 + $0x18] sm:$0xff]
    %v26 = vld [vmem:[#allocation2 + $0x20] sm:$0xff]
    %v27 = vld [vmem:[#allocation2 + $0x28] sm:$0xff]
    %v28 = vld [vmem:[#allocation2 + $0x30] sm:$0xff]
    %v29 = vld [vmem:[#allocation2 + $0x38] sm:$0xff]
    %v30 = vshra.s32 %v22, 7
    %v31 = vshra.s32 %v23, 7
    %v32 = vshra.s32 %v24, 7
    %v33 = vshra.s32 %v25, 7
    %v34 = vshra.s32 %v26, 7
    %v35 = vshra.s32 %v27, 7
    %v36 = vshra.s32 %v28, 7
    %v37 = vshra.s32 %v29, 7
    %v38 = vand.u32 %v22, 127
    %v39 = vand.u32 %v23, 127
    %v40 = vand.u32 %v24, 127
    %v41 = vand.u32 %v25, 127
    %v42 = vand.u32 %v26, 127
    %v43 = vand.u32 %v27, 127
    %v44 = vand.u32 %v28, 127
    %v45 = vand.u32 %v29, 127
    %v46 = vlaneseq
    %v47 = vshrl.u32 %v46, 7
    %v48 = vadd.s32 %v47, 8
    %v49 = vadd.s32 %v47, 16
    %v50 = vadd.s32 %v47, 24
    %v51 = vadd.s32 %v47, 32
    %v52 = vadd.s32 %v47, 40
    %v53 = vadd.s32 %v47, 48
    %v54 = vadd.s32 %v47, 56
    %v55 = vadd.s32 %v47, 64
    %v56 = vadd.s32 %v47, 72
    %v57 = vadd.s32 %v47, 80
    %v58 = vadd.s32 %v47, 88
    %v59 = vadd.s32 %v47, 96
    %v60 = vadd.s32 %v47, 104
    %v61 = vadd.s32 %v47, 112
    %v62 = vadd.s32 %v47, 120
    %v63 = vlaneseq
    %v64 = vshrl.u32 %v63, 7
    %v65 = vsub.s32 0, %v64
    %v66 = vrot.slane %v30, %v65
    %v67 = vlaneseq
    %v68 = vshrl.u32 %v67, 7
    %v69 = vsub.s32 1, %v68
    %v70 = vrot.slane %v30, %v69
    %v71 = vlaneseq
    %v72 = vshrl.u32 %v71, 7
    %v73 = vsub.s32 2, %v72
    %v74 = vrot.slane %v30, %v73
    %v75 = vlaneseq
    %v76 = vshrl.u32 %v75, 7
    %v77 = vsub.s32 3, %v76
    %v78 = vrot.slane %v30, %v77
    %v79 = vlaneseq
    %v80 = vshrl.u32 %v79, 7
    %v81 = vsub.s32 4, %v80
    %v82 = vrot.slane %v30, %v81
    %v83 = vlaneseq
    %v84 = vshrl.u32 %v83, 7
    %v85 = vsub.s32 5, %v84
    %v86 = vrot.slane %v30, %v85
    %v87 = vlaneseq
    %v88 = vshrl.u32 %v87, 7
    %v89 = vsub.s32 6, %v88
    %v90 = vrot.slane %v30, %v89
    %v91 = vlaneseq
    %v92 = vshrl.u32 %v91, 7
    %v93 = vsub.s32 7, %v92
    %v94 = vrot.slane %v30, %v93
    %v95 = vlaneseq
    %v96 = vshrl.u32 %v95, 7
    %v97 = vsub.s32 0, %v96
    %v98 = vrot.slane %v31, %v97
    %v99 = vlaneseq
    %v100 = vshrl.u32 %v99, 7
    %v101 = vsub.s32 1, %v100
    %v102 = vrot.slane %v31, %v101
    %v103 = vlaneseq
    %v104 = vshrl.u32 %v103, 7
    %v105 = vsub.s32 2, %v104
    %v106 = vrot.slane %v31, %v105
    %v107 = vlaneseq
    %v108 = vshrl.u32 %v107, 7
    %v109 = vsub.s32 3, %v108
    %v110 = vrot.slane %v31, %v109
    %v111 = vlaneseq
    %v112 = vshrl.u32 %v111, 7
    %v113 = vsub.s32 4, %v112
    %v114 = vrot.slane %v31, %v113
    %v115 = vlaneseq
    %v116 = vshrl.u32 %v115, 7
    %v117 = vsub.s32 5, %v116
    %v118 = vrot.slane %v31, %v117
    %v119 = vlaneseq
    %v120 = vshrl.u32 %v119, 7
    %v121 = vsub.s32 6, %v120
    %v122 = vrot.slane %v31, %v121
    %v123 = vlaneseq
    %v124 = vshrl.u32 %v123, 7
    %v125 = vsub.s32 7, %v124
    %v126 = vrot.slane %v31, %v125
    %v127 = vlaneseq
    %v128 = vshrl.u32 %v127, 7
    %v129 = vsub.s32 0, %v128
    %v130 = vrot.slane %v32, %v129
    %v131 = vlaneseq
    %v132 = vshrl.u32 %v131, 7
    %v133 = vsub.s32 1, %v132
    %v134 = vrot.slane %v32, %v133
    %v135 = vlaneseq
    %v136 = vshrl.u32 %v135, 7
    %v137 = vsub.s32 2, %v136
    %v138 = vrot.slane %v32, %v137
    %v139 = vlaneseq
    %v140 = vshrl.u32 %v139, 7
    %v141 = vsub.s32 3, %v140
    %v142 = vrot.slane %v32, %v141
    %v143 = vlaneseq
    %v144 = vshrl.u32 %v143, 7
    %v145 = vsub.s32 4, %v144
    %v146 = vrot.slane %v32, %v145
    %v147 = vlaneseq
    %v148 = vshrl.u32 %v147, 7
    %v149 = vsub.s32 5, %v148
    %v150 = vrot.slane %v32, %v149
    %v151 = vlaneseq
    %v152 = vshrl.u32 %v151, 7
    %v153 = vsub.s32 6, %v152
    %v154 = vrot.slane %v32, %v153
    %v155 = vlaneseq
    %v156 = vshrl.u32 %v155, 7
    %v157 = vsub.s32 7, %v156
    %v158 = vrot.slane %v32, %v157
    %v159 = vlaneseq
    %v160 = vshrl.u32 %v159, 7
    %v161 = vsub.s32 0, %v160
    %v162 = vrot.slane %v33, %v161
    %v163 = vlaneseq
    %v164 = vshrl.u32 %v163, 7
    %v165 = vsub.s32 1, %v164
    %v166 = vrot.slane %v33, %v165
    %v167 = vlaneseq
    %v168 = vshrl.u32 %v167, 7
    %v169 = vsub.s32 2, %v168
    %v170 = vrot.slane %v33, %v169
    %v171 = vlaneseq
    %v172 = vshrl.u32 %v171, 7
    %v173 = vsub.s32 3, %v172
    %v174 = vrot.slane %v33, %v173
    %v175 = vlaneseq
    %v176 = vshrl.u32 %v175, 7
    %v177 = vsub.s32 4, %v176
    %v178 = vrot.slane %v33, %v177
    %v179 = vlaneseq
    %v180 = vshrl.u32 %v179, 7
    %v181 = vsub.s32 5, %v180
    %v182 = vrot.slane %v33, %v181
    %v183 = vlaneseq
    %v184 = vshrl.u32 %v183, 7
    %v185 = vsub.s32 6, %v184
    %v186 = vrot.slane %v33, %v185
    %v187 = vlaneseq
    %v188 = vshrl.u32 %v187, 7
    %v189 = vsub.s32 7, %v188
    %v190 = vrot.slane %v33, %v189
    %v191 = vlaneseq
    %v192 = vshrl.u32 %v191, 7
    %v193 = vsub.s32 0, %v192
    %v194 = vrot.slane %v34, %v193
    %v195 = vlaneseq
    %v196 = vshrl.u32 %v195, 7
    %v197 = vsub.s32 1, %v196
    %v198 = vrot.slane %v34, %v197
    %v199 = vlaneseq
    %v200 = vshrl.u32 %v199, 7
    %v201 = vsub.s32 2, %v200
    %v202 = vrot.slane %v34, %v201
    %v203 = vlaneseq
    %v204 = vshrl.u32 %v203, 7
    %v205 = vsub.s32 3, %v204
    %v206 = vrot.slane %v34, %v205
    %v207 = vlaneseq
    %v208 = vshrl.u32 %v207, 7
    %v209 = vsub.s32 4, %v208
    %v210 = vrot.slane %v34, %v209
    %v211 = vlaneseq
    %v212 = vshrl.u32 %v211, 7
    %v213 = vsub.s32 5, %v212
    %v214 = vrot.slane %v34, %v213
    %v215 = vlaneseq
    %v216 = vshrl.u32 %v215, 7
    %v217 = vsub.s32 6, %v216
    %v218 = vrot.slane %v34, %v217
    %v219 = vlaneseq
    %v220 = vshrl.u32 %v219, 7
    %v221 = vsub.s32 7, %v220
    %v222 = vrot.slane %v34, %v221
    %v223 = vlaneseq
    %v224 = vshrl.u32 %v223, 7
    %v225 = vsub.s32 0, %v224
    %v226 = vrot.slane %v35, %v225
    %v227 = vlaneseq
    %v228 = vshrl.u32 %v227, 7
    %v229 = vsub.s32 1, %v228
    %v230 = vrot.slane %v35, %v229
    %v231 = vlaneseq
    %v232 = vshrl.u32 %v231, 7
    %v233 = vsub.s32 2, %v232
    %v234 = vrot.slane %v35, %v233
    %v235 = vlaneseq
    %v236 = vshrl.u32 %v235, 7
    %v237 = vsub.s32 3, %v236
    %v238 = vrot.slane %v35, %v237
    %v239 = vlaneseq
    %v240 = vshrl.u32 %v239, 7
    %v241 = vsub.s32 4, %v240
    %v242 = vrot.slane %v35, %v241
    %v243 = vlaneseq
    %v244 = vshrl.u32 %v243, 7
    %v245 = vsub.s32 5, %v244
    %v246 = vrot.slane %v35, %v245
    %v247 = vlaneseq
    %v248 = vshrl.u32 %v247, 7
    %v249 = vsub.s32 6, %v248
    %v250 = vrot.slane %v35, %v249
    %v251 = vlaneseq
    %v252 = vshrl.u32 %v251, 7
    %v253 = vsub.s32 7, %v252
    %v254 = vrot.slane %v35, %v253
    %v255 = vlaneseq
    %v256 = vshrl.u32 %v255, 7
    %v257 = vsub.s32 0, %v256
    %v258 = vrot.slane %v36, %v257
    %v259 = vlaneseq
    %v260 = vshrl.u32 %v259, 7
    %v261 = vsub.s32 1, %v260
    %v262 = vrot.slane %v36, %v261
    %v263 = vlaneseq
    %v264 = vshrl.u32 %v263, 7
    %v265 = vsub.s32 2, %v264
    %v266 = vrot.slane %v36, %v265
    %v267 = vlaneseq
    %v268 = vshrl.u32 %v267, 7
    %v269 = vsub.s32 3, %v268
    %v270 = vrot.slane %v36, %v269
    %v271 = vlaneseq
    %v272 = vshrl.u32 %v271, 7
    %v273 = vsub.s32 4, %v272
    %v274 = vrot.slane %v36, %v273
    %v275 = vlaneseq
    %v276 = vshrl.u32 %v275, 7
    %v277 = vsub.s32 5, %v276
    %v278 = vrot.slane %v36, %v277
    %v279 = vlaneseq
    %v280 = vshrl.u32 %v279, 7
    %v281 = vsub.s32 6, %v280
    %v282 = vrot.slane %v36, %v281
    %v283 = vlaneseq
    %v284 = vshrl.u32 %v283, 7
    %v285 = vsub.s32 7, %v284
    %v286 = vrot.slane %v36, %v285
    %v287 = vlaneseq
    %v288 = vshrl.u32 %v287, 7
    %v289 = vsub.s32 0, %v288
    %v290 = vrot.slane %v37, %v289
    %v291 = vlaneseq
    %v292 = vshrl.u32 %v291, 7
    %v293 = vsub.s32 1, %v292
    %v294 = vrot.slane %v37, %v293
    %v295 = vlaneseq
    %v296 = vshrl.u32 %v295, 7
    %v297 = vsub.s32 2, %v296
    %v298 = vrot.slane %v37, %v297
    %v299 = vlaneseq
    %v300 = vshrl.u32 %v299, 7
    %v301 = vsub.s32 3, %v300
    %v302 = vrot.slane %v37, %v301
    %v303 = vlaneseq
    %v304 = vshrl.u32 %v303, 7
    %v305 = vsub.s32 4, %v304
    %v306 = vrot.slane %v37, %v305
    %v307 = vlaneseq
    %v308 = vshrl.u32 %v307, 7
    %v309 = vsub.s32 5, %v308
    %v310 = vrot.slane %v37, %v309
    %v311 = vlaneseq
    %v312 = vshrl.u32 %v311, 7
    %v313 = vsub.s32 6, %v312
    %v314 = vrot.slane %v37, %v313
    %v315 = vlaneseq
    %v316 = vshrl.u32 %v315, 7
    %v317 = vsub.s32 7, %v316
    %v318 = vrot.slane %v37, %v317
    %vm319 = vcmp.eq.s32.totalorder %v47, %v66
    %vm320 = vcmp.eq.s32.totalorder %v47, %v70
    %vm321 = vcmp.eq.s32.totalorder %v47, %v74
    %vm322 = vcmp.eq.s32.totalorder %v47, %v78
    %vm323 = vcmp.eq.s32.totalorder %v47, %v82
    %vm324 = vcmp.eq.s32.totalorder %v47, %v86
    %vm325 = vcmp.eq.s32.totalorder %v47, %v90
    %vm326 = vcmp.eq.s32.totalorder %v47, %v94
    %vm327 = vcmp.eq.s32.totalorder %v47, %v98
    %vm328 = vcmp.eq.s32.totalorder %v47, %v102
    %vm329 = vcmp.eq.s32.totalorder %v47, %v106
    %vm330 = vcmp.eq.s32.totalorder %v47, %v110
    %vm331 = vcmp.eq.s32.totalorder %v47, %v114
    %vm332 = vcmp.eq.s32.totalorder %v47, %v118
    %vm333 = vcmp.eq.s32.totalorder %v47, %v122
    %vm334 = vcmp.eq.s32.totalorder %v47, %v126
    %vm335 = vcmp.eq.s32.totalorder %v47, %v130
    %vm336 = vcmp.eq.s32.totalorder %v47, %v134
    %vm337 = vcmp.eq.s32.totalorder %v47, %v138
    %vm338 = vcmp.eq.s32.totalorder %v47, %v142
    %vm339 = vcmp.eq.s32.totalorder %v47, %v146
    %vm340 = vcmp.eq.s32.totalorder %v47, %v150
    %vm341 = vcmp.eq.s32.totalorder %v47, %v154
    %vm342 = vcmp.eq.s32.totalorder %v47, %v158
    %vm343 = vcmp.eq.s32.totalorder %v47, %v162
    %vm344 = vcmp.eq.s32.totalorder %v47, %v166
    %vm345 = vcmp.eq.s32.totalorder %v47, %v170
    %vm346 = vcmp.eq.s32.totalorder %v47, %v174
    %vm347 = vcmp.eq.s32.totalorder %v47, %v178
    %vm348 = vcmp.eq.s32.totalorder %v47, %v182
    %vm349 = vcmp.eq.s32.totalorder %v47, %v186
    %vm350 = vcmp.eq.s32.totalorder %v47, %v190
    %vm351 = vcmp.eq.s32.totalorder %v47, %v194
    %vm352 = vcmp.eq.s32.totalorder %v47, %v198
    %vm353 = vcmp.eq.s32.totalorder %v47, %v202
    %vm354 = vcmp.eq.s32.totalorder %v47, %v206
    %vm355 = vcmp.eq.s32.totalorder %v47, %v210
    %vm356 = vcmp.eq.s32.totalorder %v47, %v214
    %vm357 = vcmp.eq.s32.totalorder %v47, %v218
    %vm358 = vcmp.eq.s32.totalorder %v47, %v222
    %vm359 = vcmp.eq.s32.totalorder %v47, %v226
    %vm360 = vcmp.eq.s32.totalorder %v47, %v230
    %vm361 = vcmp.eq.s32.totalorder %v47, %v234
    %vm362 = vcmp.eq.s32.totalorder %v47, %v238
    %vm363 = vcmp.eq.s32.totalorder %v47, %v242
    %vm364 = vcmp.eq.s32.totalorder %v47, %v246
    %vm365 = vcmp.eq.s32.totalorder %v47, %v250
    %vm366 = vcmp.eq.s32.totalorder %v47, %v254
    %vm367 = vcmp.eq.s32.totalorder %v47, %v258
    %vm368 = vcmp.eq.s32.totalorder %v47, %v262
    %vm369 = vcmp.eq.s32.totalorder %v47, %v266
    %vm370 = vcmp.eq.s32.totalorder %v47, %v270
    %vm371 = vcmp.eq.s32.totalorder %v47, %v274
    %vm372 = vcmp.eq.s32.totalorder %v47, %v278
    %vm373 = vcmp.eq.s32.totalorder %v47, %v282
    %vm374 = vcmp.eq.s32.totalorder %v47, %v286
    %vm375 = vcmp.eq.s32.totalorder %v47, %v290
    %vm376 = vcmp.eq.s32.totalorder %v47, %v294
    %vm377 = vcmp.eq.s32.totalorder %v47, %v298
    %vm378 = vcmp.eq.s32.totalorder %v47, %v302
    %vm379 = vcmp.eq.s32.totalorder %v47, %v306
    %vm380 = vcmp.eq.s32.totalorder %v47, %v310
    %vm381 = vcmp.eq.s32.totalorder %v47, %v314
    %vm382 = vcmp.eq.s32.totalorder %v47, %v318
    %vm383 = vcmp.eq.s32.totalorder %v48, %v66
    %vm384 = vcmp.eq.s32.totalorder %v48, %v70
    %vm385 = vcmp.eq.s32.totalorder %v48, %v74
    %vm386 = vcmp.eq.s32.totalorder %v48, %v78
    %vm387 = vcmp.eq.s32.totalorder %v48, %v82
    %vm388 = vcmp.eq.s32.totalorder %v48, %v86
    %vm389 = vcmp.eq.s32.totalorder %v48, %v90
    %vm390 = vcmp.eq.s32.totalorder %v48, %v94
    %vm391 = vcmp.eq.s32.totalorder %v48, %v98
    %vm392 = vcmp.eq.s32.totalorder %v48, %v102
    %vm393 = vcmp.eq.s32.totalorder %v48, %v106
    %vm394 = vcmp.eq.s32.totalorder %v48, %v110
    %vm395 = vcmp.eq.s32.totalorder %v48, %v114
    %vm396 = vcmp.eq.s32.totalorder %v48, %v118
    %vm397 = vcmp.eq.s32.totalorder %v48, %v122
    %vm398 = vcmp.eq.s32.totalorder %v48, %v126
    %vm399 = vcmp.eq.s32.totalorder %v48, %v130
    %vm400 = vcmp.eq.s32.totalorder %v48, %v134
    %vm401 = vcmp.eq.s32.totalorder %v48, %v138
    %vm402 = vcmp.eq.s32.totalorder %v48, %v142
    %vm403 = vcmp.eq.s32.totalorder %v48, %v146
    %vm404 = vcmp.eq.s32.totalorder %v48, %v150
    %vm405 = vcmp.eq.s32.totalorder %v48, %v154
    %vm406 = vcmp.eq.s32.totalorder %v48, %v158
    %vm407 = vcmp.eq.s32.totalorder %v48, %v162
    %vm408 = vcmp.eq.s32.totalorder %v48, %v166
    %vm409 = vcmp.eq.s32.totalorder %v48, %v170
    %vm410 = vcmp.eq.s32.totalorder %v48, %v174
    %vm411 = vcmp.eq.s32.totalorder %v48, %v178
    %vm412 = vcmp.eq.s32.totalorder %v48, %v182
    %vm413 = vcmp.eq.s32.totalorder %v48, %v186
    %vm414 = vcmp.eq.s32.totalorder %v48, %v190
    %vm415 = vcmp.eq.s32.totalorder %v48, %v194
    %vm416 = vcmp.eq.s32.totalorder %v48, %v198
    %vm417 = vcmp.eq.s32.totalorder %v48, %v202
    %vm418 = vcmp.eq.s32.totalorder %v48, %v206
    %vm419 = vcmp.eq.s32.totalorder %v48, %v210
    %vm420 = vcmp.eq.s32.totalorder %v48, %v214
    %vm421 = vcmp.eq.s32.totalorder %v48, %v218
    %vm422 = vcmp.eq.s32.totalorder %v48, %v222
    %vm423 = vcmp.eq.s32.totalorder %v48, %v226
    %vm424 = vcmp.eq.s32.totalorder %v48, %v230
    %vm425 = vcmp.eq.s32.totalorder %v48, %v234
    %vm426 = vcmp.eq.s32.totalorder %v48, %v238
    %vm427 = vcmp.eq.s32.totalorder %v48, %v242
    %vm428 = vcmp.eq.s32.totalorder %v48, %v246
    %vm429 = vcmp.eq.s32.totalorder %v48, %v250
    %vm430 = vcmp.eq.s32.totalorder %v48, %v254
    %vm431 = vcmp.eq.s32.totalorder %v48, %v258
    %vm432 = vcmp.eq.s32.totalorder %v48, %v262
    %vm433 = vcmp.eq.s32.totalorder %v48, %v266
    %vm434 = vcmp.eq.s32.totalorder %v48, %v270
    %vm435 = vcmp.eq.s32.totalorder %v48, %v274
    %vm436 = vcmp.eq.s32.totalorder %v48, %v278
    %vm437 = vcmp.eq.s32.totalorder %v48, %v282
    %vm438 = vcmp.eq.s32.totalorder %v48, %v286
    %vm439 = vcmp.eq.s32.totalorder %v48, %v290
    %vm440 = vcmp.eq.s32.totalorder %v48, %v294
    %vm441 = vcmp.eq.s32.totalorder %v48, %v298
    %vm442 = vcmp.eq.s32.totalorder %v48, %v302
    %vm443 = vcmp.eq.s32.totalorder %v48, %v306
    %vm444 = vcmp.eq.s32.totalorder %v48, %v310
    %vm445 = vcmp.eq.s32.totalorder %v48, %v314
    %vm446 = vcmp.eq.s32.totalorder %v48, %v318
    %vm447 = vcmp.eq.s32.totalorder %v49, %v66
    %vm448 = vcmp.eq.s32.totalorder %v49, %v70
    %vm449 = vcmp.eq.s32.totalorder %v49, %v74
    %vm450 = vcmp.eq.s32.totalorder %v49, %v78
    %vm451 = vcmp.eq.s32.totalorder %v49, %v82
    %vm452 = vcmp.eq.s32.totalorder %v49, %v86
    %vm453 = vcmp.eq.s32.totalorder %v49, %v90
    %vm454 = vcmp.eq.s32.totalorder %v49, %v94
    %vm455 = vcmp.eq.s32.totalorder %v49, %v98
    %vm456 = vcmp.eq.s32.totalorder %v49, %v102
    %vm457 = vcmp.eq.s32.totalorder %v49, %v106
    %vm458 = vcmp.eq.s32.totalorder %v49, %v110
    %vm459 = vcmp.eq.s32.totalorder %v49, %v114
    %vm460 = vcmp.eq.s32.totalorder %v49, %v118
    %vm461 = vcmp.eq.s32.totalorder %v49, %v122
    %vm462 = vcmp.eq.s32.totalorder %v49, %v126
    %vm463 = vcmp.eq.s32.totalorder %v49, %v130
    %vm464 = vcmp.eq.s32.totalorder %v49, %v134
    %vm465 = vcmp.eq.s32.totalorder %v49, %v138
    %vm466 = vcmp.eq.s32.totalorder %v49, %v142
    %vm467 = vcmp.eq.s32.totalorder %v49, %v146
    %vm468 = vcmp.eq.s32.totalorder %v49, %v150
    %vm469 = vcmp.eq.s32.totalorder %v49, %v154
    %vm470 = vcmp.eq.s32.totalorder %v49, %v158
    %vm471 = vcmp.eq.s32.totalorder %v49, %v162
    %vm472 = vcmp.eq.s32.totalorder %v49, %v166
    %vm473 = vcmp.eq.s32.totalorder %v49, %v170
    %vm474 = vcmp.eq.s32.totalorder %v49, %v174
    %vm475 = vcmp.eq.s32.totalorder %v49, %v178
    %vm476 = vcmp.eq.s32.totalorder %v49, %v182
    %vm477 = vcmp.eq.s32.totalorder %v49, %v186
    %vm478 = vcmp.eq.s32.totalorder %v49, %v190
    %vm479 = vcmp.eq.s32.totalorder %v49, %v194
    %vm480 = vcmp.eq.s32.totalorder %v49, %v198
    %vm481 = vcmp.eq.s32.totalorder %v49, %v202
    %vm482 = vcmp.eq.s32.totalorder %v49, %v206
    %vm483 = vcmp.eq.s32.totalorder %v49, %v210
    %vm484 = vcmp.eq.s32.totalorder %v49, %v214
    %vm485 = vcmp.eq.s32.totalorder %v49, %v218
    %vm486 = vcmp.eq.s32.totalorder %v49, %v222
    %vm487 = vcmp.eq.s32.totalorder %v49, %v226
    %vm488 = vcmp.eq.s32.totalorder %v49, %v230
    %vm489 = vcmp.eq.s32.totalorder %v49, %v234
    %vm490 = vcmp.eq.s32.totalorder %v49, %v238
    %vm491 = vcmp.eq.s32.totalorder %v49, %v242
    %vm492 = vcmp.eq.s32.totalorder %v49, %v246
    %vm493 = vcmp.eq.s32.totalorder %v49, %v250
    %vm494 = vcmp.eq.s32.totalorder %v49, %v254
    %vm495 = vcmp.eq.s32.totalorder %v49, %v258
    %vm496 = vcmp.eq.s32.totalorder %v49, %v262
    %vm497 = vcmp.eq.s32.totalorder %v49, %v266
    %vm498 = vcmp.eq.s32.totalorder %v49, %v270
    %vm499 = vcmp.eq.s32.totalorder %v49, %v274
    %vm500 = vcmp.eq.s32.totalorder %v49, %v278
    %vm501 = vcmp.eq.s32.totalorder %v49, %v282
    %vm502 = vcmp.eq.s32.totalorder %v49, %v286
    %vm503 = vcmp.eq.s32.totalorder %v49, %v290
    %vm504 = vcmp.eq.s32.totalorder %v49, %v294
    %vm505 = vcmp.eq.s32.totalorder %v49, %v298
    %vm506 = vcmp.eq.s32.totalorder %v49, %v302
    %vm507 = vcmp.eq.s32.totalorder %v49, %v306
    %vm508 = vcmp.eq.s32.totalorder %v49, %v310
    %vm509 = vcmp.eq.s32.totalorder %v49, %v314
    %vm510 = vcmp.eq.s32.totalorder %v49, %v318
    %vm511 = vcmp.eq.s32.totalorder %v50, %v66
    %vm512 = vcmp.eq.s32.totalorder %v50, %v70
    %vm513 = vcmp.eq.s32.totalorder %v50, %v74
    %vm514 = vcmp.eq.s32.totalorder %v50, %v78
    %vm515 = vcmp.eq.s32.totalorder %v50, %v82
    %vm516 = vcmp.eq.s32.totalorder %v50, %v86
    %vm517 = vcmp.eq.s32.totalorder %v50, %v90
    %vm518 = vcmp.eq.s32.totalorder %v50, %v94
    %vm519 = vcmp.eq.s32.totalorder %v50, %v98
    %vm520 = vcmp.eq.s32.totalorder %v50, %v102
    %vm521 = vcmp.eq.s32.totalorder %v50, %v106
    %vm522 = vcmp.eq.s32.totalorder %v50, %v110
    %vm523 = vcmp.eq.s32.totalorder %v50, %v114
    %vm524 = vcmp.eq.s32.totalorder %v50, %v118
    %vm525 = vcmp.eq.s32.totalorder %v50, %v122
    %vm526 = vcmp.eq.s32.totalorder %v50, %v126
    %vm527 = vcmp.eq.s32.totalorder %v50, %v130
    %vm528 = vcmp.eq.s32.totalorder %v50, %v134
    %vm529 = vcmp.eq.s32.totalorder %v50, %v138
    %vm530 = vcmp.eq.s32.totalorder %v50, %v142
    %vm531 = vcmp.eq.s32.totalorder %v50, %v146
    %vm532 = vcmp.eq.s32.totalorder %v50, %v150
    %vm533 = vcmp.eq.s32.totalorder %v50, %v154
    %vm534 = vcmp.eq.s32.totalorder %v50, %v158
    %vm535 = vcmp.eq.s32.totalorder %v50, %v162
    %vm536 = vcmp.eq.s32.totalorder %v50, %v166
    %vm537 = vcmp.eq.s32.totalorder %v50, %v170
    %vm538 = vcmp.eq.s32.totalorder %v50, %v174
    %vm539 = vcmp.eq.s32.totalorder %v50, %v178
    %vm540 = vcmp.eq.s32.totalorder %v50, %v182
    %vm541 = vcmp.eq.s32.totalorder %v50, %v186
    %vm542 = vcmp.eq.s32.totalorder %v50, %v190
    %vm543 = vcmp.eq.s32.totalorder %v50, %v194
    %vm544 = vcmp.eq.s32.totalorder %v50, %v198
    %vm545 = vcmp.eq.s32.totalorder %v50, %v202
    %vm546 = vcmp.eq.s32.totalorder %v50, %v206
    %vm547 = vcmp.eq.s32.totalorder %v50, %v210
    %vm548 = vcmp.eq.s32.totalorder %v50, %v214
    %vm549 = vcmp.eq.s32.totalorder %v50, %v218
    %vm550 = vcmp.eq.s32.totalorder %v50, %v222
    %vm551 = vcmp.eq.s32.totalorder %v50, %v226
    %vm552 = vcmp.eq.s32.totalorder %v50, %v230
    %vm553 = vcmp.eq.s32.totalorder %v50, %v234
    %vm554 = vcmp.eq.s32.totalorder %v50, %v238
    %vm555 = vcmp.eq.s32.totalorder %v50, %v242
    %vm556 = vcmp.eq.s32.totalorder %v50, %v246
    %vm557 = vcmp.eq.s32.totalorder %v50, %v250
    %vm558 = vcmp.eq.s32.totalorder %v50, %v254
    %vm559 = vcmp.eq.s32.totalorder %v50, %v258
    %vm560 = vcmp.eq.s32.totalorder %v50, %v262
    %vm561 = vcmp.eq.s32.totalorder %v50, %v266
    %vm562 = vcmp.eq.s32.totalorder %v50, %v270
    %vm563 = vcmp.eq.s32.totalorder %v50, %v274
    %vm564 = vcmp.eq.s32.totalorder %v50, %v278
    %vm565 = vcmp.eq.s32.totalorder %v50, %v282
    %vm566 = vcmp.eq.s32.totalorder %v50, %v286
    %vm567 = vcmp.eq.s32.totalorder %v50, %v290
    %vm568 = vcmp.eq.s32.totalorder %v50, %v294
    %vm569 = vcmp.eq.s32.totalorder %v50, %v298
    %vm570 = vcmp.eq.s32.totalorder %v50, %v302
    %vm571 = vcmp.eq.s32.totalorder %v50, %v306
    %vm572 = vcmp.eq.s32.totalorder %v50, %v310
    %vm573 = vcmp.eq.s32.totalorder %v50, %v314
    %vm574 = vcmp.eq.s32.totalorder %v50, %v318
    %vm575 = vcmp.eq.s32.totalorder %v51, %v66
    %vm576 = vcmp.eq.s32.totalorder %v51, %v70
    %vm577 = vcmp.eq.s32.totalorder %v51, %v74
    %vm578 = vcmp.eq.s32.totalorder %v51, %v78
    %vm579 = vcmp.eq.s32.totalorder %v51, %v82
    %vm580 = vcmp.eq.s32.totalorder %v51, %v86
    %vm581 = vcmp.eq.s32.totalorder %v51, %v90
    %vm582 = vcmp.eq.s32.totalorder %v51, %v94
    %vm583 = vcmp.eq.s32.totalorder %v51, %v98
    %vm584 = vcmp.eq.s32.totalorder %v51, %v102
    %vm585 = vcmp.eq.s32.totalorder %v51, %v106
    %vm586 = vcmp.eq.s32.totalorder %v51, %v110
    %vm587 = vcmp.eq.s32.totalorder %v51, %v114
    %vm588 = vcmp.eq.s32.totalorder %v51, %v118
    %vm589 = vcmp.eq.s32.totalorder %v51, %v122
    %vm590 = vcmp.eq.s32.totalorder %v51, %v126
    %vm591 = vcmp.eq.s32.totalorder %v51, %v130
    %vm592 = vcmp.eq.s32.totalorder %v51, %v134
    %vm593 = vcmp.eq.s32.totalorder %v51, %v138
    %vm594 = vcmp.eq.s32.totalorder %v51, %v142
    %vm595 = vcmp.eq.s32.totalorder %v51, %v146
    %vm596 = vcmp.eq.s32.totalorder %v51, %v150
    %vm597 = vcmp.eq.s32.totalorder %v51, %v154
    %vm598 = vcmp.eq.s32.totalorder %v51, %v158
    %vm599 = vcmp.eq.s32.totalorder %v51, %v162
    %vm600 = vcmp.eq.s32.totalorder %v51, %v166
    %vm601 = vcmp.eq.s32.totalorder %v51, %v170
    %vm602 = vcmp.eq.s32.totalorder %v51, %v174
    %vm603 = vcmp.eq.s32.totalorder %v51, %v178
    %vm604 = vcmp.eq.s32.totalorder %v51, %v182
    %vm605 = vcmp.eq.s32.totalorder %v51, %v186
    %vm606 = vcmp.eq.s32.totalorder %v51, %v190
    %vm607 = vcmp.eq.s32.totalorder %v51, %v194
    %vm608 = vcmp.eq.s32.totalorder %v51, %v198
    %vm609 = vcmp.eq.s32.totalorder %v51, %v202
    %vm610 = vcmp.eq.s32.totalorder %v51, %v206
    %vm611 = vcmp.eq.s32.totalorder %v51, %v210
    %vm612 = vcmp.eq.s32.totalorder %v51, %v214
    %vm613 = vcmp.eq.s32.totalorder %v51, %v218
    %vm614 = vcmp.eq.s32.totalorder %v51, %v222
    %vm615 = vcmp.eq.s32.totalorder %v51, %v226
    %vm616 = vcmp.eq.s32.totalorder %v51, %v230
    %vm617 = vcmp.eq.s32.totalorder %v51, %v234
    %vm618 = vcmp.eq.s32.totalorder %v51, %v238
    %vm619 = vcmp.eq.s32.totalorder %v51, %v242
    %vm620 = vcmp.eq.s32.totalorder %v51, %v246
    %vm621 = vcmp.eq.s32.totalorder %v51, %v250
    %vm622 = vcmp.eq.s32.totalorder %v51, %v254
    %vm623 = vcmp.eq.s32.totalorder %v51, %v258
    %vm624 = vcmp.eq.s32.totalorder %v51, %v262
    %vm625 = vcmp.eq.s32.totalorder %v51, %v266
    %vm626 = vcmp.eq.s32.totalorder %v51, %v270
    %vm627 = vcmp.eq.s32.totalorder %v51, %v274
    %vm628 = vcmp.eq.s32.totalorder %v51, %v278
    %vm629 = vcmp.eq.s32.totalorder %v51, %v282
    %vm630 = vcmp.eq.s32.totalorder %v51, %v286
    %vm631 = vcmp.eq.s32.totalorder %v51, %v290
    %vm632 = vcmp.eq.s32.totalorder %v51, %v294
    %vm633 = vcmp.eq.s32.totalorder %v51, %v298
    %vm634 = vcmp.eq.s32.totalorder %v51, %v302
    %vm635 = vcmp.eq.s32.totalorder %v51, %v306
    %vm636 = vcmp.eq.s32.totalorder %v51, %v310
    %vm637 = vcmp.eq.s32.totalorder %v51, %v314
    %vm638 = vcmp.eq.s32.totalorder %v51, %v318
    %vm639 = vcmp.eq.s32.totalorder %v52, %v66
    %vm640 = vcmp.eq.s32.totalorder %v52, %v70
    %vm641 = vcmp.eq.s32.totalorder %v52, %v74
    %vm642 = vcmp.eq.s32.totalorder %v52, %v78
    %vm643 = vcmp.eq.s32.totalorder %v52, %v82
    %vm644 = vcmp.eq.s32.totalorder %v52, %v86
    %vm645 = vcmp.eq.s32.totalorder %v52, %v90
    %vm646 = vcmp.eq.s32.totalorder %v52, %v94
    %vm647 = vcmp.eq.s32.totalorder %v52, %v98
    %vm648 = vcmp.eq.s32.totalorder %v52, %v102
    %vm649 = vcmp.eq.s32.totalorder %v52, %v106
    %vm650 = vcmp.eq.s32.totalorder %v52, %v110
    %vm651 = vcmp.eq.s32.totalorder %v52, %v114
    %vm652 = vcmp.eq.s32.totalorder %v52, %v118
    %vm653 = vcmp.eq.s32.totalorder %v52, %v122
    %vm654 = vcmp.eq.s32.totalorder %v52, %v126
    %vm655 = vcmp.eq.s32.totalorder %v52, %v130
    %vm656 = vcmp.eq.s32.totalorder %v52, %v134
    %vm657 = vcmp.eq.s32.totalorder %v52, %v138
    %vm658 = vcmp.eq.s32.totalorder %v52, %v142
    %vm659 = vcmp.eq.s32.totalorder %v52, %v146
    %vm660 = vcmp.eq.s32.totalorder %v52, %v150
    %vm661 = vcmp.eq.s32.totalorder %v52, %v154
    %vm662 = vcmp.eq.s32.totalorder %v52, %v158
    %vm663 = vcmp.eq.s32.totalorder %v52, %v162
    %vm664 = vcmp.eq.s32.totalorder %v52, %v166
    %vm665 = vcmp.eq.s32.totalorder %v52, %v170
    %vm666 = vcmp.eq.s32.totalorder %v52, %v174
    %vm667 = vcmp.eq.s32.totalorder %v52, %v178
    %vm668 = vcmp.eq.s32.totalorder %v52, %v182
    %vm669 = vcmp.eq.s32.totalorder %v52, %v186
    %vm670 = vcmp.eq.s32.totalorder %v52, %v190
    %vm671 = vcmp.eq.s32.totalorder %v52, %v194
    %vm672 = vcmp.eq.s32.totalorder %v52, %v198
    %vm673 = vcmp.eq.s32.totalorder %v52, %v202
    %vm674 = vcmp.eq.s32.totalorder %v52, %v206
    %vm675 = vcmp.eq.s32.totalorder %v52, %v210
    %vm676 = vcmp.eq.s32.totalorder %v52, %v214
    %vm677 = vcmp.eq.s32.totalorder %v52, %v218
    %vm678 = vcmp.eq.s32.totalorder %v52, %v222
    %vm679 = vcmp.eq.s32.totalorder %v52, %v226
    %vm680 = vcmp.eq.s32.totalorder %v52, %v230
    %vm681 = vcmp.eq.s32.totalorder %v52, %v234
    %vm682 = vcmp.eq.s32.totalorder %v52, %v238
    %vm683 = vcmp.eq.s32.totalorder %v52, %v242
    %vm684 = vcmp.eq.s32.totalorder %v52, %v246
    %vm685 = vcmp.eq.s32.totalorder %v52, %v250
    %vm686 = vcmp.eq.s32.totalorder %v52, %v254
    %vm687 = vcmp.eq.s32.totalorder %v52, %v258
    %vm688 = vcmp.eq.s32.totalorder %v52, %v262
    %vm689 = vcmp.eq.s32.totalorder %v52, %v266
    %vm690 = vcmp.eq.s32.totalorder %v52, %v270
    %vm691 = vcmp.eq.s32.totalorder %v52, %v274
    %vm692 = vcmp.eq.s32.totalorder %v52, %v278
    %vm693 = vcmp.eq.s32.totalorder %v52, %v282
    %vm694 = vcmp.eq.s32.totalorder %v52, %v286
    %vm695 = vcmp.eq.s32.totalorder %v52, %v290
    %vm696 = vcmp.eq.s32.totalorder %v52, %v294
    %vm697 = vcmp.eq.s32.totalorder %v52, %v298
    %vm698 = vcmp.eq.s32.totalorder %v52, %v302
    %vm699 = vcmp.eq.s32.totalorder %v52, %v306
    %vm700 = vcmp.eq.s32.totalorder %v52, %v310
    %vm701 = vcmp.eq.s32.totalorder %v52, %v314
    %vm702 = vcmp.eq.s32.totalorder %v52, %v318
    %vm703 = vcmp.eq.s32.totalorder %v53, %v66
    %vm704 = vcmp.eq.s32.totalorder %v53, %v70
    %vm705 = vcmp.eq.s32.totalorder %v53, %v74
    %vm706 = vcmp.eq.s32.totalorder %v53, %v78
    %vm707 = vcmp.eq.s32.totalorder %v53, %v82
    %vm708 = vcmp.eq.s32.totalorder %v53, %v86
    %vm709 = vcmp.eq.s32.totalorder %v53, %v90
    %vm710 = vcmp.eq.s32.totalorder %v53, %v94
    %vm711 = vcmp.eq.s32.totalorder %v53, %v98
    %vm712 = vcmp.eq.s32.totalorder %v53, %v102
    %vm713 = vcmp.eq.s32.totalorder %v53, %v106
    %vm714 = vcmp.eq.s32.totalorder %v53, %v110
    %vm715 = vcmp.eq.s32.totalorder %v53, %v114
    %vm716 = vcmp.eq.s32.totalorder %v53, %v118
    %vm717 = vcmp.eq.s32.totalorder %v53, %v122
    %vm718 = vcmp.eq.s32.totalorder %v53, %v126
    %vm719 = vcmp.eq.s32.totalorder %v53, %v130
    %vm720 = vcmp.eq.s32.totalorder %v53, %v134
    %vm721 = vcmp.eq.s32.totalorder %v53, %v138
    %vm722 = vcmp.eq.s32.totalorder %v53, %v142
    %vm723 = vcmp.eq.s32.totalorder %v53, %v146
    %vm724 = vcmp.eq.s32.totalorder %v53, %v150
    %vm725 = vcmp.eq.s32.totalorder %v53, %v154
    %vm726 = vcmp.eq.s32.totalorder %v53, %v158
    %vm727 = vcmp.eq.s32.totalorder %v53, %v162
    %vm728 = vcmp.eq.s32.totalorder %v53, %v166
    %vm729 = vcmp.eq.s32.totalorder %v53, %v170
    %vm730 = vcmp.eq.s32.totalorder %v53, %v174
    %vm731 = vcmp.eq.s32.totalorder %v53, %v178
    %vm732 = vcmp.eq.s32.totalorder %v53, %v182
    %vm733 = vcmp.eq.s32.totalorder %v53, %v186
    %vm734 = vcmp.eq.s32.totalorder %v53, %v190
    %vm735 = vcmp.eq.s32.totalorder %v53, %v194
    %vm736 = vcmp.eq.s32.totalorder %v53, %v198
    %vm737 = vcmp.eq.s32.totalorder %v53, %v202
    %vm738 = vcmp.eq.s32.totalorder %v53, %v206
    %vm739 = vcmp.eq.s32.totalorder %v53, %v210
    %vm740 = vcmp.eq.s32.totalorder %v53, %v214
    %vm741 = vcmp.eq.s32.totalorder %v53, %v218
    %vm742 = vcmp.eq.s32.totalorder %v53, %v222
    %vm743 = vcmp.eq.s32.totalorder %v53, %v226
    %vm744 = vcmp.eq.s32.totalorder %v53, %v230
    %vm745 = vcmp.eq.s32.totalorder %v53, %v234
    %vm746 = vcmp.eq.s32.totalorder %v53, %v238
    %vm747 = vcmp.eq.s32.totalorder %v53, %v242
    %vm748 = vcmp.eq.s32.totalorder %v53, %v246
    %vm749 = vcmp.eq.s32.totalorder %v53, %v250
    %vm750 = vcmp.eq.s32.totalorder %v53, %v254
    %vm751 = vcmp.eq.s32.totalorder %v53, %v258
    %vm752 = vcmp.eq.s32.totalorder %v53, %v262
    %vm753 = vcmp.eq.s32.totalorder %v53, %v266
    %vm754 = vcmp.eq.s32.totalorder %v53, %v270
    %vm755 = vcmp.eq.s32.totalorder %v53, %v274
    %vm756 = vcmp.eq.s32.totalorder %v53, %v278
    %vm757 = vcmp.eq.s32.totalorder %v53, %v282
    %vm758 = vcmp.eq.s32.totalorder %v53, %v286
    %vm759 = vcmp.eq.s32.totalorder %v53, %v290
    %vm760 = vcmp.eq.s32.totalorder %v53, %v294
    %vm761 = vcmp.eq.s32.totalorder %v53, %v298
    %vm762 = vcmp.eq.s32.totalorder %v53, %v302
    %vm763 = vcmp.eq.s32.totalorder %v53, %v306
    %vm764 = vcmp.eq.s32.totalorder %v53, %v310
    %vm765 = vcmp.eq.s32.totalorder %v53, %v314
    %vm766 = vcmp.eq.s32.totalorder %v53, %v318
    %vm767 = vcmp.eq.s32.totalorder %v54, %v66
    %vm768 = vcmp.eq.s32.totalorder %v54, %v70
    %vm769 = vcmp.eq.s32.totalorder %v54, %v74
    %vm770 = vcmp.eq.s32.totalorder %v54, %v78
    %vm771 = vcmp.eq.s32.totalorder %v54, %v82
    %vm772 = vcmp.eq.s32.totalorder %v54, %v86
    %vm773 = vcmp.eq.s32.totalorder %v54, %v90
    %vm774 = vcmp.eq.s32.totalorder %v54, %v94
    %vm775 = vcmp.eq.s32.totalorder %v54, %v98
    %vm776 = vcmp.eq.s32.totalorder %v54, %v102
    %vm777 = vcmp.eq.s32.totalorder %v54, %v106
    %vm778 = vcmp.eq.s32.totalorder %v54, %v110
    %vm779 = vcmp.eq.s32.totalorder %v54, %v114
    %vm780 = vcmp.eq.s32.totalorder %v54, %v118
    %vm781 = vcmp.eq.s32.totalorder %v54, %v122
    %vm782 = vcmp.eq.s32.totalorder %v54, %v126
    %vm783 = vcmp.eq.s32.totalorder %v54, %v130
    %vm784 = vcmp.eq.s32.totalorder %v54, %v134
    %vm785 = vcmp.eq.s32.totalorder %v54, %v138
    %vm786 = vcmp.eq.s32.totalorder %v54, %v142
    %vm787 = vcmp.eq.s32.totalorder %v54, %v146
    %vm788 = vcmp.eq.s32.totalorder %v54, %v150
    %vm789 = vcmp.eq.s32.totalorder %v54, %v154
    %vm790 = vcmp.eq.s32.totalorder %v54, %v158
    %vm791 = vcmp.eq.s32.totalorder %v54, %v162
    %vm792 = vcmp.eq.s32.totalorder %v54, %v166
    %vm793 = vcmp.eq.s32.totalorder %v54, %v170
    %vm794 = vcmp.eq.s32.totalorder %v54, %v174
    %vm795 = vcmp.eq.s32.totalorder %v54, %v178
    %vm796 = vcmp.eq.s32.totalorder %v54, %v182
    %vm797 = vcmp.eq.s32.totalorder %v54, %v186
    %vm798 = vcmp.eq.s32.totalorder %v54, %v190
    %vm799 = vcmp.eq.s32.totalorder %v54, %v194
    %vm800 = vcmp.eq.s32.totalorder %v54, %v198
    %vm801 = vcmp.eq.s32.totalorder %v54, %v202
    %vm802 = vcmp.eq.s32.totalorder %v54, %v206
    %vm803 = vcmp.eq.s32.totalorder %v54, %v210
    %vm804 = vcmp.eq.s32.totalorder %v54, %v214
    %vm805 = vcmp.eq.s32.totalorder %v54, %v218
    %vm806 = vcmp.eq.s32.totalorder %v54, %v222
    %vm807 = vcmp.eq.s32.totalorder %v54, %v226
    %vm808 = vcmp.eq.s32.totalorder %v54, %v230
    %vm809 = vcmp.eq.s32.totalorder %v54, %v234
    %vm810 = vcmp.eq.s32.totalorder %v54, %v238
    %vm811 = vcmp.eq.s32.totalorder %v54, %v242
    %vm812 = vcmp.eq.s32.totalorder %v54, %v246
    %vm813 = vcmp.eq.s32.totalorder %v54, %v250
    %vm814 = vcmp.eq.s32.totalorder %v54, %v254
    %vm815 = vcmp.eq.s32.totalorder %v54, %v258
    %vm816 = vcmp.eq.s32.totalorder %v54, %v262
    %vm817 = vcmp.eq.s32.totalorder %v54, %v266
    %vm818 = vcmp.eq.s32.totalorder %v54, %v270
    %vm819 = vcmp.eq.s32.totalorder %v54, %v274
    %vm820 = vcmp.eq.s32.totalorder %v54, %v278
    %vm821 = vcmp.eq.s32.totalorder %v54, %v282
    %vm822 = vcmp.eq.s32.totalorder %v54, %v286
    %vm823 = vcmp.eq.s32.totalorder %v54, %v290
    %vm824 = vcmp.eq.s32.totalorder %v54, %v294
    %vm825 = vcmp.eq.s32.totalorder %v54, %v298
    %vm826 = vcmp.eq.s32.totalorder %v54, %v302
    %vm827 = vcmp.eq.s32.totalorder %v54, %v306
    %vm828 = vcmp.eq.s32.totalorder %v54, %v310
    %vm829 = vcmp.eq.s32.totalorder %v54, %v314
    %vm830 = vcmp.eq.s32.totalorder %v54, %v318
    %vm831 = vcmp.eq.s32.totalorder %v55, %v66
    %vm832 = vcmp.eq.s32.totalorder %v55, %v70
    %vm833 = vcmp.eq.s32.totalorder %v55, %v74
    %vm834 = vcmp.eq.s32.totalorder %v55, %v78
    %vm835 = vcmp.eq.s32.totalorder %v55, %v82
    %vm836 = vcmp.eq.s32.totalorder %v55, %v86
    %vm837 = vcmp.eq.s32.totalorder %v55, %v90
    %vm838 = vcmp.eq.s32.totalorder %v55, %v94
    %vm839 = vcmp.eq.s32.totalorder %v55, %v98
    %vm840 = vcmp.eq.s32.totalorder %v55, %v102
    %vm841 = vcmp.eq.s32.totalorder %v55, %v106
    %vm842 = vcmp.eq.s32.totalorder %v55, %v110
    %vm843 = vcmp.eq.s32.totalorder %v55, %v114
    %vm844 = vcmp.eq.s32.totalorder %v55, %v118
    %vm845 = vcmp.eq.s32.totalorder %v55, %v122
    %vm846 = vcmp.eq.s32.totalorder %v55, %v126
    %vm847 = vcmp.eq.s32.totalorder %v55, %v130
    %vm848 = vcmp.eq.s32.totalorder %v55, %v134
    %vm849 = vcmp.eq.s32.totalorder %v55, %v138
    %vm850 = vcmp.eq.s32.totalorder %v55, %v142
    %vm851 = vcmp.eq.s32.totalorder %v55, %v146
    %vm852 = vcmp.eq.s32.totalorder %v55, %v150
    %vm853 = vcmp.eq.s32.totalorder %v55, %v154
    %vm854 = vcmp.eq.s32.totalorder %v55, %v158
    %vm855 = vcmp.eq.s32.totalorder %v55, %v162
    %vm856 = vcmp.eq.s32.totalorder %v55, %v166
    %vm857 = vcmp.eq.s32.totalorder %v55, %v170
    %vm858 = vcmp.eq.s32.totalorder %v55, %v174
    %vm859 = vcmp.eq.s32.totalorder %v55, %v178
    %vm860 = vcmp.eq.s32.totalorder %v55, %v182
    %vm861 = vcmp.eq.s32.totalorder %v55, %v186
    %vm862 = vcmp.eq.s32.totalorder %v55, %v190
    %vm863 = vcmp.eq.s32.totalorder %v55, %v194
    %vm864 = vcmp.eq.s32.totalorder %v55, %v198
    %vm865 = vcmp.eq.s32.totalorder %v55, %v202
    %vm866 = vcmp.eq.s32.totalorder %v55, %v206
    %vm867 = vcmp.eq.s32.totalorder %v55, %v210
    %vm868 = vcmp.eq.s32.totalorder %v55, %v214
    %vm869 = vcmp.eq.s32.totalorder %v55, %v218
    %vm870 = vcmp.eq.s32.totalorder %v55, %v222
    %vm871 = vcmp.eq.s32.totalorder %v55, %v226
    %vm872 = vcmp.eq.s32.totalorder %v55, %v230
    %vm873 = vcmp.eq.s32.totalorder %v55, %v234
    %vm874 = vcmp.eq.s32.totalorder %v55, %v238
    %vm875 = vcmp.eq.s32.totalorder %v55, %v242
    %vm876 = vcmp.eq.s32.totalorder %v55, %v246
    %vm877 = vcmp.eq.s32.totalorder %v55, %v250
    %vm878 = vcmp.eq.s32.totalorder %v55, %v254
    %vm879 = vcmp.eq.s32.totalorder %v55, %v258
    %vm880 = vcmp.eq.s32.totalorder %v55, %v262
    %vm881 = vcmp.eq.s32.totalorder %v55, %v266
    %vm882 = vcmp.eq.s32.totalorder %v55, %v270
    %vm883 = vcmp.eq.s32.totalorder %v55, %v274
    %vm884 = vcmp.eq.s32.totalorder %v55, %v278
    %vm885 = vcmp.eq.s32.totalorder %v55, %v282
    %vm886 = vcmp.eq.s32.totalorder %v55, %v286
    %vm887 = vcmp.eq.s32.totalorder %v55, %v290
    %vm888 = vcmp.eq.s32.totalorder %v55, %v294
    %vm889 = vcmp.eq.s32.totalorder %v55, %v298
    %vm890 = vcmp.eq.s32.totalorder %v55, %v302
    %vm891 = vcmp.eq.s32.totalorder %v55, %v306
    %vm892 = vcmp.eq.s32.totalorder %v55, %v310
    %vm893 = vcmp.eq.s32.totalorder %v55, %v314
    %vm894 = vcmp.eq.s32.totalorder %v55, %v318
    %vm895 = vcmp.eq.s32.totalorder %v56, %v66
    %vm896 = vcmp.eq.s32.totalorder %v56, %v70
    %vm897 = vcmp.eq.s32.totalorder %v56, %v74
    %vm898 = vcmp.eq.s32.totalorder %v56, %v78
    %vm899 = vcmp.eq.s32.totalorder %v56, %v82
    %vm900 = vcmp.eq.s32.totalorder %v56, %v86
    %vm901 = vcmp.eq.s32.totalorder %v56, %v90
    %vm902 = vcmp.eq.s32.totalorder %v56, %v94
    %vm903 = vcmp.eq.s32.totalorder %v56, %v98
    %vm904 = vcmp.eq.s32.totalorder %v56, %v102
    %vm905 = vcmp.eq.s32.totalorder %v56, %v106
    %vm906 = vcmp.eq.s32.totalorder %v56, %v110
    %vm907 = vcmp.eq.s32.totalorder %v56, %v114
    %vm908 = vcmp.eq.s32.totalorder %v56, %v118
    %vm909 = vcmp.eq.s32.totalorder %v56, %v122
    %vm910 = vcmp.eq.s32.totalorder %v56, %v126
    %vm911 = vcmp.eq.s32.totalorder %v56, %v130
    %vm912 = vcmp.eq.s32.totalorder %v56, %v134
    %vm913 = vcmp.eq.s32.totalorder %v56, %v138
    %vm914 = vcmp.eq.s32.totalorder %v56, %v142
    %vm915 = vcmp.eq.s32.totalorder %v56, %v146
    %vm916 = vcmp.eq.s32.totalorder %v56, %v150
    %vm917 = vcmp.eq.s32.totalorder %v56, %v154
    %vm918 = vcmp.eq.s32.totalorder %v56, %v158
    %vm919 = vcmp.eq.s32.totalorder %v56, %v162
    %vm920 = vcmp.eq.s32.totalorder %v56, %v166
    %vm921 = vcmp.eq.s32.totalorder %v56, %v170
    %vm922 = vcmp.eq.s32.totalorder %v56, %v174
    %vm923 = vcmp.eq.s32.totalorder %v56, %v178
    %vm924 = vcmp.eq.s32.totalorder %v56, %v182
    %vm925 = vcmp.eq.s32.totalorder %v56, %v186
    %vm926 = vcmp.eq.s32.totalorder %v56, %v190
    %vm927 = vcmp.eq.s32.totalorder %v56, %v194
    %vm928 = vcmp.eq.s32.totalorder %v56, %v198
    %vm929 = vcmp.eq.s32.totalorder %v56, %v202
    %vm930 = vcmp.eq.s32.totalorder %v56, %v206
    %vm931 = vcmp.eq.s32.totalorder %v56, %v210
    %vm932 = vcmp.eq.s32.totalorder %v56, %v214
    %vm933 = vcmp.eq.s32.totalorder %v56, %v218
    %vm934 = vcmp.eq.s32.totalorder %v56, %v222
    %vm935 = vcmp.eq.s32.totalorder %v56, %v226
    %vm936 = vcmp.eq.s32.totalorder %v56, %v230
    %vm937 = vcmp.eq.s32.totalorder %v56, %v234
    %vm938 = vcmp.eq.s32.totalorder %v56, %v238
    %vm939 = vcmp.eq.s32.totalorder %v56, %v242
    %vm940 = vcmp.eq.s32.totalorder %v56, %v246
    %vm941 = vcmp.eq.s32.totalorder %v56, %v250
    %vm942 = vcmp.eq.s32.totalorder %v56, %v254
    %vm943 = vcmp.eq.s32.totalorder %v56, %v258
    %vm944 = vcmp.eq.s32.totalorder %v56, %v262
    %vm945 = vcmp.eq.s32.totalorder %v56, %v266
    %vm946 = vcmp.eq.s32.totalorder %v56, %v270
    %vm947 = vcmp.eq.s32.totalorder %v56, %v274
    %vm948 = vcmp.eq.s32.totalorder %v56, %v278
    %vm949 = vcmp.eq.s32.totalorder %v56, %v282
    %vm950 = vcmp.eq.s32.totalorder %v56, %v286
    %vm951 = vcmp.eq.s32.totalorder %v56, %v290
    %vm952 = vcmp.eq.s32.totalorder %v56, %v294
    %vm953 = vcmp.eq.s32.totalorder %v56, %v298
    %vm954 = vcmp.eq.s32.totalorder %v56, %v302
    %vm955 = vcmp.eq.s32.totalorder %v56, %v306
    %vm956 = vcmp.eq.s32.totalorder %v56, %v310
    %vm957 = vcmp.eq.s32.totalorder %v56, %v314
    %vm958 = vcmp.eq.s32.totalorder %v56, %v318
    %vm959 = vcmp.eq.s32.totalorder %v57, %v66
    %vm960 = vcmp.eq.s32.totalorder %v57, %v70
    %vm961 = vcmp.eq.s32.totalorder %v57, %v74
    %vm962 = vcmp.eq.s32.totalorder %v57, %v78
    %vm963 = vcmp.eq.s32.totalorder %v57, %v82
    %vm964 = vcmp.eq.s32.totalorder %v57, %v86
    %vm965 = vcmp.eq.s32.totalorder %v57, %v90
    %vm966 = vcmp.eq.s32.totalorder %v57, %v94
    %vm967 = vcmp.eq.s32.totalorder %v57, %v98
    %vm968 = vcmp.eq.s32.totalorder %v57, %v102
    %vm969 = vcmp.eq.s32.totalorder %v57, %v106
    %vm970 = vcmp.eq.s32.totalorder %v57, %v110
    %vm971 = vcmp.eq.s32.totalorder %v57, %v114
    %vm972 = vcmp.eq.s32.totalorder %v57, %v118
    %vm973 = vcmp.eq.s32.totalorder %v57, %v122
    %vm974 = vcmp.eq.s32.totalorder %v57, %v126
    %vm975 = vcmp.eq.s32.totalorder %v57, %v130
    %vm976 = vcmp.eq.s32.totalorder %v57, %v134
    %vm977 = vcmp.eq.s32.totalorder %v57, %v138
    %vm978 = vcmp.eq.s32.totalorder %v57, %v142
    %vm979 = vcmp.eq.s32.totalorder %v57, %v146
    %vm980 = vcmp.eq.s32.totalorder %v57, %v150
    %vm981 = vcmp.eq.s32.totalorder %v57, %v154
    %vm982 = vcmp.eq.s32.totalorder %v57, %v158
    %vm983 = vcmp.eq.s32.totalorder %v57, %v162
    %vm984 = vcmp.eq.s32.totalorder %v57, %v166
    %vm985 = vcmp.eq.s32.totalorder %v57, %v170
    %vm986 = vcmp.eq.s32.totalorder %v57, %v174
    %vm987 = vcmp.eq.s32.totalorder %v57, %v178
    %vm988 = vcmp.eq.s32.totalorder %v57, %v182
    %vm989 = vcmp.eq.s32.totalorder %v57, %v186
    %vm990 = vcmp.eq.s32.totalorder %v57, %v190
    %vm991 = vcmp.eq.s32.totalorder %v57, %v194
    %vm992 = vcmp.eq.s32.totalorder %v57, %v198
    %vm993 = vcmp.eq.s32.totalorder %v57, %v202
    %vm994 = vcmp.eq.s32.totalorder %v57, %v206
    %vm995 = vcmp.eq.s32.totalorder %v57, %v210
    %vm996 = vcmp.eq.s32.totalorder %v57, %v214
    %vm997 = vcmp.eq.s32.totalorder %v57, %v218
    %vm998 = vcmp.eq.s32.totalorder %v57, %v222
    %vm999 = vcmp.eq.s32.totalorder %v57, %v226
    %vm1000 = vcmp.eq.s32.totalorder %v57, %v230
    %vm1001 = vcmp.eq.s32.totalorder %v57, %v234
    %vm1002 = vcmp.eq.s32.totalorder %v57, %v238
    %vm1003 = vcmp.eq.s32.totalorder %v57, %v242
    %vm1004 = vcmp.eq.s32.totalorder %v57, %v246
    %vm1005 = vcmp.eq.s32.totalorder %v57, %v250
    %vm1006 = vcmp.eq.s32.totalorder %v57, %v254
    %vm1007 = vcmp.eq.s32.totalorder %v57, %v258
    %vm1008 = vcmp.eq.s32.totalorder %v57, %v262
    %vm1009 = vcmp.eq.s32.totalorder %v57, %v266
    %vm1010 = vcmp.eq.s32.totalorder %v57, %v270
    %vm1011 = vcmp.eq.s32.totalorder %v57, %v274
    %vm1012 = vcmp.eq.s32.totalorder %v57, %v278
    %vm1013 = vcmp.eq.s32.totalorder %v57, %v282
    %vm1014 = vcmp.eq.s32.totalorder %v57, %v286
    %vm1015 = vcmp.eq.s32.totalorder %v57, %v290
    %vm1016 = vcmp.eq.s32.totalorder %v57, %v294
    %vm1017 = vcmp.eq.s32.totalorder %v57, %v298
    %vm1018 = vcmp.eq.s32.totalorder %v57, %v302
    %vm1019 = vcmp.eq.s32.totalorder %v57, %v306
    %vm1020 = vcmp.eq.s32.totalorder %v57, %v310
    %vm1021 = vcmp.eq.s32.totalorder %v57, %v314
    %vm1022 = vcmp.eq.s32.totalorder %v57, %v318
    %vm1023 = vcmp.eq.s32.totalorder %v58, %v66
    %vm1024 = vcmp.eq.s32.totalorder %v58, %v70
    %vm1025 = vcmp.eq.s32.totalorder %v58, %v74
    %vm1026 = vcmp.eq.s32.totalorder %v58, %v78
    %vm1027 = vcmp.eq.s32.totalorder %v58, %v82
    %vm1028 = vcmp.eq.s32.totalorder %v58, %v86
    %vm1029 = vcmp.eq.s32.totalorder %v58, %v90
    %vm1030 = vcmp.eq.s32.totalorder %v58, %v94
    %vm1031 = vcmp.eq.s32.totalorder %v58, %v98
    %vm1032 = vcmp.eq.s32.totalorder %v58, %v102
    %vm1033 = vcmp.eq.s32.totalorder %v58, %v106
    %vm1034 = vcmp.eq.s32.totalorder %v58, %v110
    %vm1035 = vcmp.eq.s32.totalorder %v58, %v114
    %vm1036 = vcmp.eq.s32.totalorder %v58, %v118
    %vm1037 = vcmp.eq.s32.totalorder %v58, %v122
    %vm1038 = vcmp.eq.s32.totalorder %v58, %v126
    %vm1039 = vcmp.eq.s32.totalorder %v58, %v130
    %vm1040 = vcmp.eq.s32.totalorder %v58, %v134
    %vm1041 = vcmp.eq.s32.totalorder %v58, %v138
    %vm1042 = vcmp.eq.s32.totalorder %v58, %v142
    %vm1043 = vcmp.eq.s32.totalorder %v58, %v146
    %vm1044 = vcmp.eq.s32.totalorder %v58, %v150
    %vm1045 = vcmp.eq.s32.totalorder %v58, %v154
    %vm1046 = vcmp.eq.s32.totalorder %v58, %v158
    %vm1047 = vcmp.eq.s32.totalorder %v58, %v162
    %vm1048 = vcmp.eq.s32.totalorder %v58, %v166
    %vm1049 = vcmp.eq.s32.totalorder %v58, %v170
    %vm1050 = vcmp.eq.s32.totalorder %v58, %v174
    %vm1051 = vcmp.eq.s32.totalorder %v58, %v178
    %vm1052 = vcmp.eq.s32.totalorder %v58, %v182
    %vm1053 = vcmp.eq.s32.totalorder %v58, %v186
    %vm1054 = vcmp.eq.s32.totalorder %v58, %v190
    %vm1055 = vcmp.eq.s32.totalorder %v58, %v194
    %vm1056 = vcmp.eq.s32.totalorder %v58, %v198
    %vm1057 = vcmp.eq.s32.totalorder %v58, %v202
    %vm1058 = vcmp.eq.s32.totalorder %v58, %v206
    %vm1059 = vcmp.eq.s32.totalorder %v58, %v210
    %vm1060 = vcmp.eq.s32.totalorder %v58, %v214
    %vm1061 = vcmp.eq.s32.totalorder %v58, %v218
    %vm1062 = vcmp.eq.s32.totalorder %v58, %v222
    %vm1063 = vcmp.eq.s32.totalorder %v58, %v226
    %vm1064 = vcmp.eq.s32.totalorder %v58, %v230
    %vm1065 = vcmp.eq.s32.totalorder %v58, %v234
    %vm1066 = vcmp.eq.s32.totalorder %v58, %v238
    %vm1067 = vcmp.eq.s32.totalorder %v58, %v242
    %vm1068 = vcmp.eq.s32.totalorder %v58, %v246
    %vm1069 = vcmp.eq.s32.totalorder %v58, %v250
    %vm1070 = vcmp.eq.s32.totalorder %v58, %v254
    %vm1071 = vcmp.eq.s32.totalorder %v58, %v258
    %vm1072 = vcmp.eq.s32.totalorder %v58, %v262
    %vm1073 = vcmp.eq.s32.totalorder %v58, %v266
    %vm1074 = vcmp.eq.s32.totalorder %v58, %v270
    %vm1075 = vcmp.eq.s32.totalorder %v58, %v274
    %vm1076 = vcmp.eq.s32.totalorder %v58, %v278
    %vm1077 = vcmp.eq.s32.totalorder %v58, %v282
    %vm1078 = vcmp.eq.s32.totalorder %v58, %v286
    %vm1079 = vcmp.eq.s32.totalorder %v58, %v290
    %vm1080 = vcmp.eq.s32.totalorder %v58, %v294
    %vm1081 = vcmp.eq.s32.totalorder %v58, %v298
    %vm1082 = vcmp.eq.s32.totalorder %v58, %v302
    %vm1083 = vcmp.eq.s32.totalorder %v58, %v306
    %vm1084 = vcmp.eq.s32.totalorder %v58, %v310
    %vm1085 = vcmp.eq.s32.totalorder %v58, %v314
    %vm1086 = vcmp.eq.s32.totalorder %v58, %v318
    %vm1087 = vcmp.eq.s32.totalorder %v59, %v66
    %vm1088 = vcmp.eq.s32.totalorder %v59, %v70
    %vm1089 = vcmp.eq.s32.totalorder %v59, %v74
    %vm1090 = vcmp.eq.s32.totalorder %v59, %v78
    %vm1091 = vcmp.eq.s32.totalorder %v59, %v82
    %vm1092 = vcmp.eq.s32.totalorder %v59, %v86
    %vm1093 = vcmp.eq.s32.totalorder %v59, %v90
    %vm1094 = vcmp.eq.s32.totalorder %v59, %v94
    %vm1095 = vcmp.eq.s32.totalorder %v59, %v98
    %vm1096 = vcmp.eq.s32.totalorder %v59, %v102
    %vm1097 = vcmp.eq.s32.totalorder %v59, %v106
    %vm1098 = vcmp.eq.s32.totalorder %v59, %v110
    %vm1099 = vcmp.eq.s32.totalorder %v59, %v114
    %vm1100 = vcmp.eq.s32.totalorder %v59, %v118
    %vm1101 = vcmp.eq.s32.totalorder %v59, %v122
    %vm1102 = vcmp.eq.s32.totalorder %v59, %v126
    %vm1103 = vcmp.eq.s32.totalorder %v59, %v130
    %vm1104 = vcmp.eq.s32.totalorder %v59, %v134
    %vm1105 = vcmp.eq.s32.totalorder %v59, %v138
    %vm1106 = vcmp.eq.s32.totalorder %v59, %v142
    %vm1107 = vcmp.eq.s32.totalorder %v59, %v146
    %vm1108 = vcmp.eq.s32.totalorder %v59, %v150
    %vm1109 = vcmp.eq.s32.totalorder %v59, %v154
    %vm1110 = vcmp.eq.s32.totalorder %v59, %v158
    %vm1111 = vcmp.eq.s32.totalorder %v59, %v162
    %vm1112 = vcmp.eq.s32.totalorder %v59, %v166
    %vm1113 = vcmp.eq.s32.totalorder %v59, %v170
    %vm1114 = vcmp.eq.s32.totalorder %v59, %v174
    %vm1115 = vcmp.eq.s32.totalorder %v59, %v178
    %vm1116 = vcmp.eq.s32.totalorder %v59, %v182
    %vm1117 = vcmp.eq.s32.totalorder %v59, %v186
    %vm1118 = vcmp.eq.s32.totalorder %v59, %v190
    %vm1119 = vcmp.eq.s32.totalorder %v59, %v194
    %vm1120 = vcmp.eq.s32.totalorder %v59, %v198
    %vm1121 = vcmp.eq.s32.totalorder %v59, %v202
    %vm1122 = vcmp.eq.s32.totalorder %v59, %v206
    %vm1123 = vcmp.eq.s32.totalorder %v59, %v210
    %vm1124 = vcmp.eq.s32.totalorder %v59, %v214
    %vm1125 = vcmp.eq.s32.totalorder %v59, %v218
    %vm1126 = vcmp.eq.s32.totalorder %v59, %v222
    %vm1127 = vcmp.eq.s32.totalorder %v59, %v226
    %vm1128 = vcmp.eq.s32.totalorder %v59, %v230
    %vm1129 = vcmp.eq.s32.totalorder %v59, %v234
    %vm1130 = vcmp.eq.s32.totalorder %v59, %v238
    %vm1131 = vcmp.eq.s32.totalorder %v59, %v242
    %vm1132 = vcmp.eq.s32.totalorder %v59, %v246
    %vm1133 = vcmp.eq.s32.totalorder %v59, %v250
    %vm1134 = vcmp.eq.s32.totalorder %v59, %v254
    %vm1135 = vcmp.eq.s32.totalorder %v59, %v258
    %vm1136 = vcmp.eq.s32.totalorder %v59, %v262
    %vm1137 = vcmp.eq.s32.totalorder %v59, %v266
    %vm1138 = vcmp.eq.s32.totalorder %v59, %v270
    %vm1139 = vcmp.eq.s32.totalorder %v59, %v274
    %vm1140 = vcmp.eq.s32.totalorder %v59, %v278
    %vm1141 = vcmp.eq.s32.totalorder %v59, %v282
    %vm1142 = vcmp.eq.s32.totalorder %v59, %v286
    %vm1143 = vcmp.eq.s32.totalorder %v59, %v290
    %vm1144 = vcmp.eq.s32.totalorder %v59, %v294
    %vm1145 = vcmp.eq.s32.totalorder %v59, %v298
    %vm1146 = vcmp.eq.s32.totalorder %v59, %v302
    %vm1147 = vcmp.eq.s32.totalorder %v59, %v306
    %vm1148 = vcmp.eq.s32.totalorder %v59, %v310
    %vm1149 = vcmp.eq.s32.totalorder %v59, %v314
    %vm1150 = vcmp.eq.s32.totalorder %v59, %v318
    %vm1151 = vcmp.eq.s32.totalorder %v60, %v66
    %vm1152 = vcmp.eq.s32.totalorder %v60, %v70
    %vm1153 = vcmp.eq.s32.totalorder %v60, %v74
    %vm1154 = vcmp.eq.s32.totalorder %v60, %v78
    %vm1155 = vcmp.eq.s32.totalorder %v60, %v82
    %vm1156 = vcmp.eq.s32.totalorder %v60, %v86
    %vm1157 = vcmp.eq.s32.totalorder %v60, %v90
    %vm1158 = vcmp.eq.s32.totalorder %v60, %v94
    %vm1159 = vcmp.eq.s32.totalorder %v60, %v98
    %vm1160 = vcmp.eq.s32.totalorder %v60, %v102
    %vm1161 = vcmp.eq.s32.totalorder %v60, %v106
    %vm1162 = vcmp.eq.s32.totalorder %v60, %v110
    %vm1163 = vcmp.eq.s32.totalorder %v60, %v114
    %vm1164 = vcmp.eq.s32.totalorder %v60, %v118
    %vm1165 = vcmp.eq.s32.totalorder %v60, %v122
    %vm1166 = vcmp.eq.s32.totalorder %v60, %v126
    %vm1167 = vcmp.eq.s32.totalorder %v60, %v130
    %vm1168 = vcmp.eq.s32.totalorder %v60, %v134
    %vm1169 = vcmp.eq.s32.totalorder %v60, %v138
    %vm1170 = vcmp.eq.s32.totalorder %v60, %v142
    %vm1171 = vcmp.eq.s32.totalorder %v60, %v146
    %vm1172 = vcmp.eq.s32.totalorder %v60, %v150
    %vm1173 = vcmp.eq.s32.totalorder %v60, %v154
    %vm1174 = vcmp.eq.s32.totalorder %v60, %v158
    %vm1175 = vcmp.eq.s32.totalorder %v60, %v162
    %vm1176 = vcmp.eq.s32.totalorder %v60, %v166
    %vm1177 = vcmp.eq.s32.totalorder %v60, %v170
    %vm1178 = vcmp.eq.s32.totalorder %v60, %v174
    %vm1179 = vcmp.eq.s32.totalorder %v60, %v178
    %vm1180 = vcmp.eq.s32.totalorder %v60, %v182
    %vm1181 = vcmp.eq.s32.totalorder %v60, %v186
    %vm1182 = vcmp.eq.s32.totalorder %v60, %v190
    %vm1183 = vcmp.eq.s32.totalorder %v60, %v194
    %vm1184 = vcmp.eq.s32.totalorder %v60, %v198
    %vm1185 = vcmp.eq.s32.totalorder %v60, %v202
    %vm1186 = vcmp.eq.s32.totalorder %v60, %v206
    %vm1187 = vcmp.eq.s32.totalorder %v60, %v210
    %vm1188 = vcmp.eq.s32.totalorder %v60, %v214
    %vm1189 = vcmp.eq.s32.totalorder %v60, %v218
    %vm1190 = vcmp.eq.s32.totalorder %v60, %v222
    %vm1191 = vcmp.eq.s32.totalorder %v60, %v226
    %vm1192 = vcmp.eq.s32.totalorder %v60, %v230
    %vm1193 = vcmp.eq.s32.totalorder %v60, %v234
    %vm1194 = vcmp.eq.s32.totalorder %v60, %v238
    %vm1195 = vcmp.eq.s32.totalorder %v60, %v242
    %vm1196 = vcmp.eq.s32.totalorder %v60, %v246
    %vm1197 = vcmp.eq.s32.totalorder %v60, %v250
    %vm1198 = vcmp.eq.s32.totalorder %v60, %v254
    %vm1199 = vcmp.eq.s32.totalorder %v60, %v258
    %vm1200 = vcmp.eq.s32.totalorder %v60, %v262
    %vm1201 = vcmp.eq.s32.totalorder %v60, %v266
    %vm1202 = vcmp.eq.s32.totalorder %v60, %v270
    %vm1203 = vcmp.eq.s32.totalorder %v60, %v274
    %vm1204 = vcmp.eq.s32.totalorder %v60, %v278
    %vm1205 = vcmp.eq.s32.totalorder %v60, %v282
    %vm1206 = vcmp.eq.s32.totalorder %v60, %v286
    %vm1207 = vcmp.eq.s32.totalorder %v60, %v290
    %vm1208 = vcmp.eq.s32.totalorder %v60, %v294
    %vm1209 = vcmp.eq.s32.totalorder %v60, %v298
    %vm1210 = vcmp.eq.s32.totalorder %v60, %v302
    %vm1211 = vcmp.eq.s32.totalorder %v60, %v306
    %vm1212 = vcmp.eq.s32.totalorder %v60, %v310
    %vm1213 = vcmp.eq.s32.totalorder %v60, %v314
    %vm1214 = vcmp.eq.s32.totalorder %v60, %v318
    %vm1215 = vcmp.eq.s32.totalorder %v61, %v66
    %vm1216 = vcmp.eq.s32.totalorder %v61, %v70
    %vm1217 = vcmp.eq.s32.totalorder %v61, %v74
    %vm1218 = vcmp.eq.s32.totalorder %v61, %v78
    %vm1219 = vcmp.eq.s32.totalorder %v61, %v82
    %vm1220 = vcmp.eq.s32.totalorder %v61, %v86
    %vm1221 = vcmp.eq.s32.totalorder %v61, %v90
    %vm1222 = vcmp.eq.s32.totalorder %v61, %v94
    %vm1223 = vcmp.eq.s32.totalorder %v61, %v98
    %vm1224 = vcmp.eq.s32.totalorder %v61, %v102
    %vm1225 = vcmp.eq.s32.totalorder %v61, %v106
    %vm1226 = vcmp.eq.s32.totalorder %v61, %v110
    %vm1227 = vcmp.eq.s32.totalorder %v61, %v114
    %vm1228 = vcmp.eq.s32.totalorder %v61, %v118
    %vm1229 = vcmp.eq.s32.totalorder %v61, %v122
    %vm1230 = vcmp.eq.s32.totalorder %v61, %v126
    %vm1231 = vcmp.eq.s32.totalorder %v61, %v130
    %vm1232 = vcmp.eq.s32.totalorder %v61, %v134
    %vm1233 = vcmp.eq.s32.totalorder %v61, %v138
    %vm1234 = vcmp.eq.s32.totalorder %v61, %v142
    %vm1235 = vcmp.eq.s32.totalorder %v61, %v146
    %vm1236 = vcmp.eq.s32.totalorder %v61, %v150
    %vm1237 = vcmp.eq.s32.totalorder %v61, %v154
    %vm1238 = vcmp.eq.s32.totalorder %v61, %v158
    %vm1239 = vcmp.eq.s32.totalorder %v61, %v162
    %vm1240 = vcmp.eq.s32.totalorder %v61, %v166
    %vm1241 = vcmp.eq.s32.totalorder %v61, %v170
    %vm1242 = vcmp.eq.s32.totalorder %v61, %v174
    %vm1243 = vcmp.eq.s32.totalorder %v61, %v178
    %vm1244 = vcmp.eq.s32.totalorder %v61, %v182
    %vm1245 = vcmp.eq.s32.totalorder %v61, %v186
    %vm1246 = vcmp.eq.s32.totalorder %v61, %v190
    %vm1247 = vcmp.eq.s32.totalorder %v61, %v194
    %vm1248 = vcmp.eq.s32.totalorder %v61, %v198
    %vm1249 = vcmp.eq.s32.totalorder %v61, %v202
    %vm1250 = vcmp.eq.s32.totalorder %v61, %v206
    %vm1251 = vcmp.eq.s32.totalorder %v61, %v210
    %vm1252 = vcmp.eq.s32.totalorder %v61, %v214
    %vm1253 = vcmp.eq.s32.totalorder %v61, %v218
    %vm1254 = vcmp.eq.s32.totalorder %v61, %v222
    %vm1255 = vcmp.eq.s32.totalorder %v61, %v226
    %vm1256 = vcmp.eq.s32.totalorder %v61, %v230
    %vm1257 = vcmp.eq.s32.totalorder %v61, %v234
    %vm1258 = vcmp.eq.s32.totalorder %v61, %v238
    %vm1259 = vcmp.eq.s32.totalorder %v61, %v242
    %vm1260 = vcmp.eq.s32.totalorder %v61, %v246
    %vm1261 = vcmp.eq.s32.totalorder %v61, %v250
    %vm1262 = vcmp.eq.s32.totalorder %v61, %v254
    %vm1263 = vcmp.eq.s32.totalorder %v61, %v258
    %vm1264 = vcmp.eq.s32.totalorder %v61, %v262
    %vm1265 = vcmp.eq.s32.totalorder %v61, %v266
    %vm1266 = vcmp.eq.s32.totalorder %v61, %v270
    %vm1267 = vcmp.eq.s32.totalorder %v61, %v274
    %vm1268 = vcmp.eq.s32.totalorder %v61, %v278
    %vm1269 = vcmp.eq.s32.totalorder %v61, %v282
    %vm1270 = vcmp.eq.s32.totalorder %v61, %v286
    %vm1271 = vcmp.eq.s32.totalorder %v61, %v290
    %vm1272 = vcmp.eq.s32.totalorder %v61, %v294
    %vm1273 = vcmp.eq.s32.totalorder %v61, %v298
    %vm1274 = vcmp.eq.s32.totalorder %v61, %v302
    %vm1275 = vcmp.eq.s32.totalorder %v61, %v306
    %vm1276 = vcmp.eq.s32.totalorder %v61, %v310
    %vm1277 = vcmp.eq.s32.totalorder %v61, %v314
    %vm1278 = vcmp.eq.s32.totalorder %v61, %v318
    %vm1279 = vcmp.eq.s32.totalorder %v62, %v66
    %vm1280 = vcmp.eq.s32.totalorder %v62, %v70
    %vm1281 = vcmp.eq.s32.totalorder %v62, %v74
    %vm1282 = vcmp.eq.s32.totalorder %v62, %v78
    %vm1283 = vcmp.eq.s32.totalorder %v62, %v82
    %vm1284 = vcmp.eq.s32.totalorder %v62, %v86
    %vm1285 = vcmp.eq.s32.totalorder %v62, %v90
    %vm1286 = vcmp.eq.s32.totalorder %v62, %v94
    %vm1287 = vcmp.eq.s32.totalorder %v62, %v98
    %vm1288 = vcmp.eq.s32.totalorder %v62, %v102
    %vm1289 = vcmp.eq.s32.totalorder %v62, %v106
    %vm1290 = vcmp.eq.s32.totalorder %v62, %v110
    %vm1291 = vcmp.eq.s32.totalorder %v62, %v114
    %vm1292 = vcmp.eq.s32.totalorder %v62, %v118
    %vm1293 = vcmp.eq.s32.totalorder %v62, %v122
    %vm1294 = vcmp.eq.s32.totalorder %v62, %v126
    %vm1295 = vcmp.eq.s32.totalorder %v62, %v130
    %vm1296 = vcmp.eq.s32.totalorder %v62, %v134
    %vm1297 = vcmp.eq.s32.totalorder %v62, %v138
    %vm1298 = vcmp.eq.s32.totalorder %v62, %v142
    %vm1299 = vcmp.eq.s32.totalorder %v62, %v146
    %vm1300 = vcmp.eq.s32.totalorder %v62, %v150
    %vm1301 = vcmp.eq.s32.totalorder %v62, %v154
    %vm1302 = vcmp.eq.s32.totalorder %v62, %v158
    %vm1303 = vcmp.eq.s32.totalorder %v62, %v162
    %vm1304 = vcmp.eq.s32.totalorder %v62, %v166
    %vm1305 = vcmp.eq.s32.totalorder %v62, %v170
    %vm1306 = vcmp.eq.s32.totalorder %v62, %v174
    %vm1307 = vcmp.eq.s32.totalorder %v62, %v178
    %vm1308 = vcmp.eq.s32.totalorder %v62, %v182
    %vm1309 = vcmp.eq.s32.totalorder %v62, %v186
    %vm1310 = vcmp.eq.s32.totalorder %v62, %v190
    %vm1311 = vcmp.eq.s32.totalorder %v62, %v194
    %vm1312 = vcmp.eq.s32.totalorder %v62, %v198
    %vm1313 = vcmp.eq.s32.totalorder %v62, %v202
    %vm1314 = vcmp.eq.s32.totalorder %v62, %v206
    %vm1315 = vcmp.eq.s32.totalorder %v62, %v210
    %vm1316 = vcmp.eq.s32.totalorder %v62, %v214
    %vm1317 = vcmp.eq.s32.totalorder %v62, %v218
    %vm1318 = vcmp.eq.s32.totalorder %v62, %v222
    %vm1319 = vcmp.eq.s32.totalorder %v62, %v226
    %vm1320 = vcmp.eq.s32.totalorder %v62, %v230
    %vm1321 = vcmp.eq.s32.totalorder %v62, %v234
    %vm1322 = vcmp.eq.s32.totalorder %v62, %v238
    %vm1323 = vcmp.eq.s32.totalorder %v62, %v242
    %vm1324 = vcmp.eq.s32.totalorder %v62, %v246
    %vm1325 = vcmp.eq.s32.totalorder %v62, %v250
    %vm1326 = vcmp.eq.s32.totalorder %v62, %v254
    %vm1327 = vcmp.eq.s32.totalorder %v62, %v258
    %vm1328 = vcmp.eq.s32.totalorder %v62, %v262
    %vm1329 = vcmp.eq.s32.totalorder %v62, %v266
    %vm1330 = vcmp.eq.s32.totalorder %v62, %v270
    %vm1331 = vcmp.eq.s32.totalorder %v62, %v274
    %vm1332 = vcmp.eq.s32.totalorder %v62, %v278
    %vm1333 = vcmp.eq.s32.totalorder %v62, %v282
    %vm1334 = vcmp.eq.s32.totalorder %v62, %v286
    %vm1335 = vcmp.eq.s32.totalorder %v62, %v290
    %vm1336 = vcmp.eq.s32.totalorder %v62, %v294
    %vm1337 = vcmp.eq.s32.totalorder %v62, %v298
    %vm1338 = vcmp.eq.s32.totalorder %v62, %v302
    %vm1339 = vcmp.eq.s32.totalorder %v62, %v306
    %vm1340 = vcmp.eq.s32.totalorder %v62, %v310
    %vm1341 = vcmp.eq.s32.totalorder %v62, %v314
    %vm1342 = vcmp.eq.s32.totalorder %v62, %v318
    %v1343 = vsel %vm319, 1, 0
    %v1344 = vsel %vm320, 1, 0
    %v1345 = vsel %vm321, 1, 0
    %v1346 = vsel %vm322, 1, 0
    %v1347 = vsel %vm323, 1, 0
    %v1348 = vsel %vm324, 1, 0
    %v1349 = vsel %vm325, 1, 0
    %v1350 = vsel %vm326, 1, 0
    %v1351 = vsel %vm327, 1, 0
    %v1352 = vsel %vm328, 1, 0
    %v1353 = vsel %vm329, 1, 0
    %v1354 = vsel %vm330, 1, 0
    %v1355 = vsel %vm331, 1, 0
    %v1356 = vsel %vm332, 1, 0
    %v1357 = vsel %vm333, 1, 0
    %v1358 = vsel %vm334, 1, 0
    %v1359 = vsel %vm335, 1, 0
    %v1360 = vsel %vm336, 1, 0
    %v1361 = vsel %vm337, 1, 0
    %v1362 = vsel %vm338, 1, 0
    %v1363 = vsel %vm339, 1, 0
    %v1364 = vsel %vm340, 1, 0
    %v1365 = vsel %vm341, 1, 0
    %v1366 = vsel %vm342, 1, 0
    %v1367 = vsel %vm343, 1, 0
    %v1368 = vsel %vm344, 1, 0
    %v1369 = vsel %vm345, 1, 0
    %v1370 = vsel %vm346, 1, 0
    %v1371 = vsel %vm347, 1, 0
    %v1372 = vsel %vm348, 1, 0
    %v1373 = vsel %vm349, 1, 0
    %v1374 = vsel %vm350, 1, 0
    %v1375 = vsel %vm351, 1, 0
    %v1376 = vsel %vm352, 1, 0
    %v1377 = vsel %vm353, 1, 0
    %v1378 = vsel %vm354, 1, 0
    %v1379 = vsel %vm355, 1, 0
    %v1380 = vsel %vm356, 1, 0
    %v1381 = vsel %vm357, 1, 0
    %v1382 = vsel %vm358, 1, 0
    %v1383 = vsel %vm359, 1, 0
    %v1384 = vsel %vm360, 1, 0
    %v1385 = vsel %vm361, 1, 0
    %v1386 = vsel %vm362, 1, 0
    %v1387 = vsel %vm363, 1, 0
    %v1388 = vsel %vm364, 1, 0
    %v1389 = vsel %vm365, 1, 0
    %v1390 = vsel %vm366, 1, 0
    %v1391 = vsel %vm367, 1, 0
    %v1392 = vsel %vm368, 1, 0
    %v1393 = vsel %vm369, 1, 0
    %v1394 = vsel %vm370, 1, 0
    %v1395 = vsel %vm371, 1, 0
    %v1396 = vsel %vm372, 1, 0
    %v1397 = vsel %vm373, 1, 0
    %v1398 = vsel %vm374, 1, 0
    %v1399 = vsel %vm375, 1, 0
    %v1400 = vsel %vm376, 1, 0
    %v1401 = vsel %vm377, 1, 0
    %v1402 = vsel %vm378, 1, 0
    %v1403 = vsel %vm379, 1, 0
    %v1404 = vsel %vm380, 1, 0
    %v1405 = vsel %vm381, 1, 0
    %v1406 = vsel %vm382, 1, 0
    %v1407 = vsel %vm383, 1, 0
    %v1408 = vsel %vm384, 1, 0
    %v1409 = vsel %vm385, 1, 0
    %v1410 = vsel %vm386, 1, 0
    %v1411 = vsel %vm387, 1, 0
    %v1412 = vsel %vm388, 1, 0
    %v1413 = vsel %vm389, 1, 0
    %v1414 = vsel %vm390, 1, 0
    %v1415 = vsel %vm391, 1, 0
    %v1416 = vsel %vm392, 1, 0
    %v1417 = vsel %vm393, 1, 0
    %v1418 = vsel %vm394, 1, 0
    %v1419 = vsel %vm395, 1, 0
    %v1420 = vsel %vm396, 1, 0
    %v1421 = vsel %vm397, 1, 0
    %v1422 = vsel %vm398, 1, 0
    %v1423 = vsel %vm399, 1, 0
    %v1424 = vsel %vm400, 1, 0
    %v1425 = vsel %vm401, 1, 0
    %v1426 = vsel %vm402, 1, 0
    %v1427 = vsel %vm403, 1, 0
    %v1428 = vsel %vm404, 1, 0
    %v1429 = vsel %vm405, 1, 0
    %v1430 = vsel %vm406, 1, 0
    %v1431 = vsel %vm407, 1, 0
    %v1432 = vsel %vm408, 1, 0
    %v1433 = vsel %vm409, 1, 0
    %v1434 = vsel %vm410, 1, 0
    %v1435 = vsel %vm411, 1, 0
    %v1436 = vsel %vm412, 1, 0
    %v1437 = vsel %vm413, 1, 0
    %v1438 = vsel %vm414, 1, 0
    %v1439 = vsel %vm415, 1, 0
    %v1440 = vsel %vm416, 1, 0
    %v1441 = vsel %vm417, 1, 0
    %v1442 = vsel %vm418, 1, 0
    %v1443 = vsel %vm419, 1, 0
    %v1444 = vsel %vm420, 1, 0
    %v1445 = vsel %vm421, 1, 0
    %v1446 = vsel %vm422, 1, 0
    %v1447 = vsel %vm423, 1, 0
    %v1448 = vsel %vm424, 1, 0
    %v1449 = vsel %vm425, 1, 0
    %v1450 = vsel %vm426, 1, 0
    %v1451 = vsel %vm427, 1, 0
    %v1452 = vsel %vm428, 1, 0
    %v1453 = vsel %vm429, 1, 0
    %v1454 = vsel %vm430, 1, 0
    %v1455 = vsel %vm431, 1, 0
    %v1456 = vsel %vm432, 1, 0
    %v1457 = vsel %vm433, 1, 0
    %v1458 = vsel %vm434, 1, 0
    %v1459 = vsel %vm435, 1, 0
    %v1460 = vsel %vm436, 1, 0
    %v1461 = vsel %vm437, 1, 0
    %v1462 = vsel %vm438, 1, 0
    %v1463 = vsel %vm439, 1, 0
    %v1464 = vsel %vm440, 1, 0
    %v1465 = vsel %vm441, 1, 0
    %v1466 = vsel %vm442, 1, 0
    %v1467 = vsel %vm443, 1, 0
    %v1468 = vsel %vm444, 1, 0
    %v1469 = vsel %vm445, 1, 0
    %v1470 = vsel %vm446, 1, 0
    %v1471 = vsel %vm447, 1, 0
    %v1472 = vsel %vm448, 1, 0
    %v1473 = vsel %vm449, 1, 0
    %v1474 = vsel %vm450, 1, 0
    %v1475 = vsel %vm451, 1, 0
    %v1476 = vsel %vm452, 1, 0
    %v1477 = vsel %vm453, 1, 0
    %v1478 = vsel %vm454, 1, 0
    %v1479 = vsel %vm455, 1, 0
    %v1480 = vsel %vm456, 1, 0
    %v1481 = vsel %vm457, 1, 0
    %v1482 = vsel %vm458, 1, 0
    %v1483 = vsel %vm459, 1, 0
    %v1484 = vsel %vm460, 1, 0
    %v1485 = vsel %vm461, 1, 0
    %v1486 = vsel %vm462, 1, 0
    %v1487 = vsel %vm463, 1, 0
    %v1488 = vsel %vm464, 1, 0
    %v1489 = vsel %vm465, 1, 0
    %v1490 = vsel %vm466, 1, 0
    %v1491 = vsel %vm467, 1, 0
    %v1492 = vsel %vm468, 1, 0
    %v1493 = vsel %vm469, 1, 0
    %v1494 = vsel %vm470, 1, 0
    %v1495 = vsel %vm471, 1, 0
    %v1496 = vsel %vm472, 1, 0
    %v1497 = vsel %vm473, 1, 0
    %v1498 = vsel %vm474, 1, 0
    %v1499 = vsel %vm475, 1, 0
    %v1500 = vsel %vm476, 1, 0
    %v1501 = vsel %vm477, 1, 0
    %v1502 = vsel %vm478, 1, 0
    %v1503 = vsel %vm479, 1, 0
    %v1504 = vsel %vm480, 1, 0
    %v1505 = vsel %vm481, 1, 0
    %v1506 = vsel %vm482, 1, 0
    %v1507 = vsel %vm483, 1, 0
    %v1508 = vsel %vm484, 1, 0
    %v1509 = vsel %vm485, 1, 0
    %v1510 = vsel %vm486, 1, 0
    %v1511 = vsel %vm487, 1, 0
    %v1512 = vsel %vm488, 1, 0
    %v1513 = vsel %vm489, 1, 0
    %v1514 = vsel %vm490, 1, 0
    %v1515 = vsel %vm491, 1, 0
    %v1516 = vsel %vm492, 1, 0
    %v1517 = vsel %vm493, 1, 0
    %v1518 = vsel %vm494, 1, 0
    %v1519 = vsel %vm495, 1, 0
    %v1520 = vsel %vm496, 1, 0
    %v1521 = vsel %vm497, 1, 0
    %v1522 = vsel %vm498, 1, 0
    %v1523 = vsel %vm499, 1, 0
    %v1524 = vsel %vm500, 1, 0
    %v1525 = vsel %vm501, 1, 0
    %v1526 = vsel %vm502, 1, 0
    %v1527 = vsel %vm503, 1, 0
    %v1528 = vsel %vm504, 1, 0
    %v1529 = vsel %vm505, 1, 0
    %v1530 = vsel %vm506, 1, 0
    %v1531 = vsel %vm507, 1, 0
    %v1532 = vsel %vm508, 1, 0
    %v1533 = vsel %vm509, 1, 0
    %v1534 = vsel %vm510, 1, 0
    %v1535 = vsel %vm511, 1, 0
    %v1536 = vsel %vm512, 1, 0
    %v1537 = vsel %vm513, 1, 0
    %v1538 = vsel %vm514, 1, 0
    %v1539 = vsel %vm515, 1, 0
    %v1540 = vsel %vm516, 1, 0
    %v1541 = vsel %vm517, 1, 0
    %v1542 = vsel %vm518, 1, 0
    %v1543 = vsel %vm519, 1, 0
    %v1544 = vsel %vm520, 1, 0
    %v1545 = vsel %vm521, 1, 0
    %v1546 = vsel %vm522, 1, 0
    %v1547 = vsel %vm523, 1, 0
    %v1548 = vsel %vm524, 1, 0
    %v1549 = vsel %vm525, 1, 0
    %v1550 = vsel %vm526, 1, 0
    %v1551 = vsel %vm527, 1, 0
    %v1552 = vsel %vm528, 1, 0
    %v1553 = vsel %vm529, 1, 0
    %v1554 = vsel %vm530, 1, 0
    %v1555 = vsel %vm531, 1, 0
    %v1556 = vsel %vm532, 1, 0
    %v1557 = vsel %vm533, 1, 0
    %v1558 = vsel %vm534, 1, 0
    %v1559 = vsel %vm535, 1, 0
    %v1560 = vsel %vm536, 1, 0
    %v1561 = vsel %vm537, 1, 0
    %v1562 = vsel %vm538, 1, 0
    %v1563 = vsel %vm539, 1, 0
    %v1564 = vsel %vm540, 1, 0
    %v1565 = vsel %vm541, 1, 0
    %v1566 = vsel %vm542, 1, 0
    %v1567 = vsel %vm543, 1, 0
    %v1568 = vsel %vm544, 1, 0
    %v1569 = vsel %vm545, 1, 0
    %v1570 = vsel %vm546, 1, 0
    %v1571 = vsel %vm547, 1, 0
    %v1572 = vsel %vm548, 1, 0
    %v1573 = vsel %vm549, 1, 0
    %v1574 = vsel %vm550, 1, 0
    %v1575 = vsel %vm551, 1, 0
    %v1576 = vsel %vm552, 1, 0
    %v1577 = vsel %vm553, 1, 0
    %v1578 = vsel %vm554, 1, 0
    %v1579 = vsel %vm555, 1, 0
    %v1580 = vsel %vm556, 1, 0
    %v1581 = vsel %vm557, 1, 0
    %v1582 = vsel %vm558, 1, 0
    %v1583 = vsel %vm559, 1, 0
    %v1584 = vsel %vm560, 1, 0
    %v1585 = vsel %vm561, 1, 0
    %v1586 = vsel %vm562, 1, 0
    %v1587 = vsel %vm563, 1, 0
    %v1588 = vsel %vm564, 1, 0
    %v1589 = vsel %vm565, 1, 0
    %v1590 = vsel %vm566, 1, 0
    %v1591 = vsel %vm567, 1, 0
    %v1592 = vsel %vm568, 1, 0
    %v1593 = vsel %vm569, 1, 0
    %v1594 = vsel %vm570, 1, 0
    %v1595 = vsel %vm571, 1, 0
    %v1596 = vsel %vm572, 1, 0
    %v1597 = vsel %vm573, 1, 0
    %v1598 = vsel %vm574, 1, 0
    %v1599 = vsel %vm575, 1, 0
    %v1600 = vsel %vm576, 1, 0
    %v1601 = vsel %vm577, 1, 0
    %v1602 = vsel %vm578, 1, 0
    %v1603 = vsel %vm579, 1, 0
    %v1604 = vsel %vm580, 1, 0
    %v1605 = vsel %vm581, 1, 0
    %v1606 = vsel %vm582, 1, 0
    %v1607 = vsel %vm583, 1, 0
    %v1608 = vsel %vm584, 1, 0
    %v1609 = vsel %vm585, 1, 0
    %v1610 = vsel %vm586, 1, 0
    %v1611 = vsel %vm587, 1, 0
    %v1612 = vsel %vm588, 1, 0
    %v1613 = vsel %vm589, 1, 0
    %v1614 = vsel %vm590, 1, 0
    %v1615 = vsel %vm591, 1, 0
    %v1616 = vsel %vm592, 1, 0
    %v1617 = vsel %vm593, 1, 0
    %v1618 = vsel %vm594, 1, 0
    %v1619 = vsel %vm595, 1, 0
    %v1620 = vsel %vm596, 1, 0
    %v1621 = vsel %vm597, 1, 0
    %v1622 = vsel %vm598, 1, 0
    %v1623 = vsel %vm599, 1, 0
    %v1624 = vsel %vm600, 1, 0
    %v1625 = vsel %vm601, 1, 0
    %v1626 = vsel %vm602, 1, 0
    %v1627 = vsel %vm603, 1, 0
    %v1628 = vsel %vm604, 1, 0
    %v1629 = vsel %vm605, 1, 0
    %v1630 = vsel %vm606, 1, 0
    %v1631 = vsel %vm607, 1, 0
    %v1632 = vsel %vm608, 1, 0
    %v1633 = vsel %vm609, 1, 0
    %v1634 = vsel %vm610, 1, 0
    %v1635 = vsel %vm611, 1, 0
    %v1636 = vsel %vm612, 1, 0
    %v1637 = vsel %vm613, 1, 0
    %v1638 = vsel %vm614, 1, 0
    %v1639 = vsel %vm615, 1, 0
    %v1640 = vsel %vm616, 1, 0
    %v1641 = vsel %vm617, 1, 0
    %v1642 = vsel %vm618, 1, 0
    %v1643 = vsel %vm619, 1, 0
    %v1644 = vsel %vm620, 1, 0
    %v1645 = vsel %vm621, 1, 0
    %v1646 = vsel %vm622, 1, 0
    %v1647 = vsel %vm623, 1, 0
    %v1648 = vsel %vm624, 1, 0
    %v1649 = vsel %vm625, 1, 0
    %v1650 = vsel %vm626, 1, 0
    %v1651 = vsel %vm627, 1, 0
    %v1652 = vsel %vm628, 1, 0
    %v1653 = vsel %vm629, 1, 0
    %v1654 = vsel %vm630, 1, 0
    %v1655 = vsel %vm631, 1, 0
    %v1656 = vsel %vm632, 1, 0
    %v1657 = vsel %vm633, 1, 0
    %v1658 = vsel %vm634, 1, 0
    %v1659 = vsel %vm635, 1, 0
    %v1660 = vsel %vm636, 1, 0
    %v1661 = vsel %vm637, 1, 0
    %v1662 = vsel %vm638, 1, 0
    %v1663 = vsel %vm639, 1, 0
    %v1664 = vsel %vm640, 1, 0
    %v1665 = vsel %vm641, 1, 0
    %v1666 = vsel %vm642, 1, 0
    %v1667 = vsel %vm643, 1, 0
    %v1668 = vsel %vm644, 1, 0
    %v1669 = vsel %vm645, 1, 0
    %v1670 = vsel %vm646, 1, 0
    %v1671 = vsel %vm647, 1, 0
    %v1672 = vsel %vm648, 1, 0
    %v1673 = vsel %vm649, 1, 0
    %v1674 = vsel %vm650, 1, 0
    %v1675 = vsel %vm651, 1, 0
    %v1676 = vsel %vm652, 1, 0
    %v1677 = vsel %vm653, 1, 0
    %v1678 = vsel %vm654, 1, 0
    %v1679 = vsel %vm655, 1, 0
    %v1680 = vsel %vm656, 1, 0
    %v1681 = vsel %vm657, 1, 0
    %v1682 = vsel %vm658, 1, 0
    %v1683 = vsel %vm659, 1, 0
    %v1684 = vsel %vm660, 1, 0
    %v1685 = vsel %vm661, 1, 0
    %v1686 = vsel %vm662, 1, 0
    %v1687 = vsel %vm663, 1, 0
    %v1688 = vsel %vm664, 1, 0
    %v1689 = vsel %vm665, 1, 0
    %v1690 = vsel %vm666, 1, 0
    %v1691 = vsel %vm667, 1, 0
    %v1692 = vsel %vm668, 1, 0
    %v1693 = vsel %vm669, 1, 0
    %v1694 = vsel %vm670, 1, 0
    %v1695 = vsel %vm671, 1, 0
    %v1696 = vsel %vm672, 1, 0
    %v1697 = vsel %vm673, 1, 0
    %v1698 = vsel %vm674, 1, 0
    %v1699 = vsel %vm675, 1, 0
    %v1700 = vsel %vm676, 1, 0
    %v1701 = vsel %vm677, 1, 0
    %v1702 = vsel %vm678, 1, 0
    %v1703 = vsel %vm679, 1, 0
    %v1704 = vsel %vm680, 1, 0
    %v1705 = vsel %vm681, 1, 0
    %v1706 = vsel %vm682, 1, 0
    %v1707 = vsel %vm683, 1, 0
    %v1708 = vsel %vm684, 1, 0
    %v1709 = vsel %vm685, 1, 0
    %v1710 = vsel %vm686, 1, 0
    %v1711 = vsel %vm687, 1, 0
    %v1712 = vsel %vm688, 1, 0
    %v1713 = vsel %vm689, 1, 0
    %v1714 = vsel %vm690, 1, 0
    %v1715 = vsel %vm691, 1, 0
    %v1716 = vsel %vm692, 1, 0
    %v1717 = vsel %vm693, 1, 0
    %v1718 = vsel %vm694, 1, 0
    %v1719 = vsel %vm695, 1, 0
    %v1720 = vsel %vm696, 1, 0
    %v1721 = vsel %vm697, 1, 0
    %v1722 = vsel %vm698, 1, 0
    %v1723 = vsel %vm699, 1, 0
    %v1724 = vsel %vm700, 1, 0
    %v1725 = vsel %vm701, 1, 0
    %v1726 = vsel %vm702, 1, 0
    %v1727 = vsel %vm703, 1, 0
    %v1728 = vsel %vm704, 1, 0
    %v1729 = vsel %vm705, 1, 0
    %v1730 = vsel %vm706, 1, 0
    %v1731 = vsel %vm707, 1, 0
    %v1732 = vsel %vm708, 1, 0
    %v1733 = vsel %vm709, 1, 0
    %v1734 = vsel %vm710, 1, 0
    %v1735 = vsel %vm711, 1, 0
    %v1736 = vsel %vm712, 1, 0
    %v1737 = vsel %vm713, 1, 0
    %v1738 = vsel %vm714, 1, 0
    %v1739 = vsel %vm715, 1, 0
    %v1740 = vsel %vm716, 1, 0
    %v1741 = vsel %vm717, 1, 0
    %v1742 = vsel %vm718, 1, 0
    %v1743 = vsel %vm719, 1, 0
    %v1744 = vsel %vm720, 1, 0
    %v1745 = vsel %vm721, 1, 0
    %v1746 = vsel %vm722, 1, 0
    %v1747 = vsel %vm723, 1, 0
    %v1748 = vsel %vm724, 1, 0
    %v1749 = vsel %vm725, 1, 0
    %v1750 = vsel %vm726, 1, 0
    %v1751 = vsel %vm727, 1, 0
    %v1752 = vsel %vm728, 1, 0
    %v1753 = vsel %vm729, 1, 0
    %v1754 = vsel %vm730, 1, 0
    %v1755 = vsel %vm731, 1, 0
    %v1756 = vsel %vm732, 1, 0
    %v1757 = vsel %vm733, 1, 0
    %v1758 = vsel %vm734, 1, 0
    %v1759 = vsel %vm735, 1, 0
    %v1760 = vsel %vm736, 1, 0
    %v1761 = vsel %vm737, 1, 0
    %v1762 = vsel %vm738, 1, 0
    %v1763 = vsel %vm739, 1, 0
    %v1764 = vsel %vm740, 1, 0
    %v1765 = vsel %vm741, 1, 0
    %v1766 = vsel %vm742, 1, 0
    %v1767 = vsel %vm743, 1, 0
    %v1768 = vsel %vm744, 1, 0
    %v1769 = vsel %vm745, 1, 0
    %v1770 = vsel %vm746, 1, 0
    %v1771 = vsel %vm747, 1, 0
    %v1772 = vsel %vm748, 1, 0
    %v1773 = vsel %vm749, 1, 0
    %v1774 = vsel %vm750, 1, 0
    %v1775 = vsel %vm751, 1, 0
    %v1776 = vsel %vm752, 1, 0
    %v1777 = vsel %vm753, 1, 0
    %v1778 = vsel %vm754, 1, 0
    %v1779 = vsel %vm755, 1, 0
    %v1780 = vsel %vm756, 1, 0
    %v1781 = vsel %vm757, 1, 0
    %v1782 = vsel %vm758, 1, 0
    %v1783 = vsel %vm759, 1, 0
    %v1784 = vsel %vm760, 1, 0
    %v1785 = vsel %vm761, 1, 0
    %v1786 = vsel %vm762, 1, 0
    %v1787 = vsel %vm763, 1, 0
    %v1788 = vsel %vm764, 1, 0
    %v1789 = vsel %vm765, 1, 0
    %v1790 = vsel %vm766, 1, 0
    %v1791 = vsel %vm767, 1, 0
    %v1792 = vsel %vm768, 1, 0
    %v1793 = vsel %vm769, 1, 0
    %v1794 = vsel %vm770, 1, 0
    %v1795 = vsel %vm771, 1, 0
    %v1796 = vsel %vm772, 1, 0
    %v1797 = vsel %vm773, 1, 0
    %v1798 = vsel %vm774, 1, 0
    %v1799 = vsel %vm775, 1, 0
    %v1800 = vsel %vm776, 1, 0
    %v1801 = vsel %vm777, 1, 0
    %v1802 = vsel %vm778, 1, 0
    %v1803 = vsel %vm779, 1, 0
    %v1804 = vsel %vm780, 1, 0
    %v1805 = vsel %vm781, 1, 0
    %v1806 = vsel %vm782, 1, 0
    %v1807 = vsel %vm783, 1, 0
    %v1808 = vsel %vm784, 1, 0
    %v1809 = vsel %vm785, 1, 0
    %v1810 = vsel %vm786, 1, 0
    %v1811 = vsel %vm787, 1, 0
    %v1812 = vsel %vm788, 1, 0
    %v1813 = vsel %vm789, 1, 0
    %v1814 = vsel %vm790, 1, 0
    %v1815 = vsel %vm791, 1, 0
    %v1816 = vsel %vm792, 1, 0
    %v1817 = vsel %vm793, 1, 0
    %v1818 = vsel %vm794, 1, 0
    %v1819 = vsel %vm795, 1, 0
    %v1820 = vsel %vm796, 1, 0
    %v1821 = vsel %vm797, 1, 0
    %v1822 = vsel %vm798, 1, 0
    %v1823 = vsel %vm799, 1, 0
    %v1824 = vsel %vm800, 1, 0
    %v1825 = vsel %vm801, 1, 0
    %v1826 = vsel %vm802, 1, 0
    %v1827 = vsel %vm803, 1, 0
    %v1828 = vsel %vm804, 1, 0
    %v1829 = vsel %vm805, 1, 0
    %v1830 = vsel %vm806, 1, 0
    %v1831 = vsel %vm807, 1, 0
    %v1832 = vsel %vm808, 1, 0
    %v1833 = vsel %vm809, 1, 0
    %v1834 = vsel %vm810, 1, 0
    %v1835 = vsel %vm811, 1, 0
    %v1836 = vsel %vm812, 1, 0
    %v1837 = vsel %vm813, 1, 0
    %v1838 = vsel %vm814, 1, 0
    %v1839 = vsel %vm815, 1, 0
    %v1840 = vsel %vm816, 1, 0
    %v1841 = vsel %vm817, 1, 0
    %v1842 = vsel %vm818, 1, 0
    %v1843 = vsel %vm819, 1, 0
    %v1844 = vsel %vm820, 1, 0
    %v1845 = vsel %vm821, 1, 0
    %v1846 = vsel %vm822, 1, 0
    %v1847 = vsel %vm823, 1, 0
    %v1848 = vsel %vm824, 1, 0
    %v1849 = vsel %vm825, 1, 0
    %v1850 = vsel %vm826, 1, 0
    %v1851 = vsel %vm827, 1, 0
    %v1852 = vsel %vm828, 1, 0
    %v1853 = vsel %vm829, 1, 0
    %v1854 = vsel %vm830, 1, 0
    %v1855 = vsel %vm831, 1, 0
    %v1856 = vsel %vm832, 1, 0
    %v1857 = vsel %vm833, 1, 0
    %v1858 = vsel %vm834, 1, 0
    %v1859 = vsel %vm835, 1, 0
    %v1860 = vsel %vm836, 1, 0
    %v1861 = vsel %vm837, 1, 0
    %v1862 = vsel %vm838, 1, 0
    %v1863 = vsel %vm839, 1, 0
    %v1864 = vsel %vm840, 1, 0
    %v1865 = vsel %vm841, 1, 0
    %v1866 = vsel %vm842, 1, 0
    %v1867 = vsel %vm843, 1, 0
    %v1868 = vsel %vm844, 1, 0
    %v1869 = vsel %vm845, 1, 0
    %v1870 = vsel %vm846, 1, 0
    %v1871 = vsel %vm847, 1, 0
    %v1872 = vsel %vm848, 1, 0
    %v1873 = vsel %vm849, 1, 0
    %v1874 = vsel %vm850, 1, 0
    %v1875 = vsel %vm851, 1, 0
    %v1876 = vsel %vm852, 1, 0
    %v1877 = vsel %vm853, 1, 0
    %v1878 = vsel %vm854, 1, 0
    %v1879 = vsel %vm855, 1, 0
    %v1880 = vsel %vm856, 1, 0
    %v1881 = vsel %vm857, 1, 0
    %v1882 = vsel %vm858, 1, 0
    %v1883 = vsel %vm859, 1, 0
    %v1884 = vsel %vm860, 1, 0
    %v1885 = vsel %vm861, 1, 0
    %v1886 = vsel %vm862, 1, 0
    %v1887 = vsel %vm863, 1, 0
    %v1888 = vsel %vm864, 1, 0
    %v1889 = vsel %vm865, 1, 0
    %v1890 = vsel %vm866, 1, 0
    %v1891 = vsel %vm867, 1, 0
    %v1892 = vsel %vm868, 1, 0
    %v1893 = vsel %vm869, 1, 0
    %v1894 = vsel %vm870, 1, 0
    %v1895 = vsel %vm871, 1, 0
    %v1896 = vsel %vm872, 1, 0
    %v1897 = vsel %vm873, 1, 0
    %v1898 = vsel %vm874, 1, 0
    %v1899 = vsel %vm875, 1, 0
    %v1900 = vsel %vm876, 1, 0
    %v1901 = vsel %vm877, 1, 0
    %v1902 = vsel %vm878, 1, 0
    %v1903 = vsel %vm879, 1, 0
    %v1904 = vsel %vm880, 1, 0
    %v1905 = vsel %vm881, 1, 0
    %v1906 = vsel %vm882, 1, 0
    %v1907 = vsel %vm883, 1, 0
    %v1908 = vsel %vm884, 1, 0
    %v1909 = vsel %vm885, 1, 0
    %v1910 = vsel %vm886, 1, 0
    %v1911 = vsel %vm887, 1, 0
    %v1912 = vsel %vm888, 1, 0
    %v1913 = vsel %vm889, 1, 0
    %v1914 = vsel %vm890, 1, 0
    %v1915 = vsel %vm891, 1, 0
    %v1916 = vsel %vm892, 1, 0
    %v1917 = vsel %vm893, 1, 0
    %v1918 = vsel %vm894, 1, 0
    %v1919 = vsel %vm895, 1, 0
    %v1920 = vsel %vm896, 1, 0
    %v1921 = vsel %vm897, 1, 0
    %v1922 = vsel %vm898, 1, 0
    %v1923 = vsel %vm899, 1, 0
    %v1924 = vsel %vm900, 1, 0
    %v1925 = vsel %vm901, 1, 0
    %v1926 = vsel %vm902, 1, 0
    %v1927 = vsel %vm903, 1, 0
    %v1928 = vsel %vm904, 1, 0
    %v1929 = vsel %vm905, 1, 0
    %v1930 = vsel %vm906, 1, 0
    %v1931 = vsel %vm907, 1, 0
    %v1932 = vsel %vm908, 1, 0
    %v1933 = vsel %vm909, 1, 0
    %v1934 = vsel %vm910, 1, 0
    %v1935 = vsel %vm911, 1, 0
    %v1936 = vsel %vm912, 1, 0
    %v1937 = vsel %vm913, 1, 0
    %v1938 = vsel %vm914, 1, 0
    %v1939 = vsel %vm915, 1, 0
    %v1940 = vsel %vm916, 1, 0
    %v1941 = vsel %vm917, 1, 0
    %v1942 = vsel %vm918, 1, 0
    %v1943 = vsel %vm919, 1, 0
    %v1944 = vsel %vm920, 1, 0
    %v1945 = vsel %vm921, 1, 0
    %v1946 = vsel %vm922, 1, 0
    %v1947 = vsel %vm923, 1, 0
    %v1948 = vsel %vm924, 1, 0
    %v1949 = vsel %vm925, 1, 0
    %v1950 = vsel %vm926, 1, 0
    %v1951 = vsel %vm927, 1, 0
    %v1952 = vsel %vm928, 1, 0
    %v1953 = vsel %vm929, 1, 0
    %v1954 = vsel %vm930, 1, 0
    %v1955 = vsel %vm931, 1, 0
    %v1956 = vsel %vm932, 1, 0
    %v1957 = vsel %vm933, 1, 0
    %v1958 = vsel %vm934, 1, 0
    %v1959 = vsel %vm935, 1, 0
    %v1960 = vsel %vm936, 1, 0
    %v1961 = vsel %vm937, 1, 0
    %v1962 = vsel %vm938, 1, 0
    %v1963 = vsel %vm939, 1, 0
    %v1964 = vsel %vm940, 1, 0
    %v1965 = vsel %vm941, 1, 0
    %v1966 = vsel %vm942, 1, 0
    %v1967 = vsel %vm943, 1, 0
    %v1968 = vsel %vm944, 1, 0
    %v1969 = vsel %vm945, 1, 0
    %v1970 = vsel %vm946, 1, 0
    %v1971 = vsel %vm947, 1, 0
    %v1972 = vsel %vm948, 1, 0
    %v1973 = vsel %vm949, 1, 0
    %v1974 = vsel %vm950, 1, 0
    %v1975 = vsel %vm951, 1, 0
    %v1976 = vsel %vm952, 1, 0
    %v1977 = vsel %vm953, 1, 0
    %v1978 = vsel %vm954, 1, 0
    %v1979 = vsel %vm955, 1, 0
    %v1980 = vsel %vm956, 1, 0
    %v1981 = vsel %vm957, 1, 0
    %v1982 = vsel %vm958, 1, 0
    %v1983 = vsel %vm959, 1, 0
    %v1984 = vsel %vm960, 1, 0
    %v1985 = vsel %vm961, 1, 0
    %v1986 = vsel %vm962, 1, 0
    %v1987 = vsel %vm963, 1, 0
    %v1988 = vsel %vm964, 1, 0
    %v1989 = vsel %vm965, 1, 0
    %v1990 = vsel %vm966, 1, 0
    %v1991 = vsel %vm967, 1, 0
    %v1992 = vsel %vm968, 1, 0
    %v1993 = vsel %vm969, 1, 0
    %v1994 = vsel %vm970, 1, 0
    %v1995 = vsel %vm971, 1, 0
    %v1996 = vsel %vm972, 1, 0
    %v1997 = vsel %vm973, 1, 0
    %v1998 = vsel %vm974, 1, 0
    %v1999 = vsel %vm975, 1, 0
    %v2000 = vsel %vm976, 1, 0
    %v2001 = vsel %vm977, 1, 0
    %v2002 = vsel %vm978, 1, 0
    %v2003 = vsel %vm979, 1, 0
    %v2004 = vsel %vm980, 1, 0
    %v2005 = vsel %vm981, 1, 0
    %v2006 = vsel %vm982, 1, 0
    %v2007 = vsel %vm983, 1, 0
    %v2008 = vsel %vm984, 1, 0
    %v2009 = vsel %vm985, 1, 0
    %v2010 = vsel %vm986, 1, 0
    %v2011 = vsel %vm987, 1, 0
    %v2012 = vsel %vm988, 1, 0
    %v2013 = vsel %vm989, 1, 0
    %v2014 = vsel %vm990, 1, 0
    %v2015 = vsel %vm991, 1, 0
    %v2016 = vsel %vm992, 1, 0
    %v2017 = vsel %vm993, 1, 0
    %v2018 = vsel %vm994, 1, 0
    %v2019 = vsel %vm995, 1, 0
    %v2020 = vsel %vm996, 1, 0
    %v2021 = vsel %vm997, 1, 0
    %v2022 = vsel %vm998, 1, 0
    %v2023 = vsel %vm999, 1, 0
    %v2024 = vsel %vm1000, 1, 0
    %v2025 = vsel %vm1001, 1, 0
    %v2026 = vsel %vm1002, 1, 0
    %v2027 = vsel %vm1003, 1, 0
    %v2028 = vsel %vm1004, 1, 0
    %v2029 = vsel %vm1005, 1, 0
    %v2030 = vsel %vm1006, 1, 0
    %v2031 = vsel %vm1007, 1, 0
    %v2032 = vsel %vm1008, 1, 0
    %v2033 = vsel %vm1009, 1, 0
    %v2034 = vsel %vm1010, 1, 0
    %v2035 = vsel %vm1011, 1, 0
    %v2036 = vsel %vm1012, 1, 0
    %v2037 = vsel %vm1013, 1, 0
    %v2038 = vsel %vm1014, 1, 0
    %v2039 = vsel %vm1015, 1, 0
    %v2040 = vsel %vm1016, 1, 0
    %v2041 = vsel %vm1017, 1, 0
    %v2042 = vsel %vm1018, 1, 0
    %v2043 = vsel %vm1019, 1, 0
    %v2044 = vsel %vm1020, 1, 0
    %v2045 = vsel %vm1021, 1, 0
    %v2046 = vsel %vm1022, 1, 0
    %v2047 = vsel %vm1023, 1, 0
    %v2048 = vsel %vm1024, 1, 0
    %v2049 = vsel %vm1025, 1, 0
    %v2050 = vsel %vm1026, 1, 0
    %v2051 = vsel %vm1027, 1, 0
    %v2052 = vsel %vm1028, 1, 0
    %v2053 = vsel %vm1029, 1, 0
    %v2054 = vsel %vm1030, 1, 0
    %v2055 = vsel %vm1031, 1, 0
    %v2056 = vsel %vm1032, 1, 0
    %v2057 = vsel %vm1033, 1, 0
    %v2058 = vsel %vm1034, 1, 0
    %v2059 = vsel %vm1035, 1, 0
    %v2060 = vsel %vm1036, 1, 0
    %v2061 = vsel %vm1037, 1, 0
    %v2062 = vsel %vm1038, 1, 0
    %v2063 = vsel %vm1039, 1, 0
    %v2064 = vsel %vm1040, 1, 0
    %v2065 = vsel %vm1041, 1, 0
    %v2066 = vsel %vm1042, 1, 0
    %v2067 = vsel %vm1043, 1, 0
    %v2068 = vsel %vm1044, 1, 0
    %v2069 = vsel %vm1045, 1, 0
    %v2070 = vsel %vm1046, 1, 0
    %v2071 = vsel %vm1047, 1, 0
    %v2072 = vsel %vm1048, 1, 0
    %v2073 = vsel %vm1049, 1, 0
    %v2074 = vsel %vm1050, 1, 0
    %v2075 = vsel %vm1051, 1, 0
    %v2076 = vsel %vm1052, 1, 0
    %v2077 = vsel %vm1053, 1, 0
    %v2078 = vsel %vm1054, 1, 0
    %v2079 = vsel %vm1055, 1, 0
    %v2080 = vsel %vm1056, 1, 0
    %v2081 = vsel %vm1057, 1, 0
    %v2082 = vsel %vm1058, 1, 0
    %v2083 = vsel %vm1059, 1, 0
    %v2084 = vsel %vm1060, 1, 0
    %v2085 = vsel %vm1061, 1, 0
    %v2086 = vsel %vm1062, 1, 0
    %v2087 = vsel %vm1063, 1, 0
    %v2088 = vsel %vm1064, 1, 0
    %v2089 = vsel %vm1065, 1, 0
    %v2090 = vsel %vm1066, 1, 0
    %v2091 = vsel %vm1067, 1, 0
    %v2092 = vsel %vm1068, 1, 0
    %v2093 = vsel %vm1069, 1, 0
    %v2094 = vsel %vm1070, 1, 0
    %v2095 = vsel %vm1071, 1, 0
    %v2096 = vsel %vm1072, 1, 0
    %v2097 = vsel %vm1073, 1, 0
    %v2098 = vsel %vm1074, 1, 0
    %v2099 = vsel %vm1075, 1, 0
    %v2100 = vsel %vm1076, 1, 0
    %v2101 = vsel %vm1077, 1, 0
    %v2102 = vsel %vm1078, 1, 0
    %v2103 = vsel %vm1079, 1, 0
    %v2104 = vsel %vm1080, 1, 0
    %v2105 = vsel %vm1081, 1, 0
    %v2106 = vsel %vm1082, 1, 0
    %v2107 = vsel %vm1083, 1, 0
    %v2108 = vsel %vm1084, 1, 0
    %v2109 = vsel %vm1085, 1, 0
    %v2110 = vsel %vm1086, 1, 0
    %v2111 = vsel %vm1087, 1, 0
    %v2112 = vsel %vm1088, 1, 0
    %v2113 = vsel %vm1089, 1, 0
    %v2114 = vsel %vm1090, 1, 0
    %v2115 = vsel %vm1091, 1, 0
    %v2116 = vsel %vm1092, 1, 0
    %v2117 = vsel %vm1093, 1, 0
    %v2118 = vsel %vm1094, 1, 0
    %v2119 = vsel %vm1095, 1, 0
    %v2120 = vsel %vm1096, 1, 0
    %v2121 = vsel %vm1097, 1, 0
    %v2122 = vsel %vm1098, 1, 0
    %v2123 = vsel %vm1099, 1, 0
    %v2124 = vsel %vm1100, 1, 0
    %v2125 = vsel %vm1101, 1, 0
    %v2126 = vsel %vm1102, 1, 0
    %v2127 = vsel %vm1103, 1, 0
    %v2128 = vsel %vm1104, 1, 0
    %v2129 = vsel %vm1105, 1, 0
    %v2130 = vsel %vm1106, 1, 0
    %v2131 = vsel %vm1107, 1, 0
    %v2132 = vsel %vm1108, 1, 0
    %v2133 = vsel %vm1109, 1, 0
    %v2134 = vsel %vm1110, 1, 0
    %v2135 = vsel %vm1111, 1, 0
    %v2136 = vsel %vm1112, 1, 0
    %v2137 = vsel %vm1113, 1, 0
    %v2138 = vsel %vm1114, 1, 0
    %v2139 = vsel %vm1115, 1, 0
    %v2140 = vsel %vm1116, 1, 0
    %v2141 = vsel %vm1117, 1, 0
    %v2142 = vsel %vm1118, 1, 0
    %v2143 = vsel %vm1119, 1, 0
    %v2144 = vsel %vm1120, 1, 0
    %v2145 = vsel %vm1121, 1, 0
    %v2146 = vsel %vm1122, 1, 0
    %v2147 = vsel %vm1123, 1, 0
    %v2148 = vsel %vm1124, 1, 0
    %v2149 = vsel %vm1125, 1, 0
    %v2150 = vsel %vm1126, 1, 0
    %v2151 = vsel %vm1127, 1, 0
    %v2152 = vsel %vm1128, 1, 0
    %v2153 = vsel %vm1129, 1, 0
    %v2154 = vsel %vm1130, 1, 0
    %v2155 = vsel %vm1131, 1, 0
    %v2156 = vsel %vm1132, 1, 0
    %v2157 = vsel %vm1133, 1, 0
    %v2158 = vsel %vm1134, 1, 0
    %v2159 = vsel %vm1135, 1, 0
    %v2160 = vsel %vm1136, 1, 0
    %v2161 = vsel %vm1137, 1, 0
    %v2162 = vsel %vm1138, 1, 0
    %v2163 = vsel %vm1139, 1, 0
    %v2164 = vsel %vm1140, 1, 0
    %v2165 = vsel %vm1141, 1, 0
    %v2166 = vsel %vm1142, 1, 0
    %v2167 = vsel %vm1143, 1, 0
    %v2168 = vsel %vm1144, 1, 0
    %v2169 = vsel %vm1145, 1, 0
    %v2170 = vsel %vm1146, 1, 0
    %v2171 = vsel %vm1147, 1, 0
    %v2172 = vsel %vm1148, 1, 0
    %v2173 = vsel %vm1149, 1, 0
    %v2174 = vsel %vm1150, 1, 0
    %v2175 = vsel %vm1151, 1, 0
    %v2176 = vsel %vm1152, 1, 0
    %v2177 = vsel %vm1153, 1, 0
    %v2178 = vsel %vm1154, 1, 0
    %v2179 = vsel %vm1155, 1, 0
    %v2180 = vsel %vm1156, 1, 0
    %v2181 = vsel %vm1157, 1, 0
    %v2182 = vsel %vm1158, 1, 0
    %v2183 = vsel %vm1159, 1, 0
    %v2184 = vsel %vm1160, 1, 0
    %v2185 = vsel %vm1161, 1, 0
    %v2186 = vsel %vm1162, 1, 0
    %v2187 = vsel %vm1163, 1, 0
    %v2188 = vsel %vm1164, 1, 0
    %v2189 = vsel %vm1165, 1, 0
    %v2190 = vsel %vm1166, 1, 0
    %v2191 = vsel %vm1167, 1, 0
    %v2192 = vsel %vm1168, 1, 0
    %v2193 = vsel %vm1169, 1, 0
    %v2194 = vsel %vm1170, 1, 0
    %v2195 = vsel %vm1171, 1, 0
    %v2196 = vsel %vm1172, 1, 0
    %v2197 = vsel %vm1173, 1, 0
    %v2198 = vsel %vm1174, 1, 0
    %v2199 = vsel %vm1175, 1, 0
    %v2200 = vsel %vm1176, 1, 0
    %v2201 = vsel %vm1177, 1, 0
    %v2202 = vsel %vm1178, 1, 0
    %v2203 = vsel %vm1179, 1, 0
    %v2204 = vsel %vm1180, 1, 0
    %v2205 = vsel %vm1181, 1, 0
    %v2206 = vsel %vm1182, 1, 0
    %v2207 = vsel %vm1183, 1, 0
    %v2208 = vsel %vm1184, 1, 0
    %v2209 = vsel %vm1185, 1, 0
    %v2210 = vsel %vm1186, 1, 0
    %v2211 = vsel %vm1187, 1, 0
    %v2212 = vsel %vm1188, 1, 0
    %v2213 = vsel %vm1189, 1, 0
    %v2214 = vsel %vm1190, 1, 0
    %v2215 = vsel %vm1191, 1, 0
    %v2216 = vsel %vm1192, 1, 0
    %v2217 = vsel %vm1193, 1, 0
    %v2218 = vsel %vm1194, 1, 0
    %v2219 = vsel %vm1195, 1, 0
    %v2220 = vsel %vm1196, 1, 0
    %v2221 = vsel %vm1197, 1, 0
    %v2222 = vsel %vm1198, 1, 0
    %v2223 = vsel %vm1199, 1, 0
    %v2224 = vsel %vm1200, 1, 0
    %v2225 = vsel %vm1201, 1, 0
    %v2226 = vsel %vm1202, 1, 0
    %v2227 = vsel %vm1203, 1, 0
    %v2228 = vsel %vm1204, 1, 0
    %v2229 = vsel %vm1205, 1, 0
    %v2230 = vsel %vm1206, 1, 0
    %v2231 = vsel %vm1207, 1, 0
    %v2232 = vsel %vm1208, 1, 0
    %v2233 = vsel %vm1209, 1, 0
    %v2234 = vsel %vm1210, 1, 0
    %v2235 = vsel %vm1211, 1, 0
    %v2236 = vsel %vm1212, 1, 0
    %v2237 = vsel %vm1213, 1, 0
    %v2238 = vsel %vm1214, 1, 0
    %v2239 = vsel %vm1215, 1, 0
    %v2240 = vsel %vm1216, 1, 0
    %v2241 = vsel %vm1217, 1, 0
    %v2242 = vsel %vm1218, 1, 0
    %v2243 = vsel %vm1219, 1, 0
    %v2244 = vsel %vm1220, 1, 0
    %v2245 = vsel %vm1221, 1, 0
    %v2246 = vsel %vm1222, 1, 0
    %v2247 = vsel %vm1223, 1, 0
    %v2248 = vsel %vm1224, 1, 0
    %v2249 = vsel %vm1225, 1, 0
    %v2250 = vsel %vm1226, 1, 0
    %v2251 = vsel %vm1227, 1, 0
    %v2252 = vsel %vm1228, 1, 0
    %v2253 = vsel %vm1229, 1, 0
    %v2254 = vsel %vm1230, 1, 0
    %v2255 = vsel %vm1231, 1, 0
    %v2256 = vsel %vm1232, 1, 0
    %v2257 = vsel %vm1233, 1, 0
    %v2258 = vsel %vm1234, 1, 0
    %v2259 = vsel %vm1235, 1, 0
    %v2260 = vsel %vm1236, 1, 0
    %v2261 = vsel %vm1237, 1, 0
    %v2262 = vsel %vm1238, 1, 0
    %v2263 = vsel %vm1239, 1, 0
    %v2264 = vsel %vm1240, 1, 0
    %v2265 = vsel %vm1241, 1, 0
    %v2266 = vsel %vm1242, 1, 0
    %v2267 = vsel %vm1243, 1, 0
    %v2268 = vsel %vm1244, 1, 0
    %v2269 = vsel %vm1245, 1, 0
    %v2270 = vsel %vm1246, 1, 0
    %v2271 = vsel %vm1247, 1, 0
    %v2272 = vsel %vm1248, 1, 0
    %v2273 = vsel %vm1249, 1, 0
    %v2274 = vsel %vm1250, 1, 0
    %v2275 = vsel %vm1251, 1, 0
    %v2276 = vsel %vm1252, 1, 0
    %v2277 = vsel %vm1253, 1, 0
    %v2278 = vsel %vm1254, 1, 0
    %v2279 = vsel %vm1255, 1, 0
    %v2280 = vsel %vm1256, 1, 0
    %v2281 = vsel %vm1257, 1, 0
    %v2282 = vsel %vm1258, 1, 0
    %v2283 = vsel %vm1259, 1, 0
    %v2284 = vsel %vm1260, 1, 0
    %v2285 = vsel %vm1261, 1, 0
    %v2286 = vsel %vm1262, 1, 0
    %v2287 = vsel %vm1263, 1, 0
    %v2288 = vsel %vm1264, 1, 0
    %v2289 = vsel %vm1265, 1, 0
    %v2290 = vsel %vm1266, 1, 0
    %v2291 = vsel %vm1267, 1, 0
    %v2292 = vsel %vm1268, 1, 0
    %v2293 = vsel %vm1269, 1, 0
    %v2294 = vsel %vm1270, 1, 0
    %v2295 = vsel %vm1271, 1, 0
    %v2296 = vsel %vm1272, 1, 0
    %v2297 = vsel %vm1273, 1, 0
    %v2298 = vsel %vm1274, 1, 0
    %v2299 = vsel %vm1275, 1, 0
    %v2300 = vsel %vm1276, 1, 0
    %v2301 = vsel %vm1277, 1, 0
    %v2302 = vsel %vm1278, 1, 0
    %v2303 = vsel %vm1279, 1, 0
    %v2304 = vsel %vm1280, 1, 0
    %v2305 = vsel %vm1281, 1, 0
    %v2306 = vsel %vm1282, 1, 0
    %v2307 = vsel %vm1283, 1, 0
    %v2308 = vsel %vm1284, 1, 0
    %v2309 = vsel %vm1285, 1, 0
    %v2310 = vsel %vm1286, 1, 0
    %v2311 = vsel %vm1287, 1, 0
    %v2312 = vsel %vm1288, 1, 0
    %v2313 = vsel %vm1289, 1, 0
    %v2314 = vsel %vm1290, 1, 0
    %v2315 = vsel %vm1291, 1, 0
    %v2316 = vsel %vm1292, 1, 0
    %v2317 = vsel %vm1293, 1, 0
    %v2318 = vsel %vm1294, 1, 0
    %v2319 = vsel %vm1295, 1, 0
    %v2320 = vsel %vm1296, 1, 0
    %v2321 = vsel %vm1297, 1, 0
    %v2322 = vsel %vm1298, 1, 0
    %v2323 = vsel %vm1299, 1, 0
    %v2324 = vsel %vm1300, 1, 0
    %v2325 = vsel %vm1301, 1, 0
    %v2326 = vsel %vm1302, 1, 0
    %v2327 = vsel %vm1303, 1, 0
    %v2328 = vsel %vm1304, 1, 0
    %v2329 = vsel %vm1305, 1, 0
    %v2330 = vsel %vm1306, 1, 0
    %v2331 = vsel %vm1307, 1, 0
    %v2332 = vsel %vm1308, 1, 0
    %v2333 = vsel %vm1309, 1, 0
    %v2334 = vsel %vm1310, 1, 0
    %v2335 = vsel %vm1311, 1, 0
    %v2336 = vsel %vm1312, 1, 0
    %v2337 = vsel %vm1313, 1, 0
    %v2338 = vsel %vm1314, 1, 0
    %v2339 = vsel %vm1315, 1, 0
    %v2340 = vsel %vm1316, 1, 0
    %v2341 = vsel %vm1317, 1, 0
    %v2342 = vsel %vm1318, 1, 0
    %v2343 = vsel %vm1319, 1, 0
    %v2344 = vsel %vm1320, 1, 0
    %v2345 = vsel %vm1321, 1, 0
    %v2346 = vsel %vm1322, 1, 0
    %v2347 = vsel %vm1323, 1, 0
    %v2348 = vsel %vm1324, 1, 0
    %v2349 = vsel %vm1325, 1, 0
    %v2350 = vsel %vm1326, 1, 0
    %v2351 = vsel %vm1327, 1, 0
    %v2352 = vsel %vm1328, 1, 0
    %v2353 = vsel %vm1329, 1, 0
    %v2354 = vsel %vm1330, 1, 0
    %v2355 = vsel %vm1331, 1, 0
    %v2356 = vsel %vm1332, 1, 0
    %v2357 = vsel %vm1333, 1, 0
    %v2358 = vsel %vm1334, 1, 0
    %v2359 = vsel %vm1335, 1, 0
    %v2360 = vsel %vm1336, 1, 0
    %v2361 = vsel %vm1337, 1, 0
    %v2362 = vsel %vm1338, 1, 0
    %v2363 = vsel %vm1339, 1, 0
    %v2364 = vsel %vm1340, 1, 0
    %v2365 = vsel %vm1341, 1, 0
    %v2366 = vsel %vm1342, 1, 0
    %v2367 = vcvt.s32.f32 %v1343
    %v2368 = vcvt.s32.f32 %v1344
    %v2369 = vcvt.s32.f32 %v1345
    %v2370 = vcvt.s32.f32 %v1346
    %v2371 = vcvt.s32.f32 %v1347
    %v2372 = vcvt.s32.f32 %v1348
    %v2373 = vcvt.s32.f32 %v1349
    %v2374 = vcvt.s32.f32 %v1350
    %v2375 = vcvt.s32.f32 %v1351
    %v2376 = vcvt.s32.f32 %v1352
    %v2377 = vcvt.s32.f32 %v1353
    %v2378 = vcvt.s32.f32 %v1354
    %v2379 = vcvt.s32.f32 %v1355
    %v2380 = vcvt.s32.f32 %v1356
    %v2381 = vcvt.s32.f32 %v1357
    %v2382 = vcvt.s32.f32 %v1358
    %v2383 = vcvt.s32.f32 %v1359
    %v2384 = vcvt.s32.f32 %v1360
    %v2385 = vcvt.s32.f32 %v1361
    %v2386 = vcvt.s32.f32 %v1362
    %v2387 = vcvt.s32.f32 %v1363
    %v2388 = vcvt.s32.f32 %v1364
    %v2389 = vcvt.s32.f32 %v1365
    %v2390 = vcvt.s32.f32 %v1366
    %v2391 = vcvt.s32.f32 %v1367
    %v2392 = vcvt.s32.f32 %v1368
    %v2393 = vcvt.s32.f32 %v1369
    %v2394 = vcvt.s32.f32 %v1370
    %v2395 = vcvt.s32.f32 %v1371
    %v2396 = vcvt.s32.f32 %v1372
    %v2397 = vcvt.s32.f32 %v1373
    %v2398 = vcvt.s32.f32 %v1374
    %v2399 = vcvt.s32.f32 %v1375
    %v2400 = vcvt.s32.f32 %v1376
    %v2401 = vcvt.s32.f32 %v1377
    %v2402 = vcvt.s32.f32 %v1378
    %v2403 = vcvt.s32.f32 %v1379
    %v2404 = vcvt.s32.f32 %v1380
    %v2405 = vcvt.s32.f32 %v1381
    %v2406 = vcvt.s32.f32 %v1382
    %v2407 = vcvt.s32.f32 %v1383
    %v2408 = vcvt.s32.f32 %v1384
    %v2409 = vcvt.s32.f32 %v1385
    %v2410 = vcvt.s32.f32 %v1386
    %v2411 = vcvt.s32.f32 %v1387
    %v2412 = vcvt.s32.f32 %v1388
    %v2413 = vcvt.s32.f32 %v1389
    %v2414 = vcvt.s32.f32 %v1390
    %v2415 = vcvt.s32.f32 %v1391
    %v2416 = vcvt.s32.f32 %v1392
    %v2417 = vcvt.s32.f32 %v1393
    %v2418 = vcvt.s32.f32 %v1394
    %v2419 = vcvt.s32.f32 %v1395
    %v2420 = vcvt.s32.f32 %v1396
    %v2421 = vcvt.s32.f32 %v1397
    %v2422 = vcvt.s32.f32 %v1398
    %v2423 = vcvt.s32.f32 %v1399
    %v2424 = vcvt.s32.f32 %v1400
    %v2425 = vcvt.s32.f32 %v1401
    %v2426 = vcvt.s32.f32 %v1402
    %v2427 = vcvt.s32.f32 %v1403
    %v2428 = vcvt.s32.f32 %v1404
    %v2429 = vcvt.s32.f32 %v1405
    %v2430 = vcvt.s32.f32 %v1406
    %v2431 = vcvt.s32.f32 %v1407
    %v2432 = vcvt.s32.f32 %v1408
    %v2433 = vcvt.s32.f32 %v1409
    %v2434 = vcvt.s32.f32 %v1410
    %v2435 = vcvt.s32.f32 %v1411
    %v2436 = vcvt.s32.f32 %v1412
    %v2437 = vcvt.s32.f32 %v1413
    %v2438 = vcvt.s32.f32 %v1414
    %v2439 = vcvt.s32.f32 %v1415
    %v2440 = vcvt.s32.f32 %v1416
    %v2441 = vcvt.s32.f32 %v1417
    %v2442 = vcvt.s32.f32 %v1418
    %v2443 = vcvt.s32.f32 %v1419
    %v2444 = vcvt.s32.f32 %v1420
    %v2445 = vcvt.s32.f32 %v1421
    %v2446 = vcvt.s32.f32 %v1422
    %v2447 = vcvt.s32.f32 %v1423
    %v2448 = vcvt.s32.f32 %v1424
    %v2449 = vcvt.s32.f32 %v1425
    %v2450 = vcvt.s32.f32 %v1426
    %v2451 = vcvt.s32.f32 %v1427
    %v2452 = vcvt.s32.f32 %v1428
    %v2453 = vcvt.s32.f32 %v1429
    %v2454 = vcvt.s32.f32 %v1430
    %v2455 = vcvt.s32.f32 %v1431
    %v2456 = vcvt.s32.f32 %v1432
    %v2457 = vcvt.s32.f32 %v1433
    %v2458 = vcvt.s32.f32 %v1434
    %v2459 = vcvt.s32.f32 %v1435
    %v2460 = vcvt.s32.f32 %v1436
    %v2461 = vcvt.s32.f32 %v1437
    %v2462 = vcvt.s32.f32 %v1438
    %v2463 = vcvt.s32.f32 %v1439
    %v2464 = vcvt.s32.f32 %v1440
    %v2465 = vcvt.s32.f32 %v1441
    %v2466 = vcvt.s32.f32 %v1442
    %v2467 = vcvt.s32.f32 %v1443
    %v2468 = vcvt.s32.f32 %v1444
    %v2469 = vcvt.s32.f32 %v1445
    %v2470 = vcvt.s32.f32 %v1446
    %v2471 = vcvt.s32.f32 %v1447
    %v2472 = vcvt.s32.f32 %v1448
    %v2473 = vcvt.s32.f32 %v1449
    %v2474 = vcvt.s32.f32 %v1450
    %v2475 = vcvt.s32.f32 %v1451
    %v2476 = vcvt.s32.f32 %v1452
    %v2477 = vcvt.s32.f32 %v1453
    %v2478 = vcvt.s32.f32 %v1454
    %v2479 = vcvt.s32.f32 %v1455
    %v2480 = vcvt.s32.f32 %v1456
    %v2481 = vcvt.s32.f32 %v1457
    %v2482 = vcvt.s32.f32 %v1458
    %v2483 = vcvt.s32.f32 %v1459
    %v2484 = vcvt.s32.f32 %v1460
    %v2485 = vcvt.s32.f32 %v1461
    %v2486 = vcvt.s32.f32 %v1462
    %v2487 = vcvt.s32.f32 %v1463
    %v2488 = vcvt.s32.f32 %v1464
    %v2489 = vcvt.s32.f32 %v1465
    %v2490 = vcvt.s32.f32 %v1466
    %v2491 = vcvt.s32.f32 %v1467
    %v2492 = vcvt.s32.f32 %v1468
    %v2493 = vcvt.s32.f32 %v1469
    %v2494 = vcvt.s32.f32 %v1470
    %v2495 = vcvt.s32.f32 %v1471
    %v2496 = vcvt.s32.f32 %v1472
    %v2497 = vcvt.s32.f32 %v1473
    %v2498 = vcvt.s32.f32 %v1474
    %v2499 = vcvt.s32.f32 %v1475
    %v2500 = vcvt.s32.f32 %v1476
    %v2501 = vcvt.s32.f32 %v1477
    %v2502 = vcvt.s32.f32 %v1478
    %v2503 = vcvt.s32.f32 %v1479
    %v2504 = vcvt.s32.f32 %v1480
    %v2505 = vcvt.s32.f32 %v1481
    %v2506 = vcvt.s32.f32 %v1482
    %v2507 = vcvt.s32.f32 %v1483
    %v2508 = vcvt.s32.f32 %v1484
    %v2509 = vcvt.s32.f32 %v1485
    %v2510 = vcvt.s32.f32 %v1486
    %v2511 = vcvt.s32.f32 %v1487
    %v2512 = vcvt.s32.f32 %v1488
    %v2513 = vcvt.s32.f32 %v1489
    %v2514 = vcvt.s32.f32 %v1490
    %v2515 = vcvt.s32.f32 %v1491
    %v2516 = vcvt.s32.f32 %v1492
    %v2517 = vcvt.s32.f32 %v1493
    %v2518 = vcvt.s32.f32 %v1494
    %v2519 = vcvt.s32.f32 %v1495
    %v2520 = vcvt.s32.f32 %v1496
    %v2521 = vcvt.s32.f32 %v1497
    %v2522 = vcvt.s32.f32 %v1498
    %v2523 = vcvt.s32.f32 %v1499
    %v2524 = vcvt.s32.f32 %v1500
    %v2525 = vcvt.s32.f32 %v1501
    %v2526 = vcvt.s32.f32 %v1502
    %v2527 = vcvt.s32.f32 %v1503
    %v2528 = vcvt.s32.f32 %v1504
    %v2529 = vcvt.s32.f32 %v1505
    %v2530 = vcvt.s32.f32 %v1506
    %v2531 = vcvt.s32.f32 %v1507
    %v2532 = vcvt.s32.f32 %v1508
    %v2533 = vcvt.s32.f32 %v1509
    %v2534 = vcvt.s32.f32 %v1510
    %v2535 = vcvt.s32.f32 %v1511
    %v2536 = vcvt.s32.f32 %v1512
    %v2537 = vcvt.s32.f32 %v1513
    %v2538 = vcvt.s32.f32 %v1514
    %v2539 = vcvt.s32.f32 %v1515
    %v2540 = vcvt.s32.f32 %v1516
    %v2541 = vcvt.s32.f32 %v1517
    %v2542 = vcvt.s32.f32 %v1518
    %v2543 = vcvt.s32.f32 %v1519
    %v2544 = vcvt.s32.f32 %v1520
    %v2545 = vcvt.s32.f32 %v1521
    %v2546 = vcvt.s32.f32 %v1522
    %v2547 = vcvt.s32.f32 %v1523
    %v2548 = vcvt.s32.f32 %v1524
    %v2549 = vcvt.s32.f32 %v1525
    %v2550 = vcvt.s32.f32 %v1526
    %v2551 = vcvt.s32.f32 %v1527
    %v2552 = vcvt.s32.f32 %v1528
    %v2553 = vcvt.s32.f32 %v1529
    %v2554 = vcvt.s32.f32 %v1530
    %v2555 = vcvt.s32.f32 %v1531
    %v2556 = vcvt.s32.f32 %v1532
    %v2557 = vcvt.s32.f32 %v1533
    %v2558 = vcvt.s32.f32 %v1534
    %v2559 = vcvt.s32.f32 %v1535
    %v2560 = vcvt.s32.f32 %v1536
    %v2561 = vcvt.s32.f32 %v1537
    %v2562 = vcvt.s32.f32 %v1538
    %v2563 = vcvt.s32.f32 %v1539
    %v2564 = vcvt.s32.f32 %v1540
    %v2565 = vcvt.s32.f32 %v1541
    %v2566 = vcvt.s32.f32 %v1542
    %v2567 = vcvt.s32.f32 %v1543
    %v2568 = vcvt.s32.f32 %v1544
    %v2569 = vcvt.s32.f32 %v1545
    %v2570 = vcvt.s32.f32 %v1546
    %v2571 = vcvt.s32.f32 %v1547
    %v2572 = vcvt.s32.f32 %v1548
    %v2573 = vcvt.s32.f32 %v1549
    %v2574 = vcvt.s32.f32 %v1550
    %v2575 = vcvt.s32.f32 %v1551
    %v2576 = vcvt.s32.f32 %v1552
    %v2577 = vcvt.s32.f32 %v1553
    %v2578 = vcvt.s32.f32 %v1554
    %v2579 = vcvt.s32.f32 %v1555
    %v2580 = vcvt.s32.f32 %v1556
    %v2581 = vcvt.s32.f32 %v1557
    %v2582 = vcvt.s32.f32 %v1558
    %v2583 = vcvt.s32.f32 %v1559
    %v2584 = vcvt.s32.f32 %v1560
    %v2585 = vcvt.s32.f32 %v1561
    %v2586 = vcvt.s32.f32 %v1562
    %v2587 = vcvt.s32.f32 %v1563
    %v2588 = vcvt.s32.f32 %v1564
    %v2589 = vcvt.s32.f32 %v1565
    %v2590 = vcvt.s32.f32 %v1566
    %v2591 = vcvt.s32.f32 %v1567
    %v2592 = vcvt.s32.f32 %v1568
    %v2593 = vcvt.s32.f32 %v1569
    %v2594 = vcvt.s32.f32 %v1570
    %v2595 = vcvt.s32.f32 %v1571
    %v2596 = vcvt.s32.f32 %v1572
    %v2597 = vcvt.s32.f32 %v1573
    %v2598 = vcvt.s32.f32 %v1574
    %v2599 = vcvt.s32.f32 %v1575
    %v2600 = vcvt.s32.f32 %v1576
    %v2601 = vcvt.s32.f32 %v1577
    %v2602 = vcvt.s32.f32 %v1578
    %v2603 = vcvt.s32.f32 %v1579
    %v2604 = vcvt.s32.f32 %v1580
    %v2605 = vcvt.s32.f32 %v1581
    %v2606 = vcvt.s32.f32 %v1582
    %v2607 = vcvt.s32.f32 %v1583
    %v2608 = vcvt.s32.f32 %v1584
    %v2609 = vcvt.s32.f32 %v1585
    %v2610 = vcvt.s32.f32 %v1586
    %v2611 = vcvt.s32.f32 %v1587
    %v2612 = vcvt.s32.f32 %v1588
    %v2613 = vcvt.s32.f32 %v1589
    %v2614 = vcvt.s32.f32 %v1590
    %v2615 = vcvt.s32.f32 %v1591
    %v2616 = vcvt.s32.f32 %v1592
    %v2617 = vcvt.s32.f32 %v1593
    %v2618 = vcvt.s32.f32 %v1594
    %v2619 = vcvt.s32.f32 %v1595
    %v2620 = vcvt.s32.f32 %v1596
    %v2621 = vcvt.s32.f32 %v1597
    %v2622 = vcvt.s32.f32 %v1598
    %v2623 = vcvt.s32.f32 %v1599
    %v2624 = vcvt.s32.f32 %v1600
    %v2625 = vcvt.s32.f32 %v1601
    %v2626 = vcvt.s32.f32 %v1602
    %v2627 = vcvt.s32.f32 %v1603
    %v2628 = vcvt.s32.f32 %v1604
    %v2629 = vcvt.s32.f32 %v1605
    %v2630 = vcvt.s32.f32 %v1606
    %v2631 = vcvt.s32.f32 %v1607
    %v2632 = vcvt.s32.f32 %v1608
    %v2633 = vcvt.s32.f32 %v1609
    %v2634 = vcvt.s32.f32 %v1610
    %v2635 = vcvt.s32.f32 %v1611
    %v2636 = vcvt.s32.f32 %v1612
    %v2637 = vcvt.s32.f32 %v1613
    %v2638 = vcvt.s32.f32 %v1614
    %v2639 = vcvt.s32.f32 %v1615
    %v2640 = vcvt.s32.f32 %v1616
    %v2641 = vcvt.s32.f32 %v1617
    %v2642 = vcvt.s32.f32 %v1618
    %v2643 = vcvt.s32.f32 %v1619
    %v2644 = vcvt.s32.f32 %v1620
    %v2645 = vcvt.s32.f32 %v1621
    %v2646 = vcvt.s32.f32 %v1622
    %v2647 = vcvt.s32.f32 %v1623
    %v2648 = vcvt.s32.f32 %v1624
    %v2649 = vcvt.s32.f32 %v1625
    %v2650 = vcvt.s32.f32 %v1626
    %v2651 = vcvt.s32.f32 %v1627
    %v2652 = vcvt.s32.f32 %v1628
    %v2653 = vcvt.s32.f32 %v1629
    %v2654 = vcvt.s32.f32 %v1630
    %v2655 = vcvt.s32.f32 %v1631
    %v2656 = vcvt.s32.f32 %v1632
    %v2657 = vcvt.s32.f32 %v1633
    %v2658 = vcvt.s32.f32 %v1634
    %v2659 = vcvt.s32.f32 %v1635
    %v2660 = vcvt.s32.f32 %v1636
    %v2661 = vcvt.s32.f32 %v1637
    %v2662 = vcvt.s32.f32 %v1638
    %v2663 = vcvt.s32.f32 %v1639
    %v2664 = vcvt.s32.f32 %v1640
    %v2665 = vcvt.s32.f32 %v1641
    %v2666 = vcvt.s32.f32 %v1642
    %v2667 = vcvt.s32.f32 %v1643
    %v2668 = vcvt.s32.f32 %v1644
    %v2669 = vcvt.s32.f32 %v1645
    %v2670 = vcvt.s32.f32 %v1646
    %v2671 = vcvt.s32.f32 %v1647
    %v2672 = vcvt.s32.f32 %v1648
    %v2673 = vcvt.s32.f32 %v1649
    %v2674 = vcvt.s32.f32 %v1650
    %v2675 = vcvt.s32.f32 %v1651
    %v2676 = vcvt.s32.f32 %v1652
    %v2677 = vcvt.s32.f32 %v1653
    %v2678 = vcvt.s32.f32 %v1654
    %v2679 = vcvt.s32.f32 %v1655
    %v2680 = vcvt.s32.f32 %v1656
    %v2681 = vcvt.s32.f32 %v1657
    %v2682 = vcvt.s32.f32 %v1658
    %v2683 = vcvt.s32.f32 %v1659
    %v2684 = vcvt.s32.f32 %v1660
    %v2685 = vcvt.s32.f32 %v1661
    %v2686 = vcvt.s32.f32 %v1662
    %v2687 = vcvt.s32.f32 %v1663
    %v2688 = vcvt.s32.f32 %v1664
    %v2689 = vcvt.s32.f32 %v1665
    %v2690 = vcvt.s32.f32 %v1666
    %v2691 = vcvt.s32.f32 %v1667
    %v2692 = vcvt.s32.f32 %v1668
    %v2693 = vcvt.s32.f32 %v1669
    %v2694 = vcvt.s32.f32 %v1670
    %v2695 = vcvt.s32.f32 %v1671
    %v2696 = vcvt.s32.f32 %v1672
    %v2697 = vcvt.s32.f32 %v1673
    %v2698 = vcvt.s32.f32 %v1674
    %v2699 = vcvt.s32.f32 %v1675
    %v2700 = vcvt.s32.f32 %v1676
    %v2701 = vcvt.s32.f32 %v1677
    %v2702 = vcvt.s32.f32 %v1678
    %v2703 = vcvt.s32.f32 %v1679
    %v2704 = vcvt.s32.f32 %v1680
    %v2705 = vcvt.s32.f32 %v1681
    %v2706 = vcvt.s32.f32 %v1682
    %v2707 = vcvt.s32.f32 %v1683
    %v2708 = vcvt.s32.f32 %v1684
    %v2709 = vcvt.s32.f32 %v1685
    %v2710 = vcvt.s32.f32 %v1686
    %v2711 = vcvt.s32.f32 %v1687
    %v2712 = vcvt.s32.f32 %v1688
    %v2713 = vcvt.s32.f32 %v1689
    %v2714 = vcvt.s32.f32 %v1690
    %v2715 = vcvt.s32.f32 %v1691
    %v2716 = vcvt.s32.f32 %v1692
    %v2717 = vcvt.s32.f32 %v1693
    %v2718 = vcvt.s32.f32 %v1694
    %v2719 = vcvt.s32.f32 %v1695
    %v2720 = vcvt.s32.f32 %v1696
    %v2721 = vcvt.s32.f32 %v1697
    %v2722 = vcvt.s32.f32 %v1698
    %v2723 = vcvt.s32.f32 %v1699
    %v2724 = vcvt.s32.f32 %v1700
    %v2725 = vcvt.s32.f32 %v1701
    %v2726 = vcvt.s32.f32 %v1702
    %v2727 = vcvt.s32.f32 %v1703
    %v2728 = vcvt.s32.f32 %v1704
    %v2729 = vcvt.s32.f32 %v1705
    %v2730 = vcvt.s32.f32 %v1706
    %v2731 = vcvt.s32.f32 %v1707
    %v2732 = vcvt.s32.f32 %v1708
    %v2733 = vcvt.s32.f32 %v1709
    %v2734 = vcvt.s32.f32 %v1710
    %v2735 = vcvt.s32.f32 %v1711
    %v2736 = vcvt.s32.f32 %v1712
    %v2737 = vcvt.s32.f32 %v1713
    %v2738 = vcvt.s32.f32 %v1714
    %v2739 = vcvt.s32.f32 %v1715
    %v2740 = vcvt.s32.f32 %v1716
    %v2741 = vcvt.s32.f32 %v1717
    %v2742 = vcvt.s32.f32 %v1718
    %v2743 = vcvt.s32.f32 %v1719
    %v2744 = vcvt.s32.f32 %v1720
    %v2745 = vcvt.s32.f32 %v1721
    %v2746 = vcvt.s32.f32 %v1722
    %v2747 = vcvt.s32.f32 %v1723
    %v2748 = vcvt.s32.f32 %v1724
    %v2749 = vcvt.s32.f32 %v1725
    %v2750 = vcvt.s32.f32 %v1726
    %v2751 = vcvt.s32.f32 %v1727
    %v2752 = vcvt.s32.f32 %v1728
    %v2753 = vcvt.s32.f32 %v1729
    %v2754 = vcvt.s32.f32 %v1730
    %v2755 = vcvt.s32.f32 %v1731
    %v2756 = vcvt.s32.f32 %v1732
    %v2757 = vcvt.s32.f32 %v1733
    %v2758 = vcvt.s32.f32 %v1734
    %v2759 = vcvt.s32.f32 %v1735
    %v2760 = vcvt.s32.f32 %v1736
    %v2761 = vcvt.s32.f32 %v1737
    %v2762 = vcvt.s32.f32 %v1738
    %v2763 = vcvt.s32.f32 %v1739
    %v2764 = vcvt.s32.f32 %v1740
    %v2765 = vcvt.s32.f32 %v1741
    %v2766 = vcvt.s32.f32 %v1742
    %v2767 = vcvt.s32.f32 %v1743
    %v2768 = vcvt.s32.f32 %v1744
    %v2769 = vcvt.s32.f32 %v1745
    %v2770 = vcvt.s32.f32 %v1746
    %v2771 = vcvt.s32.f32 %v1747
    %v2772 = vcvt.s32.f32 %v1748
    %v2773 = vcvt.s32.f32 %v1749
    %v2774 = vcvt.s32.f32 %v1750
    %v2775 = vcvt.s32.f32 %v1751
    %v2776 = vcvt.s32.f32 %v1752
    %v2777 = vcvt.s32.f32 %v1753
    %v2778 = vcvt.s32.f32 %v1754
    %v2779 = vcvt.s32.f32 %v1755
    %v2780 = vcvt.s32.f32 %v1756
    %v2781 = vcvt.s32.f32 %v1757
    %v2782 = vcvt.s32.f32 %v1758
    %v2783 = vcvt.s32.f32 %v1759
    %v2784 = vcvt.s32.f32 %v1760
    %v2785 = vcvt.s32.f32 %v1761
    %v2786 = vcvt.s32.f32 %v1762
    %v2787 = vcvt.s32.f32 %v1763
    %v2788 = vcvt.s32.f32 %v1764
    %v2789 = vcvt.s32.f32 %v1765
    %v2790 = vcvt.s32.f32 %v1766
    %v2791 = vcvt.s32.f32 %v1767
    %v2792 = vcvt.s32.f32 %v1768
    %v2793 = vcvt.s32.f32 %v1769
    %v2794 = vcvt.s32.f32 %v1770
    %v2795 = vcvt.s32.f32 %v1771
    %v2796 = vcvt.s32.f32 %v1772
    %v2797 = vcvt.s32.f32 %v1773
    %v2798 = vcvt.s32.f32 %v1774
    %v2799 = vcvt.s32.f32 %v1775
    %v2800 = vcvt.s32.f32 %v1776
    %v2801 = vcvt.s32.f32 %v1777
    %v2802 = vcvt.s32.f32 %v1778
    %v2803 = vcvt.s32.f32 %v1779
    %v2804 = vcvt.s32.f32 %v1780
    %v2805 = vcvt.s32.f32 %v1781
    %v2806 = vcvt.s32.f32 %v1782
    %v2807 = vcvt.s32.f32 %v1783
    %v2808 = vcvt.s32.f32 %v1784
    %v2809 = vcvt.s32.f32 %v1785
    %v2810 = vcvt.s32.f32 %v1786
    %v2811 = vcvt.s32.f32 %v1787
    %v2812 = vcvt.s32.f32 %v1788
    %v2813 = vcvt.s32.f32 %v1789
    %v2814 = vcvt.s32.f32 %v1790
    %v2815 = vcvt.s32.f32 %v1791
    %v2816 = vcvt.s32.f32 %v1792
    %v2817 = vcvt.s32.f32 %v1793
    %v2818 = vcvt.s32.f32 %v1794
    %v2819 = vcvt.s32.f32 %v1795
    %v2820 = vcvt.s32.f32 %v1796
    %v2821 = vcvt.s32.f32 %v1797
    %v2822 = vcvt.s32.f32 %v1798
    %v2823 = vcvt.s32.f32 %v1799
    %v2824 = vcvt.s32.f32 %v1800
    %v2825 = vcvt.s32.f32 %v1801
    %v2826 = vcvt.s32.f32 %v1802
    %v2827 = vcvt.s32.f32 %v1803
    %v2828 = vcvt.s32.f32 %v1804
    %v2829 = vcvt.s32.f32 %v1805
    %v2830 = vcvt.s32.f32 %v1806
    %v2831 = vcvt.s32.f32 %v1807
    %v2832 = vcvt.s32.f32 %v1808
    %v2833 = vcvt.s32.f32 %v1809
    %v2834 = vcvt.s32.f32 %v1810
    %v2835 = vcvt.s32.f32 %v1811
    %v2836 = vcvt.s32.f32 %v1812
    %v2837 = vcvt.s32.f32 %v1813
    %v2838 = vcvt.s32.f32 %v1814
    %v2839 = vcvt.s32.f32 %v1815
    %v2840 = vcvt.s32.f32 %v1816
    %v2841 = vcvt.s32.f32 %v1817
    %v2842 = vcvt.s32.f32 %v1818
    %v2843 = vcvt.s32.f32 %v1819
    %v2844 = vcvt.s32.f32 %v1820
    %v2845 = vcvt.s32.f32 %v1821
    %v2846 = vcvt.s32.f32 %v1822
    %v2847 = vcvt.s32.f32 %v1823
    %v2848 = vcvt.s32.f32 %v1824
    %v2849 = vcvt.s32.f32 %v1825
    %v2850 = vcvt.s32.f32 %v1826
    %v2851 = vcvt.s32.f32 %v1827
    %v2852 = vcvt.s32.f32 %v1828
    %v2853 = vcvt.s32.f32 %v1829
    %v2854 = vcvt.s32.f32 %v1830
    %v2855 = vcvt.s32.f32 %v1831
    %v2856 = vcvt.s32.f32 %v1832
    %v2857 = vcvt.s32.f32 %v1833
    %v2858 = vcvt.s32.f32 %v1834
    %v2859 = vcvt.s32.f32 %v1835
    %v2860 = vcvt.s32.f32 %v1836
    %v2861 = vcvt.s32.f32 %v1837
    %v2862 = vcvt.s32.f32 %v1838
    %v2863 = vcvt.s32.f32 %v1839
    %v2864 = vcvt.s32.f32 %v1840
    %v2865 = vcvt.s32.f32 %v1841
    %v2866 = vcvt.s32.f32 %v1842
    %v2867 = vcvt.s32.f32 %v1843
    %v2868 = vcvt.s32.f32 %v1844
    %v2869 = vcvt.s32.f32 %v1845
    %v2870 = vcvt.s32.f32 %v1846
    %v2871 = vcvt.s32.f32 %v1847
    %v2872 = vcvt.s32.f32 %v1848
    %v2873 = vcvt.s32.f32 %v1849
    %v2874 = vcvt.s32.f32 %v1850
    %v2875 = vcvt.s32.f32 %v1851
    %v2876 = vcvt.s32.f32 %v1852
    %v2877 = vcvt.s32.f32 %v1853
    %v2878 = vcvt.s32.f32 %v1854
    %v2879 = vcvt.s32.f32 %v1855
    %v2880 = vcvt.s32.f32 %v1856
    %v2881 = vcvt.s32.f32 %v1857
    %v2882 = vcvt.s32.f32 %v1858
    %v2883 = vcvt.s32.f32 %v1859
    %v2884 = vcvt.s32.f32 %v1860
    %v2885 = vcvt.s32.f32 %v1861
    %v2886 = vcvt.s32.f32 %v1862
    %v2887 = vcvt.s32.f32 %v1863
    %v2888 = vcvt.s32.f32 %v1864
    %v2889 = vcvt.s32.f32 %v1865
    %v2890 = vcvt.s32.f32 %v1866
    %v2891 = vcvt.s32.f32 %v1867
    %v2892 = vcvt.s32.f32 %v1868
    %v2893 = vcvt.s32.f32 %v1869
    %v2894 = vcvt.s32.f32 %v1870
    %v2895 = vcvt.s32.f32 %v1871
    %v2896 = vcvt.s32.f32 %v1872
    %v2897 = vcvt.s32.f32 %v1873
    %v2898 = vcvt.s32.f32 %v1874
    %v2899 = vcvt.s32.f32 %v1875
    %v2900 = vcvt.s32.f32 %v1876
    %v2901 = vcvt.s32.f32 %v1877
    %v2902 = vcvt.s32.f32 %v1878
    %v2903 = vcvt.s32.f32 %v1879
    %v2904 = vcvt.s32.f32 %v1880
    %v2905 = vcvt.s32.f32 %v1881
    %v2906 = vcvt.s32.f32 %v1882
    %v2907 = vcvt.s32.f32 %v1883
    %v2908 = vcvt.s32.f32 %v1884
    %v2909 = vcvt.s32.f32 %v1885
    %v2910 = vcvt.s32.f32 %v1886
    %v2911 = vcvt.s32.f32 %v1887
    %v2912 = vcvt.s32.f32 %v1888
    %v2913 = vcvt.s32.f32 %v1889
    %v2914 = vcvt.s32.f32 %v1890
    %v2915 = vcvt.s32.f32 %v1891
    %v2916 = vcvt.s32.f32 %v1892
    %v2917 = vcvt.s32.f32 %v1893
    %v2918 = vcvt.s32.f32 %v1894
    %v2919 = vcvt.s32.f32 %v1895
    %v2920 = vcvt.s32.f32 %v1896
    %v2921 = vcvt.s32.f32 %v1897
    %v2922 = vcvt.s32.f32 %v1898
    %v2923 = vcvt.s32.f32 %v1899
    %v2924 = vcvt.s32.f32 %v1900
    %v2925 = vcvt.s32.f32 %v1901
    %v2926 = vcvt.s32.f32 %v1902
    %v2927 = vcvt.s32.f32 %v1903
    %v2928 = vcvt.s32.f32 %v1904
    %v2929 = vcvt.s32.f32 %v1905
    %v2930 = vcvt.s32.f32 %v1906
    %v2931 = vcvt.s32.f32 %v1907
    %v2932 = vcvt.s32.f32 %v1908
    %v2933 = vcvt.s32.f32 %v1909
    %v2934 = vcvt.s32.f32 %v1910
    %v2935 = vcvt.s32.f32 %v1911
    %v2936 = vcvt.s32.f32 %v1912
    %v2937 = vcvt.s32.f32 %v1913
    %v2938 = vcvt.s32.f32 %v1914
    %v2939 = vcvt.s32.f32 %v1915
    %v2940 = vcvt.s32.f32 %v1916
    %v2941 = vcvt.s32.f32 %v1917
    %v2942 = vcvt.s32.f32 %v1918
    %v2943 = vcvt.s32.f32 %v1919
    %v2944 = vcvt.s32.f32 %v1920
    %v2945 = vcvt.s32.f32 %v1921
    %v2946 = vcvt.s32.f32 %v1922
    %v2947 = vcvt.s32.f32 %v1923
    %v2948 = vcvt.s32.f32 %v1924
    %v2949 = vcvt.s32.f32 %v1925
    %v2950 = vcvt.s32.f32 %v1926
    %v2951 = vcvt.s32.f32 %v1927
    %v2952 = vcvt.s32.f32 %v1928
    %v2953 = vcvt.s32.f32 %v1929
    %v2954 = vcvt.s32.f32 %v1930
    %v2955 = vcvt.s32.f32 %v1931
    %v2956 = vcvt.s32.f32 %v1932
    %v2957 = vcvt.s32.f32 %v1933
    %v2958 = vcvt.s32.f32 %v1934
    %v2959 = vcvt.s32.f32 %v1935
    %v2960 = vcvt.s32.f32 %v1936
    %v2961 = vcvt.s32.f32 %v1937
    %v2962 = vcvt.s32.f32 %v1938
    %v2963 = vcvt.s32.f32 %v1939
    %v2964 = vcvt.s32.f32 %v1940
    %v2965 = vcvt.s32.f32 %v1941
    %v2966 = vcvt.s32.f32 %v1942
    %v2967 = vcvt.s32.f32 %v1943
    %v2968 = vcvt.s32.f32 %v1944
    %v2969 = vcvt.s32.f32 %v1945
    %v2970 = vcvt.s32.f32 %v1946
    %v2971 = vcvt.s32.f32 %v1947
    %v2972 = vcvt.s32.f32 %v1948
    %v2973 = vcvt.s32.f32 %v1949
    %v2974 = vcvt.s32.f32 %v1950
    %v2975 = vcvt.s32.f32 %v1951
    %v2976 = vcvt.s32.f32 %v1952
    %v2977 = vcvt.s32.f32 %v1953
    %v2978 = vcvt.s32.f32 %v1954
    %v2979 = vcvt.s32.f32 %v1955
    %v2980 = vcvt.s32.f32 %v1956
    %v2981 = vcvt.s32.f32 %v1957
    %v2982 = vcvt.s32.f32 %v1958
    %v2983 = vcvt.s32.f32 %v1959
    %v2984 = vcvt.s32.f32 %v1960
    %v2985 = vcvt.s32.f32 %v1961
    %v2986 = vcvt.s32.f32 %v1962
    %v2987 = vcvt.s32.f32 %v1963
    %v2988 = vcvt.s32.f32 %v1964
    %v2989 = vcvt.s32.f32 %v1965
    %v2990 = vcvt.s32.f32 %v1966
    %v2991 = vcvt.s32.f32 %v1967
    %v2992 = vcvt.s32.f32 %v1968
    %v2993 = vcvt.s32.f32 %v1969
    %v2994 = vcvt.s32.f32 %v1970
    %v2995 = vcvt.s32.f32 %v1971
    %v2996 = vcvt.s32.f32 %v1972
    %v2997 = vcvt.s32.f32 %v1973
    %v2998 = vcvt.s32.f32 %v1974
    %v2999 = vcvt.s32.f32 %v1975
    %v3000 = vcvt.s32.f32 %v1976
    %v3001 = vcvt.s32.f32 %v1977
    %v3002 = vcvt.s32.f32 %v1978
    %v3003 = vcvt.s32.f32 %v1979
    %v3004 = vcvt.s32.f32 %v1980
    %v3005 = vcvt.s32.f32 %v1981
    %v3006 = vcvt.s32.f32 %v1982
    %v3007 = vcvt.s32.f32 %v1983
    %v3008 = vcvt.s32.f32 %v1984
    %v3009 = vcvt.s32.f32 %v1985
    %v3010 = vcvt.s32.f32 %v1986
    %v3011 = vcvt.s32.f32 %v1987
    %v3012 = vcvt.s32.f32 %v1988
    %v3013 = vcvt.s32.f32 %v1989
    %v3014 = vcvt.s32.f32 %v1990
    %v3015 = vcvt.s32.f32 %v1991
    %v3016 = vcvt.s32.f32 %v1992
    %v3017 = vcvt.s32.f32 %v1993
    %v3018 = vcvt.s32.f32 %v1994
    %v3019 = vcvt.s32.f32 %v1995
    %v3020 = vcvt.s32.f32 %v1996
    %v3021 = vcvt.s32.f32 %v1997
    %v3022 = vcvt.s32.f32 %v1998
    %v3023 = vcvt.s32.f32 %v1999
    %v3024 = vcvt.s32.f32 %v2000
    %v3025 = vcvt.s32.f32 %v2001
    %v3026 = vcvt.s32.f32 %v2002
    %v3027 = vcvt.s32.f32 %v2003
    %v3028 = vcvt.s32.f32 %v2004
    %v3029 = vcvt.s32.f32 %v2005
    %v3030 = vcvt.s32.f32 %v2006
    %v3031 = vcvt.s32.f32 %v2007
    %v3032 = vcvt.s32.f32 %v2008
    %v3033 = vcvt.s32.f32 %v2009
    %v3034 = vcvt.s32.f32 %v2010
    %v3035 = vcvt.s32.f32 %v2011
    %v3036 = vcvt.s32.f32 %v2012
    %v3037 = vcvt.s32.f32 %v2013
    %v3038 = vcvt.s32.f32 %v2014
    %v3039 = vcvt.s32.f32 %v2015
    %v3040 = vcvt.s32.f32 %v2016
    %v3041 = vcvt.s32.f32 %v2017
    %v3042 = vcvt.s32.f32 %v2018
    %v3043 = vcvt.s32.f32 %v2019
    %v3044 = vcvt.s32.f32 %v2020
    %v3045 = vcvt.s32.f32 %v2021
    %v3046 = vcvt.s32.f32 %v2022
    %v3047 = vcvt.s32.f32 %v2023
    %v3048 = vcvt.s32.f32 %v2024
    %v3049 = vcvt.s32.f32 %v2025
    %v3050 = vcvt.s32.f32 %v2026
    %v3051 = vcvt.s32.f32 %v2027
    %v3052 = vcvt.s32.f32 %v2028
    %v3053 = vcvt.s32.f32 %v2029
    %v3054 = vcvt.s32.f32 %v2030
    %v3055 = vcvt.s32.f32 %v2031
    %v3056 = vcvt.s32.f32 %v2032
    %v3057 = vcvt.s32.f32 %v2033
    %v3058 = vcvt.s32.f32 %v2034
    %v3059 = vcvt.s32.f32 %v2035
    %v3060 = vcvt.s32.f32 %v2036
    %v3061 = vcvt.s32.f32 %v2037
    %v3062 = vcvt.s32.f32 %v2038
    %v3063 = vcvt.s32.f32 %v2039
    %v3064 = vcvt.s32.f32 %v2040
    %v3065 = vcvt.s32.f32 %v2041
    %v3066 = vcvt.s32.f32 %v2042
    %v3067 = vcvt.s32.f32 %v2043
    %v3068 = vcvt.s32.f32 %v2044
    %v3069 = vcvt.s32.f32 %v2045
    %v3070 = vcvt.s32.f32 %v2046
    %v3071 = vcvt.s32.f32 %v2047
    %v3072 = vcvt.s32.f32 %v2048
    %v3073 = vcvt.s32.f32 %v2049
    %v3074 = vcvt.s32.f32 %v2050
    %v3075 = vcvt.s32.f32 %v2051
    %v3076 = vcvt.s32.f32 %v2052
    %v3077 = vcvt.s32.f32 %v2053
    %v3078 = vcvt.s32.f32 %v2054
    %v3079 = vcvt.s32.f32 %v2055
    %v3080 = vcvt.s32.f32 %v2056
    %v3081 = vcvt.s32.f32 %v2057
    %v3082 = vcvt.s32.f32 %v2058
    %v3083 = vcvt.s32.f32 %v2059
    %v3084 = vcvt.s32.f32 %v2060
    %v3085 = vcvt.s32.f32 %v2061
    %v3086 = vcvt.s32.f32 %v2062
    %v3087 = vcvt.s32.f32 %v2063
    %v3088 = vcvt.s32.f32 %v2064
    %v3089 = vcvt.s32.f32 %v2065
    %v3090 = vcvt.s32.f32 %v2066
    %v3091 = vcvt.s32.f32 %v2067
    %v3092 = vcvt.s32.f32 %v2068
    %v3093 = vcvt.s32.f32 %v2069
    %v3094 = vcvt.s32.f32 %v2070
    %v3095 = vcvt.s32.f32 %v2071
    %v3096 = vcvt.s32.f32 %v2072
    %v3097 = vcvt.s32.f32 %v2073
    %v3098 = vcvt.s32.f32 %v2074
    %v3099 = vcvt.s32.f32 %v2075
    %v3100 = vcvt.s32.f32 %v2076
    %v3101 = vcvt.s32.f32 %v2077
    %v3102 = vcvt.s32.f32 %v2078
    %v3103 = vcvt.s32.f32 %v2079
    %v3104 = vcvt.s32.f32 %v2080
    %v3105 = vcvt.s32.f32 %v2081
    %v3106 = vcvt.s32.f32 %v2082
    %v3107 = vcvt.s32.f32 %v2083
    %v3108 = vcvt.s32.f32 %v2084
    %v3109 = vcvt.s32.f32 %v2085
    %v3110 = vcvt.s32.f32 %v2086
    %v3111 = vcvt.s32.f32 %v2087
    %v3112 = vcvt.s32.f32 %v2088
    %v3113 = vcvt.s32.f32 %v2089
    %v3114 = vcvt.s32.f32 %v2090
    %v3115 = vcvt.s32.f32 %v2091
    %v3116 = vcvt.s32.f32 %v2092
    %v3117 = vcvt.s32.f32 %v2093
    %v3118 = vcvt.s32.f32 %v2094
    %v3119 = vcvt.s32.f32 %v2095
    %v3120 = vcvt.s32.f32 %v2096
    %v3121 = vcvt.s32.f32 %v2097
    %v3122 = vcvt.s32.f32 %v2098
    %v3123 = vcvt.s32.f32 %v2099
    %v3124 = vcvt.s32.f32 %v2100
    %v3125 = vcvt.s32.f32 %v2101
    %v3126 = vcvt.s32.f32 %v2102
    %v3127 = vcvt.s32.f32 %v2103
    %v3128 = vcvt.s32.f32 %v2104
    %v3129 = vcvt.s32.f32 %v2105
    %v3130 = vcvt.s32.f32 %v2106
    %v3131 = vcvt.s32.f32 %v2107
    %v3132 = vcvt.s32.f32 %v2108
    %v3133 = vcvt.s32.f32 %v2109
    %v3134 = vcvt.s32.f32 %v2110
    %v3135 = vcvt.s32.f32 %v2111
    %v3136 = vcvt.s32.f32 %v2112
    %v3137 = vcvt.s32.f32 %v2113
    %v3138 = vcvt.s32.f32 %v2114
    %v3139 = vcvt.s32.f32 %v2115
    %v3140 = vcvt.s32.f32 %v2116
    %v3141 = vcvt.s32.f32 %v2117
    %v3142 = vcvt.s32.f32 %v2118
    %v3143 = vcvt.s32.f32 %v2119
    %v3144 = vcvt.s32.f32 %v2120
    %v3145 = vcvt.s32.f32 %v2121
    %v3146 = vcvt.s32.f32 %v2122
    %v3147 = vcvt.s32.f32 %v2123
    %v3148 = vcvt.s32.f32 %v2124
    %v3149 = vcvt.s32.f32 %v2125
    %v3150 = vcvt.s32.f32 %v2126
    %v3151 = vcvt.s32.f32 %v2127
    %v3152 = vcvt.s32.f32 %v2128
    %v3153 = vcvt.s32.f32 %v2129
    %v3154 = vcvt.s32.f32 %v2130
    %v3155 = vcvt.s32.f32 %v2131
    %v3156 = vcvt.s32.f32 %v2132
    %v3157 = vcvt.s32.f32 %v2133
    %v3158 = vcvt.s32.f32 %v2134
    %v3159 = vcvt.s32.f32 %v2135
    %v3160 = vcvt.s32.f32 %v2136
    %v3161 = vcvt.s32.f32 %v2137
    %v3162 = vcvt.s32.f32 %v2138
    %v3163 = vcvt.s32.f32 %v2139
    %v3164 = vcvt.s32.f32 %v2140
    %v3165 = vcvt.s32.f32 %v2141
    %v3166 = vcvt.s32.f32 %v2142
    %v3167 = vcvt.s32.f32 %v2143
    %v3168 = vcvt.s32.f32 %v2144
    %v3169 = vcvt.s32.f32 %v2145
    %v3170 = vcvt.s32.f32 %v2146
    %v3171 = vcvt.s32.f32 %v2147
    %v3172 = vcvt.s32.f32 %v2148
    %v3173 = vcvt.s32.f32 %v2149
    %v3174 = vcvt.s32.f32 %v2150
    %v3175 = vcvt.s32.f32 %v2151
    %v3176 = vcvt.s32.f32 %v2152
    %v3177 = vcvt.s32.f32 %v2153
    %v3178 = vcvt.s32.f32 %v2154
    %v3179 = vcvt.s32.f32 %v2155
    %v3180 = vcvt.s32.f32 %v2156
    %v3181 = vcvt.s32.f32 %v2157
    %v3182 = vcvt.s32.f32 %v2158
    %v3183 = vcvt.s32.f32 %v2159
    %v3184 = vcvt.s32.f32 %v2160
    %v3185 = vcvt.s32.f32 %v2161
    %v3186 = vcvt.s32.f32 %v2162
    %v3187 = vcvt.s32.f32 %v2163
    %v3188 = vcvt.s32.f32 %v2164
    %v3189 = vcvt.s32.f32 %v2165
    %v3190 = vcvt.s32.f32 %v2166
    %v3191 = vcvt.s32.f32 %v2167
    %v3192 = vcvt.s32.f32 %v2168
    %v3193 = vcvt.s32.f32 %v2169
    %v3194 = vcvt.s32.f32 %v2170
    %v3195 = vcvt.s32.f32 %v2171
    %v3196 = vcvt.s32.f32 %v2172
    %v3197 = vcvt.s32.f32 %v2173
    %v3198 = vcvt.s32.f32 %v2174
    %v3199 = vcvt.s32.f32 %v2175
    %v3200 = vcvt.s32.f32 %v2176
    %v3201 = vcvt.s32.f32 %v2177
    %v3202 = vcvt.s32.f32 %v2178
    %v3203 = vcvt.s32.f32 %v2179
    %v3204 = vcvt.s32.f32 %v2180
    %v3205 = vcvt.s32.f32 %v2181
    %v3206 = vcvt.s32.f32 %v2182
    %v3207 = vcvt.s32.f32 %v2183
    %v3208 = vcvt.s32.f32 %v2184
    %v3209 = vcvt.s32.f32 %v2185
    %v3210 = vcvt.s32.f32 %v2186
    %v3211 = vcvt.s32.f32 %v2187
    %v3212 = vcvt.s32.f32 %v2188
    %v3213 = vcvt.s32.f32 %v2189
    %v3214 = vcvt.s32.f32 %v2190
    %v3215 = vcvt.s32.f32 %v2191
    %v3216 = vcvt.s32.f32 %v2192
    %v3217 = vcvt.s32.f32 %v2193
    %v3218 = vcvt.s32.f32 %v2194
    %v3219 = vcvt.s32.f32 %v2195
    %v3220 = vcvt.s32.f32 %v2196
    %v3221 = vcvt.s32.f32 %v2197
    %v3222 = vcvt.s32.f32 %v2198
    %v3223 = vcvt.s32.f32 %v2199
    %v3224 = vcvt.s32.f32 %v2200
    %v3225 = vcvt.s32.f32 %v2201
    %v3226 = vcvt.s32.f32 %v2202
    %v3227 = vcvt.s32.f32 %v2203
    %v3228 = vcvt.s32.f32 %v2204
    %v3229 = vcvt.s32.f32 %v2205
    %v3230 = vcvt.s32.f32 %v2206
    %v3231 = vcvt.s32.f32 %v2207
    %v3232 = vcvt.s32.f32 %v2208
    %v3233 = vcvt.s32.f32 %v2209
    %v3234 = vcvt.s32.f32 %v2210
    %v3235 = vcvt.s32.f32 %v2211
    %v3236 = vcvt.s32.f32 %v2212
    %v3237 = vcvt.s32.f32 %v2213
    %v3238 = vcvt.s32.f32 %v2214
    %v3239 = vcvt.s32.f32 %v2215
    %v3240 = vcvt.s32.f32 %v2216
    %v3241 = vcvt.s32.f32 %v2217
    %v3242 = vcvt.s32.f32 %v2218
    %v3243 = vcvt.s32.f32 %v2219
    %v3244 = vcvt.s32.f32 %v2220
    %v3245 = vcvt.s32.f32 %v2221
    %v3246 = vcvt.s32.f32 %v2222
    %v3247 = vcvt.s32.f32 %v2223
    %v3248 = vcvt.s32.f32 %v2224
    %v3249 = vcvt.s32.f32 %v2225
    %v3250 = vcvt.s32.f32 %v2226
    %v3251 = vcvt.s32.f32 %v2227
    %v3252 = vcvt.s32.f32 %v2228
    %v3253 = vcvt.s32.f32 %v2229
    %v3254 = vcvt.s32.f32 %v2230
    %v3255 = vcvt.s32.f32 %v2231
    %v3256 = vcvt.s32.f32 %v2232
    %v3257 = vcvt.s32.f32 %v2233
    %v3258 = vcvt.s32.f32 %v2234
    %v3259 = vcvt.s32.f32 %v2235
    %v3260 = vcvt.s32.f32 %v2236
    %v3261 = vcvt.s32.f32 %v2237
    %v3262 = vcvt.s32.f32 %v2238
    %v3263 = vcvt.s32.f32 %v2239
    %v3264 = vcvt.s32.f32 %v2240
    %v3265 = vcvt.s32.f32 %v2241
    %v3266 = vcvt.s32.f32 %v2242
    %v3267 = vcvt.s32.f32 %v2243
    %v3268 = vcvt.s32.f32 %v2244
    %v3269 = vcvt.s32.f32 %v2245
    %v3270 = vcvt.s32.f32 %v2246
    %v3271 = vcvt.s32.f32 %v2247
    %v3272 = vcvt.s32.f32 %v2248
    %v3273 = vcvt.s32.f32 %v2249
    %v3274 = vcvt.s32.f32 %v2250
    %v3275 = vcvt.s32.f32 %v2251
    %v3276 = vcvt.s32.f32 %v2252
    %v3277 = vcvt.s32.f32 %v2253
    %v3278 = vcvt.s32.f32 %v2254
    %v3279 = vcvt.s32.f32 %v2255
    %v3280 = vcvt.s32.f32 %v2256
    %v3281 = vcvt.s32.f32 %v2257
    %v3282 = vcvt.s32.f32 %v2258
    %v3283 = vcvt.s32.f32 %v2259
    %v3284 = vcvt.s32.f32 %v2260
    %v3285 = vcvt.s32.f32 %v2261
    %v3286 = vcvt.s32.f32 %v2262
    %v3287 = vcvt.s32.f32 %v2263
    %v3288 = vcvt.s32.f32 %v2264
    %v3289 = vcvt.s32.f32 %v2265
    %v3290 = vcvt.s32.f32 %v2266
    %v3291 = vcvt.s32.f32 %v2267
    %v3292 = vcvt.s32.f32 %v2268
    %v3293 = vcvt.s32.f32 %v2269
    %v3294 = vcvt.s32.f32 %v2270
    %v3295 = vcvt.s32.f32 %v2271
    %v3296 = vcvt.s32.f32 %v2272
    %v3297 = vcvt.s32.f32 %v2273
    %v3298 = vcvt.s32.f32 %v2274
    %v3299 = vcvt.s32.f32 %v2275
    %v3300 = vcvt.s32.f32 %v2276
    %v3301 = vcvt.s32.f32 %v2277
    %v3302 = vcvt.s32.f32 %v2278
    %v3303 = vcvt.s32.f32 %v2279
    %v3304 = vcvt.s32.f32 %v2280
    %v3305 = vcvt.s32.f32 %v2281
    %v3306 = vcvt.s32.f32 %v2282
    %v3307 = vcvt.s32.f32 %v2283
    %v3308 = vcvt.s32.f32 %v2284
    %v3309 = vcvt.s32.f32 %v2285
    %v3310 = vcvt.s32.f32 %v2286
    %v3311 = vcvt.s32.f32 %v2287
    %v3312 = vcvt.s32.f32 %v2288
    %v3313 = vcvt.s32.f32 %v2289
    %v3314 = vcvt.s32.f32 %v2290
    %v3315 = vcvt.s32.f32 %v2291
    %v3316 = vcvt.s32.f32 %v2292
    %v3317 = vcvt.s32.f32 %v2293
    %v3318 = vcvt.s32.f32 %v2294
    %v3319 = vcvt.s32.f32 %v2295
    %v3320 = vcvt.s32.f32 %v2296
    %v3321 = vcvt.s32.f32 %v2297
    %v3322 = vcvt.s32.f32 %v2298
    %v3323 = vcvt.s32.f32 %v2299
    %v3324 = vcvt.s32.f32 %v2300
    %v3325 = vcvt.s32.f32 %v2301
    %v3326 = vcvt.s32.f32 %v2302
    %v3327 = vcvt.s32.f32 %v2303
    %v3328 = vcvt.s32.f32 %v2304
    %v3329 = vcvt.s32.f32 %v2305
    %v3330 = vcvt.s32.f32 %v2306
    %v3331 = vcvt.s32.f32 %v2307
    %v3332 = vcvt.s32.f32 %v2308
    %v3333 = vcvt.s32.f32 %v2309
    %v3334 = vcvt.s32.f32 %v2310
    %v3335 = vcvt.s32.f32 %v2311
    %v3336 = vcvt.s32.f32 %v2312
    %v3337 = vcvt.s32.f32 %v2313
    %v3338 = vcvt.s32.f32 %v2314
    %v3339 = vcvt.s32.f32 %v2315
    %v3340 = vcvt.s32.f32 %v2316
    %v3341 = vcvt.s32.f32 %v2317
    %v3342 = vcvt.s32.f32 %v2318
    %v3343 = vcvt.s32.f32 %v2319
    %v3344 = vcvt.s32.f32 %v2320
    %v3345 = vcvt.s32.f32 %v2321
    %v3346 = vcvt.s32.f32 %v2322
    %v3347 = vcvt.s32.f32 %v2323
    %v3348 = vcvt.s32.f32 %v2324
    %v3349 = vcvt.s32.f32 %v2325
    %v3350 = vcvt.s32.f32 %v2326
    %v3351 = vcvt.s32.f32 %v2327
    %v3352 = vcvt.s32.f32 %v2328
    %v3353 = vcvt.s32.f32 %v2329
    %v3354 = vcvt.s32.f32 %v2330
    %v3355 = vcvt.s32.f32 %v2331
    %v3356 = vcvt.s32.f32 %v2332
    %v3357 = vcvt.s32.f32 %v2333
    %v3358 = vcvt.s32.f32 %v2334
    %v3359 = vcvt.s32.f32 %v2335
    %v3360 = vcvt.s32.f32 %v2336
    %v3361 = vcvt.s32.f32 %v2337
    %v3362 = vcvt.s32.f32 %v2338
    %v3363 = vcvt.s32.f32 %v2339
    %v3364 = vcvt.s32.f32 %v2340
    %v3365 = vcvt.s32.f32 %v2341
    %v3366 = vcvt.s32.f32 %v2342
    %v3367 = vcvt.s32.f32 %v2343
    %v3368 = vcvt.s32.f32 %v2344
    %v3369 = vcvt.s32.f32 %v2345
    %v3370 = vcvt.s32.f32 %v2346
    %v3371 = vcvt.s32.f32 %v2347
    %v3372 = vcvt.s32.f32 %v2348
    %v3373 = vcvt.s32.f32 %v2349
    %v3374 = vcvt.s32.f32 %v2350
    %v3375 = vcvt.s32.f32 %v2351
    %v3376 = vcvt.s32.f32 %v2352
    %v3377 = vcvt.s32.f32 %v2353
    %v3378 = vcvt.s32.f32 %v2354
    %v3379 = vcvt.s32.f32 %v2355
    %v3380 = vcvt.s32.f32 %v2356
    %v3381 = vcvt.s32.f32 %v2357
    %v3382 = vcvt.s32.f32 %v2358
    %v3383 = vcvt.s32.f32 %v2359
    %v3384 = vcvt.s32.f32 %v2360
    %v3385 = vcvt.s32.f32 %v2361
    %v3386 = vcvt.s32.f32 %v2362
    %v3387 = vcvt.s32.f32 %v2363
    %v3388 = vcvt.s32.f32 %v2364
    %v3389 = vcvt.s32.f32 %v2365
    %v3390 = vcvt.s32.f32 %v2366
    %v3391 = vpack.c.bf16 %v2431, %v2367
    %v3392 = vpack.c.bf16 %v2432, %v2368
    %v3393 = vpack.c.bf16 %v2433, %v2369
    %v3394 = vpack.c.bf16 %v2434, %v2370
    %v3395 = vpack.c.bf16 %v2435, %v2371
    %v3396 = vpack.c.bf16 %v2436, %v2372
    %v3397 = vpack.c.bf16 %v2437, %v2373
    %v3398 = vpack.c.bf16 %v2438, %v2374
    %v3399 = vpack.c.bf16 %v2439, %v2375
    %v3400 = vpack.c.bf16 %v2440, %v2376
    %v3401 = vpack.c.bf16 %v2441, %v2377
    %v3402 = vpack.c.bf16 %v2442, %v2378
    %v3403 = vpack.c.bf16 %v2443, %v2379
    %v3404 = vpack.c.bf16 %v2444, %v2380
    %v3405 = vpack.c.bf16 %v2445, %v2381
    %v3406 = vpack.c.bf16 %v2446, %v2382
    %v3407 = vpack.c.bf16 %v2447, %v2383
    %v3408 = vpack.c.bf16 %v2448, %v2384
    %v3409 = vpack.c.bf16 %v2449, %v2385
    %v3410 = vpack.c.bf16 %v2450, %v2386
    %v3411 = vpack.c.bf16 %v2451, %v2387
    %v3412 = vpack.c.bf16 %v2452, %v2388
    %v3413 = vpack.c.bf16 %v2453, %v2389
    %v3414 = vpack.c.bf16 %v2454, %v2390
    %v3415 = vpack.c.bf16 %v2455, %v2391
    %v3416 = vpack.c.bf16 %v2456, %v2392
    %v3417 = vpack.c.bf16 %v2457, %v2393
    %v3418 = vpack.c.bf16 %v2458, %v2394
    %v3419 = vpack.c.bf16 %v2459, %v2395
    %v3420 = vpack.c.bf16 %v2460, %v2396
    %v3421 = vpack.c.bf16 %v2461, %v2397
    %v3422 = vpack.c.bf16 %v2462, %v2398
    %v3423 = vpack.c.bf16 %v2463, %v2399
    %v3424 = vpack.c.bf16 %v2464, %v2400
    %v3425 = vpack.c.bf16 %v2465, %v2401
    %v3426 = vpack.c.bf16 %v2466, %v2402
    %v3427 = vpack.c.bf16 %v2467, %v2403
    %v3428 = vpack.c.bf16 %v2468, %v2404
    %v3429 = vpack.c.bf16 %v2469, %v2405
    %v3430 = vpack.c.bf16 %v2470, %v2406
    %v3431 = vpack.c.bf16 %v2471, %v2407
    %v3432 = vpack.c.bf16 %v2472, %v2408
    %v3433 = vpack.c.bf16 %v2473, %v2409
    %v3434 = vpack.c.bf16 %v2474, %v2410
    %v3435 = vpack.c.bf16 %v2475, %v2411
    %v3436 = vpack.c.bf16 %v2476, %v2412
    %v3437 = vpack.c.bf16 %v2477, %v2413
    %v3438 = vpack.c.bf16 %v2478, %v2414
    %v3439 = vpack.c.bf16 %v2479, %v2415
    %v3440 = vpack.c.bf16 %v2480, %v2416
    %v3441 = vpack.c.bf16 %v2481, %v2417
    %v3442 = vpack.c.bf16 %v2482, %v2418
    %v3443 = vpack.c.bf16 %v2483, %v2419
    %v3444 = vpack.c.bf16 %v2484, %v2420
    %v3445 = vpack.c.bf16 %v2485, %v2421
    %v3446 = vpack.c.bf16 %v2486, %v2422
    %v3447 = vpack.c.bf16 %v2487, %v2423
    %v3448 = vpack.c.bf16 %v2488, %v2424
    %v3449 = vpack.c.bf16 %v2489, %v2425
    %v3450 = vpack.c.bf16 %v2490, %v2426
    %v3451 = vpack.c.bf16 %v2491, %v2427
    %v3452 = vpack.c.bf16 %v2492, %v2428
    %v3453 = vpack.c.bf16 %v2493, %v2429
    %v3454 = vpack.c.bf16 %v2494, %v2430
    %v3455 = vpack.c.bf16 %v2559, %v2495
    %v3456 = vpack.c.bf16 %v2560, %v2496
    %v3457 = vpack.c.bf16 %v2561, %v2497
    %v3458 = vpack.c.bf16 %v2562, %v2498
    %v3459 = vpack.c.bf16 %v2563, %v2499
    %v3460 = vpack.c.bf16 %v2564, %v2500
    %v3461 = vpack.c.bf16 %v2565, %v2501
    %v3462 = vpack.c.bf16 %v2566, %v2502
    %v3463 = vpack.c.bf16 %v2567, %v2503
    %v3464 = vpack.c.bf16 %v2568, %v2504
    %v3465 = vpack.c.bf16 %v2569, %v2505
    %v3466 = vpack.c.bf16 %v2570, %v2506
    %v3467 = vpack.c.bf16 %v2571, %v2507
    %v3468 = vpack.c.bf16 %v2572, %v2508
    %v3469 = vpack.c.bf16 %v2573, %v2509
    %v3470 = vpack.c.bf16 %v2574, %v2510
    %v3471 = vpack.c.bf16 %v2575, %v2511
    %v3472 = vpack.c.bf16 %v2576, %v2512
    %v3473 = vpack.c.bf16 %v2577, %v2513
    %v3474 = vpack.c.bf16 %v2578, %v2514
    %v3475 = vpack.c.bf16 %v2579, %v2515
    %v3476 = vpack.c.bf16 %v2580, %v2516
    %v3477 = vpack.c.bf16 %v2581, %v2517
    %v3478 = vpack.c.bf16 %v2582, %v2518
    %v3479 = vpack.c.bf16 %v2583, %v2519
    %v3480 = vpack.c.bf16 %v2584, %v2520
    %v3481 = vpack.c.bf16 %v2585, %v2521
    %v3482 = vpack.c.bf16 %v2586, %v2522
    %v3483 = vpack.c.bf16 %v2587, %v2523
    %v3484 = vpack.c.bf16 %v2588, %v2524
    %v3485 = vpack.c.bf16 %v2589, %v2525
    %v3486 = vpack.c.bf16 %v2590, %v2526
    %v3487 = vpack.c.bf16 %v2591, %v2527
    %v3488 = vpack.c.bf16 %v2592, %v2528
    %v3489 = vpack.c.bf16 %v2593, %v2529
    %v3490 = vpack.c.bf16 %v2594, %v2530
    %v3491 = vpack.c.bf16 %v2595, %v2531
    %v3492 = vpack.c.bf16 %v2596, %v2532
    %v3493 = vpack.c.bf16 %v2597, %v2533
    %v3494 = vpack.c.bf16 %v2598, %v2534
    %v3495 = vpack.c.bf16 %v2599, %v2535
    %v3496 = vpack.c.bf16 %v2600, %v2536
    %v3497 = vpack.c.bf16 %v2601, %v2537
    %v3498 = vpack.c.bf16 %v2602, %v2538
    %v3499 = vpack.c.bf16 %v2603, %v2539
    %v3500 = vpack.c.bf16 %v2604, %v2540
    %v3501 = vpack.c.bf16 %v2605, %v2541
    %v3502 = vpack.c.bf16 %v2606, %v2542
    %v3503 = vpack.c.bf16 %v2607, %v2543
    %v3504 = vpack.c.bf16 %v2608, %v2544
    %v3505 = vpack.c.bf16 %v2609, %v2545
    %v3506 = vpack.c.bf16 %v2610, %v2546
    %v3507 = vpack.c.bf16 %v2611, %v2547
    %v3508 = vpack.c.bf16 %v2612, %v2548
    %v3509 = vpack.c.bf16 %v2613, %v2549
    %v3510 = vpack.c.bf16 %v2614, %v2550
    %v3511 = vpack.c.bf16 %v2615, %v2551
    %v3512 = vpack.c.bf16 %v2616, %v2552
    %v3513 = vpack.c.bf16 %v2617, %v2553
    %v3514 = vpack.c.bf16 %v2618, %v2554
    %v3515 = vpack.c.bf16 %v2619, %v2555
    %v3516 = vpack.c.bf16 %v2620, %v2556
    %v3517 = vpack.c.bf16 %v2621, %v2557
    %v3518 = vpack.c.bf16 %v2622, %v2558
    %v3519 = vpack.c.bf16 %v2687, %v2623
    %v3520 = vpack.c.bf16 %v2688, %v2624
    %v3521 = vpack.c.bf16 %v2689, %v2625
    %v3522 = vpack.c.bf16 %v2690, %v2626
    %v3523 = vpack.c.bf16 %v2691, %v2627
    %v3524 = vpack.c.bf16 %v2692, %v2628
    %v3525 = vpack.c.bf16 %v2693, %v2629
    %v3526 = vpack.c.bf16 %v2694, %v2630
    %v3527 = vpack.c.bf16 %v2695, %v2631
    %v3528 = vpack.c.bf16 %v2696, %v2632
    %v3529 = vpack.c.bf16 %v2697, %v2633
    %v3530 = vpack.c.bf16 %v2698, %v2634
    %v3531 = vpack.c.bf16 %v2699, %v2635
    %v3532 = vpack.c.bf16 %v2700, %v2636
    %v3533 = vpack.c.bf16 %v2701, %v2637
    %v3534 = vpack.c.bf16 %v2702, %v2638
    %v3535 = vpack.c.bf16 %v2703, %v2639
    %v3536 = vpack.c.bf16 %v2704, %v2640
    %v3537 = vpack.c.bf16 %v2705, %v2641
    %v3538 = vpack.c.bf16 %v2706, %v2642
    %v3539 = vpack.c.bf16 %v2707, %v2643
    %v3540 = vpack.c.bf16 %v2708, %v2644
    %v3541 = vpack.c.bf16 %v2709, %v2645
    %v3542 = vpack.c.bf16 %v2710, %v2646
    %v3543 = vpack.c.bf16 %v2711, %v2647
    %v3544 = vpack.c.bf16 %v2712, %v2648
    %v3545 = vpack.c.bf16 %v2713, %v2649
    %v3546 = vpack.c.bf16 %v2714, %v2650
    %v3547 = vpack.c.bf16 %v2715, %v2651
    %v3548 = vpack.c.bf16 %v2716, %v2652
    %v3549 = vpack.c.bf16 %v2717, %v2653
    %v3550 = vpack.c.bf16 %v2718, %v2654
    %v3551 = vpack.c.bf16 %v2719, %v2655
    %v3552 = vpack.c.bf16 %v2720, %v2656
    %v3553 = vpack.c.bf16 %v2721, %v2657
    %v3554 = vpack.c.bf16 %v2722, %v2658
    %v3555 = vpack.c.bf16 %v2723, %v2659
    %v3556 = vpack.c.bf16 %v2724, %v2660
    %v3557 = vpack.c.bf16 %v2725, %v2661
    %v3558 = vpack.c.bf16 %v2726, %v2662
    %v3559 = vpack.c.bf16 %v2727, %v2663
    %v3560 = vpack.c.bf16 %v2728, %v2664
    %v3561 = vpack.c.bf16 %v2729, %v2665
    %v3562 = vpack.c.bf16 %v2730, %v2666
    %v3563 = vpack.c.bf16 %v2731, %v2667
    %v3564 = vpack.c.bf16 %v2732, %v2668
    %v3565 = vpack.c.bf16 %v2733, %v2669
    %v3566 = vpack.c.bf16 %v2734, %v2670
    %v3567 = vpack.c.bf16 %v2735, %v2671
    %v3568 = vpack.c.bf16 %v2736, %v2672
    %v3569 = vpack.c.bf16 %v2737, %v2673
    %v3570 = vpack.c.bf16 %v2738, %v2674
    %v3571 = vpack.c.bf16 %v2739, %v2675
    %v3572 = vpack.c.bf16 %v2740, %v2676
    %v3573 = vpack.c.bf16 %v2741, %v2677
    %v3574 = vpack.c.bf16 %v2742, %v2678
    %v3575 = vpack.c.bf16 %v2743, %v2679
    %v3576 = vpack.c.bf16 %v2744, %v2680
    %v3577 = vpack.c.bf16 %v2745, %v2681
    %v3578 = vpack.c.bf16 %v2746, %v2682
    %v3579 = vpack.c.bf16 %v2747, %v2683
    %v3580 = vpack.c.bf16 %v2748, %v2684
    %v3581 = vpack.c.bf16 %v2749, %v2685
    %v3582 = vpack.c.bf16 %v2750, %v2686
    %v3583 = vpack.c.bf16 %v2815, %v2751
    %v3584 = vpack.c.bf16 %v2816, %v2752
    %v3585 = vpack.c.bf16 %v2817, %v2753
    %v3586 = vpack.c.bf16 %v2818, %v2754
    %v3587 = vpack.c.bf16 %v2819, %v2755
    %v3588 = vpack.c.bf16 %v2820, %v2756
    %v3589 = vpack.c.bf16 %v2821, %v2757
    %v3590 = vpack.c.bf16 %v2822, %v2758
    %v3591 = vpack.c.bf16 %v2823, %v2759
    %v3592 = vpack.c.bf16 %v2824, %v2760
    %v3593 = vpack.c.bf16 %v2825, %v2761
    %v3594 = vpack.c.bf16 %v2826, %v2762
    %v3595 = vpack.c.bf16 %v2827, %v2763
    %v3596 = vpack.c.bf16 %v2828, %v2764
    %v3597 = vpack.c.bf16 %v2829, %v2765
    %v3598 = vpack.c.bf16 %v2830, %v2766
    %v3599 = vpack.c.bf16 %v2831, %v2767
    %v3600 = vpack.c.bf16 %v2832, %v2768
    %v3601 = vpack.c.bf16 %v2833, %v2769
    %v3602 = vpack.c.bf16 %v2834, %v2770
    %v3603 = vpack.c.bf16 %v2835, %v2771
    %v3604 = vpack.c.bf16 %v2836, %v2772
    %v3605 = vpack.c.bf16 %v2837, %v2773
    %v3606 = vpack.c.bf16 %v2838, %v2774
    %v3607 = vpack.c.bf16 %v2839, %v2775
    %v3608 = vpack.c.bf16 %v2840, %v2776
    %v3609 = vpack.c.bf16 %v2841, %v2777
    %v3610 = vpack.c.bf16 %v2842, %v2778
    %v3611 = vpack.c.bf16 %v2843, %v2779
    %v3612 = vpack.c.bf16 %v2844, %v2780
    %v3613 = vpack.c.bf16 %v2845, %v2781
    %v3614 = vpack.c.bf16 %v2846, %v2782
    %v3615 = vpack.c.bf16 %v2847, %v2783
    %v3616 = vpack.c.bf16 %v2848, %v2784
    %v3617 = vpack.c.bf16 %v2849, %v2785
    %v3618 = vpack.c.bf16 %v2850, %v2786
    %v3619 = vpack.c.bf16 %v2851, %v2787
    %v3620 = vpack.c.bf16 %v2852, %v2788
    %v3621 = vpack.c.bf16 %v2853, %v2789
    %v3622 = vpack.c.bf16 %v2854, %v2790
    %v3623 = vpack.c.bf16 %v2855, %v2791
    %v3624 = vpack.c.bf16 %v2856, %v2792
    %v3625 = vpack.c.bf16 %v2857, %v2793
    %v3626 = vpack.c.bf16 %v2858, %v2794
    %v3627 = vpack.c.bf16 %v2859, %v2795
    %v3628 = vpack.c.bf16 %v2860, %v2796
    %v3629 = vpack.c.bf16 %v2861, %v2797
    %v3630 = vpack.c.bf16 %v2862, %v2798
    %v3631 = vpack.c.bf16 %v2863, %v2799
    %v3632 = vpack.c.bf16 %v2864, %v2800
    %v3633 = vpack.c.bf16 %v2865, %v2801
    %v3634 = vpack.c.bf16 %v2866, %v2802
    %v3635 = vpack.c.bf16 %v2867, %v2803
    %v3636 = vpack.c.bf16 %v2868, %v2804
    %v3637 = vpack.c.bf16 %v2869, %v2805
    %v3638 = vpack.c.bf16 %v2870, %v2806
    %v3639 = vpack.c.bf16 %v2871, %v2807
    %v3640 = vpack.c.bf16 %v2872, %v2808
    %v3641 = vpack.c.bf16 %v2873, %v2809
    %v3642 = vpack.c.bf16 %v2874, %v2810
    %v3643 = vpack.c.bf16 %v2875, %v2811
    %v3644 = vpack.c.bf16 %v2876, %v2812
    %v3645 = vpack.c.bf16 %v2877, %v2813
    %v3646 = vpack.c.bf16 %v2878, %v2814
    %v3647 = vpack.c.bf16 %v2943, %v2879
    %v3648 = vpack.c.bf16 %v2944, %v2880
    %v3649 = vpack.c.bf16 %v2945, %v2881
    %v3650 = vpack.c.bf16 %v2946, %v2882
    %v3651 = vpack.c.bf16 %v2947, %v2883
    %v3652 = vpack.c.bf16 %v2948, %v2884
    %v3653 = vpack.c.bf16 %v2949, %v2885
    %v3654 = vpack.c.bf16 %v2950, %v2886
    %v3655 = vpack.c.bf16 %v2951, %v2887
    %v3656 = vpack.c.bf16 %v2952, %v2888
    %v3657 = vpack.c.bf16 %v2953, %v2889
    %v3658 = vpack.c.bf16 %v2954, %v2890
    %v3659 = vpack.c.bf16 %v2955, %v2891
    %v3660 = vpack.c.bf16 %v2956, %v2892
    %v3661 = vpack.c.bf16 %v2957, %v2893
    %v3662 = vpack.c.bf16 %v2958, %v2894
    %v3663 = vpack.c.bf16 %v2959, %v2895
    %v3664 = vpack.c.bf16 %v2960, %v2896
    %v3665 = vpack.c.bf16 %v2961, %v2897
    %v3666 = vpack.c.bf16 %v2962, %v2898
    %v3667 = vpack.c.bf16 %v2963, %v2899
    %v3668 = vpack.c.bf16 %v2964, %v2900
    %v3669 = vpack.c.bf16 %v2965, %v2901
    %v3670 = vpack.c.bf16 %v2966, %v2902
    %v3671 = vpack.c.bf16 %v2967, %v2903
    %v3672 = vpack.c.bf16 %v2968, %v2904
    %v3673 = vpack.c.bf16 %v2969, %v2905
    %v3674 = vpack.c.bf16 %v2970, %v2906
    %v3675 = vpack.c.bf16 %v2971, %v2907
    %v3676 = vpack.c.bf16 %v2972, %v2908
    %v3677 = vpack.c.bf16 %v2973, %v2909
    %v3678 = vpack.c.bf16 %v2974, %v2910
    %v3679 = vpack.c.bf16 %v2975, %v2911
    %v3680 = vpack.c.bf16 %v2976, %v2912
    %v3681 = vpack.c.bf16 %v2977, %v2913
    %v3682 = vpack.c.bf16 %v2978, %v2914
    %v3683 = vpack.c.bf16 %v2979, %v2915
    %v3684 = vpack.c.bf16 %v2980, %v2916
    %v3685 = vpack.c.bf16 %v2981, %v2917
    %v3686 = vpack.c.bf16 %v2982, %v2918
    %v3687 = vpack.c.bf16 %v2983, %v2919
    %v3688 = vpack.c.bf16 %v2984, %v2920
    %v3689 = vpack.c.bf16 %v2985, %v2921
    %v3690 = vpack.c.bf16 %v2986, %v2922
    %v3691 = vpack.c.bf16 %v2987, %v2923
    %v3692 = vpack.c.bf16 %v2988, %v2924
    %v3693 = vpack.c.bf16 %v2989, %v2925
    %v3694 = vpack.c.bf16 %v2990, %v2926
    %v3695 = vpack.c.bf16 %v2991, %v2927
    %v3696 = vpack.c.bf16 %v2992, %v2928
    %v3697 = vpack.c.bf16 %v2993, %v2929
    %v3698 = vpack.c.bf16 %v2994, %v2930
    %v3699 = vpack.c.bf16 %v2995, %v2931
    %v3700 = vpack.c.bf16 %v2996, %v2932
    %v3701 = vpack.c.bf16 %v2997, %v2933
    %v3702 = vpack.c.bf16 %v2998, %v2934
    %v3703 = vpack.c.bf16 %v2999, %v2935
    %v3704 = vpack.c.bf16 %v3000, %v2936
    %v3705 = vpack.c.bf16 %v3001, %v2937
    %v3706 = vpack.c.bf16 %v3002, %v2938
    %v3707 = vpack.c.bf16 %v3003, %v2939
    %v3708 = vpack.c.bf16 %v3004, %v2940
    %v3709 = vpack.c.bf16 %v3005, %v2941
    %v3710 = vpack.c.bf16 %v3006, %v2942
    %v3711 = vpack.c.bf16 %v3071, %v3007
    %v3712 = vpack.c.bf16 %v3072, %v3008
    %v3713 = vpack.c.bf16 %v3073, %v3009
    %v3714 = vpack.c.bf16 %v3074, %v3010
    %v3715 = vpack.c.bf16 %v3075, %v3011
    %v3716 = vpack.c.bf16 %v3076, %v3012
    %v3717 = vpack.c.bf16 %v3077, %v3013
    %v3718 = vpack.c.bf16 %v3078, %v3014
    %v3719 = vpack.c.bf16 %v3079, %v3015
    %v3720 = vpack.c.bf16 %v3080, %v3016
    %v3721 = vpack.c.bf16 %v3081, %v3017
    %v3722 = vpack.c.bf16 %v3082, %v3018
    %v3723 = vpack.c.bf16 %v3083, %v3019
    %v3724 = vpack.c.bf16 %v3084, %v3020
    %v3725 = vpack.c.bf16 %v3085, %v3021
    %v3726 = vpack.c.bf16 %v3086, %v3022
    %v3727 = vpack.c.bf16 %v3087, %v3023
    %v3728 = vpack.c.bf16 %v3088, %v3024
    %v3729 = vpack.c.bf16 %v3089, %v3025
    %v3730 = vpack.c.bf16 %v3090, %v3026
    %v3731 = vpack.c.bf16 %v3091, %v3027
    %v3732 = vpack.c.bf16 %v3092, %v3028
    %v3733 = vpack.c.bf16 %v3093, %v3029
    %v3734 = vpack.c.bf16 %v3094, %v3030
    %v3735 = vpack.c.bf16 %v3095, %v3031
    %v3736 = vpack.c.bf16 %v3096, %v3032
    %v3737 = vpack.c.bf16 %v3097, %v3033
    %v3738 = vpack.c.bf16 %v3098, %v3034
    %v3739 = vpack.c.bf16 %v3099, %v3035
    %v3740 = vpack.c.bf16 %v3100, %v3036
    %v3741 = vpack.c.bf16 %v3101, %v3037
    %v3742 = vpack.c.bf16 %v3102, %v3038
    %v3743 = vpack.c.bf16 %v3103, %v3039
    %v3744 = vpack.c.bf16 %v3104, %v3040
    %v3745 = vpack.c.bf16 %v3105, %v3041
    %v3746 = vpack.c.bf16 %v3106, %v3042
    %v3747 = vpack.c.bf16 %v3107, %v3043
    %v3748 = vpack.c.bf16 %v3108, %v3044
    %v3749 = vpack.c.bf16 %v3109, %v3045
    %v3750 = vpack.c.bf16 %v3110, %v3046
    %v3751 = vpack.c.bf16 %v3111, %v3047
    %v3752 = vpack.c.bf16 %v3112, %v3048
    %v3753 = vpack.c.bf16 %v3113, %v3049
    %v3754 = vpack.c.bf16 %v3114, %v3050
    %v3755 = vpack.c.bf16 %v3115, %v3051
    %v3756 = vpack.c.bf16 %v3116, %v3052
    %v3757 = vpack.c.bf16 %v3117, %v3053
    %v3758 = vpack.c.bf16 %v3118, %v3054
    %v3759 = vpack.c.bf16 %v3119, %v3055
    %v3760 = vpack.c.bf16 %v3120, %v3056
    %v3761 = vpack.c.bf16 %v3121, %v3057
    %v3762 = vpack.c.bf16 %v3122, %v3058
    %v3763 = vpack.c.bf16 %v3123, %v3059
    %v3764 = vpack.c.bf16 %v3124, %v3060
    %v3765 = vpack.c.bf16 %v3125, %v3061
    %v3766 = vpack.c.bf16 %v3126, %v3062
    %v3767 = vpack.c.bf16 %v3127, %v3063
    %v3768 = vpack.c.bf16 %v3128, %v3064
    %v3769 = vpack.c.bf16 %v3129, %v3065
    %v3770 = vpack.c.bf16 %v3130, %v3066
    %v3771 = vpack.c.bf16 %v3131, %v3067
    %v3772 = vpack.c.bf16 %v3132, %v3068
    %v3773 = vpack.c.bf16 %v3133, %v3069
    %v3774 = vpack.c.bf16 %v3134, %v3070
    %v3775 = vpack.c.bf16 %v3199, %v3135
    %v3776 = vpack.c.bf16 %v3200, %v3136
    %v3777 = vpack.c.bf16 %v3201, %v3137
    %v3778 = vpack.c.bf16 %v3202, %v3138
    %v3779 = vpack.c.bf16 %v3203, %v3139
    %v3780 = vpack.c.bf16 %v3204, %v3140
    %v3781 = vpack.c.bf16 %v3205, %v3141
    %v3782 = vpack.c.bf16 %v3206, %v3142
    %v3783 = vpack.c.bf16 %v3207, %v3143
    %v3784 = vpack.c.bf16 %v3208, %v3144
    %v3785 = vpack.c.bf16 %v3209, %v3145
    %v3786 = vpack.c.bf16 %v3210, %v3146
    %v3787 = vpack.c.bf16 %v3211, %v3147
    %v3788 = vpack.c.bf16 %v3212, %v3148
    %v3789 = vpack.c.bf16 %v3213, %v3149
    %v3790 = vpack.c.bf16 %v3214, %v3150
    %v3791 = vpack.c.bf16 %v3215, %v3151
    %v3792 = vpack.c.bf16 %v3216, %v3152
    %v3793 = vpack.c.bf16 %v3217, %v3153
    %v3794 = vpack.c.bf16 %v3218, %v3154
    %v3795 = vpack.c.bf16 %v3219, %v3155
    %v3796 = vpack.c.bf16 %v3220, %v3156
    %v3797 = vpack.c.bf16 %v3221, %v3157
    %v3798 = vpack.c.bf16 %v3222, %v3158
    %v3799 = vpack.c.bf16 %v3223, %v3159
    %v3800 = vpack.c.bf16 %v3224, %v3160
    %v3801 = vpack.c.bf16 %v3225, %v3161
    %v3802 = vpack.c.bf16 %v3226, %v3162
    %v3803 = vpack.c.bf16 %v3227, %v3163
    %v3804 = vpack.c.bf16 %v3228, %v3164
    %v3805 = vpack.c.bf16 %v3229, %v3165
    %v3806 = vpack.c.bf16 %v3230, %v3166
    %v3807 = vpack.c.bf16 %v3231, %v3167
    %v3808 = vpack.c.bf16 %v3232, %v3168
    %v3809 = vpack.c.bf16 %v3233, %v3169
    %v3810 = vpack.c.bf16 %v3234, %v3170
    %v3811 = vpack.c.bf16 %v3235, %v3171
    %v3812 = vpack.c.bf16 %v3236, %v3172
    %v3813 = vpack.c.bf16 %v3237, %v3173
    %v3814 = vpack.c.bf16 %v3238, %v3174
    %v3815 = vpack.c.bf16 %v3239, %v3175
    %v3816 = vpack.c.bf16 %v3240, %v3176
    %v3817 = vpack.c.bf16 %v3241, %v3177
    %v3818 = vpack.c.bf16 %v3242, %v3178
    %v3819 = vpack.c.bf16 %v3243, %v3179
    %v3820 = vpack.c.bf16 %v3244, %v3180
    %v3821 = vpack.c.bf16 %v3245, %v3181
    %v3822 = vpack.c.bf16 %v3246, %v3182
    %v3823 = vpack.c.bf16 %v3247, %v3183
    %v3824 = vpack.c.bf16 %v3248, %v3184
    %v3825 = vpack.c.bf16 %v3249, %v3185
    %v3826 = vpack.c.bf16 %v3250, %v3186
    %v3827 = vpack.c.bf16 %v3251, %v3187
    %v3828 = vpack.c.bf16 %v3252, %v3188
    %v3829 = vpack.c.bf16 %v3253, %v3189
    %v3830 = vpack.c.bf16 %v3254, %v3190
    %v3831 = vpack.c.bf16 %v3255, %v3191
    %v3832 = vpack.c.bf16 %v3256, %v3192
    %v3833 = vpack.c.bf16 %v3257, %v3193
    %v3834 = vpack.c.bf16 %v3258, %v3194
    %v3835 = vpack.c.bf16 %v3259, %v3195
    %v3836 = vpack.c.bf16 %v3260, %v3196
    %v3837 = vpack.c.bf16 %v3261, %v3197
    %v3838 = vpack.c.bf16 %v3262, %v3198
    %v3839 = vpack.c.bf16 %v3327, %v3263
    %v3840 = vpack.c.bf16 %v3328, %v3264
    %v3841 = vpack.c.bf16 %v3329, %v3265
    %v3842 = vpack.c.bf16 %v3330, %v3266
    %v3843 = vpack.c.bf16 %v3331, %v3267
    %v3844 = vpack.c.bf16 %v3332, %v3268
    %v3845 = vpack.c.bf16 %v3333, %v3269
    %v3846 = vpack.c.bf16 %v3334, %v3270
    %v3847 = vpack.c.bf16 %v3335, %v3271
    %v3848 = vpack.c.bf16 %v3336, %v3272
    %v3849 = vpack.c.bf16 %v3337, %v3273
    %v3850 = vpack.c.bf16 %v3338, %v3274
    %v3851 = vpack.c.bf16 %v3339, %v3275
    %v3852 = vpack.c.bf16 %v3340, %v3276
    %v3853 = vpack.c.bf16 %v3341, %v3277
    %v3854 = vpack.c.bf16 %v3342, %v3278
    %v3855 = vpack.c.bf16 %v3343, %v3279
    %v3856 = vpack.c.bf16 %v3344, %v3280
    %v3857 = vpack.c.bf16 %v3345, %v3281
    %v3858 = vpack.c.bf16 %v3346, %v3282
    %v3859 = vpack.c.bf16 %v3347, %v3283
    %v3860 = vpack.c.bf16 %v3348, %v3284
    %v3861 = vpack.c.bf16 %v3349, %v3285
    %v3862 = vpack.c.bf16 %v3350, %v3286
    %v3863 = vpack.c.bf16 %v3351, %v3287
    %v3864 = vpack.c.bf16 %v3352, %v3288
    %v3865 = vpack.c.bf16 %v3353, %v3289
    %v3866 = vpack.c.bf16 %v3354, %v3290
    %v3867 = vpack.c.bf16 %v3355, %v3291
    %v3868 = vpack.c.bf16 %v3356, %v3292
    %v3869 = vpack.c.bf16 %v3357, %v3293
    %v3870 = vpack.c.bf16 %v3358, %v3294
    %v3871 = vpack.c.bf16 %v3359, %v3295
    %v3872 = vpack.c.bf16 %v3360, %v3296
    %v3873 = vpack.c.bf16 %v3361, %v3297
    %v3874 = vpack.c.bf16 %v3362, %v3298
    %v3875 = vpack.c.bf16 %v3363, %v3299
    %v3876 = vpack.c.bf16 %v3364, %v3300
    %v3877 = vpack.c.bf16 %v3365, %v3301
    %v3878 = vpack.c.bf16 %v3366, %v3302
    %v3879 = vpack.c.bf16 %v3367, %v3303
    %v3880 = vpack.c.bf16 %v3368, %v3304
    %v3881 = vpack.c.bf16 %v3369, %v3305
    %v3882 = vpack.c.bf16 %v3370, %v3306
    %v3883 = vpack.c.bf16 %v3371, %v3307
    %v3884 = vpack.c.bf16 %v3372, %v3308
    %v3885 = vpack.c.bf16 %v3373, %v3309
    %v3886 = vpack.c.bf16 %v3374, %v3310
    %v3887 = vpack.c.bf16 %v3375, %v3311
    %v3888 = vpack.c.bf16 %v3376, %v3312
    %v3889 = vpack.c.bf16 %v3377, %v3313
    %v3890 = vpack.c.bf16 %v3378, %v3314
    %v3891 = vpack.c.bf16 %v3379, %v3315
    %v3892 = vpack.c.bf16 %v3380, %v3316
    %v3893 = vpack.c.bf16 %v3381, %v3317
    %v3894 = vpack.c.bf16 %v3382, %v3318
    %v3895 = vpack.c.bf16 %v3383, %v3319
    %v3896 = vpack.c.bf16 %v3384, %v3320
    %v3897 = vpack.c.bf16 %v3385, %v3321
    %v3898 = vpack.c.bf16 %v3386, %v3322
    %v3899 = vpack.c.bf16 %v3387, %v3323
    %v3900 = vpack.c.bf16 %v3388, %v3324
    %v3901 = vpack.c.bf16 %v3389, %v3325
    %v3902 = vpack.c.bf16 %v3390, %v3326
    %v3903 = vlaneseq
    %v3904 = vshrl.u32 %v3903, 7
    %v3905 = vsub.s32 0, %v3904
    %v3906 = vrot.slane %v38, %v3905
    %v3907 = vlaneseq
    %v3908 = vshrl.u32 %v3907, 7
    %v3909 = vsub.s32 1, %v3908
    %v3910 = vrot.slane %v38, %v3909
    %v3911 = vlaneseq
    %v3912 = vshrl.u32 %v3911, 7
    %v3913 = vsub.s32 2, %v3912
    %v3914 = vrot.slane %v38, %v3913
    %v3915 = vlaneseq
    %v3916 = vshrl.u32 %v3915, 7
    %v3917 = vsub.s32 3, %v3916
    %v3918 = vrot.slane %v38, %v3917
    %v3919 = vlaneseq
    %v3920 = vshrl.u32 %v3919, 7
    %v3921 = vsub.s32 4, %v3920
    %v3922 = vrot.slane %v38, %v3921
    %v3923 = vlaneseq
    %v3924 = vshrl.u32 %v3923, 7
    %v3925 = vsub.s32 5, %v3924
    %v3926 = vrot.slane %v38, %v3925
    %v3927 = vlaneseq
    %v3928 = vshrl.u32 %v3927, 7
    %v3929 = vsub.s32 6, %v3928
    %v3930 = vrot.slane %v38, %v3929
    %v3931 = vlaneseq
    %v3932 = vshrl.u32 %v3931, 7
    %v3933 = vsub.s32 7, %v3932
    %v3934 = vrot.slane %v38, %v3933
    %v3935 = vlaneseq
    %v3936 = vshrl.u32 %v3935, 7
    %v3937 = vsub.s32 0, %v3936
    %v3938 = vrot.slane %v39, %v3937
    %v3939 = vlaneseq
    %v3940 = vshrl.u32 %v3939, 7
    %v3941 = vsub.s32 1, %v3940
    %v3942 = vrot.slane %v39, %v3941
    %v3943 = vlaneseq
    %v3944 = vshrl.u32 %v3943, 7
    %v3945 = vsub.s32 2, %v3944
    %v3946 = vrot.slane %v39, %v3945
    %v3947 = vlaneseq
    %v3948 = vshrl.u32 %v3947, 7
    %v3949 = vsub.s32 3, %v3948
    %v3950 = vrot.slane %v39, %v3949
    %v3951 = vlaneseq
    %v3952 = vshrl.u32 %v3951, 7
    %v3953 = vsub.s32 4, %v3952
    %v3954 = vrot.slane %v39, %v3953
    %v3955 = vlaneseq
    %v3956 = vshrl.u32 %v3955, 7
    %v3957 = vsub.s32 5, %v3956
    %v3958 = vrot.slane %v39, %v3957
    %v3959 = vlaneseq
    %v3960 = vshrl.u32 %v3959, 7
    %v3961 = vsub.s32 6, %v3960
    %v3962 = vrot.slane %v39, %v3961
    %v3963 = vlaneseq
    %v3964 = vshrl.u32 %v3963, 7
    %v3965 = vsub.s32 7, %v3964
    %v3966 = vrot.slane %v39, %v3965
    %v3967 = vlaneseq
    %v3968 = vshrl.u32 %v3967, 7
    %v3969 = vsub.s32 0, %v3968
    %v3970 = vrot.slane %v40, %v3969
    %v3971 = vlaneseq
    %v3972 = vshrl.u32 %v3971, 7
    %v3973 = vsub.s32 1, %v3972
    %v3974 = vrot.slane %v40, %v3973
    %v3975 = vlaneseq
    %v3976 = vshrl.u32 %v3975, 7
    %v3977 = vsub.s32 2, %v3976
    %v3978 = vrot.slane %v40, %v3977
    %v3979 = vlaneseq
    %v3980 = vshrl.u32 %v3979, 7
    %v3981 = vsub.s32 3, %v3980
    %v3982 = vrot.slane %v40, %v3981
    %v3983 = vlaneseq
    %v3984 = vshrl.u32 %v3983, 7
    %v3985 = vsub.s32 4, %v3984
    %v3986 = vrot.slane %v40, %v3985
    %v3987 = vlaneseq
    %v3988 = vshrl.u32 %v3987, 7
    %v3989 = vsub.s32 5, %v3988
    %v3990 = vrot.slane %v40, %v3989
    %v3991 = vlaneseq
    %v3992 = vshrl.u32 %v3991, 7
    %v3993 = vsub.s32 6, %v3992
    %v3994 = vrot.slane %v40, %v3993
    %v3995 = vlaneseq
    %v3996 = vshrl.u32 %v3995, 7
    %v3997 = vsub.s32 7, %v3996
    %v3998 = vrot.slane %v40, %v3997
    %v3999 = vlaneseq
    %v4000 = vshrl.u32 %v3999, 7
    %v4001 = vsub.s32 0, %v4000
    %v4002 = vrot.slane %v41, %v4001
    %v4003 = vlaneseq
    %v4004 = vshrl.u32 %v4003, 7
    %v4005 = vsub.s32 1, %v4004
    %v4006 = vrot.slane %v41, %v4005
    %v4007 = vlaneseq
    %v4008 = vshrl.u32 %v4007, 7
    %v4009 = vsub.s32 2, %v4008
    %v4010 = vrot.slane %v41, %v4009
    %v4011 = vlaneseq
    %v4012 = vshrl.u32 %v4011, 7
    %v4013 = vsub.s32 3, %v4012
    %v4014 = vrot.slane %v41, %v4013
    %v4015 = vlaneseq
    %v4016 = vshrl.u32 %v4015, 7
    %v4017 = vsub.s32 4, %v4016
    %v4018 = vrot.slane %v41, %v4017
    %v4019 = vlaneseq
    %v4020 = vshrl.u32 %v4019, 7
    %v4021 = vsub.s32 5, %v4020
    %v4022 = vrot.slane %v41, %v4021
    %v4023 = vlaneseq
    %v4024 = vshrl.u32 %v4023, 7
    %v4025 = vsub.s32 6, %v4024
    %v4026 = vrot.slane %v41, %v4025
    %v4027 = vlaneseq
    %v4028 = vshrl.u32 %v4027, 7
    %v4029 = vsub.s32 7, %v4028
    %v4030 = vrot.slane %v41, %v4029
    %v4031 = vlaneseq
    %v4032 = vshrl.u32 %v4031, 7
    %v4033 = vsub.s32 0, %v4032
    %v4034 = vrot.slane %v42, %v4033
    %v4035 = vlaneseq
    %v4036 = vshrl.u32 %v4035, 7
    %v4037 = vsub.s32 1, %v4036
    %v4038 = vrot.slane %v42, %v4037
    %v4039 = vlaneseq
    %v4040 = vshrl.u32 %v4039, 7
    %v4041 = vsub.s32 2, %v4040
    %v4042 = vrot.slane %v42, %v4041
    %v4043 = vlaneseq
    %v4044 = vshrl.u32 %v4043, 7
    %v4045 = vsub.s32 3, %v4044
    %v4046 = vrot.slane %v42, %v4045
    %v4047 = vlaneseq
    %v4048 = vshrl.u32 %v4047, 7
    %v4049 = vsub.s32 4, %v4048
    %v4050 = vrot.slane %v42, %v4049
    %v4051 = vlaneseq
    %v4052 = vshrl.u32 %v4051, 7
    %v4053 = vsub.s32 5, %v4052
    %v4054 = vrot.slane %v42, %v4053
    %v4055 = vlaneseq
    %v4056 = vshrl.u32 %v4055, 7
    %v4057 = vsub.s32 6, %v4056
    %v4058 = vrot.slane %v42, %v4057
    %v4059 = vlaneseq
    %v4060 = vshrl.u32 %v4059, 7
    %v4061 = vsub.s32 7, %v4060
    %v4062 = vrot.slane %v42, %v4061
    %v4063 = vlaneseq
    %v4064 = vshrl.u32 %v4063, 7
    %v4065 = vsub.s32 0, %v4064
    %v4066 = vrot.slane %v43, %v4065
    %v4067 = vlaneseq
    %v4068 = vshrl.u32 %v4067, 7
    %v4069 = vsub.s32 1, %v4068
    %v4070 = vrot.slane %v43, %v4069
    %v4071 = vlaneseq
    %v4072 = vshrl.u32 %v4071, 7
    %v4073 = vsub.s32 2, %v4072
    %v4074 = vrot.slane %v43, %v4073
    %v4075 = vlaneseq
    %v4076 = vshrl.u32 %v4075, 7
    %v4077 = vsub.s32 3, %v4076
    %v4078 = vrot.slane %v43, %v4077
    %v4079 = vlaneseq
    %v4080 = vshrl.u32 %v4079, 7
    %v4081 = vsub.s32 4, %v4080
    %v4082 = vrot.slane %v43, %v4081
    %v4083 = vlaneseq
    %v4084 = vshrl.u32 %v4083, 7
    %v4085 = vsub.s32 5, %v4084
    %v4086 = vrot.slane %v43, %v4085
    %v4087 = vlaneseq
    %v4088 = vshrl.u32 %v4087, 7
    %v4089 = vsub.s32 6, %v4088
    %v4090 = vrot.slane %v43, %v4089
    %v4091 = vlaneseq
    %v4092 = vshrl.u32 %v4091, 7
    %v4093 = vsub.s32 7, %v4092
    %v4094 = vrot.slane %v43, %v4093
    %v4095 = vlaneseq
    %v4096 = vshrl.u32 %v4095, 7
    %v4097 = vsub.s32 0, %v4096
    %v4098 = vrot.slane %v44, %v4097
    %v4099 = vlaneseq
    %v4100 = vshrl.u32 %v4099, 7
    %v4101 = vsub.s32 1, %v4100
    %v4102 = vrot.slane %v44, %v4101
    %v4103 = vlaneseq
    %v4104 = vshrl.u32 %v4103, 7
    %v4105 = vsub.s32 2, %v4104
    %v4106 = vrot.slane %v44, %v4105
    %v4107 = vlaneseq
    %v4108 = vshrl.u32 %v4107, 7
    %v4109 = vsub.s32 3, %v4108
    %v4110 = vrot.slane %v44, %v4109
    %v4111 = vlaneseq
    %v4112 = vshrl.u32 %v4111, 7
    %v4113 = vsub.s32 4, %v4112
    %v4114 = vrot.slane %v44, %v4113
    %v4115 = vlaneseq
    %v4116 = vshrl.u32 %v4115, 7
    %v4117 = vsub.s32 5, %v4116
    %v4118 = vrot.slane %v44, %v4117
    %v4119 = vlaneseq
    %v4120 = vshrl.u32 %v4119, 7
    %v4121 = vsub.s32 6, %v4120
    %v4122 = vrot.slane %v44, %v4121
    %v4123 = vlaneseq
    %v4124 = vshrl.u32 %v4123, 7
    %v4125 = vsub.s32 7, %v4124
    %v4126 = vrot.slane %v44, %v4125
    %v4127 = vlaneseq
    %v4128 = vshrl.u32 %v4127, 7
    %v4129 = vsub.s32 0, %v4128
    %v4130 = vrot.slane %v45, %v4129
    %v4131 = vlaneseq
    %v4132 = vshrl.u32 %v4131, 7
    %v4133 = vsub.s32 1, %v4132
    %v4134 = vrot.slane %v45, %v4133
    %v4135 = vlaneseq
    %v4136 = vshrl.u32 %v4135, 7
    %v4137 = vsub.s32 2, %v4136
    %v4138 = vrot.slane %v45, %v4137
    %v4139 = vlaneseq
    %v4140 = vshrl.u32 %v4139, 7
    %v4141 = vsub.s32 3, %v4140
    %v4142 = vrot.slane %v45, %v4141
    %v4143 = vlaneseq
    %v4144 = vshrl.u32 %v4143, 7
    %v4145 = vsub.s32 4, %v4144
    %v4146 = vrot.slane %v45, %v4145
    %v4147 = vlaneseq
    %v4148 = vshrl.u32 %v4147, 7
    %v4149 = vsub.s32 5, %v4148
    %v4150 = vrot.slane %v45, %v4149
    %v4151 = vlaneseq
    %v4152 = vshrl.u32 %v4151, 7
    %v4153 = vsub.s32 6, %v4152
    %v4154 = vrot.slane %v45, %v4153
    %v4155 = vlaneseq
    %v4156 = vshrl.u32 %v4155, 7
    %v4157 = vsub.s32 7, %v4156
    %v4158 = vrot.slane %v45, %v4157
    %vm4159 = vcmp.eq.s32.totalorder %v47, %v3906
    %vm4160 = vcmp.eq.s32.totalorder %v47, %v3910
    %vm4161 = vcmp.eq.s32.totalorder %v47, %v3914
    %vm4162 = vcmp.eq.s32.totalorder %v47, %v3918
    %vm4163 = vcmp.eq.s32.totalorder %v47, %v3922
    %vm4164 = vcmp.eq.s32.totalorder %v47, %v3926
    %vm4165 = vcmp.eq.s32.totalorder %v47, %v3930
    %vm4166 = vcmp.eq.s32.totalorder %v47, %v3934
    %vm4167 = vcmp.eq.s32.totalorder %v47, %v3938
    %vm4168 = vcmp.eq.s32.totalorder %v47, %v3942
    %vm4169 = vcmp.eq.s32.totalorder %v47, %v3946
    %vm4170 = vcmp.eq.s32.totalorder %v47, %v3950
    %vm4171 = vcmp.eq.s32.totalorder %v47, %v3954
    %vm4172 = vcmp.eq.s32.totalorder %v47, %v3958
    %vm4173 = vcmp.eq.s32.totalorder %v47, %v3962
    %vm4174 = vcmp.eq.s32.totalorder %v47, %v3966
    %vm4175 = vcmp.eq.s32.totalorder %v47, %v3970
    %vm4176 = vcmp.eq.s32.totalorder %v47, %v3974
    %vm4177 = vcmp.eq.s32.totalorder %v47, %v3978
    %vm4178 = vcmp.eq.s32.totalorder %v47, %v3982
    %vm4179 = vcmp.eq.s32.totalorder %v47, %v3986
    %vm4180 = vcmp.eq.s32.totalorder %v47, %v3990
    %vm4181 = vcmp.eq.s32.totalorder %v47, %v3994
    %vm4182 = vcmp.eq.s32.totalorder %v47, %v3998
    %vm4183 = vcmp.eq.s32.totalorder %v47, %v4002
    %vm4184 = vcmp.eq.s32.totalorder %v47, %v4006
    %vm4185 = vcmp.eq.s32.totalorder %v47, %v4010
    %vm4186 = vcmp.eq.s32.totalorder %v47, %v4014
    %vm4187 = vcmp.eq.s32.totalorder %v47, %v4018
    %vm4188 = vcmp.eq.s32.totalorder %v47, %v4022
    %vm4189 = vcmp.eq.s32.totalorder %v47, %v4026
    %vm4190 = vcmp.eq.s32.totalorder %v47, %v4030
    %vm4191 = vcmp.eq.s32.totalorder %v47, %v4034
    %vm4192 = vcmp.eq.s32.totalorder %v47, %v4038
    %vm4193 = vcmp.eq.s32.totalorder %v47, %v4042
    %vm4194 = vcmp.eq.s32.totalorder %v47, %v4046
    %vm4195 = vcmp.eq.s32.totalorder %v47, %v4050
    %vm4196 = vcmp.eq.s32.totalorder %v47, %v4054
    %vm4197 = vcmp.eq.s32.totalorder %v47, %v4058
    %vm4198 = vcmp.eq.s32.totalorder %v47, %v4062
    %vm4199 = vcmp.eq.s32.totalorder %v47, %v4066
    %vm4200 = vcmp.eq.s32.totalorder %v47, %v4070
    %vm4201 = vcmp.eq.s32.totalorder %v47, %v4074
    %vm4202 = vcmp.eq.s32.totalorder %v47, %v4078
    %vm4203 = vcmp.eq.s32.totalorder %v47, %v4082
    %vm4204 = vcmp.eq.s32.totalorder %v47, %v4086
    %vm4205 = vcmp.eq.s32.totalorder %v47, %v4090
    %vm4206 = vcmp.eq.s32.totalorder %v47, %v4094
    %vm4207 = vcmp.eq.s32.totalorder %v47, %v4098
    %vm4208 = vcmp.eq.s32.totalorder %v47, %v4102
    %vm4209 = vcmp.eq.s32.totalorder %v47, %v4106
    %vm4210 = vcmp.eq.s32.totalorder %v47, %v4110
    %vm4211 = vcmp.eq.s32.totalorder %v47, %v4114
    %vm4212 = vcmp.eq.s32.totalorder %v47, %v4118
    %vm4213 = vcmp.eq.s32.totalorder %v47, %v4122
    %vm4214 = vcmp.eq.s32.totalorder %v47, %v4126
    %vm4215 = vcmp.eq.s32.totalorder %v47, %v4130
    %vm4216 = vcmp.eq.s32.totalorder %v47, %v4134
    %vm4217 = vcmp.eq.s32.totalorder %v47, %v4138
    %vm4218 = vcmp.eq.s32.totalorder %v47, %v4142
    %vm4219 = vcmp.eq.s32.totalorder %v47, %v4146
    %vm4220 = vcmp.eq.s32.totalorder %v47, %v4150
    %vm4221 = vcmp.eq.s32.totalorder %v47, %v4154
    %vm4222 = vcmp.eq.s32.totalorder %v47, %v4158
    %vm4223 = vcmp.eq.s32.totalorder %v48, %v3906
    %vm4224 = vcmp.eq.s32.totalorder %v48, %v3910
    %vm4225 = vcmp.eq.s32.totalorder %v48, %v3914
    %vm4226 = vcmp.eq.s32.totalorder %v48, %v3918
    %vm4227 = vcmp.eq.s32.totalorder %v48, %v3922
    %vm4228 = vcmp.eq.s32.totalorder %v48, %v3926
    %vm4229 = vcmp.eq.s32.totalorder %v48, %v3930
    %vm4230 = vcmp.eq.s32.totalorder %v48, %v3934
    %vm4231 = vcmp.eq.s32.totalorder %v48, %v3938
    %vm4232 = vcmp.eq.s32.totalorder %v48, %v3942
    %vm4233 = vcmp.eq.s32.totalorder %v48, %v3946
    %vm4234 = vcmp.eq.s32.totalorder %v48, %v3950
    %vm4235 = vcmp.eq.s32.totalorder %v48, %v3954
    %vm4236 = vcmp.eq.s32.totalorder %v48, %v3958
    %vm4237 = vcmp.eq.s32.totalorder %v48, %v3962
    %vm4238 = vcmp.eq.s32.totalorder %v48, %v3966
    %vm4239 = vcmp.eq.s32.totalorder %v48, %v3970
    %vm4240 = vcmp.eq.s32.totalorder %v48, %v3974
    %vm4241 = vcmp.eq.s32.totalorder %v48, %v3978
    %vm4242 = vcmp.eq.s32.totalorder %v48, %v3982
    %vm4243 = vcmp.eq.s32.totalorder %v48, %v3986
    %vm4244 = vcmp.eq.s32.totalorder %v48, %v3990
    %vm4245 = vcmp.eq.s32.totalorder %v48, %v3994
    %vm4246 = vcmp.eq.s32.totalorder %v48, %v3998
    %vm4247 = vcmp.eq.s32.totalorder %v48, %v4002
    %vm4248 = vcmp.eq.s32.totalorder %v48, %v4006
    %vm4249 = vcmp.eq.s32.totalorder %v48, %v4010
    %vm4250 = vcmp.eq.s32.totalorder %v48, %v4014
    %vm4251 = vcmp.eq.s32.totalorder %v48, %v4018
    %vm4252 = vcmp.eq.s32.totalorder %v48, %v4022
    %vm4253 = vcmp.eq.s32.totalorder %v48, %v4026
    %vm4254 = vcmp.eq.s32.totalorder %v48, %v4030
    %vm4255 = vcmp.eq.s32.totalorder %v48, %v4034
    %vm4256 = vcmp.eq.s32.totalorder %v48, %v4038
    %vm4257 = vcmp.eq.s32.totalorder %v48, %v4042
    %vm4258 = vcmp.eq.s32.totalorder %v48, %v4046
    %vm4259 = vcmp.eq.s32.totalorder %v48, %v4050
    %vm4260 = vcmp.eq.s32.totalorder %v48, %v4054
    %vm4261 = vcmp.eq.s32.totalorder %v48, %v4058
    %vm4262 = vcmp.eq.s32.totalorder %v48, %v4062
    %vm4263 = vcmp.eq.s32.totalorder %v48, %v4066
    %vm4264 = vcmp.eq.s32.totalorder %v48, %v4070
    %vm4265 = vcmp.eq.s32.totalorder %v48, %v4074
    %vm4266 = vcmp.eq.s32.totalorder %v48, %v4078
    %vm4267 = vcmp.eq.s32.totalorder %v48, %v4082
    %vm4268 = vcmp.eq.s32.totalorder %v48, %v4086
    %vm4269 = vcmp.eq.s32.totalorder %v48, %v4090
    %vm4270 = vcmp.eq.s32.totalorder %v48, %v4094
    %vm4271 = vcmp.eq.s32.totalorder %v48, %v4098
    %vm4272 = vcmp.eq.s32.totalorder %v48, %v4102
    %vm4273 = vcmp.eq.s32.totalorder %v48, %v4106
    %vm4274 = vcmp.eq.s32.totalorder %v48, %v4110
    %vm4275 = vcmp.eq.s32.totalorder %v48, %v4114
    %vm4276 = vcmp.eq.s32.totalorder %v48, %v4118
    %vm4277 = vcmp.eq.s32.totalorder %v48, %v4122
    %vm4278 = vcmp.eq.s32.totalorder %v48, %v4126
    %vm4279 = vcmp.eq.s32.totalorder %v48, %v4130
    %vm4280 = vcmp.eq.s32.totalorder %v48, %v4134
    %vm4281 = vcmp.eq.s32.totalorder %v48, %v4138
    %vm4282 = vcmp.eq.s32.totalorder %v48, %v4142
    %vm4283 = vcmp.eq.s32.totalorder %v48, %v4146
    %vm4284 = vcmp.eq.s32.totalorder %v48, %v4150
    %vm4285 = vcmp.eq.s32.totalorder %v48, %v4154
    %vm4286 = vcmp.eq.s32.totalorder %v48, %v4158
    %vm4287 = vcmp.eq.s32.totalorder %v49, %v3906
    %vm4288 = vcmp.eq.s32.totalorder %v49, %v3910
    %vm4289 = vcmp.eq.s32.totalorder %v49, %v3914
    %vm4290 = vcmp.eq.s32.totalorder %v49, %v3918
    %vm4291 = vcmp.eq.s32.totalorder %v49, %v3922
    %vm4292 = vcmp.eq.s32.totalorder %v49, %v3926
    %vm4293 = vcmp.eq.s32.totalorder %v49, %v3930
    %vm4294 = vcmp.eq.s32.totalorder %v49, %v3934
    %vm4295 = vcmp.eq.s32.totalorder %v49, %v3938
    %vm4296 = vcmp.eq.s32.totalorder %v49, %v3942
    %vm4297 = vcmp.eq.s32.totalorder %v49, %v3946
    %vm4298 = vcmp.eq.s32.totalorder %v49, %v3950
    %vm4299 = vcmp.eq.s32.totalorder %v49, %v3954
    %vm4300 = vcmp.eq.s32.totalorder %v49, %v3958
    %vm4301 = vcmp.eq.s32.totalorder %v49, %v3962
    %vm4302 = vcmp.eq.s32.totalorder %v49, %v3966
    %vm4303 = vcmp.eq.s32.totalorder %v49, %v3970
    %vm4304 = vcmp.eq.s32.totalorder %v49, %v3974
    %vm4305 = vcmp.eq.s32.totalorder %v49, %v3978
    %vm4306 = vcmp.eq.s32.totalorder %v49, %v3982
    %vm4307 = vcmp.eq.s32.totalorder %v49, %v3986
    %vm4308 = vcmp.eq.s32.totalorder %v49, %v3990
    %vm4309 = vcmp.eq.s32.totalorder %v49, %v3994
    %vm4310 = vcmp.eq.s32.totalorder %v49, %v3998
    %vm4311 = vcmp.eq.s32.totalorder %v49, %v4002
    %vm4312 = vcmp.eq.s32.totalorder %v49, %v4006
    %vm4313 = vcmp.eq.s32.totalorder %v49, %v4010
    %vm4314 = vcmp.eq.s32.totalorder %v49, %v4014
    %vm4315 = vcmp.eq.s32.totalorder %v49, %v4018
    %vm4316 = vcmp.eq.s32.totalorder %v49, %v4022
    %vm4317 = vcmp.eq.s32.totalorder %v49, %v4026
    %vm4318 = vcmp.eq.s32.totalorder %v49, %v4030
    %vm4319 = vcmp.eq.s32.totalorder %v49, %v4034
    %vm4320 = vcmp.eq.s32.totalorder %v49, %v4038
    %vm4321 = vcmp.eq.s32.totalorder %v49, %v4042
    %vm4322 = vcmp.eq.s32.totalorder %v49, %v4046
    %vm4323 = vcmp.eq.s32.totalorder %v49, %v4050
    %vm4324 = vcmp.eq.s32.totalorder %v49, %v4054
    %vm4325 = vcmp.eq.s32.totalorder %v49, %v4058
    %vm4326 = vcmp.eq.s32.totalorder %v49, %v4062
    %vm4327 = vcmp.eq.s32.totalorder %v49, %v4066
    %vm4328 = vcmp.eq.s32.totalorder %v49, %v4070
    %vm4329 = vcmp.eq.s32.totalorder %v49, %v4074
    %vm4330 = vcmp.eq.s32.totalorder %v49, %v4078
    %vm4331 = vcmp.eq.s32.totalorder %v49, %v4082
    %vm4332 = vcmp.eq.s32.totalorder %v49, %v4086
    %vm4333 = vcmp.eq.s32.totalorder %v49, %v4090
    %vm4334 = vcmp.eq.s32.totalorder %v49, %v4094
    %vm4335 = vcmp.eq.s32.totalorder %v49, %v4098
    %vm4336 = vcmp.eq.s32.totalorder %v49, %v4102
    %vm4337 = vcmp.eq.s32.totalorder %v49, %v4106
    %vm4338 = vcmp.eq.s32.totalorder %v49, %v4110
    %vm4339 = vcmp.eq.s32.totalorder %v49, %v4114
    %vm4340 = vcmp.eq.s32.totalorder %v49, %v4118
    %vm4341 = vcmp.eq.s32.totalorder %v49, %v4122
    %vm4342 = vcmp.eq.s32.totalorder %v49, %v4126
    %vm4343 = vcmp.eq.s32.totalorder %v49, %v4130
    %vm4344 = vcmp.eq.s32.totalorder %v49, %v4134
    %vm4345 = vcmp.eq.s32.totalorder %v49, %v4138
    %vm4346 = vcmp.eq.s32.totalorder %v49, %v4142
    %vm4347 = vcmp.eq.s32.totalorder %v49, %v4146
    %vm4348 = vcmp.eq.s32.totalorder %v49, %v4150
    %vm4349 = vcmp.eq.s32.totalorder %v49, %v4154
    %vm4350 = vcmp.eq.s32.totalorder %v49, %v4158
    %vm4351 = vcmp.eq.s32.totalorder %v50, %v3906
    %vm4352 = vcmp.eq.s32.totalorder %v50, %v3910
    %vm4353 = vcmp.eq.s32.totalorder %v50, %v3914
    %vm4354 = vcmp.eq.s32.totalorder %v50, %v3918
    %vm4355 = vcmp.eq.s32.totalorder %v50, %v3922
    %vm4356 = vcmp.eq.s32.totalorder %v50, %v3926
    %vm4357 = vcmp.eq.s32.totalorder %v50, %v3930
    %vm4358 = vcmp.eq.s32.totalorder %v50, %v3934
    %vm4359 = vcmp.eq.s32.totalorder %v50, %v3938
    %vm4360 = vcmp.eq.s32.totalorder %v50, %v3942
    %vm4361 = vcmp.eq.s32.totalorder %v50, %v3946
    %vm4362 = vcmp.eq.s32.totalorder %v50, %v3950
    %vm4363 = vcmp.eq.s32.totalorder %v50, %v3954
    %vm4364 = vcmp.eq.s32.totalorder %v50, %v3958
    %vm4365 = vcmp.eq.s32.totalorder %v50, %v3962
    %vm4366 = vcmp.eq.s32.totalorder %v50, %v3966
    %vm4367 = vcmp.eq.s32.totalorder %v50, %v3970
    %vm4368 = vcmp.eq.s32.totalorder %v50, %v3974
    %vm4369 = vcmp.eq.s32.totalorder %v50, %v3978
    %vm4370 = vcmp.eq.s32.totalorder %v50, %v3982
    %vm4371 = vcmp.eq.s32.totalorder %v50, %v3986
    %vm4372 = vcmp.eq.s32.totalorder %v50, %v3990
    %vm4373 = vcmp.eq.s32.totalorder %v50, %v3994
    %vm4374 = vcmp.eq.s32.totalorder %v50, %v3998
    %vm4375 = vcmp.eq.s32.totalorder %v50, %v4002
    %vm4376 = vcmp.eq.s32.totalorder %v50, %v4006
    %vm4377 = vcmp.eq.s32.totalorder %v50, %v4010
    %vm4378 = vcmp.eq.s32.totalorder %v50, %v4014
    %vm4379 = vcmp.eq.s32.totalorder %v50, %v4018
    %vm4380 = vcmp.eq.s32.totalorder %v50, %v4022
    %vm4381 = vcmp.eq.s32.totalorder %v50, %v4026
    %vm4382 = vcmp.eq.s32.totalorder %v50, %v4030
    %vm4383 = vcmp.eq.s32.totalorder %v50, %v4034
    %vm4384 = vcmp.eq.s32.totalorder %v50, %v4038
    %vm4385 = vcmp.eq.s32.totalorder %v50, %v4042
    %vm4386 = vcmp.eq.s32.totalorder %v50, %v4046
    %vm4387 = vcmp.eq.s32.totalorder %v50, %v4050
    %vm4388 = vcmp.eq.s32.totalorder %v50, %v4054
    %vm4389 = vcmp.eq.s32.totalorder %v50, %v4058
    %vm4390 = vcmp.eq.s32.totalorder %v50, %v4062
    %vm4391 = vcmp.eq.s32.totalorder %v50, %v4066
    %vm4392 = vcmp.eq.s32.totalorder %v50, %v4070
    %vm4393 = vcmp.eq.s32.totalorder %v50, %v4074
    %vm4394 = vcmp.eq.s32.totalorder %v50, %v4078
    %vm4395 = vcmp.eq.s32.totalorder %v50, %v4082
    %vm4396 = vcmp.eq.s32.totalorder %v50, %v4086
    %vm4397 = vcmp.eq.s32.totalorder %v50, %v4090
    %vm4398 = vcmp.eq.s32.totalorder %v50, %v4094
    %vm4399 = vcmp.eq.s32.totalorder %v50, %v4098
    %vm4400 = vcmp.eq.s32.totalorder %v50, %v4102
    %vm4401 = vcmp.eq.s32.totalorder %v50, %v4106
    %vm4402 = vcmp.eq.s32.totalorder %v50, %v4110
    %vm4403 = vcmp.eq.s32.totalorder %v50, %v4114
    %vm4404 = vcmp.eq.s32.totalorder %v50, %v4118
    %vm4405 = vcmp.eq.s32.totalorder %v50, %v4122
    %vm4406 = vcmp.eq.s32.totalorder %v50, %v4126
    %vm4407 = vcmp.eq.s32.totalorder %v50, %v4130
    %vm4408 = vcmp.eq.s32.totalorder %v50, %v4134
    %vm4409 = vcmp.eq.s32.totalorder %v50, %v4138
    %vm4410 = vcmp.eq.s32.totalorder %v50, %v4142
    %vm4411 = vcmp.eq.s32.totalorder %v50, %v4146
    %vm4412 = vcmp.eq.s32.totalorder %v50, %v4150
    %vm4413 = vcmp.eq.s32.totalorder %v50, %v4154
    %vm4414 = vcmp.eq.s32.totalorder %v50, %v4158
    %vm4415 = vcmp.eq.s32.totalorder %v51, %v3906
    %vm4416 = vcmp.eq.s32.totalorder %v51, %v3910
    %vm4417 = vcmp.eq.s32.totalorder %v51, %v3914
    %vm4418 = vcmp.eq.s32.totalorder %v51, %v3918
    %vm4419 = vcmp.eq.s32.totalorder %v51, %v3922
    %vm4420 = vcmp.eq.s32.totalorder %v51, %v3926
    %vm4421 = vcmp.eq.s32.totalorder %v51, %v3930
    %vm4422 = vcmp.eq.s32.totalorder %v51, %v3934
    %vm4423 = vcmp.eq.s32.totalorder %v51, %v3938
    %vm4424 = vcmp.eq.s32.totalorder %v51, %v3942
    %vm4425 = vcmp.eq.s32.totalorder %v51, %v3946
    %vm4426 = vcmp.eq.s32.totalorder %v51, %v3950
    %vm4427 = vcmp.eq.s32.totalorder %v51, %v3954
    %vm4428 = vcmp.eq.s32.totalorder %v51, %v3958
    %vm4429 = vcmp.eq.s32.totalorder %v51, %v3962
    %vm4430 = vcmp.eq.s32.totalorder %v51, %v3966
    %vm4431 = vcmp.eq.s32.totalorder %v51, %v3970
    %vm4432 = vcmp.eq.s32.totalorder %v51, %v3974
    %vm4433 = vcmp.eq.s32.totalorder %v51, %v3978
    %vm4434 = vcmp.eq.s32.totalorder %v51, %v3982
    %vm4435 = vcmp.eq.s32.totalorder %v51, %v3986
    %vm4436 = vcmp.eq.s32.totalorder %v51, %v3990
    %vm4437 = vcmp.eq.s32.totalorder %v51, %v3994
    %vm4438 = vcmp.eq.s32.totalorder %v51, %v3998
    %vm4439 = vcmp.eq.s32.totalorder %v51, %v4002
    %vm4440 = vcmp.eq.s32.totalorder %v51, %v4006
    %vm4441 = vcmp.eq.s32.totalorder %v51, %v4010
    %vm4442 = vcmp.eq.s32.totalorder %v51, %v4014
    %vm4443 = vcmp.eq.s32.totalorder %v51, %v4018
    %vm4444 = vcmp.eq.s32.totalorder %v51, %v4022
    %vm4445 = vcmp.eq.s32.totalorder %v51, %v4026
    %vm4446 = vcmp.eq.s32.totalorder %v51, %v4030
    %vm4447 = vcmp.eq.s32.totalorder %v51, %v4034
    %vm4448 = vcmp.eq.s32.totalorder %v51, %v4038
    %vm4449 = vcmp.eq.s32.totalorder %v51, %v4042
    %vm4450 = vcmp.eq.s32.totalorder %v51, %v4046
    %vm4451 = vcmp.eq.s32.totalorder %v51, %v4050
    %vm4452 = vcmp.eq.s32.totalorder %v51, %v4054
    %vm4453 = vcmp.eq.s32.totalorder %v51, %v4058
    %vm4454 = vcmp.eq.s32.totalorder %v51, %v4062
    %vm4455 = vcmp.eq.s32.totalorder %v51, %v4066
    %vm4456 = vcmp.eq.s32.totalorder %v51, %v4070
    %vm4457 = vcmp.eq.s32.totalorder %v51, %v4074
    %vm4458 = vcmp.eq.s32.totalorder %v51, %v4078
    %vm4459 = vcmp.eq.s32.totalorder %v51, %v4082
    %vm4460 = vcmp.eq.s32.totalorder %v51, %v4086
    %vm4461 = vcmp.eq.s32.totalorder %v51, %v4090
    %vm4462 = vcmp.eq.s32.totalorder %v51, %v4094
    %vm4463 = vcmp.eq.s32.totalorder %v51, %v4098
    %vm4464 = vcmp.eq.s32.totalorder %v51, %v4102
    %vm4465 = vcmp.eq.s32.totalorder %v51, %v4106
    %vm4466 = vcmp.eq.s32.totalorder %v51, %v4110
    %vm4467 = vcmp.eq.s32.totalorder %v51, %v4114
    %vm4468 = vcmp.eq.s32.totalorder %v51, %v4118
    %vm4469 = vcmp.eq.s32.totalorder %v51, %v4122
    %vm4470 = vcmp.eq.s32.totalorder %v51, %v4126
    %vm4471 = vcmp.eq.s32.totalorder %v51, %v4130
    %vm4472 = vcmp.eq.s32.totalorder %v51, %v4134
    %vm4473 = vcmp.eq.s32.totalorder %v51, %v4138
    %vm4474 = vcmp.eq.s32.totalorder %v51, %v4142
    %vm4475 = vcmp.eq.s32.totalorder %v51, %v4146
    %vm4476 = vcmp.eq.s32.totalorder %v51, %v4150
    %vm4477 = vcmp.eq.s32.totalorder %v51, %v4154
    %vm4478 = vcmp.eq.s32.totalorder %v51, %v4158
    %vm4479 = vcmp.eq.s32.totalorder %v52, %v3906
    %vm4480 = vcmp.eq.s32.totalorder %v52, %v3910
    %vm4481 = vcmp.eq.s32.totalorder %v52, %v3914
    %vm4482 = vcmp.eq.s32.totalorder %v52, %v3918
    %vm4483 = vcmp.eq.s32.totalorder %v52, %v3922
    %vm4484 = vcmp.eq.s32.totalorder %v52, %v3926
    %vm4485 = vcmp.eq.s32.totalorder %v52, %v3930
    %vm4486 = vcmp.eq.s32.totalorder %v52, %v3934
    %vm4487 = vcmp.eq.s32.totalorder %v52, %v3938
    %vm4488 = vcmp.eq.s32.totalorder %v52, %v3942
    %vm4489 = vcmp.eq.s32.totalorder %v52, %v3946
    %vm4490 = vcmp.eq.s32.totalorder %v52, %v3950
    %vm4491 = vcmp.eq.s32.totalorder %v52, %v3954
    %vm4492 = vcmp.eq.s32.totalorder %v52, %v3958
    %vm4493 = vcmp.eq.s32.totalorder %v52, %v3962
    %vm4494 = vcmp.eq.s32.totalorder %v52, %v3966
    %vm4495 = vcmp.eq.s32.totalorder %v52, %v3970
    %vm4496 = vcmp.eq.s32.totalorder %v52, %v3974
    %vm4497 = vcmp.eq.s32.totalorder %v52, %v3978
    %vm4498 = vcmp.eq.s32.totalorder %v52, %v3982
    %vm4499 = vcmp.eq.s32.totalorder %v52, %v3986
    %vm4500 = vcmp.eq.s32.totalorder %v52, %v3990
    %vm4501 = vcmp.eq.s32.totalorder %v52, %v3994
    %vm4502 = vcmp.eq.s32.totalorder %v52, %v3998
    %vm4503 = vcmp.eq.s32.totalorder %v52, %v4002
    %vm4504 = vcmp.eq.s32.totalorder %v52, %v4006
    %vm4505 = vcmp.eq.s32.totalorder %v52, %v4010
    %vm4506 = vcmp.eq.s32.totalorder %v52, %v4014
    %vm4507 = vcmp.eq.s32.totalorder %v52, %v4018
    %vm4508 = vcmp.eq.s32.totalorder %v52, %v4022
    %vm4509 = vcmp.eq.s32.totalorder %v52, %v4026
    %vm4510 = vcmp.eq.s32.totalorder %v52, %v4030
    %vm4511 = vcmp.eq.s32.totalorder %v52, %v4034
    %vm4512 = vcmp.eq.s32.totalorder %v52, %v4038
    %vm4513 = vcmp.eq.s32.totalorder %v52, %v4042
    %vm4514 = vcmp.eq.s32.totalorder %v52, %v4046
    %vm4515 = vcmp.eq.s32.totalorder %v52, %v4050
    %vm4516 = vcmp.eq.s32.totalorder %v52, %v4054
    %vm4517 = vcmp.eq.s32.totalorder %v52, %v4058
    %vm4518 = vcmp.eq.s32.totalorder %v52, %v4062
    %vm4519 = vcmp.eq.s32.totalorder %v52, %v4066
    %vm4520 = vcmp.eq.s32.totalorder %v52, %v4070
    %vm4521 = vcmp.eq.s32.totalorder %v52, %v4074
    %vm4522 = vcmp.eq.s32.totalorder %v52, %v4078
    %vm4523 = vcmp.eq.s32.totalorder %v52, %v4082
    %vm4524 = vcmp.eq.s32.totalorder %v52, %v4086
    %vm4525 = vcmp.eq.s32.totalorder %v52, %v4090
    %vm4526 = vcmp.eq.s32.totalorder %v52, %v4094
    %vm4527 = vcmp.eq.s32.totalorder %v52, %v4098
    %vm4528 = vcmp.eq.s32.totalorder %v52, %v4102
    %vm4529 = vcmp.eq.s32.totalorder %v52, %v4106
    %vm4530 = vcmp.eq.s32.totalorder %v52, %v4110
    %vm4531 = vcmp.eq.s32.totalorder %v52, %v4114
    %vm4532 = vcmp.eq.s32.totalorder %v52, %v4118
    %vm4533 = vcmp.eq.s32.totalorder %v52, %v4122
    %vm4534 = vcmp.eq.s32.totalorder %v52, %v4126
    %vm4535 = vcmp.eq.s32.totalorder %v52, %v4130
    %vm4536 = vcmp.eq.s32.totalorder %v52, %v4134
    %vm4537 = vcmp.eq.s32.totalorder %v52, %v4138
    %vm4538 = vcmp.eq.s32.totalorder %v52, %v4142
    %vm4539 = vcmp.eq.s32.totalorder %v52, %v4146
    %vm4540 = vcmp.eq.s32.totalorder %v52, %v4150
    %vm4541 = vcmp.eq.s32.totalorder %v52, %v4154
    %vm4542 = vcmp.eq.s32.totalorder %v52, %v4158
    %vm4543 = vcmp.eq.s32.totalorder %v53, %v3906
    %vm4544 = vcmp.eq.s32.totalorder %v53, %v3910
    %vm4545 = vcmp.eq.s32.totalorder %v53, %v3914
    %vm4546 = vcmp.eq.s32.totalorder %v53, %v3918
    %vm4547 = vcmp.eq.s32.totalorder %v53, %v3922
    %vm4548 = vcmp.eq.s32.totalorder %v53, %v3926
    %vm4549 = vcmp.eq.s32.totalorder %v53, %v3930
    %vm4550 = vcmp.eq.s32.totalorder %v53, %v3934
    %vm4551 = vcmp.eq.s32.totalorder %v53, %v3938
    %vm4552 = vcmp.eq.s32.totalorder %v53, %v3942
    %vm4553 = vcmp.eq.s32.totalorder %v53, %v3946
    %vm4554 = vcmp.eq.s32.totalorder %v53, %v3950
    %vm4555 = vcmp.eq.s32.totalorder %v53, %v3954
    %vm4556 = vcmp.eq.s32.totalorder %v53, %v3958
    %vm4557 = vcmp.eq.s32.totalorder %v53, %v3962
    %vm4558 = vcmp.eq.s32.totalorder %v53, %v3966
    %vm4559 = vcmp.eq.s32.totalorder %v53, %v3970
    %vm4560 = vcmp.eq.s32.totalorder %v53, %v3974
    %vm4561 = vcmp.eq.s32.totalorder %v53, %v3978
    %vm4562 = vcmp.eq.s32.totalorder %v53, %v3982
    %vm4563 = vcmp.eq.s32.totalorder %v53, %v3986
    %vm4564 = vcmp.eq.s32.totalorder %v53, %v3990
    %vm4565 = vcmp.eq.s32.totalorder %v53, %v3994
    %vm4566 = vcmp.eq.s32.totalorder %v53, %v3998
    %vm4567 = vcmp.eq.s32.totalorder %v53, %v4002
    %vm4568 = vcmp.eq.s32.totalorder %v53, %v4006
    %vm4569 = vcmp.eq.s32.totalorder %v53, %v4010
    %vm4570 = vcmp.eq.s32.totalorder %v53, %v4014
    %vm4571 = vcmp.eq.s32.totalorder %v53, %v4018
    %vm4572 = vcmp.eq.s32.totalorder %v53, %v4022
    %vm4573 = vcmp.eq.s32.totalorder %v53, %v4026
    %vm4574 = vcmp.eq.s32.totalorder %v53, %v4030
    %vm4575 = vcmp.eq.s32.totalorder %v53, %v4034
    %vm4576 = vcmp.eq.s32.totalorder %v53, %v4038
    %vm4577 = vcmp.eq.s32.totalorder %v53, %v4042
    %vm4578 = vcmp.eq.s32.totalorder %v53, %v4046
    %vm4579 = vcmp.eq.s32.totalorder %v53, %v4050
    %vm4580 = vcmp.eq.s32.totalorder %v53, %v4054
    %vm4581 = vcmp.eq.s32.totalorder %v53, %v4058
    %vm4582 = vcmp.eq.s32.totalorder %v53, %v4062
    %vm4583 = vcmp.eq.s32.totalorder %v53, %v4066
    %vm4584 = vcmp.eq.s32.totalorder %v53, %v4070
    %vm4585 = vcmp.eq.s32.totalorder %v53, %v4074
    %vm4586 = vcmp.eq.s32.totalorder %v53, %v4078
    %vm4587 = vcmp.eq.s32.totalorder %v53, %v4082
    %vm4588 = vcmp.eq.s32.totalorder %v53, %v4086
    %vm4589 = vcmp.eq.s32.totalorder %v53, %v4090
    %vm4590 = vcmp.eq.s32.totalorder %v53, %v4094
    %vm4591 = vcmp.eq.s32.totalorder %v53, %v4098
    %vm4592 = vcmp.eq.s32.totalorder %v53, %v4102
    %vm4593 = vcmp.eq.s32.totalorder %v53, %v4106
    %vm4594 = vcmp.eq.s32.totalorder %v53, %v4110
    %vm4595 = vcmp.eq.s32.totalorder %v53, %v4114
    %vm4596 = vcmp.eq.s32.totalorder %v53, %v4118
    %vm4597 = vcmp.eq.s32.totalorder %v53, %v4122
    %vm4598 = vcmp.eq.s32.totalorder %v53, %v4126
    %vm4599 = vcmp.eq.s32.totalorder %v53, %v4130
    %vm4600 = vcmp.eq.s32.totalorder %v53, %v4134
    %vm4601 = vcmp.eq.s32.totalorder %v53, %v4138
    %vm4602 = vcmp.eq.s32.totalorder %v53, %v4142
    %vm4603 = vcmp.eq.s32.totalorder %v53, %v4146
    %vm4604 = vcmp.eq.s32.totalorder %v53, %v4150
    %vm4605 = vcmp.eq.s32.totalorder %v53, %v4154
    %vm4606 = vcmp.eq.s32.totalorder %v53, %v4158
    %vm4607 = vcmp.eq.s32.totalorder %v54, %v3906
    %vm4608 = vcmp.eq.s32.totalorder %v54, %v3910
    %vm4609 = vcmp.eq.s32.totalorder %v54, %v3914
    %vm4610 = vcmp.eq.s32.totalorder %v54, %v3918
    %vm4611 = vcmp.eq.s32.totalorder %v54, %v3922
    %vm4612 = vcmp.eq.s32.totalorder %v54, %v3926
    %vm4613 = vcmp.eq.s32.totalorder %v54, %v3930
    %vm4614 = vcmp.eq.s32.totalorder %v54, %v3934
    %vm4615 = vcmp.eq.s32.totalorder %v54, %v3938
    %vm4616 = vcmp.eq.s32.totalorder %v54, %v3942
    %vm4617 = vcmp.eq.s32.totalorder %v54, %v3946
    %vm4618 = vcmp.eq.s32.totalorder %v54, %v3950
    %vm4619 = vcmp.eq.s32.totalorder %v54, %v3954
    %vm4620 = vcmp.eq.s32.totalorder %v54, %v3958
    %vm4621 = vcmp.eq.s32.totalorder %v54, %v3962
    %vm4622 = vcmp.eq.s32.totalorder %v54, %v3966
    %vm4623 = vcmp.eq.s32.totalorder %v54, %v3970
    %vm4624 = vcmp.eq.s32.totalorder %v54, %v3974
    %vm4625 = vcmp.eq.s32.totalorder %v54, %v3978
    %vm4626 = vcmp.eq.s32.totalorder %v54, %v3982
    %vm4627 = vcmp.eq.s32.totalorder %v54, %v3986
    %vm4628 = vcmp.eq.s32.totalorder %v54, %v3990
    %vm4629 = vcmp.eq.s32.totalorder %v54, %v3994
    %vm4630 = vcmp.eq.s32.totalorder %v54, %v3998
    %vm4631 = vcmp.eq.s32.totalorder %v54, %v4002
    %vm4632 = vcmp.eq.s32.totalorder %v54, %v4006
    %vm4633 = vcmp.eq.s32.totalorder %v54, %v4010
    %vm4634 = vcmp.eq.s32.totalorder %v54, %v4014
    %vm4635 = vcmp.eq.s32.totalorder %v54, %v4018
    %vm4636 = vcmp.eq.s32.totalorder %v54, %v4022
    %vm4637 = vcmp.eq.s32.totalorder %v54, %v4026
    %vm4638 = vcmp.eq.s32.totalorder %v54, %v4030
    %vm4639 = vcmp.eq.s32.totalorder %v54, %v4034
    %vm4640 = vcmp.eq.s32.totalorder %v54, %v4038
    %vm4641 = vcmp.eq.s32.totalorder %v54, %v4042
    %vm4642 = vcmp.eq.s32.totalorder %v54, %v4046
    %vm4643 = vcmp.eq.s32.totalorder %v54, %v4050
    %vm4644 = vcmp.eq.s32.totalorder %v54, %v4054
    %vm4645 = vcmp.eq.s32.totalorder %v54, %v4058
    %vm4646 = vcmp.eq.s32.totalorder %v54, %v4062
    %vm4647 = vcmp.eq.s32.totalorder %v54, %v4066
    %vm4648 = vcmp.eq.s32.totalorder %v54, %v4070
    %vm4649 = vcmp.eq.s32.totalorder %v54, %v4074
    %vm4650 = vcmp.eq.s32.totalorder %v54, %v4078
    %vm4651 = vcmp.eq.s32.totalorder %v54, %v4082
    %vm4652 = vcmp.eq.s32.totalorder %v54, %v4086
    %vm4653 = vcmp.eq.s32.totalorder %v54, %v4090
    %vm4654 = vcmp.eq.s32.totalorder %v54, %v4094
    %vm4655 = vcmp.eq.s32.totalorder %v54, %v4098
    %vm4656 = vcmp.eq.s32.totalorder %v54, %v4102
    %vm4657 = vcmp.eq.s32.totalorder %v54, %v4106
    %vm4658 = vcmp.eq.s32.totalorder %v54, %v4110
    %vm4659 = vcmp.eq.s32.totalorder %v54, %v4114
    %vm4660 = vcmp.eq.s32.totalorder %v54, %v4118
    %vm4661 = vcmp.eq.s32.totalorder %v54, %v4122
    %vm4662 = vcmp.eq.s32.totalorder %v54, %v4126
    %vm4663 = vcmp.eq.s32.totalorder %v54, %v4130
    %vm4664 = vcmp.eq.s32.totalorder %v54, %v4134
    %vm4665 = vcmp.eq.s32.totalorder %v54, %v4138
    %vm4666 = vcmp.eq.s32.totalorder %v54, %v4142
    %vm4667 = vcmp.eq.s32.totalorder %v54, %v4146
    %vm4668 = vcmp.eq.s32.totalorder %v54, %v4150
    %vm4669 = vcmp.eq.s32.totalorder %v54, %v4154
    %vm4670 = vcmp.eq.s32.totalorder %v54, %v4158
    %vm4671 = vcmp.eq.s32.totalorder %v55, %v3906
    %vm4672 = vcmp.eq.s32.totalorder %v55, %v3910
    %vm4673 = vcmp.eq.s32.totalorder %v55, %v3914
    %vm4674 = vcmp.eq.s32.totalorder %v55, %v3918
    %vm4675 = vcmp.eq.s32.totalorder %v55, %v3922
    %vm4676 = vcmp.eq.s32.totalorder %v55, %v3926
    %vm4677 = vcmp.eq.s32.totalorder %v55, %v3930
    %vm4678 = vcmp.eq.s32.totalorder %v55, %v3934
    %vm4679 = vcmp.eq.s32.totalorder %v55, %v3938
    %vm4680 = vcmp.eq.s32.totalorder %v55, %v3942
    %vm4681 = vcmp.eq.s32.totalorder %v55, %v3946
    %vm4682 = vcmp.eq.s32.totalorder %v55, %v3950
    %vm4683 = vcmp.eq.s32.totalorder %v55, %v3954
    %vm4684 = vcmp.eq.s32.totalorder %v55, %v3958
    %vm4685 = vcmp.eq.s32.totalorder %v55, %v3962
    %vm4686 = vcmp.eq.s32.totalorder %v55, %v3966
    %vm4687 = vcmp.eq.s32.totalorder %v55, %v3970
    %vm4688 = vcmp.eq.s32.totalorder %v55, %v3974
    %vm4689 = vcmp.eq.s32.totalorder %v55, %v3978
    %vm4690 = vcmp.eq.s32.totalorder %v55, %v3982
    %vm4691 = vcmp.eq.s32.totalorder %v55, %v3986
    %vm4692 = vcmp.eq.s32.totalorder %v55, %v3990
    %vm4693 = vcmp.eq.s32.totalorder %v55, %v3994
    %vm4694 = vcmp.eq.s32.totalorder %v55, %v3998
    %vm4695 = vcmp.eq.s32.totalorder %v55, %v4002
    %vm4696 = vcmp.eq.s32.totalorder %v55, %v4006
    %vm4697 = vcmp.eq.s32.totalorder %v55, %v4010
    %vm4698 = vcmp.eq.s32.totalorder %v55, %v4014
    %vm4699 = vcmp.eq.s32.totalorder %v55, %v4018
    %vm4700 = vcmp.eq.s32.totalorder %v55, %v4022
    %vm4701 = vcmp.eq.s32.totalorder %v55, %v4026
    %vm4702 = vcmp.eq.s32.totalorder %v55, %v4030
    %vm4703 = vcmp.eq.s32.totalorder %v55, %v4034
    %vm4704 = vcmp.eq.s32.totalorder %v55, %v4038
    %vm4705 = vcmp.eq.s32.totalorder %v55, %v4042
    %vm4706 = vcmp.eq.s32.totalorder %v55, %v4046
    %vm4707 = vcmp.eq.s32.totalorder %v55, %v4050
    %vm4708 = vcmp.eq.s32.totalorder %v55, %v4054
    %vm4709 = vcmp.eq.s32.totalorder %v55, %v4058
    %vm4710 = vcmp.eq.s32.totalorder %v55, %v4062
    %vm4711 = vcmp.eq.s32.totalorder %v55, %v4066
    %vm4712 = vcmp.eq.s32.totalorder %v55, %v4070
    %vm4713 = vcmp.eq.s32.totalorder %v55, %v4074
    %vm4714 = vcmp.eq.s32.totalorder %v55, %v4078
    %vm4715 = vcmp.eq.s32.totalorder %v55, %v4082
    %vm4716 = vcmp.eq.s32.totalorder %v55, %v4086
    %vm4717 = vcmp.eq.s32.totalorder %v55, %v4090
    %vm4718 = vcmp.eq.s32.totalorder %v55, %v4094
    %vm4719 = vcmp.eq.s32.totalorder %v55, %v4098
    %vm4720 = vcmp.eq.s32.totalorder %v55, %v4102
    %vm4721 = vcmp.eq.s32.totalorder %v55, %v4106
    %vm4722 = vcmp.eq.s32.totalorder %v55, %v4110
    %vm4723 = vcmp.eq.s32.totalorder %v55, %v4114
    %vm4724 = vcmp.eq.s32.totalorder %v55, %v4118
    %vm4725 = vcmp.eq.s32.totalorder %v55, %v4122
    %vm4726 = vcmp.eq.s32.totalorder %v55, %v4126
    %vm4727 = vcmp.eq.s32.totalorder %v55, %v4130
    %vm4728 = vcmp.eq.s32.totalorder %v55, %v4134
    %vm4729 = vcmp.eq.s32.totalorder %v55, %v4138
    %vm4730 = vcmp.eq.s32.totalorder %v55, %v4142
    %vm4731 = vcmp.eq.s32.totalorder %v55, %v4146
    %vm4732 = vcmp.eq.s32.totalorder %v55, %v4150
    %vm4733 = vcmp.eq.s32.totalorder %v55, %v4154
    %vm4734 = vcmp.eq.s32.totalorder %v55, %v4158
    %vm4735 = vcmp.eq.s32.totalorder %v56, %v3906
    %vm4736 = vcmp.eq.s32.totalorder %v56, %v3910
    %vm4737 = vcmp.eq.s32.totalorder %v56, %v3914
    %vm4738 = vcmp.eq.s32.totalorder %v56, %v3918
    %vm4739 = vcmp.eq.s32.totalorder %v56, %v3922
    %vm4740 = vcmp.eq.s32.totalorder %v56, %v3926
    %vm4741 = vcmp.eq.s32.totalorder %v56, %v3930
    %vm4742 = vcmp.eq.s32.totalorder %v56, %v3934
    %vm4743 = vcmp.eq.s32.totalorder %v56, %v3938
    %vm4744 = vcmp.eq.s32.totalorder %v56, %v3942
    %vm4745 = vcmp.eq.s32.totalorder %v56, %v3946
    %vm4746 = vcmp.eq.s32.totalorder %v56, %v3950
    %vm4747 = vcmp.eq.s32.totalorder %v56, %v3954
    %vm4748 = vcmp.eq.s32.totalorder %v56, %v3958
    %vm4749 = vcmp.eq.s32.totalorder %v56, %v3962
    %vm4750 = vcmp.eq.s32.totalorder %v56, %v3966
    %vm4751 = vcmp.eq.s32.totalorder %v56, %v3970
    %vm4752 = vcmp.eq.s32.totalorder %v56, %v3974
    %vm4753 = vcmp.eq.s32.totalorder %v56, %v3978
    %vm4754 = vcmp.eq.s32.totalorder %v56, %v3982
    %vm4755 = vcmp.eq.s32.totalorder %v56, %v3986
    %vm4756 = vcmp.eq.s32.totalorder %v56, %v3990
    %vm4757 = vcmp.eq.s32.totalorder %v56, %v3994
    %vm4758 = vcmp.eq.s32.totalorder %v56, %v3998
    %vm4759 = vcmp.eq.s32.totalorder %v56, %v4002
    %vm4760 = vcmp.eq.s32.totalorder %v56, %v4006
    %vm4761 = vcmp.eq.s32.totalorder %v56, %v4010
    %vm4762 = vcmp.eq.s32.totalorder %v56, %v4014
    %vm4763 = vcmp.eq.s32.totalorder %v56, %v4018
    %vm4764 = vcmp.eq.s32.totalorder %v56, %v4022
    %vm4765 = vcmp.eq.s32.totalorder %v56, %v4026
    %vm4766 = vcmp.eq.s32.totalorder %v56, %v4030
    %vm4767 = vcmp.eq.s32.totalorder %v56, %v4034
    %vm4768 = vcmp.eq.s32.totalorder %v56, %v4038
    %vm4769 = vcmp.eq.s32.totalorder %v56, %v4042
    %vm4770 = vcmp.eq.s32.totalorder %v56, %v4046
    %vm4771 = vcmp.eq.s32.totalorder %v56, %v4050
    %vm4772 = vcmp.eq.s32.totalorder %v56, %v4054
    %vm4773 = vcmp.eq.s32.totalorder %v56, %v4058
    %vm4774 = vcmp.eq.s32.totalorder %v56, %v4062
    %vm4775 = vcmp.eq.s32.totalorder %v56, %v4066
    %vm4776 = vcmp.eq.s32.totalorder %v56, %v4070
    %vm4777 = vcmp.eq.s32.totalorder %v56, %v4074
    %vm4778 = vcmp.eq.s32.totalorder %v56, %v4078
    %vm4779 = vcmp.eq.s32.totalorder %v56, %v4082
    %vm4780 = vcmp.eq.s32.totalorder %v56, %v4086
    %vm4781 = vcmp.eq.s32.totalorder %v56, %v4090
    %vm4782 = vcmp.eq.s32.totalorder %v56, %v4094
    %vm4783 = vcmp.eq.s32.totalorder %v56, %v4098
    %vm4784 = vcmp.eq.s32.totalorder %v56, %v4102
    %vm4785 = vcmp.eq.s32.totalorder %v56, %v4106
    %vm4786 = vcmp.eq.s32.totalorder %v56, %v4110
    %vm4787 = vcmp.eq.s32.totalorder %v56, %v4114
    %vm4788 = vcmp.eq.s32.totalorder %v56, %v4118
    %vm4789 = vcmp.eq.s32.totalorder %v56, %v4122
    %vm4790 = vcmp.eq.s32.totalorder %v56, %v4126
    %vm4791 = vcmp.eq.s32.totalorder %v56, %v4130
    %vm4792 = vcmp.eq.s32.totalorder %v56, %v4134
    %vm4793 = vcmp.eq.s32.totalorder %v56, %v4138
    %vm4794 = vcmp.eq.s32.totalorder %v56, %v4142
    %vm4795 = vcmp.eq.s32.totalorder %v56, %v4146
    %vm4796 = vcmp.eq.s32.totalorder %v56, %v4150
    %vm4797 = vcmp.eq.s32.totalorder %v56, %v4154
    %vm4798 = vcmp.eq.s32.totalorder %v56, %v4158
    %vm4799 = vcmp.eq.s32.totalorder %v57, %v3906
    %vm4800 = vcmp.eq.s32.totalorder %v57, %v3910
    %vm4801 = vcmp.eq.s32.totalorder %v57, %v3914
    %vm4802 = vcmp.eq.s32.totalorder %v57, %v3918
    %vm4803 = vcmp.eq.s32.totalorder %v57, %v3922
    %vm4804 = vcmp.eq.s32.totalorder %v57, %v3926
    %vm4805 = vcmp.eq.s32.totalorder %v57, %v3930
    %vm4806 = vcmp.eq.s32.totalorder %v57, %v3934
    %vm4807 = vcmp.eq.s32.totalorder %v57, %v3938
    %vm4808 = vcmp.eq.s32.totalorder %v57, %v3942
    %vm4809 = vcmp.eq.s32.totalorder %v57, %v3946
    %vm4810 = vcmp.eq.s32.totalorder %v57, %v3950
    %vm4811 = vcmp.eq.s32.totalorder %v57, %v3954
    %vm4812 = vcmp.eq.s32.totalorder %v57, %v3958
    %vm4813 = vcmp.eq.s32.totalorder %v57, %v3962
    %vm4814 = vcmp.eq.s32.totalorder %v57, %v3966
    %vm4815 = vcmp.eq.s32.totalorder %v57, %v3970
    %vm4816 = vcmp.eq.s32.totalorder %v57, %v3974
    %vm4817 = vcmp.eq.s32.totalorder %v57, %v3978
    %vm4818 = vcmp.eq.s32.totalorder %v57, %v3982
    %vm4819 = vcmp.eq.s32.totalorder %v57, %v3986
    %vm4820 = vcmp.eq.s32.totalorder %v57, %v3990
    %vm4821 = vcmp.eq.s32.totalorder %v57, %v3994
    %vm4822 = vcmp.eq.s32.totalorder %v57, %v3998
    %vm4823 = vcmp.eq.s32.totalorder %v57, %v4002
    %vm4824 = vcmp.eq.s32.totalorder %v57, %v4006
    %vm4825 = vcmp.eq.s32.totalorder %v57, %v4010
    %vm4826 = vcmp.eq.s32.totalorder %v57, %v4014
    %vm4827 = vcmp.eq.s32.totalorder %v57, %v4018
    %vm4828 = vcmp.eq.s32.totalorder %v57, %v4022
    %vm4829 = vcmp.eq.s32.totalorder %v57, %v4026
    %vm4830 = vcmp.eq.s32.totalorder %v57, %v4030
    %vm4831 = vcmp.eq.s32.totalorder %v57, %v4034
    %vm4832 = vcmp.eq.s32.totalorder %v57, %v4038
    %vm4833 = vcmp.eq.s32.totalorder %v57, %v4042
    %vm4834 = vcmp.eq.s32.totalorder %v57, %v4046
    %vm4835 = vcmp.eq.s32.totalorder %v57, %v4050
    %vm4836 = vcmp.eq.s32.totalorder %v57, %v4054
    %vm4837 = vcmp.eq.s32.totalorder %v57, %v4058
    %vm4838 = vcmp.eq.s32.totalorder %v57, %v4062
    %vm4839 = vcmp.eq.s32.totalorder %v57, %v4066
    %vm4840 = vcmp.eq.s32.totalorder %v57, %v4070
    %vm4841 = vcmp.eq.s32.totalorder %v57, %v4074
    %vm4842 = vcmp.eq.s32.totalorder %v57, %v4078
    %vm4843 = vcmp.eq.s32.totalorder %v57, %v4082
    %vm4844 = vcmp.eq.s32.totalorder %v57, %v4086
    %vm4845 = vcmp.eq.s32.totalorder %v57, %v4090
    %vm4846 = vcmp.eq.s32.totalorder %v57, %v4094
    %vm4847 = vcmp.eq.s32.totalorder %v57, %v4098
    %vm4848 = vcmp.eq.s32.totalorder %v57, %v4102
    %vm4849 = vcmp.eq.s32.totalorder %v57, %v4106
    %vm4850 = vcmp.eq.s32.totalorder %v57, %v4110
    %vm4851 = vcmp.eq.s32.totalorder %v57, %v4114
    %vm4852 = vcmp.eq.s32.totalorder %v57, %v4118
    %vm4853 = vcmp.eq.s32.totalorder %v57, %v4122
    %vm4854 = vcmp.eq.s32.totalorder %v57, %v4126
    %vm4855 = vcmp.eq.s32.totalorder %v57, %v4130
    %vm4856 = vcmp.eq.s32.totalorder %v57, %v4134
    %vm4857 = vcmp.eq.s32.totalorder %v57, %v4138
    %vm4858 = vcmp.eq.s32.totalorder %v57, %v4142
    %vm4859 = vcmp.eq.s32.totalorder %v57, %v4146
    %vm4860 = vcmp.eq.s32.totalorder %v57, %v4150
    %vm4861 = vcmp.eq.s32.totalorder %v57, %v4154
    %vm4862 = vcmp.eq.s32.totalorder %v57, %v4158
    %vm4863 = vcmp.eq.s32.totalorder %v58, %v3906
    %vm4864 = vcmp.eq.s32.totalorder %v58, %v3910
    %vm4865 = vcmp.eq.s32.totalorder %v58, %v3914
    %vm4866 = vcmp.eq.s32.totalorder %v58, %v3918
    %vm4867 = vcmp.eq.s32.totalorder %v58, %v3922
    %vm4868 = vcmp.eq.s32.totalorder %v58, %v3926
    %vm4869 = vcmp.eq.s32.totalorder %v58, %v3930
    %vm4870 = vcmp.eq.s32.totalorder %v58, %v3934
    %vm4871 = vcmp.eq.s32.totalorder %v58, %v3938
    %vm4872 = vcmp.eq.s32.totalorder %v58, %v3942
    %vm4873 = vcmp.eq.s32.totalorder %v58, %v3946
    %vm4874 = vcmp.eq.s32.totalorder %v58, %v3950
    %vm4875 = vcmp.eq.s32.totalorder %v58, %v3954
    %vm4876 = vcmp.eq.s32.totalorder %v58, %v3958
    %vm4877 = vcmp.eq.s32.totalorder %v58, %v3962
    %vm4878 = vcmp.eq.s32.totalorder %v58, %v3966
    %vm4879 = vcmp.eq.s32.totalorder %v58, %v3970
    %vm4880 = vcmp.eq.s32.totalorder %v58, %v3974
    %vm4881 = vcmp.eq.s32.totalorder %v58, %v3978
    %vm4882 = vcmp.eq.s32.totalorder %v58, %v3982
    %vm4883 = vcmp.eq.s32.totalorder %v58, %v3986
    %vm4884 = vcmp.eq.s32.totalorder %v58, %v3990
    %vm4885 = vcmp.eq.s32.totalorder %v58, %v3994
    %vm4886 = vcmp.eq.s32.totalorder %v58, %v3998
    %vm4887 = vcmp.eq.s32.totalorder %v58, %v4002
    %vm4888 = vcmp.eq.s32.totalorder %v58, %v4006
    %vm4889 = vcmp.eq.s32.totalorder %v58, %v4010
    %vm4890 = vcmp.eq.s32.totalorder %v58, %v4014
    %vm4891 = vcmp.eq.s32.totalorder %v58, %v4018
    %vm4892 = vcmp.eq.s32.totalorder %v58, %v4022
    %vm4893 = vcmp.eq.s32.totalorder %v58, %v4026
    %vm4894 = vcmp.eq.s32.totalorder %v58, %v4030
    %vm4895 = vcmp.eq.s32.totalorder %v58, %v4034
    %vm4896 = vcmp.eq.s32.totalorder %v58, %v4038
    %vm4897 = vcmp.eq.s32.totalorder %v58, %v4042
    %vm4898 = vcmp.eq.s32.totalorder %v58, %v4046
    %vm4899 = vcmp.eq.s32.totalorder %v58, %v4050
    %vm4900 = vcmp.eq.s32.totalorder %v58, %v4054
    %vm4901 = vcmp.eq.s32.totalorder %v58, %v4058
    %vm4902 = vcmp.eq.s32.totalorder %v58, %v4062
    %vm4903 = vcmp.eq.s32.totalorder %v58, %v4066
    %vm4904 = vcmp.eq.s32.totalorder %v58, %v4070
    %vm4905 = vcmp.eq.s32.totalorder %v58, %v4074
    %vm4906 = vcmp.eq.s32.totalorder %v58, %v4078
    %vm4907 = vcmp.eq.s32.totalorder %v58, %v4082
    %vm4908 = vcmp.eq.s32.totalorder %v58, %v4086
    %vm4909 = vcmp.eq.s32.totalorder %v58, %v4090
    %vm4910 = vcmp.eq.s32.totalorder %v58, %v4094
    %vm4911 = vcmp.eq.s32.totalorder %v58, %v4098
    %vm4912 = vcmp.eq.s32.totalorder %v58, %v4102
    %vm4913 = vcmp.eq.s32.totalorder %v58, %v4106
    %vm4914 = vcmp.eq.s32.totalorder %v58, %v4110
    %vm4915 = vcmp.eq.s32.totalorder %v58, %v4114
    %vm4916 = vcmp.eq.s32.totalorder %v58, %v4118
    %vm4917 = vcmp.eq.s32.totalorder %v58, %v4122
    %vm4918 = vcmp.eq.s32.totalorder %v58, %v4126
    %vm4919 = vcmp.eq.s32.totalorder %v58, %v4130
    %vm4920 = vcmp.eq.s32.totalorder %v58, %v4134
    %vm4921 = vcmp.eq.s32.totalorder %v58, %v4138
    %vm4922 = vcmp.eq.s32.totalorder %v58, %v4142
    %vm4923 = vcmp.eq.s32.totalorder %v58, %v4146
    %vm4924 = vcmp.eq.s32.totalorder %v58, %v4150
    %vm4925 = vcmp.eq.s32.totalorder %v58, %v4154
    %vm4926 = vcmp.eq.s32.totalorder %v58, %v4158
    %vm4927 = vcmp.eq.s32.totalorder %v59, %v3906
    %vm4928 = vcmp.eq.s32.totalorder %v59, %v3910
    %vm4929 = vcmp.eq.s32.totalorder %v59, %v3914
    %vm4930 = vcmp.eq.s32.totalorder %v59, %v3918
    %vm4931 = vcmp.eq.s32.totalorder %v59, %v3922
    %vm4932 = vcmp.eq.s32.totalorder %v59, %v3926
    %vm4933 = vcmp.eq.s32.totalorder %v59, %v3930
    %vm4934 = vcmp.eq.s32.totalorder %v59, %v3934
    %vm4935 = vcmp.eq.s32.totalorder %v59, %v3938
    %vm4936 = vcmp.eq.s32.totalorder %v59, %v3942
    %vm4937 = vcmp.eq.s32.totalorder %v59, %v3946
    %vm4938 = vcmp.eq.s32.totalorder %v59, %v3950
    %vm4939 = vcmp.eq.s32.totalorder %v59, %v3954
    %vm4940 = vcmp.eq.s32.totalorder %v59, %v3958
    %vm4941 = vcmp.eq.s32.totalorder %v59, %v3962
    %vm4942 = vcmp.eq.s32.totalorder %v59, %v3966
    %vm4943 = vcmp.eq.s32.totalorder %v59, %v3970
    %vm4944 = vcmp.eq.s32.totalorder %v59, %v3974
    %vm4945 = vcmp.eq.s32.totalorder %v59, %v3978
    %vm4946 = vcmp.eq.s32.totalorder %v59, %v3982
    %vm4947 = vcmp.eq.s32.totalorder %v59, %v3986
    %vm4948 = vcmp.eq.s32.totalorder %v59, %v3990
    %vm4949 = vcmp.eq.s32.totalorder %v59, %v3994
    %vm4950 = vcmp.eq.s32.totalorder %v59, %v3998
    %vm4951 = vcmp.eq.s32.totalorder %v59, %v4002
    %vm4952 = vcmp.eq.s32.totalorder %v59, %v4006
    %vm4953 = vcmp.eq.s32.totalorder %v59, %v4010
    %vm4954 = vcmp.eq.s32.totalorder %v59, %v4014
    %vm4955 = vcmp.eq.s32.totalorder %v59, %v4018
    %vm4956 = vcmp.eq.s32.totalorder %v59, %v4022
    %vm4957 = vcmp.eq.s32.totalorder %v59, %v4026
    %vm4958 = vcmp.eq.s32.totalorder %v59, %v4030
    %vm4959 = vcmp.eq.s32.totalorder %v59, %v4034
    %vm4960 = vcmp.eq.s32.totalorder %v59, %v4038
    %vm4961 = vcmp.eq.s32.totalorder %v59, %v4042
    %vm4962 = vcmp.eq.s32.totalorder %v59, %v4046
    %vm4963 = vcmp.eq.s32.totalorder %v59, %v4050
    %vm4964 = vcmp.eq.s32.totalorder %v59, %v4054
    %vm4965 = vcmp.eq.s32.totalorder %v59, %v4058
    %vm4966 = vcmp.eq.s32.totalorder %v59, %v4062
    %vm4967 = vcmp.eq.s32.totalorder %v59, %v4066
    %vm4968 = vcmp.eq.s32.totalorder %v59, %v4070
    %vm4969 = vcmp.eq.s32.totalorder %v59, %v4074
    %vm4970 = vcmp.eq.s32.totalorder %v59, %v4078
    %vm4971 = vcmp.eq.s32.totalorder %v59, %v4082
    %vm4972 = vcmp.eq.s32.totalorder %v59, %v4086
    %vm4973 = vcmp.eq.s32.totalorder %v59, %v4090
    %vm4974 = vcmp.eq.s32.totalorder %v59, %v4094
    %vm4975 = vcmp.eq.s32.totalorder %v59, %v4098
    %vm4976 = vcmp.eq.s32.totalorder %v59, %v4102
    %vm4977 = vcmp.eq.s32.totalorder %v59, %v4106
    %vm4978 = vcmp.eq.s32.totalorder %v59, %v4110
    %vm4979 = vcmp.eq.s32.totalorder %v59, %v4114
    %vm4980 = vcmp.eq.s32.totalorder %v59, %v4118
    %vm4981 = vcmp.eq.s32.totalorder %v59, %v4122
    %vm4982 = vcmp.eq.s32.totalorder %v59, %v4126
    %vm4983 = vcmp.eq.s32.totalorder %v59, %v4130
    %vm4984 = vcmp.eq.s32.totalorder %v59, %v4134
    %vm4985 = vcmp.eq.s32.totalorder %v59, %v4138
    %vm4986 = vcmp.eq.s32.totalorder %v59, %v4142
    %vm4987 = vcmp.eq.s32.totalorder %v59, %v4146
    %vm4988 = vcmp.eq.s32.totalorder %v59, %v4150
    %vm4989 = vcmp.eq.s32.totalorder %v59, %v4154
    %vm4990 = vcmp.eq.s32.totalorder %v59, %v4158
    %vm4991 = vcmp.eq.s32.totalorder %v60, %v3906
    %vm4992 = vcmp.eq.s32.totalorder %v60, %v3910
    %vm4993 = vcmp.eq.s32.totalorder %v60, %v3914
    %vm4994 = vcmp.eq.s32.totalorder %v60, %v3918
    %vm4995 = vcmp.eq.s32.totalorder %v60, %v3922
    %vm4996 = vcmp.eq.s32.totalorder %v60, %v3926
    %vm4997 = vcmp.eq.s32.totalorder %v60, %v3930
    %vm4998 = vcmp.eq.s32.totalorder %v60, %v3934
    %vm4999 = vcmp.eq.s32.totalorder %v60, %v3938
    %vm5000 = vcmp.eq.s32.totalorder %v60, %v3942
    %vm5001 = vcmp.eq.s32.totalorder %v60, %v3946
    %vm5002 = vcmp.eq.s32.totalorder %v60, %v3950
    %vm5003 = vcmp.eq.s32.totalorder %v60, %v3954
    %vm5004 = vcmp.eq.s32.totalorder %v60, %v3958
    %vm5005 = vcmp.eq.s32.totalorder %v60, %v3962
    %vm5006 = vcmp.eq.s32.totalorder %v60, %v3966
    %vm5007 = vcmp.eq.s32.totalorder %v60, %v3970
    %vm5008 = vcmp.eq.s32.totalorder %v60, %v3974
    %vm5009 = vcmp.eq.s32.totalorder %v60, %v3978
    %vm5010 = vcmp.eq.s32.totalorder %v60, %v3982
    %vm5011 = vcmp.eq.s32.totalorder %v60, %v3986
    %vm5012 = vcmp.eq.s32.totalorder %v60, %v3990
    %vm5013 = vcmp.eq.s32.totalorder %v60, %v3994
    %vm5014 = vcmp.eq.s32.totalorder %v60, %v3998
    %vm5015 = vcmp.eq.s32.totalorder %v60, %v4002
    %vm5016 = vcmp.eq.s32.totalorder %v60, %v4006
    %vm5017 = vcmp.eq.s32.totalorder %v60, %v4010
    %vm5018 = vcmp.eq.s32.totalorder %v60, %v4014
    %vm5019 = vcmp.eq.s32.totalorder %v60, %v4018
    %vm5020 = vcmp.eq.s32.totalorder %v60, %v4022
    %vm5021 = vcmp.eq.s32.totalorder %v60, %v4026
    %vm5022 = vcmp.eq.s32.totalorder %v60, %v4030
    %vm5023 = vcmp.eq.s32.totalorder %v60, %v4034
    %vm5024 = vcmp.eq.s32.totalorder %v60, %v4038
    %vm5025 = vcmp.eq.s32.totalorder %v60, %v4042
    %vm5026 = vcmp.eq.s32.totalorder %v60, %v4046
    %vm5027 = vcmp.eq.s32.totalorder %v60, %v4050
    %vm5028 = vcmp.eq.s32.totalorder %v60, %v4054
    %vm5029 = vcmp.eq.s32.totalorder %v60, %v4058
    %vm5030 = vcmp.eq.s32.totalorder %v60, %v4062
    %vm5031 = vcmp.eq.s32.totalorder %v60, %v4066
    %vm5032 = vcmp.eq.s32.totalorder %v60, %v4070
    %vm5033 = vcmp.eq.s32.totalorder %v60, %v4074
    %vm5034 = vcmp.eq.s32.totalorder %v60, %v4078
    %vm5035 = vcmp.eq.s32.totalorder %v60, %v4082
    %vm5036 = vcmp.eq.s32.totalorder %v60, %v4086
    %vm5037 = vcmp.eq.s32.totalorder %v60, %v4090
    %vm5038 = vcmp.eq.s32.totalorder %v60, %v4094
    %vm5039 = vcmp.eq.s32.totalorder %v60, %v4098
    %vm5040 = vcmp.eq.s32.totalorder %v60, %v4102
    %vm5041 = vcmp.eq.s32.totalorder %v60, %v4106
    %vm5042 = vcmp.eq.s32.totalorder %v60, %v4110
    %vm5043 = vcmp.eq.s32.totalorder %v60, %v4114
    %vm5044 = vcmp.eq.s32.totalorder %v60, %v4118
    %vm5045 = vcmp.eq.s32.totalorder %v60, %v4122
    %vm5046 = vcmp.eq.s32.totalorder %v60, %v4126
    %vm5047 = vcmp.eq.s32.totalorder %v60, %v4130
    %vm5048 = vcmp.eq.s32.totalorder %v60, %v4134
    %vm5049 = vcmp.eq.s32.totalorder %v60, %v4138
    %vm5050 = vcmp.eq.s32.totalorder %v60, %v4142
    %vm5051 = vcmp.eq.s32.totalorder %v60, %v4146
    %vm5052 = vcmp.eq.s32.totalorder %v60, %v4150
    %vm5053 = vcmp.eq.s32.totalorder %v60, %v4154
    %vm5054 = vcmp.eq.s32.totalorder %v60, %v4158
    %vm5055 = vcmp.eq.s32.totalorder %v61, %v3906
    %vm5056 = vcmp.eq.s32.totalorder %v61, %v3910
    %vm5057 = vcmp.eq.s32.totalorder %v61, %v3914
    %vm5058 = vcmp.eq.s32.totalorder %v61, %v3918
    %vm5059 = vcmp.eq.s32.totalorder %v61, %v3922
    %vm5060 = vcmp.eq.s32.totalorder %v61, %v3926
    %vm5061 = vcmp.eq.s32.totalorder %v61, %v3930
    %vm5062 = vcmp.eq.s32.totalorder %v61, %v3934
    %vm5063 = vcmp.eq.s32.totalorder %v61, %v3938
    %vm5064 = vcmp.eq.s32.totalorder %v61, %v3942
    %vm5065 = vcmp.eq.s32.totalorder %v61, %v3946
    %vm5066 = vcmp.eq.s32.totalorder %v61, %v3950
    %vm5067 = vcmp.eq.s32.totalorder %v61, %v3954
    %vm5068 = vcmp.eq.s32.totalorder %v61, %v3958
    %vm5069 = vcmp.eq.s32.totalorder %v61, %v3962
    %vm5070 = vcmp.eq.s32.totalorder %v61, %v3966
    %vm5071 = vcmp.eq.s32.totalorder %v61, %v3970
    %vm5072 = vcmp.eq.s32.totalorder %v61, %v3974
    %vm5073 = vcmp.eq.s32.totalorder %v61, %v3978
    %vm5074 = vcmp.eq.s32.totalorder %v61, %v3982
    %vm5075 = vcmp.eq.s32.totalorder %v61, %v3986
    %vm5076 = vcmp.eq.s32.totalorder %v61, %v3990
    %vm5077 = vcmp.eq.s32.totalorder %v61, %v3994
    %vm5078 = vcmp.eq.s32.totalorder %v61, %v3998
    %vm5079 = vcmp.eq.s32.totalorder %v61, %v4002
    %vm5080 = vcmp.eq.s32.totalorder %v61, %v4006
    %vm5081 = vcmp.eq.s32.totalorder %v61, %v4010
    %vm5082 = vcmp.eq.s32.totalorder %v61, %v4014
    %vm5083 = vcmp.eq.s32.totalorder %v61, %v4018
    %vm5084 = vcmp.eq.s32.totalorder %v61, %v4022
    %vm5085 = vcmp.eq.s32.totalorder %v61, %v4026
    %vm5086 = vcmp.eq.s32.totalorder %v61, %v4030
    %vm5087 = vcmp.eq.s32.totalorder %v61, %v4034
    %vm5088 = vcmp.eq.s32.totalorder %v61, %v4038
    %vm5089 = vcmp.eq.s32.totalorder %v61, %v4042
    %vm5090 = vcmp.eq.s32.totalorder %v61, %v4046
    %vm5091 = vcmp.eq.s32.totalorder %v61, %v4050
    %vm5092 = vcmp.eq.s32.totalorder %v61, %v4054
    %vm5093 = vcmp.eq.s32.totalorder %v61, %v4058
    %vm5094 = vcmp.eq.s32.totalorder %v61, %v4062
    %vm5095 = vcmp.eq.s32.totalorder %v61, %v4066
    %vm5096 = vcmp.eq.s32.totalorder %v61, %v4070
    %vm5097 = vcmp.eq.s32.totalorder %v61, %v4074
    %vm5098 = vcmp.eq.s32.totalorder %v61, %v4078
    %vm5099 = vcmp.eq.s32.totalorder %v61, %v4082
    %vm5100 = vcmp.eq.s32.totalorder %v61, %v4086
    %vm5101 = vcmp.eq.s32.totalorder %v61, %v4090
    %vm5102 = vcmp.eq.s32.totalorder %v61, %v4094
    %vm5103 = vcmp.eq.s32.totalorder %v61, %v4098
    %vm5104 = vcmp.eq.s32.totalorder %v61, %v4102
    %vm5105 = vcmp.eq.s32.totalorder %v61, %v4106
    %vm5106 = vcmp.eq.s32.totalorder %v61, %v4110
    %vm5107 = vcmp.eq.s32.totalorder %v61, %v4114
    %vm5108 = vcmp.eq.s32.totalorder %v61, %v4118
    %vm5109 = vcmp.eq.s32.totalorder %v61, %v4122
    %vm5110 = vcmp.eq.s32.totalorder %v61, %v4126
    %vm5111 = vcmp.eq.s32.totalorder %v61, %v4130
    %vm5112 = vcmp.eq.s32.totalorder %v61, %v4134
    %vm5113 = vcmp.eq.s32.totalorder %v61, %v4138
    %vm5114 = vcmp.eq.s32.totalorder %v61, %v4142
    %vm5115 = vcmp.eq.s32.totalorder %v61, %v4146
    %vm5116 = vcmp.eq.s32.totalorder %v61, %v4150
    %vm5117 = vcmp.eq.s32.totalorder %v61, %v4154
    %vm5118 = vcmp.eq.s32.totalorder %v61, %v4158
    %vm5119 = vcmp.eq.s32.totalorder %v62, %v3906
    %vm5120 = vcmp.eq.s32.totalorder %v62, %v3910
    %vm5121 = vcmp.eq.s32.totalorder %v62, %v3914
    %vm5122 = vcmp.eq.s32.totalorder %v62, %v3918
    %vm5123 = vcmp.eq.s32.totalorder %v62, %v3922
    %vm5124 = vcmp.eq.s32.totalorder %v62, %v3926
    %vm5125 = vcmp.eq.s32.totalorder %v62, %v3930
    %vm5126 = vcmp.eq.s32.totalorder %v62, %v3934
    %vm5127 = vcmp.eq.s32.totalorder %v62, %v3938
    %vm5128 = vcmp.eq.s32.totalorder %v62, %v3942
    %vm5129 = vcmp.eq.s32.totalorder %v62, %v3946
    %vm5130 = vcmp.eq.s32.totalorder %v62, %v3950
    %vm5131 = vcmp.eq.s32.totalorder %v62, %v3954
    %vm5132 = vcmp.eq.s32.totalorder %v62, %v3958
    %vm5133 = vcmp.eq.s32.totalorder %v62, %v3962
    %vm5134 = vcmp.eq.s32.totalorder %v62, %v3966
    %vm5135 = vcmp.eq.s32.totalorder %v62, %v3970
    %vm5136 = vcmp.eq.s32.totalorder %v62, %v3974
    %vm5137 = vcmp.eq.s32.totalorder %v62, %v3978
    %vm5138 = vcmp.eq.s32.totalorder %v62, %v3982
    %vm5139 = vcmp.eq.s32.totalorder %v62, %v3986
    %vm5140 = vcmp.eq.s32.totalorder %v62, %v3990
    %vm5141 = vcmp.eq.s32.totalorder %v62, %v3994
    %vm5142 = vcmp.eq.s32.totalorder %v62, %v3998
    %vm5143 = vcmp.eq.s32.totalorder %v62, %v4002
    %vm5144 = vcmp.eq.s32.totalorder %v62, %v4006
    %vm5145 = vcmp.eq.s32.totalorder %v62, %v4010
    %vm5146 = vcmp.eq.s32.totalorder %v62, %v4014
    %vm5147 = vcmp.eq.s32.totalorder %v62, %v4018
    %vm5148 = vcmp.eq.s32.totalorder %v62, %v4022
    %vm5149 = vcmp.eq.s32.totalorder %v62, %v4026
    %vm5150 = vcmp.eq.s32.totalorder %v62, %v4030
    %vm5151 = vcmp.eq.s32.totalorder %v62, %v4034
    %vm5152 = vcmp.eq.s32.totalorder %v62, %v4038
    %vm5153 = vcmp.eq.s32.totalorder %v62, %v4042
    %vm5154 = vcmp.eq.s32.totalorder %v62, %v4046
    %vm5155 = vcmp.eq.s32.totalorder %v62, %v4050
    %vm5156 = vcmp.eq.s32.totalorder %v62, %v4054
    %vm5157 = vcmp.eq.s32.totalorder %v62, %v4058
    %vm5158 = vcmp.eq.s32.totalorder %v62, %v4062
    %vm5159 = vcmp.eq.s32.totalorder %v62, %v4066
    %vm5160 = vcmp.eq.s32.totalorder %v62, %v4070
    %vm5161 = vcmp.eq.s32.totalorder %v62, %v4074
    %vm5162 = vcmp.eq.s32.totalorder %v62, %v4078
    %vm5163 = vcmp.eq.s32.totalorder %v62, %v4082
    %vm5164 = vcmp.eq.s32.totalorder %v62, %v4086
    %vm5165 = vcmp.eq.s32.totalorder %v62, %v4090
    %vm5166 = vcmp.eq.s32.totalorder %v62, %v4094
    %vm5167 = vcmp.eq.s32.totalorder %v62, %v4098
    %vm5168 = vcmp.eq.s32.totalorder %v62, %v4102
    %vm5169 = vcmp.eq.s32.totalorder %v62, %v4106
    %vm5170 = vcmp.eq.s32.totalorder %v62, %v4110
    %vm5171 = vcmp.eq.s32.totalorder %v62, %v4114
    %vm5172 = vcmp.eq.s32.totalorder %v62, %v4118
    %vm5173 = vcmp.eq.s32.totalorder %v62, %v4122
    %vm5174 = vcmp.eq.s32.totalorder %v62, %v4126
    %vm5175 = vcmp.eq.s32.totalorder %v62, %v4130
    %vm5176 = vcmp.eq.s32.totalorder %v62, %v4134
    %vm5177 = vcmp.eq.s32.totalorder %v62, %v4138
    %vm5178 = vcmp.eq.s32.totalorder %v62, %v4142
    %vm5179 = vcmp.eq.s32.totalorder %v62, %v4146
    %vm5180 = vcmp.eq.s32.totalorder %v62, %v4150
    %vm5181 = vcmp.eq.s32.totalorder %v62, %v4154
    %vm5182 = vcmp.eq.s32.totalorder %v62, %v4158
    %v5183 = vsel %vm4159, 1, 0
    %v5184 = vsel %vm4160, 1, 0
    %v5185 = vsel %vm4161, 1, 0
    %v5186 = vsel %vm4162, 1, 0
    %v5187 = vsel %vm4163, 1, 0
    %v5188 = vsel %vm4164, 1, 0
    %v5189 = vsel %vm4165, 1, 0
    %v5190 = vsel %vm4166, 1, 0
    %v5191 = vsel %vm4167, 1, 0
    %v5192 = vsel %vm4168, 1, 0
    %v5193 = vsel %vm4169, 1, 0
    %v5194 = vsel %vm4170, 1, 0
    %v5195 = vsel %vm4171, 1, 0
    %v5196 = vsel %vm4172, 1, 0
    %v5197 = vsel %vm4173, 1, 0
    %v5198 = vsel %vm4174, 1, 0
    %v5199 = vsel %vm4175, 1, 0
    %v5200 = vsel %vm4176, 1, 0
    %v5201 = vsel %vm4177, 1, 0
    %v5202 = vsel %vm4178, 1, 0
    %v5203 = vsel %vm4179, 1, 0
    %v5204 = vsel %vm4180, 1, 0
    %v5205 = vsel %vm4181, 1, 0
    %v5206 = vsel %vm4182, 1, 0
    %v5207 = vsel %vm4183, 1, 0
    %v5208 = vsel %vm4184, 1, 0
    %v5209 = vsel %vm4185, 1, 0
    %v5210 = vsel %vm4186, 1, 0
    %v5211 = vsel %vm4187, 1, 0
    %v5212 = vsel %vm4188, 1, 0
    %v5213 = vsel %vm4189, 1, 0
    %v5214 = vsel %vm4190, 1, 0
    %v5215 = vsel %vm4191, 1, 0
    %v5216 = vsel %vm4192, 1, 0
    %v5217 = vsel %vm4193, 1, 0
    %v5218 = vsel %vm4194, 1, 0
    %v5219 = vsel %vm4195, 1, 0
    %v5220 = vsel %vm4196, 1, 0
    %v5221 = vsel %vm4197, 1, 0
    %v5222 = vsel %vm4198, 1, 0
    %v5223 = vsel %vm4199, 1, 0
    %v5224 = vsel %vm4200, 1, 0
    %v5225 = vsel %vm4201, 1, 0
    %v5226 = vsel %vm4202, 1, 0
    %v5227 = vsel %vm4203, 1, 0
    %v5228 = vsel %vm4204, 1, 0
    %v5229 = vsel %vm4205, 1, 0
    %v5230 = vsel %vm4206, 1, 0
    %v5231 = vsel %vm4207, 1, 0
    %v5232 = vsel %vm4208, 1, 0
    %v5233 = vsel %vm4209, 1, 0
    %v5234 = vsel %vm4210, 1, 0
    %v5235 = vsel %vm4211, 1, 0
    %v5236 = vsel %vm4212, 1, 0
    %v5237 = vsel %vm4213, 1, 0
    %v5238 = vsel %vm4214, 1, 0
    %v5239 = vsel %vm4215, 1, 0
    %v5240 = vsel %vm4216, 1, 0
    %v5241 = vsel %vm4217, 1, 0
    %v5242 = vsel %vm4218, 1, 0
    %v5243 = vsel %vm4219, 1, 0
    %v5244 = vsel %vm4220, 1, 0
    %v5245 = vsel %vm4221, 1, 0
    %v5246 = vsel %vm4222, 1, 0
    %v5247 = vsel %vm4223, 1, 0
    %v5248 = vsel %vm4224, 1, 0
    %v5249 = vsel %vm4225, 1, 0
    %v5250 = vsel %vm4226, 1, 0
    %v5251 = vsel %vm4227, 1, 0
    %v5252 = vsel %vm4228, 1, 0
    %v5253 = vsel %vm4229, 1, 0
    %v5254 = vsel %vm4230, 1, 0
    %v5255 = vsel %vm4231, 1, 0
    %v5256 = vsel %vm4232, 1, 0
    %v5257 = vsel %vm4233, 1, 0
    %v5258 = vsel %vm4234, 1, 0
    %v5259 = vsel %vm4235, 1, 0
    %v5260 = vsel %vm4236, 1, 0
    %v5261 = vsel %vm4237, 1, 0
    %v5262 = vsel %vm4238, 1, 0
    %v5263 = vsel %vm4239, 1, 0
    %v5264 = vsel %vm4240, 1, 0
    %v5265 = vsel %vm4241, 1, 0
    %v5266 = vsel %vm4242, 1, 0
    %v5267 = vsel %vm4243, 1, 0
    %v5268 = vsel %vm4244, 1, 0
    %v5269 = vsel %vm4245, 1, 0
    %v5270 = vsel %vm4246, 1, 0
    %v5271 = vsel %vm4247, 1, 0
    %v5272 = vsel %vm4248, 1, 0
    %v5273 = vsel %vm4249, 1, 0
    %v5274 = vsel %vm4250, 1, 0
    %v5275 = vsel %vm4251, 1, 0
    %v5276 = vsel %vm4252, 1, 0
    %v5277 = vsel %vm4253, 1, 0
    %v5278 = vsel %vm4254, 1, 0
    %v5279 = vsel %vm4255, 1, 0
    %v5280 = vsel %vm4256, 1, 0
    %v5281 = vsel %vm4257, 1, 0
    %v5282 = vsel %vm4258, 1, 0
    %v5283 = vsel %vm4259, 1, 0
    %v5284 = vsel %vm4260, 1, 0
    %v5285 = vsel %vm4261, 1, 0
    %v5286 = vsel %vm4262, 1, 0
    %v5287 = vsel %vm4263, 1, 0
    %v5288 = vsel %vm4264, 1, 0
    %v5289 = vsel %vm4265, 1, 0
    %v5290 = vsel %vm4266, 1, 0
    %v5291 = vsel %vm4267, 1, 0
    %v5292 = vsel %vm4268, 1, 0
    %v5293 = vsel %vm4269, 1, 0
    %v5294 = vsel %vm4270, 1, 0
    %v5295 = vsel %vm4271, 1, 0
    %v5296 = vsel %vm4272, 1, 0
    %v5297 = vsel %vm4273, 1, 0
    %v5298 = vsel %vm4274, 1, 0
    %v5299 = vsel %vm4275, 1, 0
    %v5300 = vsel %vm4276, 1, 0
    %v5301 = vsel %vm4277, 1, 0
    %v5302 = vsel %vm4278, 1, 0
    %v5303 = vsel %vm4279, 1, 0
    %v5304 = vsel %vm4280, 1, 0
    %v5305 = vsel %vm4281, 1, 0
    %v5306 = vsel %vm4282, 1, 0
    %v5307 = vsel %vm4283, 1, 0
    %v5308 = vsel %vm4284, 1, 0
    %v5309 = vsel %vm4285, 1, 0
    %v5310 = vsel %vm4286, 1, 0
    %v5311 = vsel %vm4287, 1, 0
    %v5312 = vsel %vm4288, 1, 0
    %v5313 = vsel %vm4289, 1, 0
    %v5314 = vsel %vm4290, 1, 0
    %v5315 = vsel %vm4291, 1, 0
    %v5316 = vsel %vm4292, 1, 0
    %v5317 = vsel %vm4293, 1, 0
    %v5318 = vsel %vm4294, 1, 0
    %v5319 = vsel %vm4295, 1, 0
    %v5320 = vsel %vm4296, 1, 0
    %v5321 = vsel %vm4297, 1, 0
    %v5322 = vsel %vm4298, 1, 0
    %v5323 = vsel %vm4299, 1, 0
    %v5324 = vsel %vm4300, 1, 0
    %v5325 = vsel %vm4301, 1, 0
    %v5326 = vsel %vm4302, 1, 0
    %v5327 = vsel %vm4303, 1, 0
    %v5328 = vsel %vm4304, 1, 0
    %v5329 = vsel %vm4305, 1, 0
    %v5330 = vsel %vm4306, 1, 0
    %v5331 = vsel %vm4307, 1, 0
    %v5332 = vsel %vm4308, 1, 0
    %v5333 = vsel %vm4309, 1, 0
    %v5334 = vsel %vm4310, 1, 0
    %v5335 = vsel %vm4311, 1, 0
    %v5336 = vsel %vm4312, 1, 0
    %v5337 = vsel %vm4313, 1, 0
    %v5338 = vsel %vm4314, 1, 0
    %v5339 = vsel %vm4315, 1, 0
    %v5340 = vsel %vm4316, 1, 0
    %v5341 = vsel %vm4317, 1, 0
    %v5342 = vsel %vm4318, 1, 0
    %v5343 = vsel %vm4319, 1, 0
    %v5344 = vsel %vm4320, 1, 0
    %v5345 = vsel %vm4321, 1, 0
    %v5346 = vsel %vm4322, 1, 0
    %v5347 = vsel %vm4323, 1, 0
    %v5348 = vsel %vm4324, 1, 0
    %v5349 = vsel %vm4325, 1, 0
    %v5350 = vsel %vm4326, 1, 0
    %v5351 = vsel %vm4327, 1, 0
    %v5352 = vsel %vm4328, 1, 0
    %v5353 = vsel %vm4329, 1, 0
    %v5354 = vsel %vm4330, 1, 0
    %v5355 = vsel %vm4331, 1, 0
    %v5356 = vsel %vm4332, 1, 0
    %v5357 = vsel %vm4333, 1, 0
    %v5358 = vsel %vm4334, 1, 0
    %v5359 = vsel %vm4335, 1, 0
    %v5360 = vsel %vm4336, 1, 0
    %v5361 = vsel %vm4337, 1, 0
    %v5362 = vsel %vm4338, 1, 0
    %v5363 = vsel %vm4339, 1, 0
    %v5364 = vsel %vm4340, 1, 0
    %v5365 = vsel %vm4341, 1, 0
    %v5366 = vsel %vm4342, 1, 0
    %v5367 = vsel %vm4343, 1, 0
    %v5368 = vsel %vm4344, 1, 0
    %v5369 = vsel %vm4345, 1, 0
    %v5370 = vsel %vm4346, 1, 0
    %v5371 = vsel %vm4347, 1, 0
    %v5372 = vsel %vm4348, 1, 0
    %v5373 = vsel %vm4349, 1, 0
    %v5374 = vsel %vm4350, 1, 0
    %v5375 = vsel %vm4351, 1, 0
    %v5376 = vsel %vm4352, 1, 0
    %v5377 = vsel %vm4353, 1, 0
    %v5378 = vsel %vm4354, 1, 0
    %v5379 = vsel %vm4355, 1, 0
    %v5380 = vsel %vm4356, 1, 0
    %v5381 = vsel %vm4357, 1, 0
    %v5382 = vsel %vm4358, 1, 0
    %v5383 = vsel %vm4359, 1, 0
    %v5384 = vsel %vm4360, 1, 0
    %v5385 = vsel %vm4361, 1, 0
    %v5386 = vsel %vm4362, 1, 0
    %v5387 = vsel %vm4363, 1, 0
    %v5388 = vsel %vm4364, 1, 0
    %v5389 = vsel %vm4365, 1, 0
    %v5390 = vsel %vm4366, 1, 0
    %v5391 = vsel %vm4367, 1, 0
    %v5392 = vsel %vm4368, 1, 0
    %v5393 = vsel %vm4369, 1, 0
    %v5394 = vsel %vm4370, 1, 0
    %v5395 = vsel %vm4371, 1, 0
    %v5396 = vsel %vm4372, 1, 0
    %v5397 = vsel %vm4373, 1, 0
    %v5398 = vsel %vm4374, 1, 0
    %v5399 = vsel %vm4375, 1, 0
    %v5400 = vsel %vm4376, 1, 0
    %v5401 = vsel %vm4377, 1, 0
    %v5402 = vsel %vm4378, 1, 0
    %v5403 = vsel %vm4379, 1, 0
    %v5404 = vsel %vm4380, 1, 0
    %v5405 = vsel %vm4381, 1, 0
    %v5406 = vsel %vm4382, 1, 0
    %v5407 = vsel %vm4383, 1, 0
    %v5408 = vsel %vm4384, 1, 0
    %v5409 = vsel %vm4385, 1, 0
    %v5410 = vsel %vm4386, 1, 0
    %v5411 = vsel %vm4387, 1, 0
    %v5412 = vsel %vm4388, 1, 0
    %v5413 = vsel %vm4389, 1, 0
    %v5414 = vsel %vm4390, 1, 0
    %v5415 = vsel %vm4391, 1, 0
    %v5416 = vsel %vm4392, 1, 0
    %v5417 = vsel %vm4393, 1, 0
    %v5418 = vsel %vm4394, 1, 0
    %v5419 = vsel %vm4395, 1, 0
    %v5420 = vsel %vm4396, 1, 0
    %v5421 = vsel %vm4397, 1, 0
    %v5422 = vsel %vm4398, 1, 0
    %v5423 = vsel %vm4399, 1, 0
    %v5424 = vsel %vm4400, 1, 0
    %v5425 = vsel %vm4401, 1, 0
    %v5426 = vsel %vm4402, 1, 0
    %v5427 = vsel %vm4403, 1, 0
    %v5428 = vsel %vm4404, 1, 0
    %v5429 = vsel %vm4405, 1, 0
    %v5430 = vsel %vm4406, 1, 0
    %v5431 = vsel %vm4407, 1, 0
    %v5432 = vsel %vm4408, 1, 0
    %v5433 = vsel %vm4409, 1, 0
    %v5434 = vsel %vm4410, 1, 0
    %v5435 = vsel %vm4411, 1, 0
    %v5436 = vsel %vm4412, 1, 0
    %v5437 = vsel %vm4413, 1, 0
    %v5438 = vsel %vm4414, 1, 0
    %v5439 = vsel %vm4415, 1, 0
    %v5440 = vsel %vm4416, 1, 0
    %v5441 = vsel %vm4417, 1, 0
    %v5442 = vsel %vm4418, 1, 0
    %v5443 = vsel %vm4419, 1, 0
    %v5444 = vsel %vm4420, 1, 0
    %v5445 = vsel %vm4421, 1, 0
    %v5446 = vsel %vm4422, 1, 0
    %v5447 = vsel %vm4423, 1, 0
    %v5448 = vsel %vm4424, 1, 0
    %v5449 = vsel %vm4425, 1, 0
    %v5450 = vsel %vm4426, 1, 0
    %v5451 = vsel %vm4427, 1, 0
    %v5452 = vsel %vm4428, 1, 0
    %v5453 = vsel %vm4429, 1, 0
    %v5454 = vsel %vm4430, 1, 0
    %v5455 = vsel %vm4431, 1, 0
    %v5456 = vsel %vm4432, 1, 0
    %v5457 = vsel %vm4433, 1, 0
    %v5458 = vsel %vm4434, 1, 0
    %v5459 = vsel %vm4435, 1, 0
    %v5460 = vsel %vm4436, 1, 0
    %v5461 = vsel %vm4437, 1, 0
    %v5462 = vsel %vm4438, 1, 0
    %v5463 = vsel %vm4439, 1, 0
    %v5464 = vsel %vm4440, 1, 0
    %v5465 = vsel %vm4441, 1, 0
    %v5466 = vsel %vm4442, 1, 0
    %v5467 = vsel %vm4443, 1, 0
    %v5468 = vsel %vm4444, 1, 0
    %v5469 = vsel %vm4445, 1, 0
    %v5470 = vsel %vm4446, 1, 0
    %v5471 = vsel %vm4447, 1, 0
    %v5472 = vsel %vm4448, 1, 0
    %v5473 = vsel %vm4449, 1, 0
    %v5474 = vsel %vm4450, 1, 0
    %v5475 = vsel %vm4451, 1, 0
    %v5476 = vsel %vm4452, 1, 0
    %v5477 = vsel %vm4453, 1, 0
    %v5478 = vsel %vm4454, 1, 0
    %v5479 = vsel %vm4455, 1, 0
    %v5480 = vsel %vm4456, 1, 0
    %v5481 = vsel %vm4457, 1, 0
    %v5482 = vsel %vm4458, 1, 0
    %v5483 = vsel %vm4459, 1, 0
    %v5484 = vsel %vm4460, 1, 0
    %v5485 = vsel %vm4461, 1, 0
    %v5486 = vsel %vm4462, 1, 0
    %v5487 = vsel %vm4463, 1, 0
    %v5488 = vsel %vm4464, 1, 0
    %v5489 = vsel %vm4465, 1, 0
    %v5490 = vsel %vm4466, 1, 0
    %v5491 = vsel %vm4467, 1, 0
    %v5492 = vsel %vm4468, 1, 0
    %v5493 = vsel %vm4469, 1, 0
    %v5494 = vsel %vm4470, 1, 0
    %v5495 = vsel %vm4471, 1, 0
    %v5496 = vsel %vm4472, 1, 0
    %v5497 = vsel %vm4473, 1, 0
    %v5498 = vsel %vm4474, 1, 0
    %v5499 = vsel %vm4475, 1, 0
    %v5500 = vsel %vm4476, 1, 0
    %v5501 = vsel %vm4477, 1, 0
    %v5502 = vsel %vm4478, 1, 0
    %v5503 = vsel %vm4479, 1, 0
    %v5504 = vsel %vm4480, 1, 0
    %v5505 = vsel %vm4481, 1, 0
    %v5506 = vsel %vm4482, 1, 0
    %v5507 = vsel %vm4483, 1, 0
    %v5508 = vsel %vm4484, 1, 0
    %v5509 = vsel %vm4485, 1, 0
    %v5510 = vsel %vm4486, 1, 0
    %v5511 = vsel %vm4487, 1, 0
    %v5512 = vsel %vm4488, 1, 0
    %v5513 = vsel %vm4489, 1, 0
    %v5514 = vsel %vm4490, 1, 0
    %v5515 = vsel %vm4491, 1, 0
    %v5516 = vsel %vm4492, 1, 0
    %v5517 = vsel %vm4493, 1, 0
    %v5518 = vsel %vm4494, 1, 0
    %v5519 = vsel %vm4495, 1, 0
    %v5520 = vsel %vm4496, 1, 0
    %v5521 = vsel %vm4497, 1, 0
    %v5522 = vsel %vm4498, 1, 0
    %v5523 = vsel %vm4499, 1, 0
    %v5524 = vsel %vm4500, 1, 0
    %v5525 = vsel %vm4501, 1, 0
    %v5526 = vsel %vm4502, 1, 0
    %v5527 = vsel %vm4503, 1, 0
    %v5528 = vsel %vm4504, 1, 0
    %v5529 = vsel %vm4505, 1, 0
    %v5530 = vsel %vm4506, 1, 0
    %v5531 = vsel %vm4507, 1, 0
    %v5532 = vsel %vm4508, 1, 0
    %v5533 = vsel %vm4509, 1, 0
    %v5534 = vsel %vm4510, 1, 0
    %v5535 = vsel %vm4511, 1, 0
    %v5536 = vsel %vm4512, 1, 0
    %v5537 = vsel %vm4513, 1, 0
    %v5538 = vsel %vm4514, 1, 0
    %v5539 = vsel %vm4515, 1, 0
    %v5540 = vsel %vm4516, 1, 0
    %v5541 = vsel %vm4517, 1, 0
    %v5542 = vsel %vm4518, 1, 0
    %v5543 = vsel %vm4519, 1, 0
    %v5544 = vsel %vm4520, 1, 0
    %v5545 = vsel %vm4521, 1, 0
    %v5546 = vsel %vm4522, 1, 0
    %v5547 = vsel %vm4523, 1, 0
    %v5548 = vsel %vm4524, 1, 0
    %v5549 = vsel %vm4525, 1, 0
    %v5550 = vsel %vm4526, 1, 0
    %v5551 = vsel %vm4527, 1, 0
    %v5552 = vsel %vm4528, 1, 0
    %v5553 = vsel %vm4529, 1, 0
    %v5554 = vsel %vm4530, 1, 0
    %v5555 = vsel %vm4531, 1, 0
    %v5556 = vsel %vm4532, 1, 0
    %v5557 = vsel %vm4533, 1, 0
    %v5558 = vsel %vm4534, 1, 0
    %v5559 = vsel %vm4535, 1, 0
    %v5560 = vsel %vm4536, 1, 0
    %v5561 = vsel %vm4537, 1, 0
    %v5562 = vsel %vm4538, 1, 0
    %v5563 = vsel %vm4539, 1, 0
    %v5564 = vsel %vm4540, 1, 0
    %v5565 = vsel %vm4541, 1, 0
    %v5566 = vsel %vm4542, 1, 0
    %v5567 = vsel %vm4543, 1, 0
    %v5568 = vsel %vm4544, 1, 0
    %v5569 = vsel %vm4545, 1, 0
    %v5570 = vsel %vm4546, 1, 0
    %v5571 = vsel %vm4547, 1, 0
    %v5572 = vsel %vm4548, 1, 0
    %v5573 = vsel %vm4549, 1, 0
    %v5574 = vsel %vm4550, 1, 0
    %v5575 = vsel %vm4551, 1, 0
    %v5576 = vsel %vm4552, 1, 0
    %v5577 = vsel %vm4553, 1, 0
    %v5578 = vsel %vm4554, 1, 0
    %v5579 = vsel %vm4555, 1, 0
    %v5580 = vsel %vm4556, 1, 0
    %v5581 = vsel %vm4557, 1, 0
    %v5582 = vsel %vm4558, 1, 0
    %v5583 = vsel %vm4559, 1, 0
    %v5584 = vsel %vm4560, 1, 0
    %v5585 = vsel %vm4561, 1, 0
    %v5586 = vsel %vm4562, 1, 0
    %v5587 = vsel %vm4563, 1, 0
    %v5588 = vsel %vm4564, 1, 0
    %v5589 = vsel %vm4565, 1, 0
    %v5590 = vsel %vm4566, 1, 0
    %v5591 = vsel %vm4567, 1, 0
    %v5592 = vsel %vm4568, 1, 0
    %v5593 = vsel %vm4569, 1, 0
    %v5594 = vsel %vm4570, 1, 0
    %v5595 = vsel %vm4571, 1, 0
    %v5596 = vsel %vm4572, 1, 0
    %v5597 = vsel %vm4573, 1, 0
    %v5598 = vsel %vm4574, 1, 0
    %v5599 = vsel %vm4575, 1, 0
    %v5600 = vsel %vm4576, 1, 0
    %v5601 = vsel %vm4577, 1, 0
    %v5602 = vsel %vm4578, 1, 0
    %v5603 = vsel %vm4579, 1, 0
    %v5604 = vsel %vm4580, 1, 0
    %v5605 = vsel %vm4581, 1, 0
    %v5606 = vsel %vm4582, 1, 0
    %v5607 = vsel %vm4583, 1, 0
    %v5608 = vsel %vm4584, 1, 0
    %v5609 = vsel %vm4585, 1, 0
    %v5610 = vsel %vm4586, 1, 0
    %v5611 = vsel %vm4587, 1, 0
    %v5612 = vsel %vm4588, 1, 0
    %v5613 = vsel %vm4589, 1, 0
    %v5614 = vsel %vm4590, 1, 0
    %v5615 = vsel %vm4591, 1, 0
    %v5616 = vsel %vm4592, 1, 0
    %v5617 = vsel %vm4593, 1, 0
    %v5618 = vsel %vm4594, 1, 0
    %v5619 = vsel %vm4595, 1, 0
    %v5620 = vsel %vm4596, 1, 0
    %v5621 = vsel %vm4597, 1, 0
    %v5622 = vsel %vm4598, 1, 0
    %v5623 = vsel %vm4599, 1, 0
    %v5624 = vsel %vm4600, 1, 0
    %v5625 = vsel %vm4601, 1, 0
    %v5626 = vsel %vm4602, 1, 0
    %v5627 = vsel %vm4603, 1, 0
    %v5628 = vsel %vm4604, 1, 0
    %v5629 = vsel %vm4605, 1, 0
    %v5630 = vsel %vm4606, 1, 0
    %v5631 = vsel %vm4607, 1, 0
    %v5632 = vsel %vm4608, 1, 0
    %v5633 = vsel %vm4609, 1, 0
    %v5634 = vsel %vm4610, 1, 0
    %v5635 = vsel %vm4611, 1, 0
    %v5636 = vsel %vm4612, 1, 0
    %v5637 = vsel %vm4613, 1, 0
    %v5638 = vsel %vm4614, 1, 0
    %v5639 = vsel %vm4615, 1, 0
    %v5640 = vsel %vm4616, 1, 0
    %v5641 = vsel %vm4617, 1, 0
    %v5642 = vsel %vm4618, 1, 0
    %v5643 = vsel %vm4619, 1, 0
    %v5644 = vsel %vm4620, 1, 0
    %v5645 = vsel %vm4621, 1, 0
    %v5646 = vsel %vm4622, 1, 0
    %v5647 = vsel %vm4623, 1, 0
    %v5648 = vsel %vm4624, 1, 0
    %v5649 = vsel %vm4625, 1, 0
    %v5650 = vsel %vm4626, 1, 0
    %v5651 = vsel %vm4627, 1, 0
    %v5652 = vsel %vm4628, 1, 0
    %v5653 = vsel %vm4629, 1, 0
    %v5654 = vsel %vm4630, 1, 0
    %v5655 = vsel %vm4631, 1, 0
    %v5656 = vsel %vm4632, 1, 0
    %v5657 = vsel %vm4633, 1, 0
    %v5658 = vsel %vm4634, 1, 0
    %v5659 = vsel %vm4635, 1, 0
    %v5660 = vsel %vm4636, 1, 0
    %v5661 = vsel %vm4637, 1, 0
    %v5662 = vsel %vm4638, 1, 0
    %v5663 = vsel %vm4639, 1, 0
    %v5664 = vsel %vm4640, 1, 0
    %v5665 = vsel %vm4641, 1, 0
    %v5666 = vsel %vm4642, 1, 0
    %v5667 = vsel %vm4643, 1, 0
    %v5668 = vsel %vm4644, 1, 0
    %v5669 = vsel %vm4645, 1, 0
    %v5670 = vsel %vm4646, 1, 0
    %v5671 = vsel %vm4647, 1, 0
    %v5672 = vsel %vm4648, 1, 0
    %v5673 = vsel %vm4649, 1, 0
    %v5674 = vsel %vm4650, 1, 0
    %v5675 = vsel %vm4651, 1, 0
    %v5676 = vsel %vm4652, 1, 0
    %v5677 = vsel %vm4653, 1, 0
    %v5678 = vsel %vm4654, 1, 0
    %v5679 = vsel %vm4655, 1, 0
    %v5680 = vsel %vm4656, 1, 0
    %v5681 = vsel %vm4657, 1, 0
    %v5682 = vsel %vm4658, 1, 0
    %v5683 = vsel %vm4659, 1, 0
    %v5684 = vsel %vm4660, 1, 0
    %v5685 = vsel %vm4661, 1, 0
    %v5686 = vsel %vm4662, 1, 0
    %v5687 = vsel %vm4663, 1, 0
    %v5688 = vsel %vm4664, 1, 0
    %v5689 = vsel %vm4665, 1, 0
    %v5690 = vsel %vm4666, 1, 0
    %v5691 = vsel %vm4667, 1, 0
    %v5692 = vsel %vm4668, 1, 0
    %v5693 = vsel %vm4669, 1, 0
    %v5694 = vsel %vm4670, 1, 0
    %v5695 = vsel %vm4671, 1, 0
    %v5696 = vsel %vm4672, 1, 0
    %v5697 = vsel %vm4673, 1, 0
    %v5698 = vsel %vm4674, 1, 0
    %v5699 = vsel %vm4675, 1, 0
    %v5700 = vsel %vm4676, 1, 0
    %v5701 = vsel %vm4677, 1, 0
    %v5702 = vsel %vm4678, 1, 0
    %v5703 = vsel %vm4679, 1, 0
    %v5704 = vsel %vm4680, 1, 0
    %v5705 = vsel %vm4681, 1, 0
    %v5706 = vsel %vm4682, 1, 0
    %v5707 = vsel %vm4683, 1, 0
    %v5708 = vsel %vm4684, 1, 0
    %v5709 = vsel %vm4685, 1, 0
    %v5710 = vsel %vm4686, 1, 0
    %v5711 = vsel %vm4687, 1, 0
    %v5712 = vsel %vm4688, 1, 0
    %v5713 = vsel %vm4689, 1, 0
    %v5714 = vsel %vm4690, 1, 0
    %v5715 = vsel %vm4691, 1, 0
    %v5716 = vsel %vm4692, 1, 0
    %v5717 = vsel %vm4693, 1, 0
    %v5718 = vsel %vm4694, 1, 0
    %v5719 = vsel %vm4695, 1, 0
    %v5720 = vsel %vm4696, 1, 0
    %v5721 = vsel %vm4697, 1, 0
    %v5722 = vsel %vm4698, 1, 0
    %v5723 = vsel %vm4699, 1, 0
    %v5724 = vsel %vm4700, 1, 0
    %v5725 = vsel %vm4701, 1, 0
    %v5726 = vsel %vm4702, 1, 0
    %v5727 = vsel %vm4703, 1, 0
    %v5728 = vsel %vm4704, 1, 0
    %v5729 = vsel %vm4705, 1, 0
    %v5730 = vsel %vm4706, 1, 0
    %v5731 = vsel %vm4707, 1, 0
    %v5732 = vsel %vm4708, 1, 0
    %v5733 = vsel %vm4709, 1, 0
    %v5734 = vsel %vm4710, 1, 0
    %v5735 = vsel %vm4711, 1, 0
    %v5736 = vsel %vm4712, 1, 0
    %v5737 = vsel %vm4713, 1, 0
    %v5738 = vsel %vm4714, 1, 0
    %v5739 = vsel %vm4715, 1, 0
    %v5740 = vsel %vm4716, 1, 0
    %v5741 = vsel %vm4717, 1, 0
    %v5742 = vsel %vm4718, 1, 0
    %v5743 = vsel %vm4719, 1, 0
    %v5744 = vsel %vm4720, 1, 0
    %v5745 = vsel %vm4721, 1, 0
    %v5746 = vsel %vm4722, 1, 0
    %v5747 = vsel %vm4723, 1, 0
    %v5748 = vsel %vm4724, 1, 0
    %v5749 = vsel %vm4725, 1, 0
    %v5750 = vsel %vm4726, 1, 0
    %v5751 = vsel %vm4727, 1, 0
    %v5752 = vsel %vm4728, 1, 0
    %v5753 = vsel %vm4729, 1, 0
    %v5754 = vsel %vm4730, 1, 0
    %v5755 = vsel %vm4731, 1, 0
    %v5756 = vsel %vm4732, 1, 0
    %v5757 = vsel %vm4733, 1, 0
    %v5758 = vsel %vm4734, 1, 0
    %v5759 = vsel %vm4735, 1, 0
    %v5760 = vsel %vm4736, 1, 0
    %v5761 = vsel %vm4737, 1, 0
    %v5762 = vsel %vm4738, 1, 0
    %v5763 = vsel %vm4739, 1, 0
    %v5764 = vsel %vm4740, 1, 0
    %v5765 = vsel %vm4741, 1, 0
    %v5766 = vsel %vm4742, 1, 0
    %v5767 = vsel %vm4743, 1, 0
    %v5768 = vsel %vm4744, 1, 0
    %v5769 = vsel %vm4745, 1, 0
    %v5770 = vsel %vm4746, 1, 0
    %v5771 = vsel %vm4747, 1, 0
    %v5772 = vsel %vm4748, 1, 0
    %v5773 = vsel %vm4749, 1, 0
    %v5774 = vsel %vm4750, 1, 0
    %v5775 = vsel %vm4751, 1, 0
    %v5776 = vsel %vm4752, 1, 0
    %v5777 = vsel %vm4753, 1, 0
    %v5778 = vsel %vm4754, 1, 0
    %v5779 = vsel %vm4755, 1, 0
    %v5780 = vsel %vm4756, 1, 0
    %v5781 = vsel %vm4757, 1, 0
    %v5782 = vsel %vm4758, 1, 0
    %v5783 = vsel %vm4759, 1, 0
    %v5784 = vsel %vm4760, 1, 0
    %v5785 = vsel %vm4761, 1, 0
    %v5786 = vsel %vm4762, 1, 0
    %v5787 = vsel %vm4763, 1, 0
    %v5788 = vsel %vm4764, 1, 0
    %v5789 = vsel %vm4765, 1, 0
    %v5790 = vsel %vm4766, 1, 0
    %v5791 = vsel %vm4767, 1, 0
    %v5792 = vsel %vm4768, 1, 0
    %v5793 = vsel %vm4769, 1, 0
    %v5794 = vsel %vm4770, 1, 0
    %v5795 = vsel %vm4771, 1, 0
    %v5796 = vsel %vm4772, 1, 0
    %v5797 = vsel %vm4773, 1, 0
    %v5798 = vsel %vm4774, 1, 0
    %v5799 = vsel %vm4775, 1, 0
    %v5800 = vsel %vm4776, 1, 0
    %v5801 = vsel %vm4777, 1, 0
    %v5802 = vsel %vm4778, 1, 0
    %v5803 = vsel %vm4779, 1, 0
    %v5804 = vsel %vm4780, 1, 0
    %v5805 = vsel %vm4781, 1, 0
    %v5806 = vsel %vm4782, 1, 0
    %v5807 = vsel %vm4783, 1, 0
    %v5808 = vsel %vm4784, 1, 0
    %v5809 = vsel %vm4785, 1, 0
    %v5810 = vsel %vm4786, 1, 0
    %v5811 = vsel %vm4787, 1, 0
    %v5812 = vsel %vm4788, 1, 0
    %v5813 = vsel %vm4789, 1, 0
    %v5814 = vsel %vm4790, 1, 0
    %v5815 = vsel %vm4791, 1, 0
    %v5816 = vsel %vm4792, 1, 0
    %v5817 = vsel %vm4793, 1, 0
    %v5818 = vsel %vm4794, 1, 0
    %v5819 = vsel %vm4795, 1, 0
    %v5820 = vsel %vm4796, 1, 0
    %v5821 = vsel %vm4797, 1, 0
    %v5822 = vsel %vm4798, 1, 0
    %v5823 = vsel %vm4799, 1, 0
    %v5824 = vsel %vm4800, 1, 0
    %v5825 = vsel %vm4801, 1, 0
    %v5826 = vsel %vm4802, 1, 0
    %v5827 = vsel %vm4803, 1, 0
    %v5828 = vsel %vm4804, 1, 0
    %v5829 = vsel %vm4805, 1, 0
    %v5830 = vsel %vm4806, 1, 0
    %v5831 = vsel %vm4807, 1, 0
    %v5832 = vsel %vm4808, 1, 0
    %v5833 = vsel %vm4809, 1, 0
    %v5834 = vsel %vm4810, 1, 0
    %v5835 = vsel %vm4811, 1, 0
    %v5836 = vsel %vm4812, 1, 0
    %v5837 = vsel %vm4813, 1, 0
    %v5838 = vsel %vm4814, 1, 0
    %v5839 = vsel %vm4815, 1, 0
    %v5840 = vsel %vm4816, 1, 0
    %v5841 = vsel %vm4817, 1, 0
    %v5842 = vsel %vm4818, 1, 0
    %v5843 = vsel %vm4819, 1, 0
    %v5844 = vsel %vm4820, 1, 0
    %v5845 = vsel %vm4821, 1, 0
    %v5846 = vsel %vm4822, 1, 0
    %v5847 = vsel %vm4823, 1, 0
    %v5848 = vsel %vm4824, 1, 0
    %v5849 = vsel %vm4825, 1, 0
    %v5850 = vsel %vm4826, 1, 0
    %v5851 = vsel %vm4827, 1, 0
    %v5852 = vsel %vm4828, 1, 0
    %v5853 = vsel %vm4829, 1, 0
    %v5854 = vsel %vm4830, 1, 0
    %v5855 = vsel %vm4831, 1, 0
    %v5856 = vsel %vm4832, 1, 0
    %v5857 = vsel %vm4833, 1, 0
    %v5858 = vsel %vm4834, 1, 0
    %v5859 = vsel %vm4835, 1, 0
    %v5860 = vsel %vm4836, 1, 0
    %v5861 = vsel %vm4837, 1, 0
    %v5862 = vsel %vm4838, 1, 0
    %v5863 = vsel %vm4839, 1, 0
    %v5864 = vsel %vm4840, 1, 0
    %v5865 = vsel %vm4841, 1, 0
    %v5866 = vsel %vm4842, 1, 0
    %v5867 = vsel %vm4843, 1, 0
    %v5868 = vsel %vm4844, 1, 0
    %v5869 = vsel %vm4845, 1, 0
    %v5870 = vsel %vm4846, 1, 0
    %v5871 = vsel %vm4847, 1, 0
    %v5872 = vsel %vm4848, 1, 0
    %v5873 = vsel %vm4849, 1, 0
    %v5874 = vsel %vm4850, 1, 0
    %v5875 = vsel %vm4851, 1, 0
    %v5876 = vsel %vm4852, 1, 0
    %v5877 = vsel %vm4853, 1, 0
    %v5878 = vsel %vm4854, 1, 0
    %v5879 = vsel %vm4855, 1, 0
    %v5880 = vsel %vm4856, 1, 0
    %v5881 = vsel %vm4857, 1, 0
    %v5882 = vsel %vm4858, 1, 0
    %v5883 = vsel %vm4859, 1, 0
    %v5884 = vsel %vm4860, 1, 0
    %v5885 = vsel %vm4861, 1, 0
    %v5886 = vsel %vm4862, 1, 0
    %v5887 = vsel %vm4863, 1, 0
    %v5888 = vsel %vm4864, 1, 0
    %v5889 = vsel %vm4865, 1, 0
    %v5890 = vsel %vm4866, 1, 0
    %v5891 = vsel %vm4867, 1, 0
    %v5892 = vsel %vm4868, 1, 0
    %v5893 = vsel %vm4869, 1, 0
    %v5894 = vsel %vm4870, 1, 0
    %v5895 = vsel %vm4871, 1, 0
    %v5896 = vsel %vm4872, 1, 0
    %v5897 = vsel %vm4873, 1, 0
    %v5898 = vsel %vm4874, 1, 0
    %v5899 = vsel %vm4875, 1, 0
    %v5900 = vsel %vm4876, 1, 0
    %v5901 = vsel %vm4877, 1, 0
    %v5902 = vsel %vm4878, 1, 0
    %v5903 = vsel %vm4879, 1, 0
    %v5904 = vsel %vm4880, 1, 0
    %v5905 = vsel %vm4881, 1, 0
    %v5906 = vsel %vm4882, 1, 0
    %v5907 = vsel %vm4883, 1, 0
    %v5908 = vsel %vm4884, 1, 0
    %v5909 = vsel %vm4885, 1, 0
    %v5910 = vsel %vm4886, 1, 0
    %v5911 = vsel %vm4887, 1, 0
    %v5912 = vsel %vm4888, 1, 0
    %v5913 = vsel %vm4889, 1, 0
    %v5914 = vsel %vm4890, 1, 0
    %v5915 = vsel %vm4891, 1, 0
    %v5916 = vsel %vm4892, 1, 0
    %v5917 = vsel %vm4893, 1, 0
    %v5918 = vsel %vm4894, 1, 0
    %v5919 = vsel %vm4895, 1, 0
    %v5920 = vsel %vm4896, 1, 0
    %v5921 = vsel %vm4897, 1, 0
    %v5922 = vsel %vm4898, 1, 0
    %v5923 = vsel %vm4899, 1, 0
    %v5924 = vsel %vm4900, 1, 0
    %v5925 = vsel %vm4901, 1, 0
    %v5926 = vsel %vm4902, 1, 0
    %v5927 = vsel %vm4903, 1, 0
    %v5928 = vsel %vm4904, 1, 0
    %v5929 = vsel %vm4905, 1, 0
    %v5930 = vsel %vm4906, 1, 0
    %v5931 = vsel %vm4907, 1, 0
    %v5932 = vsel %vm4908, 1, 0
    %v5933 = vsel %vm4909, 1, 0
    %v5934 = vsel %vm4910, 1, 0
    %v5935 = vsel %vm4911, 1, 0
    %v5936 = vsel %vm4912, 1, 0
    %v5937 = vsel %vm4913, 1, 0
    %v5938 = vsel %vm4914, 1, 0
    %v5939 = vsel %vm4915, 1, 0
    %v5940 = vsel %vm4916, 1, 0
    %v5941 = vsel %vm4917, 1, 0
    %v5942 = vsel %vm4918, 1, 0
    %v5943 = vsel %vm4919, 1, 0
    %v5944 = vsel %vm4920, 1, 0
    %v5945 = vsel %vm4921, 1, 0
    %v5946 = vsel %vm4922, 1, 0
    %v5947 = vsel %vm4923, 1, 0
    %v5948 = vsel %vm4924, 1, 0
    %v5949 = vsel %vm4925, 1, 0
    %v5950 = vsel %vm4926, 1, 0
    %v5951 = vsel %vm4927, 1, 0
    %v5952 = vsel %vm4928, 1, 0
    %v5953 = vsel %vm4929, 1, 0
    %v5954 = vsel %vm4930, 1, 0
    %v5955 = vsel %vm4931, 1, 0
    %v5956 = vsel %vm4932, 1, 0
    %v5957 = vsel %vm4933, 1, 0
    %v5958 = vsel %vm4934, 1, 0
    %v5959 = vsel %vm4935, 1, 0
    %v5960 = vsel %vm4936, 1, 0
    %v5961 = vsel %vm4937, 1, 0
    %v5962 = vsel %vm4938, 1, 0
    %v5963 = vsel %vm4939, 1, 0
    %v5964 = vsel %vm4940, 1, 0
    %v5965 = vsel %vm4941, 1, 0
    %v5966 = vsel %vm4942, 1, 0
    %v5967 = vsel %vm4943, 1, 0
    %v5968 = vsel %vm4944, 1, 0
    %v5969 = vsel %vm4945, 1, 0
    %v5970 = vsel %vm4946, 1, 0
    %v5971 = vsel %vm4947, 1, 0
    %v5972 = vsel %vm4948, 1, 0
    %v5973 = vsel %vm4949, 1, 0
    %v5974 = vsel %vm4950, 1, 0
    %v5975 = vsel %vm4951, 1, 0
    %v5976 = vsel %vm4952, 1, 0
    %v5977 = vsel %vm4953, 1, 0
    %v5978 = vsel %vm4954, 1, 0
    %v5979 = vsel %vm4955, 1, 0
    %v5980 = vsel %vm4956, 1, 0
    %v5981 = vsel %vm4957, 1, 0
    %v5982 = vsel %vm4958, 1, 0
    %v5983 = vsel %vm4959, 1, 0
    %v5984 = vsel %vm4960, 1, 0
    %v5985 = vsel %vm4961, 1, 0
    %v5986 = vsel %vm4962, 1, 0
    %v5987 = vsel %vm4963, 1, 0
    %v5988 = vsel %vm4964, 1, 0
    %v5989 = vsel %vm4965, 1, 0
    %v5990 = vsel %vm4966, 1, 0
    %v5991 = vsel %vm4967, 1, 0
    %v5992 = vsel %vm4968, 1, 0
    %v5993 = vsel %vm4969, 1, 0
    %v5994 = vsel %vm4970, 1, 0
    %v5995 = vsel %vm4971, 1, 0
    %v5996 = vsel %vm4972, 1, 0
    %v5997 = vsel %vm4973, 1, 0
    %v5998 = vsel %vm4974, 1, 0
    %v5999 = vsel %vm4975, 1, 0
    %v6000 = vsel %vm4976, 1, 0
    %v6001 = vsel %vm4977, 1, 0
    %v6002 = vsel %vm4978, 1, 0
    %v6003 = vsel %vm4979, 1, 0
    %v6004 = vsel %vm4980, 1, 0
    %v6005 = vsel %vm4981, 1, 0
    %v6006 = vsel %vm4982, 1, 0
    %v6007 = vsel %vm4983, 1, 0
    %v6008 = vsel %vm4984, 1, 0
    %v6009 = vsel %vm4985, 1, 0
    %v6010 = vsel %vm4986, 1, 0
    %v6011 = vsel %vm4987, 1, 0
    %v6012 = vsel %vm4988, 1, 0
    %v6013 = vsel %vm4989, 1, 0
    %v6014 = vsel %vm4990, 1, 0
    %v6015 = vsel %vm4991, 1, 0
    %v6016 = vsel %vm4992, 1, 0
    %v6017 = vsel %vm4993, 1, 0
    %v6018 = vsel %vm4994, 1, 0
    %v6019 = vsel %vm4995, 1, 0
    %v6020 = vsel %vm4996, 1, 0
    %v6021 = vsel %vm4997, 1, 0
    %v6022 = vsel %vm4998, 1, 0
    %v6023 = vsel %vm4999, 1, 0
    %v6024 = vsel %vm5000, 1, 0
    %v6025 = vsel %vm5001, 1, 0
    %v6026 = vsel %vm5002, 1, 0
    %v6027 = vsel %vm5003, 1, 0
    %v6028 = vsel %vm5004, 1, 0
    %v6029 = vsel %vm5005, 1, 0
    %v6030 = vsel %vm5006, 1, 0
    %v6031 = vsel %vm5007, 1, 0
    %v6032 = vsel %vm5008, 1, 0
    %v6033 = vsel %vm5009, 1, 0
    %v6034 = vsel %vm5010, 1, 0
    %v6035 = vsel %vm5011, 1, 0
    %v6036 = vsel %vm5012, 1, 0
    %v6037 = vsel %vm5013, 1, 0
    %v6038 = vsel %vm5014, 1, 0
    %v6039 = vsel %vm5015, 1, 0
    %v6040 = vsel %vm5016, 1, 0
    %v6041 = vsel %vm5017, 1, 0
    %v6042 = vsel %vm5018, 1, 0
    %v6043 = vsel %vm5019, 1, 0
    %v6044 = vsel %vm5020, 1, 0
    %v6045 = vsel %vm5021, 1, 0
    %v6046 = vsel %vm5022, 1, 0
    %v6047 = vsel %vm5023, 1, 0
    %v6048 = vsel %vm5024, 1, 0
    %v6049 = vsel %vm5025, 1, 0
    %v6050 = vsel %vm5026, 1, 0
    %v6051 = vsel %vm5027, 1, 0
    %v6052 = vsel %vm5028, 1, 0
    %v6053 = vsel %vm5029, 1, 0
    %v6054 = vsel %vm5030, 1, 0
    %v6055 = vsel %vm5031, 1, 0
    %v6056 = vsel %vm5032, 1, 0
    %v6057 = vsel %vm5033, 1, 0
    %v6058 = vsel %vm5034, 1, 0
    %v6059 = vsel %vm5035, 1, 0
    %v6060 = vsel %vm5036, 1, 0
    %v6061 = vsel %vm5037, 1, 0
    %v6062 = vsel %vm5038, 1, 0
    %v6063 = vsel %vm5039, 1, 0
    %v6064 = vsel %vm5040, 1, 0
    %v6065 = vsel %vm5041, 1, 0
    %v6066 = vsel %vm5042, 1, 0
    %v6067 = vsel %vm5043, 1, 0
    %v6068 = vsel %vm5044, 1, 0
    %v6069 = vsel %vm5045, 1, 0
    %v6070 = vsel %vm5046, 1, 0
    %v6071 = vsel %vm5047, 1, 0
    %v6072 = vsel %vm5048, 1, 0
    %v6073 = vsel %vm5049, 1, 0
    %v6074 = vsel %vm5050, 1, 0
    %v6075 = vsel %vm5051, 1, 0
    %v6076 = vsel %vm5052, 1, 0
    %v6077 = vsel %vm5053, 1, 0
    %v6078 = vsel %vm5054, 1, 0
    %v6079 = vsel %vm5055, 1, 0
    %v6080 = vsel %vm5056, 1, 0
    %v6081 = vsel %vm5057, 1, 0
    %v6082 = vsel %vm5058, 1, 0
    %v6083 = vsel %vm5059, 1, 0
    %v6084 = vsel %vm5060, 1, 0
    %v6085 = vsel %vm5061, 1, 0
    %v6086 = vsel %vm5062, 1, 0
    %v6087 = vsel %vm5063, 1, 0
    %v6088 = vsel %vm5064, 1, 0
    %v6089 = vsel %vm5065, 1, 0
    %v6090 = vsel %vm5066, 1, 0
    %v6091 = vsel %vm5067, 1, 0
    %v6092 = vsel %vm5068, 1, 0
    %v6093 = vsel %vm5069, 1, 0
    %v6094 = vsel %vm5070, 1, 0
    %v6095 = vsel %vm5071, 1, 0
    %v6096 = vsel %vm5072, 1, 0
    %v6097 = vsel %vm5073, 1, 0
    %v6098 = vsel %vm5074, 1, 0
    %v6099 = vsel %vm5075, 1, 0
    %v6100 = vsel %vm5076, 1, 0
    %v6101 = vsel %vm5077, 1, 0
    %v6102 = vsel %vm5078, 1, 0
    %v6103 = vsel %vm5079, 1, 0
    %v6104 = vsel %vm5080, 1, 0
    %v6105 = vsel %vm5081, 1, 0
    %v6106 = vsel %vm5082, 1, 0
    %v6107 = vsel %vm5083, 1, 0
    %v6108 = vsel %vm5084, 1, 0
    %v6109 = vsel %vm5085, 1, 0
    %v6110 = vsel %vm5086, 1, 0
    %v6111 = vsel %vm5087, 1, 0
    %v6112 = vsel %vm5088, 1, 0
    %v6113 = vsel %vm5089, 1, 0
    %v6114 = vsel %vm5090, 1, 0
    %v6115 = vsel %vm5091, 1, 0
    %v6116 = vsel %vm5092, 1, 0
    %v6117 = vsel %vm5093, 1, 0
    %v6118 = vsel %vm5094, 1, 0
    %v6119 = vsel %vm5095, 1, 0
    %v6120 = vsel %vm5096, 1, 0
    %v6121 = vsel %vm5097, 1, 0
    %v6122 = vsel %vm5098, 1, 0
    %v6123 = vsel %vm5099, 1, 0
    %v6124 = vsel %vm5100, 1, 0
    %v6125 = vsel %vm5101, 1, 0
    %v6126 = vsel %vm5102, 1, 0
    %v6127 = vsel %vm5103, 1, 0
    %v6128 = vsel %vm5104, 1, 0
    %v6129 = vsel %vm5105, 1, 0
    %v6130 = vsel %vm5106, 1, 0
    %v6131 = vsel %vm5107, 1, 0
    %v6132 = vsel %vm5108, 1, 0
    %v6133 = vsel %vm5109, 1, 0
    %v6134 = vsel %vm5110, 1, 0
    %v6135 = vsel %vm5111, 1, 0
    %v6136 = vsel %vm5112, 1, 0
    %v6137 = vsel %vm5113, 1, 0
    %v6138 = vsel %vm5114, 1, 0
    %v6139 = vsel %vm5115, 1, 0
    %v6140 = vsel %vm5116, 1, 0
    %v6141 = vsel %vm5117, 1, 0
    %v6142 = vsel %vm5118, 1, 0
    %v6143 = vsel %vm5119, 1, 0
    %v6144 = vsel %vm5120, 1, 0
    %v6145 = vsel %vm5121, 1, 0
    %v6146 = vsel %vm5122, 1, 0
    %v6147 = vsel %vm5123, 1, 0
    %v6148 = vsel %vm5124, 1, 0
    %v6149 = vsel %vm5125, 1, 0
    %v6150 = vsel %vm5126, 1, 0
    %v6151 = vsel %vm5127, 1, 0
    %v6152 = vsel %vm5128, 1, 0
    %v6153 = vsel %vm5129, 1, 0
    %v6154 = vsel %vm5130, 1, 0
    %v6155 = vsel %vm5131, 1, 0
    %v6156 = vsel %vm5132, 1, 0
    %v6157 = vsel %vm5133, 1, 0
    %v6158 = vsel %vm5134, 1, 0
    %v6159 = vsel %vm5135, 1, 0
    %v6160 = vsel %vm5136, 1, 0
    %v6161 = vsel %vm5137, 1, 0
    %v6162 = vsel %vm5138, 1, 0
    %v6163 = vsel %vm5139, 1, 0
    %v6164 = vsel %vm5140, 1, 0
    %v6165 = vsel %vm5141, 1, 0
    %v6166 = vsel %vm5142, 1, 0
    %v6167 = vsel %vm5143, 1, 0
    %v6168 = vsel %vm5144, 1, 0
    %v6169 = vsel %vm5145, 1, 0
    %v6170 = vsel %vm5146, 1, 0
    %v6171 = vsel %vm5147, 1, 0
    %v6172 = vsel %vm5148, 1, 0
    %v6173 = vsel %vm5149, 1, 0
    %v6174 = vsel %vm5150, 1, 0
    %v6175 = vsel %vm5151, 1, 0
    %v6176 = vsel %vm5152, 1, 0
    %v6177 = vsel %vm5153, 1, 0
    %v6178 = vsel %vm5154, 1, 0
    %v6179 = vsel %vm5155, 1, 0
    %v6180 = vsel %vm5156, 1, 0
    %v6181 = vsel %vm5157, 1, 0
    %v6182 = vsel %vm5158, 1, 0
    %v6183 = vsel %vm5159, 1, 0
    %v6184 = vsel %vm5160, 1, 0
    %v6185 = vsel %vm5161, 1, 0
    %v6186 = vsel %vm5162, 1, 0
    %v6187 = vsel %vm5163, 1, 0
    %v6188 = vsel %vm5164, 1, 0
    %v6189 = vsel %vm5165, 1, 0
    %v6190 = vsel %vm5166, 1, 0
    %v6191 = vsel %vm5167, 1, 0
    %v6192 = vsel %vm5168, 1, 0
    %v6193 = vsel %vm5169, 1, 0
    %v6194 = vsel %vm5170, 1, 0
    %v6195 = vsel %vm5171, 1, 0
    %v6196 = vsel %vm5172, 1, 0
    %v6197 = vsel %vm5173, 1, 0
    %v6198 = vsel %vm5174, 1, 0
    %v6199 = vsel %vm5175, 1, 0
    %v6200 = vsel %vm5176, 1, 0
    %v6201 = vsel %vm5177, 1, 0
    %v6202 = vsel %vm5178, 1, 0
    %v6203 = vsel %vm5179, 1, 0
    %v6204 = vsel %vm5180, 1, 0
    %v6205 = vsel %vm5181, 1, 0
    %v6206 = vsel %vm5182, 1, 0
    %v6207 = vcvt.s32.f32 %v5183
    %v6208 = vcvt.s32.f32 %v5184
    %v6209 = vcvt.s32.f32 %v5185
    %v6210 = vcvt.s32.f32 %v5186
    %v6211 = vcvt.s32.f32 %v5187
    %v6212 = vcvt.s32.f32 %v5188
    %v6213 = vcvt.s32.f32 %v5189
    %v6214 = vcvt.s32.f32 %v5190
    %v6215 = vcvt.s32.f32 %v5191
    %v6216 = vcvt.s32.f32 %v5192
    %v6217 = vcvt.s32.f32 %v5193
    %v6218 = vcvt.s32.f32 %v5194
    %v6219 = vcvt.s32.f32 %v5195
    %v6220 = vcvt.s32.f32 %v5196
    %v6221 = vcvt.s32.f32 %v5197
    %v6222 = vcvt.s32.f32 %v5198
    %v6223 = vcvt.s32.f32 %v5199
    %v6224 = vcvt.s32.f32 %v5200
    %v6225 = vcvt.s32.f32 %v5201
    %v6226 = vcvt.s32.f32 %v5202
    %v6227 = vcvt.s32.f32 %v5203
    %v6228 = vcvt.s32.f32 %v5204
    %v6229 = vcvt.s32.f32 %v5205
    %v6230 = vcvt.s32.f32 %v5206
    %v6231 = vcvt.s32.f32 %v5207
    %v6232 = vcvt.s32.f32 %v5208
    %v6233 = vcvt.s32.f32 %v5209
    %v6234 = vcvt.s32.f32 %v5210
    %v6235 = vcvt.s32.f32 %v5211
    %v6236 = vcvt.s32.f32 %v5212
    %v6237 = vcvt.s32.f32 %v5213
    %v6238 = vcvt.s32.f32 %v5214
    %v6239 = vcvt.s32.f32 %v5215
    %v6240 = vcvt.s32.f32 %v5216
    %v6241 = vcvt.s32.f32 %v5217
    %v6242 = vcvt.s32.f32 %v5218
    %v6243 = vcvt.s32.f32 %v5219
    %v6244 = vcvt.s32.f32 %v5220
    %v6245 = vcvt.s32.f32 %v5221
    %v6246 = vcvt.s32.f32 %v5222
    %v6247 = vcvt.s32.f32 %v5223
    %v6248 = vcvt.s32.f32 %v5224
    %v6249 = vcvt.s32.f32 %v5225
    %v6250 = vcvt.s32.f32 %v5226
    %v6251 = vcvt.s32.f32 %v5227
    %v6252 = vcvt.s32.f32 %v5228
    %v6253 = vcvt.s32.f32 %v5229
    %v6254 = vcvt.s32.f32 %v5230
    %v6255 = vcvt.s32.f32 %v5231
    %v6256 = vcvt.s32.f32 %v5232
    %v6257 = vcvt.s32.f32 %v5233
    %v6258 = vcvt.s32.f32 %v5234
    %v6259 = vcvt.s32.f32 %v5235
    %v6260 = vcvt.s32.f32 %v5236
    %v6261 = vcvt.s32.f32 %v5237
    %v6262 = vcvt.s32.f32 %v5238
    %v6263 = vcvt.s32.f32 %v5239
    %v6264 = vcvt.s32.f32 %v5240
    %v6265 = vcvt.s32.f32 %v5241
    %v6266 = vcvt.s32.f32 %v5242
    %v6267 = vcvt.s32.f32 %v5243
    %v6268 = vcvt.s32.f32 %v5244
    %v6269 = vcvt.s32.f32 %v5245
    %v6270 = vcvt.s32.f32 %v5246
    %v6271 = vcvt.s32.f32 %v5247
    %v6272 = vcvt.s32.f32 %v5248
    %v6273 = vcvt.s32.f32 %v5249
    %v6274 = vcvt.s32.f32 %v5250
    %v6275 = vcvt.s32.f32 %v5251
    %v6276 = vcvt.s32.f32 %v5252
    %v6277 = vcvt.s32.f32 %v5253
    %v6278 = vcvt.s32.f32 %v5254
    %v6279 = vcvt.s32.f32 %v5255
    %v6280 = vcvt.s32.f32 %v5256
    %v6281 = vcvt.s32.f32 %v5257
    %v6282 = vcvt.s32.f32 %v5258
    %v6283 = vcvt.s32.f32 %v5259
    %v6284 = vcvt.s32.f32 %v5260
    %v6285 = vcvt.s32.f32 %v5261
    %v6286 = vcvt.s32.f32 %v5262
    %v6287 = vcvt.s32.f32 %v5263
    %v6288 = vcvt.s32.f32 %v5264
    %v6289 = vcvt.s32.f32 %v5265
    %v6290 = vcvt.s32.f32 %v5266
    %v6291 = vcvt.s32.f32 %v5267
    %v6292 = vcvt.s32.f32 %v5268
    %v6293 = vcvt.s32.f32 %v5269
    %v6294 = vcvt.s32.f32 %v5270
    %v6295 = vcvt.s32.f32 %v5271
    %v6296 = vcvt.s32.f32 %v5272
    %v6297 = vcvt.s32.f32 %v5273
    %v6298 = vcvt.s32.f32 %v5274
    %v6299 = vcvt.s32.f32 %v5275
    %v6300 = vcvt.s32.f32 %v5276
    %v6301 = vcvt.s32.f32 %v5277
    %v6302 = vcvt.s32.f32 %v5278
    %v6303 = vcvt.s32.f32 %v5279
    %v6304 = vcvt.s32.f32 %v5280
    %v6305 = vcvt.s32.f32 %v5281
    %v6306 = vcvt.s32.f32 %v5282
    %v6307 = vcvt.s32.f32 %v5283
    %v6308 = vcvt.s32.f32 %v5284
    %v6309 = vcvt.s32.f32 %v5285
    %v6310 = vcvt.s32.f32 %v5286
    %v6311 = vcvt.s32.f32 %v5287
    %v6312 = vcvt.s32.f32 %v5288
    %v6313 = vcvt.s32.f32 %v5289
    %v6314 = vcvt.s32.f32 %v5290
    %v6315 = vcvt.s32.f32 %v5291
    %v6316 = vcvt.s32.f32 %v5292
    %v6317 = vcvt.s32.f32 %v5293
    %v6318 = vcvt.s32.f32 %v5294
    %v6319 = vcvt.s32.f32 %v5295
    %v6320 = vcvt.s32.f32 %v5296
    %v6321 = vcvt.s32.f32 %v5297
    %v6322 = vcvt.s32.f32 %v5298
    %v6323 = vcvt.s32.f32 %v5299
    %v6324 = vcvt.s32.f32 %v5300
    %v6325 = vcvt.s32.f32 %v5301
    %v6326 = vcvt.s32.f32 %v5302
    %v6327 = vcvt.s32.f32 %v5303
    %v6328 = vcvt.s32.f32 %v5304
    %v6329 = vcvt.s32.f32 %v5305
    %v6330 = vcvt.s32.f32 %v5306
    %v6331 = vcvt.s32.f32 %v5307
    %v6332 = vcvt.s32.f32 %v5308
    %v6333 = vcvt.s32.f32 %v5309
    %v6334 = vcvt.s32.f32 %v5310
    %v6335 = vcvt.s32.f32 %v5311
    %v6336 = vcvt.s32.f32 %v5312
    %v6337 = vcvt.s32.f32 %v5313
    %v6338 = vcvt.s32.f32 %v5314
    %v6339 = vcvt.s32.f32 %v5315
    %v6340 = vcvt.s32.f32 %v5316
    %v6341 = vcvt.s32.f32 %v5317
    %v6342 = vcvt.s32.f32 %v5318
    %v6343 = vcvt.s32.f32 %v5319
    %v6344 = vcvt.s32.f32 %v5320
    %v6345 = vcvt.s32.f32 %v5321
    %v6346 = vcvt.s32.f32 %v5322
    %v6347 = vcvt.s32.f32 %v5323
    %v6348 = vcvt.s32.f32 %v5324
    %v6349 = vcvt.s32.f32 %v5325
    %v6350 = vcvt.s32.f32 %v5326
    %v6351 = vcvt.s32.f32 %v5327
    %v6352 = vcvt.s32.f32 %v5328
    %v6353 = vcvt.s32.f32 %v5329
    %v6354 = vcvt.s32.f32 %v5330
    %v6355 = vcvt.s32.f32 %v5331
    %v6356 = vcvt.s32.f32 %v5332
    %v6357 = vcvt.s32.f32 %v5333
    %v6358 = vcvt.s32.f32 %v5334
    %v6359 = vcvt.s32.f32 %v5335
    %v6360 = vcvt.s32.f32 %v5336
    %v6361 = vcvt.s32.f32 %v5337
    %v6362 = vcvt.s32.f32 %v5338
    %v6363 = vcvt.s32.f32 %v5339
    %v6364 = vcvt.s32.f32 %v5340
    %v6365 = vcvt.s32.f32 %v5341
    %v6366 = vcvt.s32.f32 %v5342
    %v6367 = vcvt.s32.f32 %v5343
    %v6368 = vcvt.s32.f32 %v5344
    %v6369 = vcvt.s32.f32 %v5345
    %v6370 = vcvt.s32.f32 %v5346
    %v6371 = vcvt.s32.f32 %v5347
    %v6372 = vcvt.s32.f32 %v5348
    %v6373 = vcvt.s32.f32 %v5349
    %v6374 = vcvt.s32.f32 %v5350
    %v6375 = vcvt.s32.f32 %v5351
    %v6376 = vcvt.s32.f32 %v5352
    %v6377 = vcvt.s32.f32 %v5353
    %v6378 = vcvt.s32.f32 %v5354
    %v6379 = vcvt.s32.f32 %v5355
    %v6380 = vcvt.s32.f32 %v5356
    %v6381 = vcvt.s32.f32 %v5357
    %v6382 = vcvt.s32.f32 %v5358
    %v6383 = vcvt.s32.f32 %v5359
    %v6384 = vcvt.s32.f32 %v5360
    %v6385 = vcvt.s32.f32 %v5361
    %v6386 = vcvt.s32.f32 %v5362
    %v6387 = vcvt.s32.f32 %v5363
    %v6388 = vcvt.s32.f32 %v5364
    %v6389 = vcvt.s32.f32 %v5365
    %v6390 = vcvt.s32.f32 %v5366
    %v6391 = vcvt.s32.f32 %v5367
    %v6392 = vcvt.s32.f32 %v5368
    %v6393 = vcvt.s32.f32 %v5369
    %v6394 = vcvt.s32.f32 %v5370
    %v6395 = vcvt.s32.f32 %v5371
    %v6396 = vcvt.s32.f32 %v5372
    %v6397 = vcvt.s32.f32 %v5373
    %v6398 = vcvt.s32.f32 %v5374
    %v6399 = vcvt.s32.f32 %v5375
    %v6400 = vcvt.s32.f32 %v5376
    %v6401 = vcvt.s32.f32 %v5377
    %v6402 = vcvt.s32.f32 %v5378
    %v6403 = vcvt.s32.f32 %v5379
    %v6404 = vcvt.s32.f32 %v5380
    %v6405 = vcvt.s32.f32 %v5381
    %v6406 = vcvt.s32.f32 %v5382
    %v6407 = vcvt.s32.f32 %v5383
    %v6408 = vcvt.s32.f32 %v5384
    %v6409 = vcvt.s32.f32 %v5385
    %v6410 = vcvt.s32.f32 %v5386
    %v6411 = vcvt.s32.f32 %v5387
    %v6412 = vcvt.s32.f32 %v5388
    %v6413 = vcvt.s32.f32 %v5389
    %v6414 = vcvt.s32.f32 %v5390
    %v6415 = vcvt.s32.f32 %v5391
    %v6416 = vcvt.s32.f32 %v5392
    %v6417 = vcvt.s32.f32 %v5393
    %v6418 = vcvt.s32.f32 %v5394
    %v6419 = vcvt.s32.f32 %v5395
    %v6420 = vcvt.s32.f32 %v5396
    %v6421 = vcvt.s32.f32 %v5397
    %v6422 = vcvt.s32.f32 %v5398
    %v6423 = vcvt.s32.f32 %v5399
    %v6424 = vcvt.s32.f32 %v5400
    %v6425 = vcvt.s32.f32 %v5401
    %v6426 = vcvt.s32.f32 %v5402
    %v6427 = vcvt.s32.f32 %v5403
    %v6428 = vcvt.s32.f32 %v5404
    %v6429 = vcvt.s32.f32 %v5405
    %v6430 = vcvt.s32.f32 %v5406
    %v6431 = vcvt.s32.f32 %v5407
    %v6432 = vcvt.s32.f32 %v5408
    %v6433 = vcvt.s32.f32 %v5409
    %v6434 = vcvt.s32.f32 %v5410
    %v6435 = vcvt.s32.f32 %v5411
    %v6436 = vcvt.s32.f32 %v5412
    %v6437 = vcvt.s32.f32 %v5413
    %v6438 = vcvt.s32.f32 %v5414
    %v6439 = vcvt.s32.f32 %v5415
    %v6440 = vcvt.s32.f32 %v5416
    %v6441 = vcvt.s32.f32 %v5417
    %v6442 = vcvt.s32.f32 %v5418
    %v6443 = vcvt.s32.f32 %v5419
    %v6444 = vcvt.s32.f32 %v5420
    %v6445 = vcvt.s32.f32 %v5421
    %v6446 = vcvt.s32.f32 %v5422
    %v6447 = vcvt.s32.f32 %v5423
    %v6448 = vcvt.s32.f32 %v5424
    %v6449 = vcvt.s32.f32 %v5425
    %v6450 = vcvt.s32.f32 %v5426
    %v6451 = vcvt.s32.f32 %v5427
    %v6452 = vcvt.s32.f32 %v5428
    %v6453 = vcvt.s32.f32 %v5429
    %v6454 = vcvt.s32.f32 %v5430
    %v6455 = vcvt.s32.f32 %v5431
    %v6456 = vcvt.s32.f32 %v5432
    %v6457 = vcvt.s32.f32 %v5433
    %v6458 = vcvt.s32.f32 %v5434
    %v6459 = vcvt.s32.f32 %v5435
    %v6460 = vcvt.s32.f32 %v5436
    %v6461 = vcvt.s32.f32 %v5437
    %v6462 = vcvt.s32.f32 %v5438
    %v6463 = vcvt.s32.f32 %v5439
    %v6464 = vcvt.s32.f32 %v5440
    %v6465 = vcvt.s32.f32 %v5441
    %v6466 = vcvt.s32.f32 %v5442
    %v6467 = vcvt.s32.f32 %v5443
    %v6468 = vcvt.s32.f32 %v5444
    %v6469 = vcvt.s32.f32 %v5445
    %v6470 = vcvt.s32.f32 %v5446
    %v6471 = vcvt.s32.f32 %v5447
    %v6472 = vcvt.s32.f32 %v5448
    %v6473 = vcvt.s32.f32 %v5449
    %v6474 = vcvt.s32.f32 %v5450
    %v6475 = vcvt.s32.f32 %v5451
    %v6476 = vcvt.s32.f32 %v5452
    %v6477 = vcvt.s32.f32 %v5453
    %v6478 = vcvt.s32.f32 %v5454
    %v6479 = vcvt.s32.f32 %v5455
    %v6480 = vcvt.s32.f32 %v5456
    %v6481 = vcvt.s32.f32 %v5457
    %v6482 = vcvt.s32.f32 %v5458
    %v6483 = vcvt.s32.f32 %v5459
    %v6484 = vcvt.s32.f32 %v5460
    %v6485 = vcvt.s32.f32 %v5461
    %v6486 = vcvt.s32.f32 %v5462
    %v6487 = vcvt.s32.f32 %v5463
    %v6488 = vcvt.s32.f32 %v5464
    %v6489 = vcvt.s32.f32 %v5465
    %v6490 = vcvt.s32.f32 %v5466
    %v6491 = vcvt.s32.f32 %v5467
    %v6492 = vcvt.s32.f32 %v5468
    %v6493 = vcvt.s32.f32 %v5469
    %v6494 = vcvt.s32.f32 %v5470
    %v6495 = vcvt.s32.f32 %v5471
    %v6496 = vcvt.s32.f32 %v5472
    %v6497 = vcvt.s32.f32 %v5473
    %v6498 = vcvt.s32.f32 %v5474
    %v6499 = vcvt.s32.f32 %v5475
    %v6500 = vcvt.s32.f32 %v5476
    %v6501 = vcvt.s32.f32 %v5477
    %v6502 = vcvt.s32.f32 %v5478
    %v6503 = vcvt.s32.f32 %v5479
    %v6504 = vcvt.s32.f32 %v5480
    %v6505 = vcvt.s32.f32 %v5481
    %v6506 = vcvt.s32.f32 %v5482
    %v6507 = vcvt.s32.f32 %v5483
    %v6508 = vcvt.s32.f32 %v5484
    %v6509 = vcvt.s32.f32 %v5485
    %v6510 = vcvt.s32.f32 %v5486
    %v6511 = vcvt.s32.f32 %v5487
    %v6512 = vcvt.s32.f32 %v5488
    %v6513 = vcvt.s32.f32 %v5489
    %v6514 = vcvt.s32.f32 %v5490
    %v6515 = vcvt.s32.f32 %v5491
    %v6516 = vcvt.s32.f32 %v5492
    %v6517 = vcvt.s32.f32 %v5493
    %v6518 = vcvt.s32.f32 %v5494
    %v6519 = vcvt.s32.f32 %v5495
    %v6520 = vcvt.s32.f32 %v5496
    %v6521 = vcvt.s32.f32 %v5497
    %v6522 = vcvt.s32.f32 %v5498
    %v6523 = vcvt.s32.f32 %v5499
    %v6524 = vcvt.s32.f32 %v5500
    %v6525 = vcvt.s32.f32 %v5501
    %v6526 = vcvt.s32.f32 %v5502
    %v6527 = vcvt.s32.f32 %v5503
    %v6528 = vcvt.s32.f32 %v5504
    %v6529 = vcvt.s32.f32 %v5505
    %v6530 = vcvt.s32.f32 %v5506
    %v6531 = vcvt.s32.f32 %v5507
    %v6532 = vcvt.s32.f32 %v5508
    %v6533 = vcvt.s32.f32 %v5509
    %v6534 = vcvt.s32.f32 %v5510
    %v6535 = vcvt.s32.f32 %v5511
    %v6536 = vcvt.s32.f32 %v5512
    %v6537 = vcvt.s32.f32 %v5513
    %v6538 = vcvt.s32.f32 %v5514
    %v6539 = vcvt.s32.f32 %v5515
    %v6540 = vcvt.s32.f32 %v5516
    %v6541 = vcvt.s32.f32 %v5517
    %v6542 = vcvt.s32.f32 %v5518
    %v6543 = vcvt.s32.f32 %v5519
    %v6544 = vcvt.s32.f32 %v5520
    %v6545 = vcvt.s32.f32 %v5521
    %v6546 = vcvt.s32.f32 %v5522
    %v6547 = vcvt.s32.f32 %v5523
    %v6548 = vcvt.s32.f32 %v5524
    %v6549 = vcvt.s32.f32 %v5525
    %v6550 = vcvt.s32.f32 %v5526
    %v6551 = vcvt.s32.f32 %v5527
    %v6552 = vcvt.s32.f32 %v5528
    %v6553 = vcvt.s32.f32 %v5529
    %v6554 = vcvt.s32.f32 %v5530
    %v6555 = vcvt.s32.f32 %v5531
    %v6556 = vcvt.s32.f32 %v5532
    %v6557 = vcvt.s32.f32 %v5533
    %v6558 = vcvt.s32.f32 %v5534
    %v6559 = vcvt.s32.f32 %v5535
    %v6560 = vcvt.s32.f32 %v5536
    %v6561 = vcvt.s32.f32 %v5537
    %v6562 = vcvt.s32.f32 %v5538
    %v6563 = vcvt.s32.f32 %v5539
    %v6564 = vcvt.s32.f32 %v5540
    %v6565 = vcvt.s32.f32 %v5541
    %v6566 = vcvt.s32.f32 %v5542
    %v6567 = vcvt.s32.f32 %v5543
    %v6568 = vcvt.s32.f32 %v5544
    %v6569 = vcvt.s32.f32 %v5545
    %v6570 = vcvt.s32.f32 %v5546
    %v6571 = vcvt.s32.f32 %v5547
    %v6572 = vcvt.s32.f32 %v5548
    %v6573 = vcvt.s32.f32 %v5549
    %v6574 = vcvt.s32.f32 %v5550
    %v6575 = vcvt.s32.f32 %v5551
    %v6576 = vcvt.s32.f32 %v5552
    %v6577 = vcvt.s32.f32 %v5553
    %v6578 = vcvt.s32.f32 %v5554
    %v6579 = vcvt.s32.f32 %v5555
    %v6580 = vcvt.s32.f32 %v5556
    %v6581 = vcvt.s32.f32 %v5557
    %v6582 = vcvt.s32.f32 %v5558
    %v6583 = vcvt.s32.f32 %v5559
    %v6584 = vcvt.s32.f32 %v5560
    %v6585 = vcvt.s32.f32 %v5561
    %v6586 = vcvt.s32.f32 %v5562
    %v6587 = vcvt.s32.f32 %v5563
    %v6588 = vcvt.s32.f32 %v5564
    %v6589 = vcvt.s32.f32 %v5565
    %v6590 = vcvt.s32.f32 %v5566
    %v6591 = vcvt.s32.f32 %v5567
    %v6592 = vcvt.s32.f32 %v5568
    %v6593 = vcvt.s32.f32 %v5569
    %v6594 = vcvt.s32.f32 %v5570
    %v6595 = vcvt.s32.f32 %v5571
    %v6596 = vcvt.s32.f32 %v5572
    %v6597 = vcvt.s32.f32 %v5573
    %v6598 = vcvt.s32.f32 %v5574
    %v6599 = vcvt.s32.f32 %v5575
    %v6600 = vcvt.s32.f32 %v5576
    %v6601 = vcvt.s32.f32 %v5577
    %v6602 = vcvt.s32.f32 %v5578
    %v6603 = vcvt.s32.f32 %v5579
    %v6604 = vcvt.s32.f32 %v5580
    %v6605 = vcvt.s32.f32 %v5581
    %v6606 = vcvt.s32.f32 %v5582
    %v6607 = vcvt.s32.f32 %v5583
    %v6608 = vcvt.s32.f32 %v5584
    %v6609 = vcvt.s32.f32 %v5585
    %v6610 = vcvt.s32.f32 %v5586
    %v6611 = vcvt.s32.f32 %v5587
    %v6612 = vcvt.s32.f32 %v5588
    %v6613 = vcvt.s32.f32 %v5589
    %v6614 = vcvt.s32.f32 %v5590
    %v6615 = vcvt.s32.f32 %v5591
    %v6616 = vcvt.s32.f32 %v5592
    %v6617 = vcvt.s32.f32 %v5593
    %v6618 = vcvt.s32.f32 %v5594
    %v6619 = vcvt.s32.f32 %v5595
    %v6620 = vcvt.s32.f32 %v5596
    %v6621 = vcvt.s32.f32 %v5597
    %v6622 = vcvt.s32.f32 %v5598
    %v6623 = vcvt.s32.f32 %v5599
    %v6624 = vcvt.s32.f32 %v5600
    %v6625 = vcvt.s32.f32 %v5601
    %v6626 = vcvt.s32.f32 %v5602
    %v6627 = vcvt.s32.f32 %v5603
    %v6628 = vcvt.s32.f32 %v5604
    %v6629 = vcvt.s32.f32 %v5605
    %v6630 = vcvt.s32.f32 %v5606
    %v6631 = vcvt.s32.f32 %v5607
    %v6632 = vcvt.s32.f32 %v5608
    %v6633 = vcvt.s32.f32 %v5609
    %v6634 = vcvt.s32.f32 %v5610
    %v6635 = vcvt.s32.f32 %v5611
    %v6636 = vcvt.s32.f32 %v5612
    %v6637 = vcvt.s32.f32 %v5613
    %v6638 = vcvt.s32.f32 %v5614
    %v6639 = vcvt.s32.f32 %v5615
    %v6640 = vcvt.s32.f32 %v5616
    %v6641 = vcvt.s32.f32 %v5617
    %v6642 = vcvt.s32.f32 %v5618
    %v6643 = vcvt.s32.f32 %v5619
    %v6644 = vcvt.s32.f32 %v5620
    %v6645 = vcvt.s32.f32 %v5621
    %v6646 = vcvt.s32.f32 %v5622
    %v6647 = vcvt.s32.f32 %v5623
    %v6648 = vcvt.s32.f32 %v5624
    %v6649 = vcvt.s32.f32 %v5625
    %v6650 = vcvt.s32.f32 %v5626
    %v6651 = vcvt.s32.f32 %v5627
    %v6652 = vcvt.s32.f32 %v5628
    %v6653 = vcvt.s32.f32 %v5629
    %v6654 = vcvt.s32.f32 %v5630
    %v6655 = vcvt.s32.f32 %v5631
    %v6656 = vcvt.s32.f32 %v5632
    %v6657 = vcvt.s32.f32 %v5633
    %v6658 = vcvt.s32.f32 %v5634
    %v6659 = vcvt.s32.f32 %v5635
    %v6660 = vcvt.s32.f32 %v5636
    %v6661 = vcvt.s32.f32 %v5637
    %v6662 = vcvt.s32.f32 %v5638
    %v6663 = vcvt.s32.f32 %v5639
    %v6664 = vcvt.s32.f32 %v5640
    %v6665 = vcvt.s32.f32 %v5641
    %v6666 = vcvt.s32.f32 %v5642
    %v6667 = vcvt.s32.f32 %v5643
    %v6668 = vcvt.s32.f32 %v5644
    %v6669 = vcvt.s32.f32 %v5645
    %v6670 = vcvt.s32.f32 %v5646
    %v6671 = vcvt.s32.f32 %v5647
    %v6672 = vcvt.s32.f32 %v5648
    %v6673 = vcvt.s32.f32 %v5649
    %v6674 = vcvt.s32.f32 %v5650
    %v6675 = vcvt.s32.f32 %v5651
    %v6676 = vcvt.s32.f32 %v5652
    %v6677 = vcvt.s32.f32 %v5653
    %v6678 = vcvt.s32.f32 %v5654
    %v6679 = vcvt.s32.f32 %v5655
    %v6680 = vcvt.s32.f32 %v5656
    %v6681 = vcvt.s32.f32 %v5657
    %v6682 = vcvt.s32.f32 %v5658
    %v6683 = vcvt.s32.f32 %v5659
    %v6684 = vcvt.s32.f32 %v5660
    %v6685 = vcvt.s32.f32 %v5661
    %v6686 = vcvt.s32.f32 %v5662
    %v6687 = vcvt.s32.f32 %v5663
    %v6688 = vcvt.s32.f32 %v5664
    %v6689 = vcvt.s32.f32 %v5665
    %v6690 = vcvt.s32.f32 %v5666
    %v6691 = vcvt.s32.f32 %v5667
    %v6692 = vcvt.s32.f32 %v5668
    %v6693 = vcvt.s32.f32 %v5669
    %v6694 = vcvt.s32.f32 %v5670
    %v6695 = vcvt.s32.f32 %v5671
    %v6696 = vcvt.s32.f32 %v5672
    %v6697 = vcvt.s32.f32 %v5673
    %v6698 = vcvt.s32.f32 %v5674
    %v6699 = vcvt.s32.f32 %v5675
    %v6700 = vcvt.s32.f32 %v5676
    %v6701 = vcvt.s32.f32 %v5677
    %v6702 = vcvt.s32.f32 %v5678
    %v6703 = vcvt.s32.f32 %v5679
    %v6704 = vcvt.s32.f32 %v5680
    %v6705 = vcvt.s32.f32 %v5681
    %v6706 = vcvt.s32.f32 %v5682
    %v6707 = vcvt.s32.f32 %v5683
    %v6708 = vcvt.s32.f32 %v5684
    %v6709 = vcvt.s32.f32 %v5685
    %v6710 = vcvt.s32.f32 %v5686
    %v6711 = vcvt.s32.f32 %v5687
    %v6712 = vcvt.s32.f32 %v5688
    %v6713 = vcvt.s32.f32 %v5689
    %v6714 = vcvt.s32.f32 %v5690
    %v6715 = vcvt.s32.f32 %v5691
    %v6716 = vcvt.s32.f32 %v5692
    %v6717 = vcvt.s32.f32 %v5693
    %v6718 = vcvt.s32.f32 %v5694
    %v6719 = vcvt.s32.f32 %v5695
    %v6720 = vcvt.s32.f32 %v5696
    %v6721 = vcvt.s32.f32 %v5697
    %v6722 = vcvt.s32.f32 %v5698
    %v6723 = vcvt.s32.f32 %v5699
    %v6724 = vcvt.s32.f32 %v5700
    %v6725 = vcvt.s32.f32 %v5701
    %v6726 = vcvt.s32.f32 %v5702
    %v6727 = vcvt.s32.f32 %v5703
    %v6728 = vcvt.s32.f32 %v5704
    %v6729 = vcvt.s32.f32 %v5705
    %v6730 = vcvt.s32.f32 %v5706
    %v6731 = vcvt.s32.f32 %v5707
    %v6732 = vcvt.s32.f32 %v5708
    %v6733 = vcvt.s32.f32 %v5709
    %v6734 = vcvt.s32.f32 %v5710
    %v6735 = vcvt.s32.f32 %v5711
    %v6736 = vcvt.s32.f32 %v5712
    %v6737 = vcvt.s32.f32 %v5713
    %v6738 = vcvt.s32.f32 %v5714
    %v6739 = vcvt.s32.f32 %v5715
    %v6740 = vcvt.s32.f32 %v5716
    %v6741 = vcvt.s32.f32 %v5717
    %v6742 = vcvt.s32.f32 %v5718
    %v6743 = vcvt.s32.f32 %v5719
    %v6744 = vcvt.s32.f32 %v5720
    %v6745 = vcvt.s32.f32 %v5721
    %v6746 = vcvt.s32.f32 %v5722
    %v6747 = vcvt.s32.f32 %v5723
    %v6748 = vcvt.s32.f32 %v5724
    %v6749 = vcvt.s32.f32 %v5725
    %v6750 = vcvt.s32.f32 %v5726
    %v6751 = vcvt.s32.f32 %v5727
    %v6752 = vcvt.s32.f32 %v5728
    %v6753 = vcvt.s32.f32 %v5729
    %v6754 = vcvt.s32.f32 %v5730
    %v6755 = vcvt.s32.f32 %v5731
    %v6756 = vcvt.s32.f32 %v5732
    %v6757 = vcvt.s32.f32 %v5733
    %v6758 = vcvt.s32.f32 %v5734
    %v6759 = vcvt.s32.f32 %v5735
    %v6760 = vcvt.s32.f32 %v5736
    %v6761 = vcvt.s32.f32 %v5737
    %v6762 = vcvt.s32.f32 %v5738
    %v6763 = vcvt.s32.f32 %v5739
    %v6764 = vcvt.s32.f32 %v5740
    %v6765 = vcvt.s32.f32 %v5741
    %v6766 = vcvt.s32.f32 %v5742
    %v6767 = vcvt.s32.f32 %v5743
    %v6768 = vcvt.s32.f32 %v5744
    %v6769 = vcvt.s32.f32 %v5745
    %v6770 = vcvt.s32.f32 %v5746
    %v6771 = vcvt.s32.f32 %v5747
    %v6772 = vcvt.s32.f32 %v5748
    %v6773 = vcvt.s32.f32 %v5749
    %v6774 = vcvt.s32.f32 %v5750
    %v6775 = vcvt.s32.f32 %v5751
    %v6776 = vcvt.s32.f32 %v5752
    %v6777 = vcvt.s32.f32 %v5753
    %v6778 = vcvt.s32.f32 %v5754
    %v6779 = vcvt.s32.f32 %v5755
    %v6780 = vcvt.s32.f32 %v5756
    %v6781 = vcvt.s32.f32 %v5757
    %v6782 = vcvt.s32.f32 %v5758
    %v6783 = vcvt.s32.f32 %v5759
    %v6784 = vcvt.s32.f32 %v5760
    %v6785 = vcvt.s32.f32 %v5761
    %v6786 = vcvt.s32.f32 %v5762
    %v6787 = vcvt.s32.f32 %v5763
    %v6788 = vcvt.s32.f32 %v5764
    %v6789 = vcvt.s32.f32 %v5765
    %v6790 = vcvt.s32.f32 %v5766
    %v6791 = vcvt.s32.f32 %v5767
    %v6792 = vcvt.s32.f32 %v5768
    %v6793 = vcvt.s32.f32 %v5769
    %v6794 = vcvt.s32.f32 %v5770
    %v6795 = vcvt.s32.f32 %v5771
    %v6796 = vcvt.s32.f32 %v5772
    %v6797 = vcvt.s32.f32 %v5773
    %v6798 = vcvt.s32.f32 %v5774
    %v6799 = vcvt.s32.f32 %v5775
    %v6800 = vcvt.s32.f32 %v5776
    %v6801 = vcvt.s32.f32 %v5777
    %v6802 = vcvt.s32.f32 %v5778
    %v6803 = vcvt.s32.f32 %v5779
    %v6804 = vcvt.s32.f32 %v5780
    %v6805 = vcvt.s32.f32 %v5781
    %v6806 = vcvt.s32.f32 %v5782
    %v6807 = vcvt.s32.f32 %v5783
    %v6808 = vcvt.s32.f32 %v5784
    %v6809 = vcvt.s32.f32 %v5785
    %v6810 = vcvt.s32.f32 %v5786
    %v6811 = vcvt.s32.f32 %v5787
    %v6812 = vcvt.s32.f32 %v5788
    %v6813 = vcvt.s32.f32 %v5789
    %v6814 = vcvt.s32.f32 %v5790
    %v6815 = vcvt.s32.f32 %v5791
    %v6816 = vcvt.s32.f32 %v5792
    %v6817 = vcvt.s32.f32 %v5793
    %v6818 = vcvt.s32.f32 %v5794
    %v6819 = vcvt.s32.f32 %v5795
    %v6820 = vcvt.s32.f32 %v5796
    %v6821 = vcvt.s32.f32 %v5797
    %v6822 = vcvt.s32.f32 %v5798
    %v6823 = vcvt.s32.f32 %v5799
    %v6824 = vcvt.s32.f32 %v5800
    %v6825 = vcvt.s32.f32 %v5801
    %v6826 = vcvt.s32.f32 %v5802
    %v6827 = vcvt.s32.f32 %v5803
    %v6828 = vcvt.s32.f32 %v5804
    %v6829 = vcvt.s32.f32 %v5805
    %v6830 = vcvt.s32.f32 %v5806
    %v6831 = vcvt.s32.f32 %v5807
    %v6832 = vcvt.s32.f32 %v5808
    %v6833 = vcvt.s32.f32 %v5809
    %v6834 = vcvt.s32.f32 %v5810
    %v6835 = vcvt.s32.f32 %v5811
    %v6836 = vcvt.s32.f32 %v5812
    %v6837 = vcvt.s32.f32 %v5813
    %v6838 = vcvt.s32.f32 %v5814
    %v6839 = vcvt.s32.f32 %v5815
    %v6840 = vcvt.s32.f32 %v5816
    %v6841 = vcvt.s32.f32 %v5817
    %v6842 = vcvt.s32.f32 %v5818
    %v6843 = vcvt.s32.f32 %v5819
    %v6844 = vcvt.s32.f32 %v5820
    %v6845 = vcvt.s32.f32 %v5821
    %v6846 = vcvt.s32.f32 %v5822
    %v6847 = vcvt.s32.f32 %v5823
    %v6848 = vcvt.s32.f32 %v5824
    %v6849 = vcvt.s32.f32 %v5825
    %v6850 = vcvt.s32.f32 %v5826
    %v6851 = vcvt.s32.f32 %v5827
    %v6852 = vcvt.s32.f32 %v5828
    %v6853 = vcvt.s32.f32 %v5829
    %v6854 = vcvt.s32.f32 %v5830
    %v6855 = vcvt.s32.f32 %v5831
    %v6856 = vcvt.s32.f32 %v5832
    %v6857 = vcvt.s32.f32 %v5833
    %v6858 = vcvt.s32.f32 %v5834
    %v6859 = vcvt.s32.f32 %v5835
    %v6860 = vcvt.s32.f32 %v5836
    %v6861 = vcvt.s32.f32 %v5837
    %v6862 = vcvt.s32.f32 %v5838
    %v6863 = vcvt.s32.f32 %v5839
    %v6864 = vcvt.s32.f32 %v5840
    %v6865 = vcvt.s32.f32 %v5841
    %v6866 = vcvt.s32.f32 %v5842
    %v6867 = vcvt.s32.f32 %v5843
    %v6868 = vcvt.s32.f32 %v5844
    %v6869 = vcvt.s32.f32 %v5845
    %v6870 = vcvt.s32.f32 %v5846
    %v6871 = vcvt.s32.f32 %v5847
    %v6872 = vcvt.s32.f32 %v5848
    %v6873 = vcvt.s32.f32 %v5849
    %v6874 = vcvt.s32.f32 %v5850
    %v6875 = vcvt.s32.f32 %v5851
    %v6876 = vcvt.s32.f32 %v5852
    %v6877 = vcvt.s32.f32 %v5853
    %v6878 = vcvt.s32.f32 %v5854
    %v6879 = vcvt.s32.f32 %v5855
    %v6880 = vcvt.s32.f32 %v5856
    %v6881 = vcvt.s32.f32 %v5857
    %v6882 = vcvt.s32.f32 %v5858
    %v6883 = vcvt.s32.f32 %v5859
    %v6884 = vcvt.s32.f32 %v5860
    %v6885 = vcvt.s32.f32 %v5861
    %v6886 = vcvt.s32.f32 %v5862
    %v6887 = vcvt.s32.f32 %v5863
    %v6888 = vcvt.s32.f32 %v5864
    %v6889 = vcvt.s32.f32 %v5865
    %v6890 = vcvt.s32.f32 %v5866
    %v6891 = vcvt.s32.f32 %v5867
    %v6892 = vcvt.s32.f32 %v5868
    %v6893 = vcvt.s32.f32 %v5869
    %v6894 = vcvt.s32.f32 %v5870
    %v6895 = vcvt.s32.f32 %v5871
    %v6896 = vcvt.s32.f32 %v5872
    %v6897 = vcvt.s32.f32 %v5873
    %v6898 = vcvt.s32.f32 %v5874
    %v6899 = vcvt.s32.f32 %v5875
    %v6900 = vcvt.s32.f32 %v5876
    %v6901 = vcvt.s32.f32 %v5877
    %v6902 = vcvt.s32.f32 %v5878
    %v6903 = vcvt.s32.f32 %v5879
    %v6904 = vcvt.s32.f32 %v5880
    %v6905 = vcvt.s32.f32 %v5881
    %v6906 = vcvt.s32.f32 %v5882
    %v6907 = vcvt.s32.f32 %v5883
    %v6908 = vcvt.s32.f32 %v5884
    %v6909 = vcvt.s32.f32 %v5885
    %v6910 = vcvt.s32.f32 %v5886
    %v6911 = vcvt.s32.f32 %v5887
    %v6912 = vcvt.s32.f32 %v5888
    %v6913 = vcvt.s32.f32 %v5889
    %v6914 = vcvt.s32.f32 %v5890
    %v6915 = vcvt.s32.f32 %v5891
    %v6916 = vcvt.s32.f32 %v5892
    %v6917 = vcvt.s32.f32 %v5893
    %v6918 = vcvt.s32.f32 %v5894
    %v6919 = vcvt.s32.f32 %v5895
    %v6920 = vcvt.s32.f32 %v5896
    %v6921 = vcvt.s32.f32 %v5897
    %v6922 = vcvt.s32.f32 %v5898
    %v6923 = vcvt.s32.f32 %v5899
    %v6924 = vcvt.s32.f32 %v5900
    %v6925 = vcvt.s32.f32 %v5901
    %v6926 = vcvt.s32.f32 %v5902
    %v6927 = vcvt.s32.f32 %v5903
    %v6928 = vcvt.s32.f32 %v5904
    %v6929 = vcvt.s32.f32 %v5905
    %v6930 = vcvt.s32.f32 %v5906
    %v6931 = vcvt.s32.f32 %v5907
    %v6932 = vcvt.s32.f32 %v5908
    %v6933 = vcvt.s32.f32 %v5909
    %v6934 = vcvt.s32.f32 %v5910
    %v6935 = vcvt.s32.f32 %v5911
    %v6936 = vcvt.s32.f32 %v5912
    %v6937 = vcvt.s32.f32 %v5913
    %v6938 = vcvt.s32.f32 %v5914
    %v6939 = vcvt.s32.f32 %v5915
    %v6940 = vcvt.s32.f32 %v5916
    %v6941 = vcvt.s32.f32 %v5917
    %v6942 = vcvt.s32.f32 %v5918
    %v6943 = vcvt.s32.f32 %v5919
    %v6944 = vcvt.s32.f32 %v5920
    %v6945 = vcvt.s32.f32 %v5921
    %v6946 = vcvt.s32.f32 %v5922
    %v6947 = vcvt.s32.f32 %v5923
    %v6948 = vcvt.s32.f32 %v5924
    %v6949 = vcvt.s32.f32 %v5925
    %v6950 = vcvt.s32.f32 %v5926
    %v6951 = vcvt.s32.f32 %v5927
    %v6952 = vcvt.s32.f32 %v5928
    %v6953 = vcvt.s32.f32 %v5929
    %v6954 = vcvt.s32.f32 %v5930
    %v6955 = vcvt.s32.f32 %v5931
    %v6956 = vcvt.s32.f32 %v5932
    %v6957 = vcvt.s32.f32 %v5933
    %v6958 = vcvt.s32.f32 %v5934
    %v6959 = vcvt.s32.f32 %v5935
    %v6960 = vcvt.s32.f32 %v5936
    %v6961 = vcvt.s32.f32 %v5937
    %v6962 = vcvt.s32.f32 %v5938
    %v6963 = vcvt.s32.f32 %v5939
    %v6964 = vcvt.s32.f32 %v5940
    %v6965 = vcvt.s32.f32 %v5941
    %v6966 = vcvt.s32.f32 %v5942
    %v6967 = vcvt.s32.f32 %v5943
    %v6968 = vcvt.s32.f32 %v5944
    %v6969 = vcvt.s32.f32 %v5945
    %v6970 = vcvt.s32.f32 %v5946
    %v6971 = vcvt.s32.f32 %v5947
    %v6972 = vcvt.s32.f32 %v5948
    %v6973 = vcvt.s32.f32 %v5949
    %v6974 = vcvt.s32.f32 %v5950
    %v6975 = vcvt.s32.f32 %v5951
    %v6976 = vcvt.s32.f32 %v5952
    %v6977 = vcvt.s32.f32 %v5953
    %v6978 = vcvt.s32.f32 %v5954
    %v6979 = vcvt.s32.f32 %v5955
    %v6980 = vcvt.s32.f32 %v5956
    %v6981 = vcvt.s32.f32 %v5957
    %v6982 = vcvt.s32.f32 %v5958
    %v6983 = vcvt.s32.f32 %v5959
    %v6984 = vcvt.s32.f32 %v5960
    %v6985 = vcvt.s32.f32 %v5961
    %v6986 = vcvt.s32.f32 %v5962
    %v6987 = vcvt.s32.f32 %v5963
    %v6988 = vcvt.s32.f32 %v5964
    %v6989 = vcvt.s32.f32 %v5965
    %v6990 = vcvt.s32.f32 %v5966
    %v6991 = vcvt.s32.f32 %v5967
    %v6992 = vcvt.s32.f32 %v5968
    %v6993 = vcvt.s32.f32 %v5969
    %v6994 = vcvt.s32.f32 %v5970
    %v6995 = vcvt.s32.f32 %v5971
    %v6996 = vcvt.s32.f32 %v5972
    %v6997 = vcvt.s32.f32 %v5973
    %v6998 = vcvt.s32.f32 %v5974
    %v6999 = vcvt.s32.f32 %v5975
    %v7000 = vcvt.s32.f32 %v5976
    %v7001 = vcvt.s32.f32 %v5977
    %v7002 = vcvt.s32.f32 %v5978
    %v7003 = vcvt.s32.f32 %v5979
    %v7004 = vcvt.s32.f32 %v5980
    %v7005 = vcvt.s32.f32 %v5981
    %v7006 = vcvt.s32.f32 %v5982
    %v7007 = vcvt.s32.f32 %v5983
    %v7008 = vcvt.s32.f32 %v5984
    %v7009 = vcvt.s32.f32 %v5985
    %v7010 = vcvt.s32.f32 %v5986
    %v7011 = vcvt.s32.f32 %v5987
    %v7012 = vcvt.s32.f32 %v5988
    %v7013 = vcvt.s32.f32 %v5989
    %v7014 = vcvt.s32.f32 %v5990
    %v7015 = vcvt.s32.f32 %v5991
    %v7016 = vcvt.s32.f32 %v5992
    %v7017 = vcvt.s32.f32 %v5993
    %v7018 = vcvt.s32.f32 %v5994
    %v7019 = vcvt.s32.f32 %v5995
    %v7020 = vcvt.s32.f32 %v5996
    %v7021 = vcvt.s32.f32 %v5997
    %v7022 = vcvt.s32.f32 %v5998
    %v7023 = vcvt.s32.f32 %v5999
    %v7024 = vcvt.s32.f32 %v6000
    %v7025 = vcvt.s32.f32 %v6001
    %v7026 = vcvt.s32.f32 %v6002
    %v7027 = vcvt.s32.f32 %v6003
    %v7028 = vcvt.s32.f32 %v6004
    %v7029 = vcvt.s32.f32 %v6005
    %v7030 = vcvt.s32.f32 %v6006
    %v7031 = vcvt.s32.f32 %v6007
    %v7032 = vcvt.s32.f32 %v6008
    %v7033 = vcvt.s32.f32 %v6009
    %v7034 = vcvt.s32.f32 %v6010
    %v7035 = vcvt.s32.f32 %v6011
    %v7036 = vcvt.s32.f32 %v6012
    %v7037 = vcvt.s32.f32 %v6013
    %v7038 = vcvt.s32.f32 %v6014
    %v7039 = vcvt.s32.f32 %v6015
    %v7040 = vcvt.s32.f32 %v6016
    %v7041 = vcvt.s32.f32 %v6017
    %v7042 = vcvt.s32.f32 %v6018
    %v7043 = vcvt.s32.f32 %v6019
    %v7044 = vcvt.s32.f32 %v6020
    %v7045 = vcvt.s32.f32 %v6021
    %v7046 = vcvt.s32.f32 %v6022
    %v7047 = vcvt.s32.f32 %v6023
    %v7048 = vcvt.s32.f32 %v6024
    %v7049 = vcvt.s32.f32 %v6025
    %v7050 = vcvt.s32.f32 %v6026
    %v7051 = vcvt.s32.f32 %v6027
    %v7052 = vcvt.s32.f32 %v6028
    %v7053 = vcvt.s32.f32 %v6029
    %v7054 = vcvt.s32.f32 %v6030
    %v7055 = vcvt.s32.f32 %v6031
    %v7056 = vcvt.s32.f32 %v6032
    %v7057 = vcvt.s32.f32 %v6033
    %v7058 = vcvt.s32.f32 %v6034
    %v7059 = vcvt.s32.f32 %v6035
    %v7060 = vcvt.s32.f32 %v6036
    %v7061 = vcvt.s32.f32 %v6037
    %v7062 = vcvt.s32.f32 %v6038
    %v7063 = vcvt.s32.f32 %v6039
    %v7064 = vcvt.s32.f32 %v6040
    %v7065 = vcvt.s32.f32 %v6041
    %v7066 = vcvt.s32.f32 %v6042
    %v7067 = vcvt.s32.f32 %v6043
    %v7068 = vcvt.s32.f32 %v6044
    %v7069 = vcvt.s32.f32 %v6045
    %v7070 = vcvt.s32.f32 %v6046
    %v7071 = vcvt.s32.f32 %v6047
    %v7072 = vcvt.s32.f32 %v6048
    %v7073 = vcvt.s32.f32 %v6049
    %v7074 = vcvt.s32.f32 %v6050
    %v7075 = vcvt.s32.f32 %v6051
    %v7076 = vcvt.s32.f32 %v6052
    %v7077 = vcvt.s32.f32 %v6053
    %v7078 = vcvt.s32.f32 %v6054
    %v7079 = vcvt.s32.f32 %v6055
    %v7080 = vcvt.s32.f32 %v6056
    %v7081 = vcvt.s32.f32 %v6057
    %v7082 = vcvt.s32.f32 %v6058
    %v7083 = vcvt.s32.f32 %v6059
    %v7084 = vcvt.s32.f32 %v6060
    %v7085 = vcvt.s32.f32 %v6061
    %v7086 = vcvt.s32.f32 %v6062
    %v7087 = vcvt.s32.f32 %v6063
    %v7088 = vcvt.s32.f32 %v6064
    %v7089 = vcvt.s32.f32 %v6065
    %v7090 = vcvt.s32.f32 %v6066
    %v7091 = vcvt.s32.f32 %v6067
    %v7092 = vcvt.s32.f32 %v6068
    %v7093 = vcvt.s32.f32 %v6069
    %v7094 = vcvt.s32.f32 %v6070
    %v7095 = vcvt.s32.f32 %v6071
    %v7096 = vcvt.s32.f32 %v6072
    %v7097 = vcvt.s32.f32 %v6073
    %v7098 = vcvt.s32.f32 %v6074
    %v7099 = vcvt.s32.f32 %v6075
    %v7100 = vcvt.s32.f32 %v6076
    %v7101 = vcvt.s32.f32 %v6077
    %v7102 = vcvt.s32.f32 %v6078
    %v7103 = vcvt.s32.f32 %v6079
    %v7104 = vcvt.s32.f32 %v6080
    %v7105 = vcvt.s32.f32 %v6081
    %v7106 = vcvt.s32.f32 %v6082
    %v7107 = vcvt.s32.f32 %v6083
    %v7108 = vcvt.s32.f32 %v6084
    %v7109 = vcvt.s32.f32 %v6085
    %v7110 = vcvt.s32.f32 %v6086
    %v7111 = vcvt.s32.f32 %v6087
    %v7112 = vcvt.s32.f32 %v6088
    %v7113 = vcvt.s32.f32 %v6089
    %v7114 = vcvt.s32.f32 %v6090
    %v7115 = vcvt.s32.f32 %v6091
    %v7116 = vcvt.s32.f32 %v6092
    %v7117 = vcvt.s32.f32 %v6093
    %v7118 = vcvt.s32.f32 %v6094
    %v7119 = vcvt.s32.f32 %v6095
    %v7120 = vcvt.s32.f32 %v6096
    %v7121 = vcvt.s32.f32 %v6097
    %v7122 = vcvt.s32.f32 %v6098
    %v7123 = vcvt.s32.f32 %v6099
    %v7124 = vcvt.s32.f32 %v6100
    %v7125 = vcvt.s32.f32 %v6101
    %v7126 = vcvt.s32.f32 %v6102
    %v7127 = vcvt.s32.f32 %v6103
    %v7128 = vcvt.s32.f32 %v6104
    %v7129 = vcvt.s32.f32 %v6105
    %v7130 = vcvt.s32.f32 %v6106
    %v7131 = vcvt.s32.f32 %v6107
    %v7132 = vcvt.s32.f32 %v6108
    %v7133 = vcvt.s32.f32 %v6109
    %v7134 = vcvt.s32.f32 %v6110
    %v7135 = vcvt.s32.f32 %v6111
    %v7136 = vcvt.s32.f32 %v6112
    %v7137 = vcvt.s32.f32 %v6113
    %v7138 = vcvt.s32.f32 %v6114
    %v7139 = vcvt.s32.f32 %v6115
    %v7140 = vcvt.s32.f32 %v6116
    %v7141 = vcvt.s32.f32 %v6117
    %v7142 = vcvt.s32.f32 %v6118
    %v7143 = vcvt.s32.f32 %v6119
    %v7144 = vcvt.s32.f32 %v6120
    %v7145 = vcvt.s32.f32 %v6121
    %v7146 = vcvt.s32.f32 %v6122
    %v7147 = vcvt.s32.f32 %v6123
    %v7148 = vcvt.s32.f32 %v6124
    %v7149 = vcvt.s32.f32 %v6125
    %v7150 = vcvt.s32.f32 %v6126
    %v7151 = vcvt.s32.f32 %v6127
    %v7152 = vcvt.s32.f32 %v6128
    %v7153 = vcvt.s32.f32 %v6129
    %v7154 = vcvt.s32.f32 %v6130
    %v7155 = vcvt.s32.f32 %v6131
    %v7156 = vcvt.s32.f32 %v6132
    %v7157 = vcvt.s32.f32 %v6133
    %v7158 = vcvt.s32.f32 %v6134
    %v7159 = vcvt.s32.f32 %v6135
    %v7160 = vcvt.s32.f32 %v6136
    %v7161 = vcvt.s32.f32 %v6137
    %v7162 = vcvt.s32.f32 %v6138
    %v7163 = vcvt.s32.f32 %v6139
    %v7164 = vcvt.s32.f32 %v6140
    %v7165 = vcvt.s32.f32 %v6141
    %v7166 = vcvt.s32.f32 %v6142
    %v7167 = vcvt.s32.f32 %v6143
    %v7168 = vcvt.s32.f32 %v6144
    %v7169 = vcvt.s32.f32 %v6145
    %v7170 = vcvt.s32.f32 %v6146
    %v7171 = vcvt.s32.f32 %v6147
    %v7172 = vcvt.s32.f32 %v6148
    %v7173 = vcvt.s32.f32 %v6149
    %v7174 = vcvt.s32.f32 %v6150
    %v7175 = vcvt.s32.f32 %v6151
    %v7176 = vcvt.s32.f32 %v6152
    %v7177 = vcvt.s32.f32 %v6153
    %v7178 = vcvt.s32.f32 %v6154
    %v7179 = vcvt.s32.f32 %v6155
    %v7180 = vcvt.s32.f32 %v6156
    %v7181 = vcvt.s32.f32 %v6157
    %v7182 = vcvt.s32.f32 %v6158
    %v7183 = vcvt.s32.f32 %v6159
    %v7184 = vcvt.s32.f32 %v6160
    %v7185 = vcvt.s32.f32 %v6161
    %v7186 = vcvt.s32.f32 %v6162
    %v7187 = vcvt.s32.f32 %v6163
    %v7188 = vcvt.s32.f32 %v6164
    %v7189 = vcvt.s32.f32 %v6165
    %v7190 = vcvt.s32.f32 %v6166
    %v7191 = vcvt.s32.f32 %v6167
    %v7192 = vcvt.s32.f32 %v6168
    %v7193 = vcvt.s32.f32 %v6169
    %v7194 = vcvt.s32.f32 %v6170
    %v7195 = vcvt.s32.f32 %v6171
    %v7196 = vcvt.s32.f32 %v6172
    %v7197 = vcvt.s32.f32 %v6173
    %v7198 = vcvt.s32.f32 %v6174
    %v7199 = vcvt.s32.f32 %v6175
    %v7200 = vcvt.s32.f32 %v6176
    %v7201 = vcvt.s32.f32 %v6177
    %v7202 = vcvt.s32.f32 %v6178
    %v7203 = vcvt.s32.f32 %v6179
    %v7204 = vcvt.s32.f32 %v6180
    %v7205 = vcvt.s32.f32 %v6181
    %v7206 = vcvt.s32.f32 %v6182
    %v7207 = vcvt.s32.f32 %v6183
    %v7208 = vcvt.s32.f32 %v6184
    %v7209 = vcvt.s32.f32 %v6185
    %v7210 = vcvt.s32.f32 %v6186
    %v7211 = vcvt.s32.f32 %v6187
    %v7212 = vcvt.s32.f32 %v6188
    %v7213 = vcvt.s32.f32 %v6189
    %v7214 = vcvt.s32.f32 %v6190
    %v7215 = vcvt.s32.f32 %v6191
    %v7216 = vcvt.s32.f32 %v6192
    %v7217 = vcvt.s32.f32 %v6193
    %v7218 = vcvt.s32.f32 %v6194
    %v7219 = vcvt.s32.f32 %v6195
    %v7220 = vcvt.s32.f32 %v6196
    %v7221 = vcvt.s32.f32 %v6197
    %v7222 = vcvt.s32.f32 %v6198
    %v7223 = vcvt.s32.f32 %v6199
    %v7224 = vcvt.s32.f32 %v6200
    %v7225 = vcvt.s32.f32 %v6201
    %v7226 = vcvt.s32.f32 %v6202
    %v7227 = vcvt.s32.f32 %v6203
    %v7228 = vcvt.s32.f32 %v6204
    %v7229 = vcvt.s32.f32 %v6205
    %v7230 = vcvt.s32.f32 %v6206
    %v7231 = vpack.c.bf16 %v6271, %v6207
    %v7232 = vpack.c.bf16 %v6272, %v6208
    %v7233 = vpack.c.bf16 %v6273, %v6209
    %v7234 = vpack.c.bf16 %v6274, %v6210
    %v7235 = vpack.c.bf16 %v6275, %v6211
    %v7236 = vpack.c.bf16 %v6276, %v6212
    %v7237 = vpack.c.bf16 %v6277, %v6213
    %v7238 = vpack.c.bf16 %v6278, %v6214
    %v7239 = vpack.c.bf16 %v6279, %v6215
    %v7240 = vpack.c.bf16 %v6280, %v6216
    %v7241 = vpack.c.bf16 %v6281, %v6217
    %v7242 = vpack.c.bf16 %v6282, %v6218
    %v7243 = vpack.c.bf16 %v6283, %v6219
    %v7244 = vpack.c.bf16 %v6284, %v6220
    %v7245 = vpack.c.bf16 %v6285, %v6221
    %v7246 = vpack.c.bf16 %v6286, %v6222
    %v7247 = vpack.c.bf16 %v6287, %v6223
    %v7248 = vpack.c.bf16 %v6288, %v6224
    %v7249 = vpack.c.bf16 %v6289, %v6225
    %v7250 = vpack.c.bf16 %v6290, %v6226
    %v7251 = vpack.c.bf16 %v6291, %v6227
    %v7252 = vpack.c.bf16 %v6292, %v6228
    %v7253 = vpack.c.bf16 %v6293, %v6229
    %v7254 = vpack.c.bf16 %v6294, %v6230
    %v7255 = vpack.c.bf16 %v6295, %v6231
    %v7256 = vpack.c.bf16 %v6296, %v6232
    %v7257 = vpack.c.bf16 %v6297, %v6233
    %v7258 = vpack.c.bf16 %v6298, %v6234
    %v7259 = vpack.c.bf16 %v6299, %v6235
    %v7260 = vpack.c.bf16 %v6300, %v6236
    %v7261 = vpack.c.bf16 %v6301, %v6237
    %v7262 = vpack.c.bf16 %v6302, %v6238
    %v7263 = vpack.c.bf16 %v6303, %v6239
    %v7264 = vpack.c.bf16 %v6304, %v6240
    %v7265 = vpack.c.bf16 %v6305, %v6241
    %v7266 = vpack.c.bf16 %v6306, %v6242
    %v7267 = vpack.c.bf16 %v6307, %v6243
    %v7268 = vpack.c.bf16 %v6308, %v6244
    %v7269 = vpack.c.bf16 %v6309, %v6245
    %v7270 = vpack.c.bf16 %v6310, %v6246
    %v7271 = vpack.c.bf16 %v6311, %v6247
    %v7272 = vpack.c.bf16 %v6312, %v6248
    %v7273 = vpack.c.bf16 %v6313, %v6249
    %v7274 = vpack.c.bf16 %v6314, %v6250
    %v7275 = vpack.c.bf16 %v6315, %v6251
    %v7276 = vpack.c.bf16 %v6316, %v6252
    %v7277 = vpack.c.bf16 %v6317, %v6253
    %v7278 = vpack.c.bf16 %v6318, %v6254
    %v7279 = vpack.c.bf16 %v6319, %v6255
    %v7280 = vpack.c.bf16 %v6320, %v6256
    %v7281 = vpack.c.bf16 %v6321, %v6257
    %v7282 = vpack.c.bf16 %v6322, %v6258
    %v7283 = vpack.c.bf16 %v6323, %v6259
    %v7284 = vpack.c.bf16 %v6324, %v6260
    %v7285 = vpack.c.bf16 %v6325, %v6261
    %v7286 = vpack.c.bf16 %v6326, %v6262
    %v7287 = vpack.c.bf16 %v6327, %v6263
    %v7288 = vpack.c.bf16 %v6328, %v6264
    %v7289 = vpack.c.bf16 %v6329, %v6265
    %v7290 = vpack.c.bf16 %v6330, %v6266
    %v7291 = vpack.c.bf16 %v6331, %v6267
    %v7292 = vpack.c.bf16 %v6332, %v6268
    %v7293 = vpack.c.bf16 %v6333, %v6269
    %v7294 = vpack.c.bf16 %v6334, %v6270
    %v7295 = vpack.c.bf16 %v6399, %v6335
    %v7296 = vpack.c.bf16 %v6400, %v6336
    %v7297 = vpack.c.bf16 %v6401, %v6337
    %v7298 = vpack.c.bf16 %v6402, %v6338
    %v7299 = vpack.c.bf16 %v6403, %v6339
    %v7300 = vpack.c.bf16 %v6404, %v6340
    %v7301 = vpack.c.bf16 %v6405, %v6341
    %v7302 = vpack.c.bf16 %v6406, %v6342
    %v7303 = vpack.c.bf16 %v6407, %v6343
    %v7304 = vpack.c.bf16 %v6408, %v6344
    %v7305 = vpack.c.bf16 %v6409, %v6345
    %v7306 = vpack.c.bf16 %v6410, %v6346
    %v7307 = vpack.c.bf16 %v6411, %v6347
    %v7308 = vpack.c.bf16 %v6412, %v6348
    %v7309 = vpack.c.bf16 %v6413, %v6349
    %v7310 = vpack.c.bf16 %v6414, %v6350
    %v7311 = vpack.c.bf16 %v6415, %v6351
    %v7312 = vpack.c.bf16 %v6416, %v6352
    %v7313 = vpack.c.bf16 %v6417, %v6353
    %v7314 = vpack.c.bf16 %v6418, %v6354
    %v7315 = vpack.c.bf16 %v6419, %v6355
    %v7316 = vpack.c.bf16 %v6420, %v6356
    %v7317 = vpack.c.bf16 %v6421, %v6357
    %v7318 = vpack.c.bf16 %v6422, %v6358
    %v7319 = vpack.c.bf16 %v6423, %v6359
    %v7320 = vpack.c.bf16 %v6424, %v6360
    %v7321 = vpack.c.bf16 %v6425, %v6361
    %v7322 = vpack.c.bf16 %v6426, %v6362
    %v7323 = vpack.c.bf16 %v6427, %v6363
    %v7324 = vpack.c.bf16 %v6428, %v6364
    %v7325 = vpack.c.bf16 %v6429, %v6365
    %v7326 = vpack.c.bf16 %v6430, %v6366
    %v7327 = vpack.c.bf16 %v6431, %v6367
    %v7328 = vpack.c.bf16 %v6432, %v6368
    %v7329 = vpack.c.bf16 %v6433, %v6369
    %v7330 = vpack.c.bf16 %v6434, %v6370
    %v7331 = vpack.c.bf16 %v6435, %v6371
    %v7332 = vpack.c.bf16 %v6436, %v6372
    %v7333 = vpack.c.bf16 %v6437, %v6373
    %v7334 = vpack.c.bf16 %v6438, %v6374
    %v7335 = vpack.c.bf16 %v6439, %v6375
    %v7336 = vpack.c.bf16 %v6440, %v6376
    %v7337 = vpack.c.bf16 %v6441, %v6377
    %v7338 = vpack.c.bf16 %v6442, %v6378
    %v7339 = vpack.c.bf16 %v6443, %v6379
    %v7340 = vpack.c.bf16 %v6444, %v6380
    %v7341 = vpack.c.bf16 %v6445, %v6381
    %v7342 = vpack.c.bf16 %v6446, %v6382
    %v7343 = vpack.c.bf16 %v6447, %v6383
    %v7344 = vpack.c.bf16 %v6448, %v6384
    %v7345 = vpack.c.bf16 %v6449, %v6385
    %v7346 = vpack.c.bf16 %v6450, %v6386
    %v7347 = vpack.c.bf16 %v6451, %v6387
    %v7348 = vpack.c.bf16 %v6452, %v6388
    %v7349 = vpack.c.bf16 %v6453, %v6389
    %v7350 = vpack.c.bf16 %v6454, %v6390
    %v7351 = vpack.c.bf16 %v6455, %v6391
    %v7352 = vpack.c.bf16 %v6456, %v6392
    %v7353 = vpack.c.bf16 %v6457, %v6393
    %v7354 = vpack.c.bf16 %v6458, %v6394
    %v7355 = vpack.c.bf16 %v6459, %v6395
    %v7356 = vpack.c.bf16 %v6460, %v6396
    %v7357 = vpack.c.bf16 %v6461, %v6397
    %v7358 = vpack.c.bf16 %v6462, %v6398
    %v7359 = vpack.c.bf16 %v6527, %v6463
    %v7360 = vpack.c.bf16 %v6528, %v6464
    %v7361 = vpack.c.bf16 %v6529, %v6465
    %v7362 = vpack.c.bf16 %v6530, %v6466
    %v7363 = vpack.c.bf16 %v6531, %v6467
    %v7364 = vpack.c.bf16 %v6532, %v6468
    %v7365 = vpack.c.bf16 %v6533, %v6469
    %v7366 = vpack.c.bf16 %v6534, %v6470
    %v7367 = vpack.c.bf16 %v6535, %v6471
    %v7368 = vpack.c.bf16 %v6536, %v6472
    %v7369 = vpack.c.bf16 %v6537, %v6473
    %v7370 = vpack.c.bf16 %v6538, %v6474
    %v7371 = vpack.c.bf16 %v6539, %v6475
    %v7372 = vpack.c.bf16 %v6540, %v6476
    %v7373 = vpack.c.bf16 %v6541, %v6477
    %v7374 = vpack.c.bf16 %v6542, %v6478
    %v7375 = vpack.c.bf16 %v6543, %v6479
    %v7376 = vpack.c.bf16 %v6544, %v6480
    %v7377 = vpack.c.bf16 %v6545, %v6481
    %v7378 = vpack.c.bf16 %v6546, %v6482
    %v7379 = vpack.c.bf16 %v6547, %v6483
    %v7380 = vpack.c.bf16 %v6548, %v6484
    %v7381 = vpack.c.bf16 %v6549, %v6485
    %v7382 = vpack.c.bf16 %v6550, %v6486
    %v7383 = vpack.c.bf16 %v6551, %v6487
    %v7384 = vpack.c.bf16 %v6552, %v6488
    %v7385 = vpack.c.bf16 %v6553, %v6489
    %v7386 = vpack.c.bf16 %v6554, %v6490
    %v7387 = vpack.c.bf16 %v6555, %v6491
    %v7388 = vpack.c.bf16 %v6556, %v6492
    %v7389 = vpack.c.bf16 %v6557, %v6493
    %v7390 = vpack.c.bf16 %v6558, %v6494
    %v7391 = vpack.c.bf16 %v6559, %v6495
    %v7392 = vpack.c.bf16 %v6560, %v6496
    %v7393 = vpack.c.bf16 %v6561, %v6497
    %v7394 = vpack.c.bf16 %v6562, %v6498
    %v7395 = vpack.c.bf16 %v6563, %v6499
    %v7396 = vpack.c.bf16 %v6564, %v6500
    %v7397 = vpack.c.bf16 %v6565, %v6501
    %v7398 = vpack.c.bf16 %v6566, %v6502
    %v7399 = vpack.c.bf16 %v6567, %v6503
    %v7400 = vpack.c.bf16 %v6568, %v6504
    %v7401 = vpack.c.bf16 %v6569, %v6505
    %v7402 = vpack.c.bf16 %v6570, %v6506
    %v7403 = vpack.c.bf16 %v6571, %v6507
    %v7404 = vpack.c.bf16 %v6572, %v6508
    %v7405 = vpack.c.bf16 %v6573, %v6509
    %v7406 = vpack.c.bf16 %v6574, %v6510
    %v7407 = vpack.c.bf16 %v6575, %v6511
    %v7408 = vpack.c.bf16 %v6576, %v6512
    %v7409 = vpack.c.bf16 %v6577, %v6513
    %v7410 = vpack.c.bf16 %v6578, %v6514
    %v7411 = vpack.c.bf16 %v6579, %v6515
    %v7412 = vpack.c.bf16 %v6580, %v6516
    %v7413 = vpack.c.bf16 %v6581, %v6517
    %v7414 = vpack.c.bf16 %v6582, %v6518
    %v7415 = vpack.c.bf16 %v6583, %v6519
    %v7416 = vpack.c.bf16 %v6584, %v6520
    %v7417 = vpack.c.bf16 %v6585, %v6521
    %v7418 = vpack.c.bf16 %v6586, %v6522
    %v7419 = vpack.c.bf16 %v6587, %v6523
    %v7420 = vpack.c.bf16 %v6588, %v6524
    %v7421 = vpack.c.bf16 %v6589, %v6525
    %v7422 = vpack.c.bf16 %v6590, %v6526
    %v7423 = vpack.c.bf16 %v6655, %v6591
    %v7424 = vpack.c.bf16 %v6656, %v6592
    %v7425 = vpack.c.bf16 %v6657, %v6593
    %v7426 = vpack.c.bf16 %v6658, %v6594
    %v7427 = vpack.c.bf16 %v6659, %v6595
    %v7428 = vpack.c.bf16 %v6660, %v6596
    %v7429 = vpack.c.bf16 %v6661, %v6597
    %v7430 = vpack.c.bf16 %v6662, %v6598
    %v7431 = vpack.c.bf16 %v6663, %v6599
    %v7432 = vpack.c.bf16 %v6664, %v6600
    %v7433 = vpack.c.bf16 %v6665, %v6601
    %v7434 = vpack.c.bf16 %v6666, %v6602
    %v7435 = vpack.c.bf16 %v6667, %v6603
    %v7436 = vpack.c.bf16 %v6668, %v6604
    %v7437 = vpack.c.bf16 %v6669, %v6605
    %v7438 = vpack.c.bf16 %v6670, %v6606
    %v7439 = vpack.c.bf16 %v6671, %v6607
    %v7440 = vpack.c.bf16 %v6672, %v6608
    %v7441 = vpack.c.bf16 %v6673, %v6609
    %v7442 = vpack.c.bf16 %v6674, %v6610
    %v7443 = vpack.c.bf16 %v6675, %v6611
    %v7444 = vpack.c.bf16 %v6676, %v6612
    %v7445 = vpack.c.bf16 %v6677, %v6613
    %v7446 = vpack.c.bf16 %v6678, %v6614
    %v7447 = vpack.c.bf16 %v6679, %v6615
    %v7448 = vpack.c.bf16 %v6680, %v6616
    %v7449 = vpack.c.bf16 %v6681, %v6617
    %v7450 = vpack.c.bf16 %v6682, %v6618
    %v7451 = vpack.c.bf16 %v6683, %v6619
    %v7452 = vpack.c.bf16 %v6684, %v6620
    %v7453 = vpack.c.bf16 %v6685, %v6621
    %v7454 = vpack.c.bf16 %v6686, %v6622
    %v7455 = vpack.c.bf16 %v6687, %v6623
    %v7456 = vpack.c.bf16 %v6688, %v6624
    %v7457 = vpack.c.bf16 %v6689, %v6625
    %v7458 = vpack.c.bf16 %v6690, %v6626
    %v7459 = vpack.c.bf16 %v6691, %v6627
    %v7460 = vpack.c.bf16 %v6692, %v6628
    %v7461 = vpack.c.bf16 %v6693, %v6629
    %v7462 = vpack.c.bf16 %v6694, %v6630
    %v7463 = vpack.c.bf16 %v6695, %v6631
    %v7464 = vpack.c.bf16 %v6696, %v6632
    %v7465 = vpack.c.bf16 %v6697, %v6633
    %v7466 = vpack.c.bf16 %v6698, %v6634
    %v7467 = vpack.c.bf16 %v6699, %v6635
    %v7468 = vpack.c.bf16 %v6700, %v6636
    %v7469 = vpack.c.bf16 %v6701, %v6637
    %v7470 = vpack.c.bf16 %v6702, %v6638
    %v7471 = vpack.c.bf16 %v6703, %v6639
    %v7472 = vpack.c.bf16 %v6704, %v6640
    %v7473 = vpack.c.bf16 %v6705, %v6641
    %v7474 = vpack.c.bf16 %v6706, %v6642
    %v7475 = vpack.c.bf16 %v6707, %v6643
    %v7476 = vpack.c.bf16 %v6708, %v6644
    %v7477 = vpack.c.bf16 %v6709, %v6645
    %v7478 = vpack.c.bf16 %v6710, %v6646
    %v7479 = vpack.c.bf16 %v6711, %v6647
    %v7480 = vpack.c.bf16 %v6712, %v6648
    %v7481 = vpack.c.bf16 %v6713, %v6649
    %v7482 = vpack.c.bf16 %v6714, %v6650
    %v7483 = vpack.c.bf16 %v6715, %v6651
    %v7484 = vpack.c.bf16 %v6716, %v6652
    %v7485 = vpack.c.bf16 %v6717, %v6653
    %v7486 = vpack.c.bf16 %v6718, %v6654
    %v7487 = vpack.c.bf16 %v6783, %v6719
    %v7488 = vpack.c.bf16 %v6784, %v6720
    %v7489 = vpack.c.bf16 %v6785, %v6721
    %v7490 = vpack.c.bf16 %v6786, %v6722
    %v7491 = vpack.c.bf16 %v6787, %v6723
    %v7492 = vpack.c.bf16 %v6788, %v6724
    %v7493 = vpack.c.bf16 %v6789, %v6725
    %v7494 = vpack.c.bf16 %v6790, %v6726
    %v7495 = vpack.c.bf16 %v6791, %v6727
    %v7496 = vpack.c.bf16 %v6792, %v6728
    %v7497 = vpack.c.bf16 %v6793, %v6729
    %v7498 = vpack.c.bf16 %v6794, %v6730
    %v7499 = vpack.c.bf16 %v6795, %v6731
    %v7500 = vpack.c.bf16 %v6796, %v6732
    %v7501 = vpack.c.bf16 %v6797, %v6733
    %v7502 = vpack.c.bf16 %v6798, %v6734
    %v7503 = vpack.c.bf16 %v6799, %v6735
    %v7504 = vpack.c.bf16 %v6800, %v6736
    %v7505 = vpack.c.bf16 %v6801, %v6737
    %v7506 = vpack.c.bf16 %v6802, %v6738
    %v7507 = vpack.c.bf16 %v6803, %v6739
    %v7508 = vpack.c.bf16 %v6804, %v6740
    %v7509 = vpack.c.bf16 %v6805, %v6741
    %v7510 = vpack.c.bf16 %v6806, %v6742
    %v7511 = vpack.c.bf16 %v6807, %v6743
    %v7512 = vpack.c.bf16 %v6808, %v6744
    %v7513 = vpack.c.bf16 %v6809, %v6745
    %v7514 = vpack.c.bf16 %v6810, %v6746
    %v7515 = vpack.c.bf16 %v6811, %v6747
    %v7516 = vpack.c.bf16 %v6812, %v6748
    %v7517 = vpack.c.bf16 %v6813, %v6749
    %v7518 = vpack.c.bf16 %v6814, %v6750
    %v7519 = vpack.c.bf16 %v6815, %v6751
    %v7520 = vpack.c.bf16 %v6816, %v6752
    %v7521 = vpack.c.bf16 %v6817, %v6753
    %v7522 = vpack.c.bf16 %v6818, %v6754
    %v7523 = vpack.c.bf16 %v6819, %v6755
    %v7524 = vpack.c.bf16 %v6820, %v6756
    %v7525 = vpack.c.bf16 %v6821, %v6757
    %v7526 = vpack.c.bf16 %v6822, %v6758
    %v7527 = vpack.c.bf16 %v6823, %v6759
    %v7528 = vpack.c.bf16 %v6824, %v6760
    %v7529 = vpack.c.bf16 %v6825, %v6761
    %v7530 = vpack.c.bf16 %v6826, %v6762
    %v7531 = vpack.c.bf16 %v6827, %v6763
    %v7532 = vpack.c.bf16 %v6828, %v6764
    %v7533 = vpack.c.bf16 %v6829, %v6765
    %v7534 = vpack.c.bf16 %v6830, %v6766
    %v7535 = vpack.c.bf16 %v6831, %v6767
    %v7536 = vpack.c.bf16 %v6832, %v6768
    %v7537 = vpack.c.bf16 %v6833, %v6769
    %v7538 = vpack.c.bf16 %v6834, %v6770
    %v7539 = vpack.c.bf16 %v6835, %v6771
    %v7540 = vpack.c.bf16 %v6836, %v6772
    %v7541 = vpack.c.bf16 %v6837, %v6773
    %v7542 = vpack.c.bf16 %v6838, %v6774
    %v7543 = vpack.c.bf16 %v6839, %v6775
    %v7544 = vpack.c.bf16 %v6840, %v6776
    %v7545 = vpack.c.bf16 %v6841, %v6777
    %v7546 = vpack.c.bf16 %v6842, %v6778
    %v7547 = vpack.c.bf16 %v6843, %v6779
    %v7548 = vpack.c.bf16 %v6844, %v6780
    %v7549 = vpack.c.bf16 %v6845, %v6781
    %v7550 = vpack.c.bf16 %v6846, %v6782
    %v7551 = vpack.c.bf16 %v6911, %v6847
    %v7552 = vpack.c.bf16 %v6912, %v6848
    %v7553 = vpack.c.bf16 %v6913, %v6849
    %v7554 = vpack.c.bf16 %v6914, %v6850
    %v7555 = vpack.c.bf16 %v6915, %v6851
    %v7556 = vpack.c.bf16 %v6916, %v6852
    %v7557 = vpack.c.bf16 %v6917, %v6853
    %v7558 = vpack.c.bf16 %v6918, %v6854
    %v7559 = vpack.c.bf16 %v6919, %v6855
    %v7560 = vpack.c.bf16 %v6920, %v6856
    %v7561 = vpack.c.bf16 %v6921, %v6857
    %v7562 = vpack.c.bf16 %v6922, %v6858
    %v7563 = vpack.c.bf16 %v6923, %v6859
    %v7564 = vpack.c.bf16 %v6924, %v6860
    %v7565 = vpack.c.bf16 %v6925, %v6861
    %v7566 = vpack.c.bf16 %v6926, %v6862
    %v7567 = vpack.c.bf16 %v6927, %v6863
    %v7568 = vpack.c.bf16 %v6928, %v6864
    %v7569 = vpack.c.bf16 %v6929, %v6865
    %v7570 = vpack.c.bf16 %v6930, %v6866
    %v7571 = vpack.c.bf16 %v6931, %v6867
    %v7572 = vpack.c.bf16 %v6932, %v6868
    %v7573 = vpack.c.bf16 %v6933, %v6869
    %v7574 = vpack.c.bf16 %v6934, %v6870
    %v7575 = vpack.c.bf16 %v6935, %v6871
    %v7576 = vpack.c.bf16 %v6936, %v6872
    %v7577 = vpack.c.bf16 %v6937, %v6873
    %v7578 = vpack.c.bf16 %v6938, %v6874
    %v7579 = vpack.c.bf16 %v6939, %v6875
    %v7580 = vpack.c.bf16 %v6940, %v6876
    %v7581 = vpack.c.bf16 %v6941, %v6877
    %v7582 = vpack.c.bf16 %v6942, %v6878
    %v7583 = vpack.c.bf16 %v6943, %v6879
    %v7584 = vpack.c.bf16 %v6944, %v6880
    %v7585 = vpack.c.bf16 %v6945, %v6881
    %v7586 = vpack.c.bf16 %v6946, %v6882
    %v7587 = vpack.c.bf16 %v6947, %v6883
    %v7588 = vpack.c.bf16 %v6948, %v6884
    %v7589 = vpack.c.bf16 %v6949, %v6885
    %v7590 = vpack.c.bf16 %v6950, %v6886
    %v7591 = vpack.c.bf16 %v6951, %v6887
    %v7592 = vpack.c.bf16 %v6952, %v6888
    %v7593 = vpack.c.bf16 %v6953, %v6889
    %v7594 = vpack.c.bf16 %v6954, %v6890
    %v7595 = vpack.c.bf16 %v6955, %v6891
    %v7596 = vpack.c.bf16 %v6956, %v6892
    %v7597 = vpack.c.bf16 %v6957, %v6893
    %v7598 = vpack.c.bf16 %v6958, %v6894
    %v7599 = vpack.c.bf16 %v6959, %v6895
    %v7600 = vpack.c.bf16 %v6960, %v6896
    %v7601 = vpack.c.bf16 %v6961, %v6897
    %v7602 = vpack.c.bf16 %v6962, %v6898
    %v7603 = vpack.c.bf16 %v6963, %v6899
    %v7604 = vpack.c.bf16 %v6964, %v6900
    %v7605 = vpack.c.bf16 %v6965, %v6901
    %v7606 = vpack.c.bf16 %v6966, %v6902
    %v7607 = vpack.c.bf16 %v6967, %v6903
    %v7608 = vpack.c.bf16 %v6968, %v6904
    %v7609 = vpack.c.bf16 %v6969, %v6905
    %v7610 = vpack.c.bf16 %v6970, %v6906
    %v7611 = vpack.c.bf16 %v6971, %v6907
    %v7612 = vpack.c.bf16 %v6972, %v6908
    %v7613 = vpack.c.bf16 %v6973, %v6909
    %v7614 = vpack.c.bf16 %v6974, %v6910
    %v7615 = vpack.c.bf16 %v7039, %v6975
    %v7616 = vpack.c.bf16 %v7040, %v6976
    %v7617 = vpack.c.bf16 %v7041, %v6977
    %v7618 = vpack.c.bf16 %v7042, %v6978
    %v7619 = vpack.c.bf16 %v7043, %v6979
    %v7620 = vpack.c.bf16 %v7044, %v6980
    %v7621 = vpack.c.bf16 %v7045, %v6981
    %v7622 = vpack.c.bf16 %v7046, %v6982
    %v7623 = vpack.c.bf16 %v7047, %v6983
    %v7624 = vpack.c.bf16 %v7048, %v6984
    %v7625 = vpack.c.bf16 %v7049, %v6985
    %v7626 = vpack.c.bf16 %v7050, %v6986
    %v7627 = vpack.c.bf16 %v7051, %v6987
    %v7628 = vpack.c.bf16 %v7052, %v6988
    %v7629 = vpack.c.bf16 %v7053, %v6989
    %v7630 = vpack.c.bf16 %v7054, %v6990
    %v7631 = vpack.c.bf16 %v7055, %v6991
    %v7632 = vpack.c.bf16 %v7056, %v6992
    %v7633 = vpack.c.bf16 %v7057, %v6993
    %v7634 = vpack.c.bf16 %v7058, %v6994
    %v7635 = vpack.c.bf16 %v7059, %v6995
    %v7636 = vpack.c.bf16 %v7060, %v6996
    %v7637 = vpack.c.bf16 %v7061, %v6997
    %v7638 = vpack.c.bf16 %v7062, %v6998
    %v7639 = vpack.c.bf16 %v7063, %v6999
    %v7640 = vpack.c.bf16 %v7064, %v7000
    %v7641 = vpack.c.bf16 %v7065, %v7001
    %v7642 = vpack.c.bf16 %v7066, %v7002
    %v7643 = vpack.c.bf16 %v7067, %v7003
    %v7644 = vpack.c.bf16 %v7068, %v7004
    %v7645 = vpack.c.bf16 %v7069, %v7005
    %v7646 = vpack.c.bf16 %v7070, %v7006
    %v7647 = vpack.c.bf16 %v7071, %v7007
    %v7648 = vpack.c.bf16 %v7072, %v7008
    %v7649 = vpack.c.bf16 %v7073, %v7009
    %v7650 = vpack.c.bf16 %v7074, %v7010
    %v7651 = vpack.c.bf16 %v7075, %v7011
    %v7652 = vpack.c.bf16 %v7076, %v7012
    %v7653 = vpack.c.bf16 %v7077, %v7013
    %v7654 = vpack.c.bf16 %v7078, %v7014
    %v7655 = vpack.c.bf16 %v7079, %v7015
    %v7656 = vpack.c.bf16 %v7080, %v7016
    %v7657 = vpack.c.bf16 %v7081, %v7017
    %v7658 = vpack.c.bf16 %v7082, %v7018
    %v7659 = vpack.c.bf16 %v7083, %v7019
    %v7660 = vpack.c.bf16 %v7084, %v7020
    %v7661 = vpack.c.bf16 %v7085, %v7021
    %v7662 = vpack.c.bf16 %v7086, %v7022
    %v7663 = vpack.c.bf16 %v7087, %v7023
    %v7664 = vpack.c.bf16 %v7088, %v7024
    %v7665 = vpack.c.bf16 %v7089, %v7025
    %v7666 = vpack.c.bf16 %v7090, %v7026
    %v7667 = vpack.c.bf16 %v7091, %v7027
    %v7668 = vpack.c.bf16 %v7092, %v7028
    %v7669 = vpack.c.bf16 %v7093, %v7029
    %v7670 = vpack.c.bf16 %v7094, %v7030
    %v7671 = vpack.c.bf16 %v7095, %v7031
    %v7672 = vpack.c.bf16 %v7096, %v7032
    %v7673 = vpack.c.bf16 %v7097, %v7033
    %v7674 = vpack.c.bf16 %v7098, %v7034
    %v7675 = vpack.c.bf16 %v7099, %v7035
    %v7676 = vpack.c.bf16 %v7100, %v7036
    %v7677 = vpack.c.bf16 %v7101, %v7037
    %v7678 = vpack.c.bf16 %v7102, %v7038
    %v7679 = vpack.c.bf16 %v7167, %v7103
    %v7680 = vpack.c.bf16 %v7168, %v7104
    %v7681 = vpack.c.bf16 %v7169, %v7105
    %v7682 = vpack.c.bf16 %v7170, %v7106
    %v7683 = vpack.c.bf16 %v7171, %v7107
    %v7684 = vpack.c.bf16 %v7172, %v7108
    %v7685 = vpack.c.bf16 %v7173, %v7109
    %v7686 = vpack.c.bf16 %v7174, %v7110
    %v7687 = vpack.c.bf16 %v7175, %v7111
    %v7688 = vpack.c.bf16 %v7176, %v7112
    %v7689 = vpack.c.bf16 %v7177, %v7113
    %v7690 = vpack.c.bf16 %v7178, %v7114
    %v7691 = vpack.c.bf16 %v7179, %v7115
    %v7692 = vpack.c.bf16 %v7180, %v7116
    %v7693 = vpack.c.bf16 %v7181, %v7117
    %v7694 = vpack.c.bf16 %v7182, %v7118
    %v7695 = vpack.c.bf16 %v7183, %v7119
    %v7696 = vpack.c.bf16 %v7184, %v7120
    %v7697 = vpack.c.bf16 %v7185, %v7121
    %v7698 = vpack.c.bf16 %v7186, %v7122
    %v7699 = vpack.c.bf16 %v7187, %v7123
    %v7700 = vpack.c.bf16 %v7188, %v7124
    %v7701 = vpack.c.bf16 %v7189, %v7125
    %v7702 = vpack.c.bf16 %v7190, %v7126
    %v7703 = vpack.c.bf16 %v7191, %v7127
    %v7704 = vpack.c.bf16 %v7192, %v7128
    %v7705 = vpack.c.bf16 %v7193, %v7129
    %v7706 = vpack.c.bf16 %v7194, %v7130
    %v7707 = vpack.c.bf16 %v7195, %v7131
    %v7708 = vpack.c.bf16 %v7196, %v7132
    %v7709 = vpack.c.bf16 %v7197, %v7133
    %v7710 = vpack.c.bf16 %v7198, %v7134
    %v7711 = vpack.c.bf16 %v7199, %v7135
    %v7712 = vpack.c.bf16 %v7200, %v7136
    %v7713 = vpack.c.bf16 %v7201, %v7137
    %v7714 = vpack.c.bf16 %v7202, %v7138
    %v7715 = vpack.c.bf16 %v7203, %v7139
    %v7716 = vpack.c.bf16 %v7204, %v7140
    %v7717 = vpack.c.bf16 %v7205, %v7141
    %v7718 = vpack.c.bf16 %v7206, %v7142
    %v7719 = vpack.c.bf16 %v7207, %v7143
    %v7720 = vpack.c.bf16 %v7208, %v7144
    %v7721 = vpack.c.bf16 %v7209, %v7145
    %v7722 = vpack.c.bf16 %v7210, %v7146
    %v7723 = vpack.c.bf16 %v7211, %v7147
    %v7724 = vpack.c.bf16 %v7212, %v7148
    %v7725 = vpack.c.bf16 %v7213, %v7149
    %v7726 = vpack.c.bf16 %v7214, %v7150
    %v7727 = vpack.c.bf16 %v7215, %v7151
    %v7728 = vpack.c.bf16 %v7216, %v7152
    %v7729 = vpack.c.bf16 %v7217, %v7153
    %v7730 = vpack.c.bf16 %v7218, %v7154
    %v7731 = vpack.c.bf16 %v7219, %v7155
    %v7732 = vpack.c.bf16 %v7220, %v7156
    %v7733 = vpack.c.bf16 %v7221, %v7157
    %v7734 = vpack.c.bf16 %v7222, %v7158
    %v7735 = vpack.c.bf16 %v7223, %v7159
    %v7736 = vpack.c.bf16 %v7224, %v7160
    %v7737 = vpack.c.bf16 %v7225, %v7161
    %v7738 = vpack.c.bf16 %v7226, %v7162
    %v7739 = vpack.c.bf16 %v7227, %v7163
    %v7740 = vpack.c.bf16 %v7228, %v7164
    %v7741 = vpack.c.bf16 %v7229, %v7165
    %v7742 = vpack.c.bf16 %v7230, %v7166
    %7743 = vmatprep.subr.bf16.mxu0 %v7680
    %7744 = vmatpush1.bf16.xpose.msra.mxu0 %v7679
    %7745 = vmatprep.subr.bf16.mxu0 %v7616
    %7746 = vmatpush1.bf16.xpose.msra.mxu0 %v7615
    %7747 = vmatprep.subr.bf16.mxu0 %v7552
    %7748 = vmatpush1.bf16.xpose.msra.mxu0 %v7551
    %7749 = vmatprep.subr.bf16.mxu0 %v7488
    %7750 = vmatpush1.bf16.xpose.msra.mxu0 %v7487
    %7751 = vmatprep.subr.bf16.mxu0 %v7424
    %7752 = vmatpush1.bf16.xpose.msra.mxu0 %v7423
    %7753 = vmatprep.subr.bf16.mxu0 %v7360
    %7754 = vmatpush1.bf16.xpose.msra.mxu0 %v7359
    %7755 = vmatprep.subr.bf16.mxu0 %v7296
    %7756 = vmatpush1.bf16.xpose.msra.mxu0 %v7295
    %7757 = vmatprep.subr.bf16.mxu0 %v7232
    %7758 = vmatpush1.bf16.xpose.msra.mxu0 %v7231
    %7759 = vmatprep.subr.bf16.mxu0 0
    %7760 = vmatpush2.bf16.xpose.msra.mxu0 0
    %7761 = vmatprep.subr.bf16.mxu0 0
    %7762 = vmatpush2.bf16.xpose.msra.mxu0 0
    %7763 = vmatprep.subr.bf16.mxu0 0
    %7764 = vmatpush2.bf16.xpose.msra.mxu0 0
    %7765 = vmatprep.subr.bf16.mxu0 0
    %7766 = vmatpush2.bf16.xpose.msra.mxu0 0
    %7767 = vmatprep.subr.bf16.mxu0 0
    %7768 = vmatpush2.bf16.xpose.msra.mxu0 0
    %7769 = vmatprep.subr.bf16.mxu0 0
    %7770 = vmatpush2.bf16.xpose.msra.mxu0 0
    %7771 = vmatprep.subr.bf16.mxu0 0
    %7772 = vmatpush2.bf16.xpose.msra.mxu0 0
    %7773 = vmatprep.subr.bf16.mxu0 0
    %7774 = vmatpush2.bf16.xpose.msra.mxu0 0
    %7775 = vmatprep.mubr.bf16.mxu0 %v3392
    %7776 = vmatmul.mubr.bf16.gmra.mxu0 %v3391
    %v7777 = vpop.f32.mrf.mxu0
    %v7778 = vadd.f32 0.0, %v7777
    %v7779 = vpop.f32.mrf.mxu0
    %v7780 = vpop.f32.mrf.mxu0
    %v7781 = vadd.f32 0.0, %v7780
    %v7782 = vpop.f32.mrf.mxu0
    %7783 = vmatprep.mubr.bf16.mxu0 %v3456
    %7784 = vmatmul.mubr.bf16.gmra.mxu0 %v3455
    %v7785 = vpop.f32.mrf.mxu0
    %v7786 = vadd.f32 0.0, %v7785
    %v7787 = vpop.f32.mrf.mxu0
    %v7788 = vpop.f32.mrf.mxu0
    %v7789 = vadd.f32 0.0, %v7788
    %v7790 = vpop.f32.mrf.mxu0
    %7791 = vmatprep.mubr.bf16.mxu0 %v3520
    %7792 = vmatmul.mubr.bf16.gmra.mxu0 %v3519
    %v7793 = vpop.f32.mrf.mxu0
    %v7794 = vadd.f32 0.0, %v7793
    %v7795 = vpop.f32.mrf.mxu0
    %v7796 = vpop.f32.mrf.mxu0
    %v7797 = vadd.f32 0.0, %v7796
    %v7798 = vpop.f32.mrf.mxu0
    %7799 = vmatprep.mubr.bf16.mxu0 %v3584
    %7800 = vmatmul.mubr.bf16.gmra.mxu0 %v3583
    %v7801 = vpop.f32.mrf.mxu0
    %v7802 = vadd.f32 0.0, %v7801
    %v7803 = vpop.f32.mrf.mxu0
    %v7804 = vpop.f32.mrf.mxu0
    %v7805 = vadd.f32 0.0, %v7804
    %v7806 = vpop.f32.mrf.mxu0
    %7807 = vmatprep.mubr.bf16.mxu0 %v3648
    %7808 = vmatmul.mubr.bf16.gmra.mxu0 %v3647
    %v7809 = vpop.f32.mrf.mxu0
    %v7810 = vadd.f32 0.0, %v7809
    %v7811 = vpop.f32.mrf.mxu0
    %v7812 = vpop.f32.mrf.mxu0
    %v7813 = vadd.f32 0.0, %v7812
    %v7814 = vpop.f32.mrf.mxu0
    %7815 = vmatprep.mubr.bf16.mxu0 %v3712
    %7816 = vmatmul.mubr.bf16.gmra.mxu0 %v3711
    %v7817 = vpop.f32.mrf.mxu0
    %v7818 = vadd.f32 0.0, %v7817
    %v7819 = vpop.f32.mrf.mxu0
    %v7820 = vpop.f32.mrf.mxu0
    %v7821 = vadd.f32 0.0, %v7820
    %v7822 = vpop.f32.mrf.mxu0
    %7823 = vmatprep.mubr.bf16.mxu0 %v3776
    %7824 = vmatmul.mubr.bf16.gmra.mxu0 %v3775
    %v7825 = vpop.f32.mrf.mxu0
    %v7826 = vadd.f32 0.0, %v7825
    %v7827 = vpop.f32.mrf.mxu0
    %v7828 = vpop.f32.mrf.mxu0
    %v7829 = vadd.f32 0.0, %v7828
    %v7830 = vpop.f32.mrf.mxu0
    %7831 = vmatprep.mubr.bf16.mxu0 %v3840
    %7832 = vmatmul.mubr.bf16.gmra.mxu0 %v3839
    %v7833 = vpop.f32.mrf.mxu0
    %v7834 = vadd.f32 0.0, %v7833
    %v7835 = vpop.f32.mrf.mxu0
    %v7836 = vpop.f32.mrf.mxu0
    %v7837 = vadd.f32 0.0, %v7836
    %v7838 = vpop.f32.mrf.mxu0
    %7839 = vdwg.mxu0
    %7840 = vmatprep.subr.bf16.mxu0 %v7682
    %7841 = vmatpush1.bf16.xpose.msra.mxu0 %v7681
    %7842 = vmatprep.subr.bf16.mxu0 %v7618
    %7843 = vmatpush1.bf16.xpose.msra.mxu0 %v7617
    %7844 = vmatprep.subr.bf16.mxu0 %v7554
    %7845 = vmatpush1.bf16.xpose.msra.mxu0 %v7553
    %7846 = vmatprep.subr.bf16.mxu0 %v7490
    %7847 = vmatpush1.bf16.xpose.msra.mxu0 %v7489
    %7848 = vmatprep.subr.bf16.mxu0 %v7426
    %7849 = vmatpush1.bf16.xpose.msra.mxu0 %v7425
    %7850 = vmatprep.subr.bf16.mxu0 %v7362
    %7851 = vmatpush1.bf16.xpose.msra.mxu0 %v7361
    %7852 = vmatprep.subr.bf16.mxu0 %v7298
    %7853 = vmatpush1.bf16.xpose.msra.mxu0 %v7297
    %7854 = vmatprep.subr.bf16.mxu0 %v7234
    %7855 = vmatpush1.bf16.xpose.msra.mxu0 %v7233
    %7856 = vmatprep.subr.bf16.mxu0 0
    %7857 = vmatpush2.bf16.xpose.msra.mxu0 0
    %7858 = vmatprep.subr.bf16.mxu0 0
    %7859 = vmatpush2.bf16.xpose.msra.mxu0 0
    %7860 = vmatprep.subr.bf16.mxu0 0
    %7861 = vmatpush2.bf16.xpose.msra.mxu0 0
    %7862 = vmatprep.subr.bf16.mxu0 0
    %7863 = vmatpush2.bf16.xpose.msra.mxu0 0
    %7864 = vmatprep.subr.bf16.mxu0 0
    %7865 = vmatpush2.bf16.xpose.msra.mxu0 0
    %7866 = vmatprep.subr.bf16.mxu0 0
    %7867 = vmatpush2.bf16.xpose.msra.mxu0 0
    %7868 = vmatprep.subr.bf16.mxu0 0
    %7869 = vmatpush2.bf16.xpose.msra.mxu0 0
    %7870 = vmatprep.subr.bf16.mxu0 0
    %7871 = vmatpush2.bf16.xpose.msra.mxu0 0
    %7872 = vmatprep.mubr.bf16.mxu0 %v3394
    %7873 = vmatmul.mubr.bf16.gmra.mxu0 %v3393
    %v7874 = vpop.f32.mrf.mxu0
    %v7875 = vadd.f32 %v7778, %v7874
    %v7876 = vpop.f32.mrf.mxu0
    %v7877 = vpop.f32.mrf.mxu0
    %v7878 = vadd.f32 %v7781, %v7877
    %v7879 = vpop.f32.mrf.mxu0
    %7880 = vmatprep.mubr.bf16.mxu0 %v3458
    %7881 = vmatmul.mubr.bf16.gmra.mxu0 %v3457
    %v7882 = vpop.f32.mrf.mxu0
    %v7883 = vadd.f32 %v7786, %v7882
    %v7884 = vpop.f32.mrf.mxu0
    %v7885 = vpop.f32.mrf.mxu0
    %v7886 = vadd.f32 %v7789, %v7885
    %v7887 = vpop.f32.mrf.mxu0
    %7888 = vmatprep.mubr.bf16.mxu0 %v3522
    %7889 = vmatmul.mubr.bf16.gmra.mxu0 %v3521
    %v7890 = vpop.f32.mrf.mxu0
    %v7891 = vadd.f32 %v7794, %v7890
    %v7892 = vpop.f32.mrf.mxu0
    %v7893 = vpop.f32.mrf.mxu0
    %v7894 = vadd.f32 %v7797, %v7893
    %v7895 = vpop.f32.mrf.mxu0
    %7896 = vmatprep.mubr.bf16.mxu0 %v3586
    %7897 = vmatmul.mubr.bf16.gmra.mxu0 %v3585
    %v7898 = vpop.f32.mrf.mxu0
    %v7899 = vadd.f32 %v7802, %v7898
    %v7900 = vpop.f32.mrf.mxu0
    %v7901 = vpop.f32.mrf.mxu0
    %v7902 = vadd.f32 %v7805, %v7901
    %v7903 = vpop.f32.mrf.mxu0
    %7904 = vmatprep.mubr.bf16.mxu0 %v3650
    %7905 = vmatmul.mubr.bf16.gmra.mxu0 %v3649
    %v7906 = vpop.f32.mrf.mxu0
    %v7907 = vadd.f32 %v7810, %v7906
    %v7908 = vpop.f32.mrf.mxu0
    %v7909 = vpop.f32.mrf.mxu0
    %v7910 = vadd.f32 %v7813, %v7909
    %v7911 = vpop.f32.mrf.mxu0
    %7912 = vmatprep.mubr.bf16.mxu0 %v3714
    %7913 = vmatmul.mubr.bf16.gmra.mxu0 %v3713
    %v7914 = vpop.f32.mrf.mxu0
    %v7915 = vadd.f32 %v7818, %v7914
    %v7916 = vpop.f32.mrf.mxu0
    %v7917 = vpop.f32.mrf.mxu0
    %v7918 = vadd.f32 %v7821, %v7917
    %v7919 = vpop.f32.mrf.mxu0
    %7920 = vmatprep.mubr.bf16.mxu0 %v3778
    %7921 = vmatmul.mubr.bf16.gmra.mxu0 %v3777
    %v7922 = vpop.f32.mrf.mxu0
    %v7923 = vadd.f32 %v7826, %v7922
    %v7924 = vpop.f32.mrf.mxu0
    %v7925 = vpop.f32.mrf.mxu0
    %v7926 = vadd.f32 %v7829, %v7925
    %v7927 = vpop.f32.mrf.mxu0
    %7928 = vmatprep.mubr.bf16.mxu0 %v3842
    %7929 = vmatmul.mubr.bf16.gmra.mxu0 %v3841
    %v7930 = vpop.f32.mrf.mxu0
    %v7931 = vadd.f32 %v7834, %v7930
    %v7932 = vpop.f32.mrf.mxu0
    %v7933 = vpop.f32.mrf.mxu0
    %v7934 = vadd.f32 %v7837, %v7933
    %v7935 = vpop.f32.mrf.mxu0
    %7936 = vdwg.mxu0
    %7937 = vmatprep.subr.bf16.mxu0 %v7684
    %7938 = vmatpush1.bf16.xpose.msra.mxu0 %v7683
    %7939 = vmatprep.subr.bf16.mxu0 %v7620
    %7940 = vmatpush1.bf16.xpose.msra.mxu0 %v7619
    %7941 = vmatprep.subr.bf16.mxu0 %v7556
    %7942 = vmatpush1.bf16.xpose.msra.mxu0 %v7555
    %7943 = vmatprep.subr.bf16.mxu0 %v7492
    %7944 = vmatpush1.bf16.xpose.msra.mxu0 %v7491
    %7945 = vmatprep.subr.bf16.mxu0 %v7428
    %7946 = vmatpush1.bf16.xpose.msra.mxu0 %v7427
    %7947 = vmatprep.subr.bf16.mxu0 %v7364
    %7948 = vmatpush1.bf16.xpose.msra.mxu0 %v7363
    %7949 = vmatprep.subr.bf16.mxu0 %v7300
    %7950 = vmatpush1.bf16.xpose.msra.mxu0 %v7299
    %7951 = vmatprep.subr.bf16.mxu0 %v7236
    %7952 = vmatpush1.bf16.xpose.msra.mxu0 %v7235
    %7953 = vmatprep.subr.bf16.mxu0 0
    %7954 = vmatpush2.bf16.xpose.msra.mxu0 0
    %7955 = vmatprep.subr.bf16.mxu0 0
    %7956 = vmatpush2.bf16.xpose.msra.mxu0 0
    %7957 = vmatprep.subr.bf16.mxu0 0
    %7958 = vmatpush2.bf16.xpose.msra.mxu0 0
    %7959 = vmatprep.subr.bf16.mxu0 0
    %7960 = vmatpush2.bf16.xpose.msra.mxu0 0
    %7961 = vmatprep.subr.bf16.mxu0 0
    %7962 = vmatpush2.bf16.xpose.msra.mxu0 0
    %7963 = vmatprep.subr.bf16.mxu0 0
    %7964 = vmatpush2.bf16.xpose.msra.mxu0 0
    %7965 = vmatprep.subr.bf16.mxu0 0
    %7966 = vmatpush2.bf16.xpose.msra.mxu0 0
    %7967 = vmatprep.subr.bf16.mxu0 0
    %7968 = vmatpush2.bf16.xpose.msra.mxu0 0
    %7969 = vmatprep.mubr.bf16.mxu0 %v3396
    %7970 = vmatmul.mubr.bf16.gmra.mxu0 %v3395
    %v7971 = vpop.f32.mrf.mxu0
    %v7972 = vadd.f32 %v7875, %v7971
    %v7973 = vpop.f32.mrf.mxu0
    %v7974 = vpop.f32.mrf.mxu0
    %v7975 = vadd.f32 %v7878, %v7974
    %v7976 = vpop.f32.mrf.mxu0
    %7977 = vmatprep.mubr.bf16.mxu0 %v3460
    %7978 = vmatmul.mubr.bf16.gmra.mxu0 %v3459
    %v7979 = vpop.f32.mrf.mxu0
    %v7980 = vadd.f32 %v7883, %v7979
    %v7981 = vpop.f32.mrf.mxu0
    %v7982 = vpop.f32.mrf.mxu0
    %v7983 = vadd.f32 %v7886, %v7982
    %v7984 = vpop.f32.mrf.mxu0
    %7985 = vmatprep.mubr.bf16.mxu0 %v3524
    %7986 = vmatmul.mubr.bf16.gmra.mxu0 %v3523
    %v7987 = vpop.f32.mrf.mxu0
    %v7988 = vadd.f32 %v7891, %v7987
    %v7989 = vpop.f32.mrf.mxu0
    %v7990 = vpop.f32.mrf.mxu0
    %v7991 = vadd.f32 %v7894, %v7990
    %v7992 = vpop.f32.mrf.mxu0
    %7993 = vmatprep.mubr.bf16.mxu0 %v3588
    %7994 = vmatmul.mubr.bf16.gmra.mxu0 %v3587
    %v7995 = vpop.f32.mrf.mxu0
    %v7996 = vadd.f32 %v7899, %v7995
    %v7997 = vpop.f32.mrf.mxu0
    %v7998 = vpop.f32.mrf.mxu0
    %v7999 = vadd.f32 %v7902, %v7998
    %v8000 = vpop.f32.mrf.mxu0
    %8001 = vmatprep.mubr.bf16.mxu0 %v3652
    %8002 = vmatmul.mubr.bf16.gmra.mxu0 %v3651
    %v8003 = vpop.f32.mrf.mxu0
    %v8004 = vadd.f32 %v7907, %v8003
    %v8005 = vpop.f32.mrf.mxu0
    %v8006 = vpop.f32.mrf.mxu0
    %v8007 = vadd.f32 %v7910, %v8006
    %v8008 = vpop.f32.mrf.mxu0
    %8009 = vmatprep.mubr.bf16.mxu0 %v3716
    %8010 = vmatmul.mubr.bf16.gmra.mxu0 %v3715
    %v8011 = vpop.f32.mrf.mxu0
    %v8012 = vadd.f32 %v7915, %v8011
    %v8013 = vpop.f32.mrf.mxu0
    %v8014 = vpop.f32.mrf.mxu0
    %v8015 = vadd.f32 %v7918, %v8014
    %v8016 = vpop.f32.mrf.mxu0
    %8017 = vmatprep.mubr.bf16.mxu0 %v3780
    %8018 = vmatmul.mubr.bf16.gmra.mxu0 %v3779
    %v8019 = vpop.f32.mrf.mxu0
    %v8020 = vadd.f32 %v7923, %v8019
    %v8021 = vpop.f32.mrf.mxu0
    %v8022 = vpop.f32.mrf.mxu0
    %v8023 = vadd.f32 %v7926, %v8022
    %v8024 = vpop.f32.mrf.mxu0
    %8025 = vmatprep.mubr.bf16.mxu0 %v3844
    %8026 = vmatmul.mubr.bf16.gmra.mxu0 %v3843
    %v8027 = vpop.f32.mrf.mxu0
    %v8028 = vadd.f32 %v7931, %v8027
    %v8029 = vpop.f32.mrf.mxu0
    %v8030 = vpop.f32.mrf.mxu0
    %v8031 = vadd.f32 %v7934, %v8030
    %v8032 = vpop.f32.mrf.mxu0
    %8033 = vdwg.mxu0
    %8034 = vmatprep.subr.bf16.mxu0 %v7686
    %8035 = vmatpush1.bf16.xpose.msra.mxu0 %v7685
    %8036 = vmatprep.subr.bf16.mxu0 %v7622
    %8037 = vmatpush1.bf16.xpose.msra.mxu0 %v7621
    %8038 = vmatprep.subr.bf16.mxu0 %v7558
    %8039 = vmatpush1.bf16.xpose.msra.mxu0 %v7557
    %8040 = vmatprep.subr.bf16.mxu0 %v7494
    %8041 = vmatpush1.bf16.xpose.msra.mxu0 %v7493
    %8042 = vmatprep.subr.bf16.mxu0 %v7430
    %8043 = vmatpush1.bf16.xpose.msra.mxu0 %v7429
    %8044 = vmatprep.subr.bf16.mxu0 %v7366
    %8045 = vmatpush1.bf16.xpose.msra.mxu0 %v7365
    %8046 = vmatprep.subr.bf16.mxu0 %v7302
    %8047 = vmatpush1.bf16.xpose.msra.mxu0 %v7301
    %8048 = vmatprep.subr.bf16.mxu0 %v7238
    %8049 = vmatpush1.bf16.xpose.msra.mxu0 %v7237
    %8050 = vmatprep.subr.bf16.mxu0 0
    %8051 = vmatpush2.bf16.xpose.msra.mxu0 0
    %8052 = vmatprep.subr.bf16.mxu0 0
    %8053 = vmatpush2.bf16.xpose.msra.mxu0 0
    %8054 = vmatprep.subr.bf16.mxu0 0
    %8055 = vmatpush2.bf16.xpose.msra.mxu0 0
    %8056 = vmatprep.subr.bf16.mxu0 0
    %8057 = vmatpush2.bf16.xpose.msra.mxu0 0
    %8058 = vmatprep.subr.bf16.mxu0 0
    %8059 = vmatpush2.bf16.xpose.msra.mxu0 0
    %8060 = vmatprep.subr.bf16.mxu0 0
    %8061 = vmatpush2.bf16.xpose.msra.mxu0 0
    %8062 = vmatprep.subr.bf16.mxu0 0
    %8063 = vmatpush2.bf16.xpose.msra.mxu0 0
    %8064 = vmatprep.subr.bf16.mxu0 0
    %8065 = vmatpush2.bf16.xpose.msra.mxu0 0
    %8066 = vmatprep.mubr.bf16.mxu0 %v3398
    %8067 = vmatmul.mubr.bf16.gmra.mxu0 %v3397
    %v8068 = vpop.f32.mrf.mxu0
    %v8069 = vadd.f32 %v7972, %v8068
    %v8070 = vpop.f32.mrf.mxu0
    %v8071 = vpop.f32.mrf.mxu0
    %v8072 = vadd.f32 %v7975, %v8071
    %v8073 = vpop.f32.mrf.mxu0
    %8074 = vmatprep.mubr.bf16.mxu0 %v3462
    %8075 = vmatmul.mubr.bf16.gmra.mxu0 %v3461
    %v8076 = vpop.f32.mrf.mxu0
    %v8077 = vadd.f32 %v7980, %v8076
    %v8078 = vpop.f32.mrf.mxu0
    %v8079 = vpop.f32.mrf.mxu0
    %v8080 = vadd.f32 %v7983, %v8079
    %v8081 = vpop.f32.mrf.mxu0
    %8082 = vmatprep.mubr.bf16.mxu0 %v3526
    %8083 = vmatmul.mubr.bf16.gmra.mxu0 %v3525
    %v8084 = vpop.f32.mrf.mxu0
    %v8085 = vadd.f32 %v7988, %v8084
    %v8086 = vpop.f32.mrf.mxu0
    %v8087 = vpop.f32.mrf.mxu0
    %v8088 = vadd.f32 %v7991, %v8087
    %v8089 = vpop.f32.mrf.mxu0
    %8090 = vmatprep.mubr.bf16.mxu0 %v3590
    %8091 = vmatmul.mubr.bf16.gmra.mxu0 %v3589
    %v8092 = vpop.f32.mrf.mxu0
    %v8093 = vadd.f32 %v7996, %v8092
    %v8094 = vpop.f32.mrf.mxu0
    %v8095 = vpop.f32.mrf.mxu0
    %v8096 = vadd.f32 %v7999, %v8095
    %v8097 = vpop.f32.mrf.mxu0
    %8098 = vmatprep.mubr.bf16.mxu0 %v3654
    %8099 = vmatmul.mubr.bf16.gmra.mxu0 %v3653
    %v8100 = vpop.f32.mrf.mxu0
    %v8101 = vadd.f32 %v8004, %v8100
    %v8102 = vpop.f32.mrf.mxu0
    %v8103 = vpop.f32.mrf.mxu0
    %v8104 = vadd.f32 %v8007, %v8103
    %v8105 = vpop.f32.mrf.mxu0
    %8106 = vmatprep.mubr.bf16.mxu0 %v3718
    %8107 = vmatmul.mubr.bf16.gmra.mxu0 %v3717
    %v8108 = vpop.f32.mrf.mxu0
    %v8109 = vadd.f32 %v8012, %v8108
    %v8110 = vpop.f32.mrf.mxu0
    %v8111 = vpop.f32.mrf.mxu0
    %v8112 = vadd.f32 %v8015, %v8111
    %v8113 = vpop.f32.mrf.mxu0
    %8114 = vmatprep.mubr.bf16.mxu0 %v3782
    %8115 = vmatmul.mubr.bf16.gmra.mxu0 %v3781
    %v8116 = vpop.f32.mrf.mxu0
    %v8117 = vadd.f32 %v8020, %v8116
    %v8118 = vpop.f32.mrf.mxu0
    %v8119 = vpop.f32.mrf.mxu0
    %v8120 = vadd.f32 %v8023, %v8119
    %v8121 = vpop.f32.mrf.mxu0
    %8122 = vmatprep.mubr.bf16.mxu0 %v3846
    %8123 = vmatmul.mubr.bf16.gmra.mxu0 %v3845
    %v8124 = vpop.f32.mrf.mxu0
    %v8125 = vadd.f32 %v8028, %v8124
    %v8126 = vpop.f32.mrf.mxu0
    %v8127 = vpop.f32.mrf.mxu0
    %v8128 = vadd.f32 %v8031, %v8127
    %v8129 = vpop.f32.mrf.mxu0
    %8130 = vdwg.mxu0
    %8131 = vmatprep.subr.bf16.mxu0 %v7688
    %8132 = vmatpush1.bf16.xpose.msra.mxu0 %v7687
    %8133 = vmatprep.subr.bf16.mxu0 %v7624
    %8134 = vmatpush1.bf16.xpose.msra.mxu0 %v7623
    %8135 = vmatprep.subr.bf16.mxu0 %v7560
    %8136 = vmatpush1.bf16.xpose.msra.mxu0 %v7559
    %8137 = vmatprep.subr.bf16.mxu0 %v7496
    %8138 = vmatpush1.bf16.xpose.msra.mxu0 %v7495
    %8139 = vmatprep.subr.bf16.mxu0 %v7432
    %8140 = vmatpush1.bf16.xpose.msra.mxu0 %v7431
    %8141 = vmatprep.subr.bf16.mxu0 %v7368
    %8142 = vmatpush1.bf16.xpose.msra.mxu0 %v7367
    %8143 = vmatprep.subr.bf16.mxu0 %v7304
    %8144 = vmatpush1.bf16.xpose.msra.mxu0 %v7303
    %8145 = vmatprep.subr.bf16.mxu0 %v7240
    %8146 = vmatpush1.bf16.xpose.msra.mxu0 %v7239
    %8147 = vmatprep.subr.bf16.mxu0 0
    %8148 = vmatpush2.bf16.xpose.msra.mxu0 0
    %8149 = vmatprep.subr.bf16.mxu0 0
    %8150 = vmatpush2.bf16.xpose.msra.mxu0 0
    %8151 = vmatprep.subr.bf16.mxu0 0
    %8152 = vmatpush2.bf16.xpose.msra.mxu0 0
    %8153 = vmatprep.subr.bf16.mxu0 0
    %8154 = vmatpush2.bf16.xpose.msra.mxu0 0
    %8155 = vmatprep.subr.bf16.mxu0 0
    %8156 = vmatpush2.bf16.xpose.msra.mxu0 0
    %8157 = vmatprep.subr.bf16.mxu0 0
    %8158 = vmatpush2.bf16.xpose.msra.mxu0 0
    %8159 = vmatprep.subr.bf16.mxu0 0
    %8160 = vmatpush2.bf16.xpose.msra.mxu0 0
    %8161 = vmatprep.subr.bf16.mxu0 0
    %8162 = vmatpush2.bf16.xpose.msra.mxu0 0
    %8163 = vmatprep.mubr.bf16.mxu0 %v3400
    %8164 = vmatmul.mubr.bf16.gmra.mxu0 %v3399
    %v8165 = vpop.f32.mrf.mxu0
    %v8166 = vadd.f32 %v8069, %v8165
    %v8167 = vpop.f32.mrf.mxu0
    %v8168 = vpop.f32.mrf.mxu0
    %v8169 = vadd.f32 %v8072, %v8168
    %v8170 = vpop.f32.mrf.mxu0
    %8171 = vmatprep.mubr.bf16.mxu0 %v3464
    %8172 = vmatmul.mubr.bf16.gmra.mxu0 %v3463
    %v8173 = vpop.f32.mrf.mxu0
    %v8174 = vadd.f32 %v8077, %v8173
    %v8175 = vpop.f32.mrf.mxu0
    %v8176 = vpop.f32.mrf.mxu0
    %v8177 = vadd.f32 %v8080, %v8176
    %v8178 = vpop.f32.mrf.mxu0
    %8179 = vmatprep.mubr.bf16.mxu0 %v3528
    %8180 = vmatmul.mubr.bf16.gmra.mxu0 %v3527
    %v8181 = vpop.f32.mrf.mxu0
    %v8182 = vadd.f32 %v8085, %v8181
    %v8183 = vpop.f32.mrf.mxu0
    %v8184 = vpop.f32.mrf.mxu0
    %v8185 = vadd.f32 %v8088, %v8184
    %v8186 = vpop.f32.mrf.mxu0
    %8187 = vmatprep.mubr.bf16.mxu0 %v3592
    %8188 = vmatmul.mubr.bf16.gmra.mxu0 %v3591
    %v8189 = vpop.f32.mrf.mxu0
    %v8190 = vadd.f32 %v8093, %v8189
    %v8191 = vpop.f32.mrf.mxu0
    %v8192 = vpop.f32.mrf.mxu0
    %v8193 = vadd.f32 %v8096, %v8192
    %v8194 = vpop.f32.mrf.mxu0
    %8195 = vmatprep.mubr.bf16.mxu0 %v3656
    %8196 = vmatmul.mubr.bf16.gmra.mxu0 %v3655
    %v8197 = vpop.f32.mrf.mxu0
    %v8198 = vadd.f32 %v8101, %v8197
    %v8199 = vpop.f32.mrf.mxu0
    %v8200 = vpop.f32.mrf.mxu0
    %v8201 = vadd.f32 %v8104, %v8200
    %v8202 = vpop.f32.mrf.mxu0
    %8203 = vmatprep.mubr.bf16.mxu0 %v3720
    %8204 = vmatmul.mubr.bf16.gmra.mxu0 %v3719
    %v8205 = vpop.f32.mrf.mxu0
    %v8206 = vadd.f32 %v8109, %v8205
    %v8207 = vpop.f32.mrf.mxu0
    %v8208 = vpop.f32.mrf.mxu0
    %v8209 = vadd.f32 %v8112, %v8208
    %v8210 = vpop.f32.mrf.mxu0
    %8211 = vmatprep.mubr.bf16.mxu0 %v3784
    %8212 = vmatmul.mubr.bf16.gmra.mxu0 %v3783
    %v8213 = vpop.f32.mrf.mxu0
    %v8214 = vadd.f32 %v8117, %v8213
    %v8215 = vpop.f32.mrf.mxu0
    %v8216 = vpop.f32.mrf.mxu0
    %v8217 = vadd.f32 %v8120, %v8216
    %v8218 = vpop.f32.mrf.mxu0
    %8219 = vmatprep.mubr.bf16.mxu0 %v3848
    %8220 = vmatmul.mubr.bf16.gmra.mxu0 %v3847
    %v8221 = vpop.f32.mrf.mxu0
    %v8222 = vadd.f32 %v8125, %v8221
    %v8223 = vpop.f32.mrf.mxu0
    %v8224 = vpop.f32.mrf.mxu0
    %v8225 = vadd.f32 %v8128, %v8224
    %v8226 = vpop.f32.mrf.mxu0
    %8227 = vdwg.mxu0
    %8228 = vmatprep.subr.bf16.mxu0 %v7690
    %8229 = vmatpush1.bf16.xpose.msra.mxu0 %v7689
    %8230 = vmatprep.subr.bf16.mxu0 %v7626
    %8231 = vmatpush1.bf16.xpose.msra.mxu0 %v7625
    %8232 = vmatprep.subr.bf16.mxu0 %v7562
    %8233 = vmatpush1.bf16.xpose.msra.mxu0 %v7561
    %8234 = vmatprep.subr.bf16.mxu0 %v7498
    %8235 = vmatpush1.bf16.xpose.msra.mxu0 %v7497
    %8236 = vmatprep.subr.bf16.mxu0 %v7434
    %8237 = vmatpush1.bf16.xpose.msra.mxu0 %v7433
    %8238 = vmatprep.subr.bf16.mxu0 %v7370
    %8239 = vmatpush1.bf16.xpose.msra.mxu0 %v7369
    %8240 = vmatprep.subr.bf16.mxu0 %v7306
    %8241 = vmatpush1.bf16.xpose.msra.mxu0 %v7305
    %8242 = vmatprep.subr.bf16.mxu0 %v7242
    %8243 = vmatpush1.bf16.xpose.msra.mxu0 %v7241
    %8244 = vmatprep.subr.bf16.mxu0 0
    %8245 = vmatpush2.bf16.xpose.msra.mxu0 0
    %8246 = vmatprep.subr.bf16.mxu0 0
    %8247 = vmatpush2.bf16.xpose.msra.mxu0 0
    %8248 = vmatprep.subr.bf16.mxu0 0
    %8249 = vmatpush2.bf16.xpose.msra.mxu0 0
    %8250 = vmatprep.subr.bf16.mxu0 0
    %8251 = vmatpush2.bf16.xpose.msra.mxu0 0
    %8252 = vmatprep.subr.bf16.mxu0 0
    %8253 = vmatpush2.bf16.xpose.msra.mxu0 0
    %8254 = vmatprep.subr.bf16.mxu0 0
    %8255 = vmatpush2.bf16.xpose.msra.mxu0 0
    %8256 = vmatprep.subr.bf16.mxu0 0
    %8257 = vmatpush2.bf16.xpose.msra.mxu0 0
    %8258 = vmatprep.subr.bf16.mxu0 0
    %8259 = vmatpush2.bf16.xpose.msra.mxu0 0
    %8260 = vmatprep.mubr.bf16.mxu0 %v3402
    %8261 = vmatmul.mubr.bf16.gmra.mxu0 %v3401
    %v8262 = vpop.f32.mrf.mxu0
    %v8263 = vadd.f32 %v8166, %v8262
    %v8264 = vpop.f32.mrf.mxu0
    %v8265 = vpop.f32.mrf.mxu0
    %v8266 = vadd.f32 %v8169, %v8265
    %v8267 = vpop.f32.mrf.mxu0
    %8268 = vmatprep.mubr.bf16.mxu0 %v3466
    %8269 = vmatmul.mubr.bf16.gmra.mxu0 %v3465
    %v8270 = vpop.f32.mrf.mxu0
    %v8271 = vadd.f32 %v8174, %v8270
    %v8272 = vpop.f32.mrf.mxu0
    %v8273 = vpop.f32.mrf.mxu0
    %v8274 = vadd.f32 %v8177, %v8273
    %v8275 = vpop.f32.mrf.mxu0
    %8276 = vmatprep.mubr.bf16.mxu0 %v3530
    %8277 = vmatmul.mubr.bf16.gmra.mxu0 %v3529
    %v8278 = vpop.f32.mrf.mxu0
    %v8279 = vadd.f32 %v8182, %v8278
    %v8280 = vpop.f32.mrf.mxu0
    %v8281 = vpop.f32.mrf.mxu0
    %v8282 = vadd.f32 %v8185, %v8281
    %v8283 = vpop.f32.mrf.mxu0
    %8284 = vmatprep.mubr.bf16.mxu0 %v3594
    %8285 = vmatmul.mubr.bf16.gmra.mxu0 %v3593
    %v8286 = vpop.f32.mrf.mxu0
    %v8287 = vadd.f32 %v8190, %v8286
    %v8288 = vpop.f32.mrf.mxu0
    %v8289 = vpop.f32.mrf.mxu0
    %v8290 = vadd.f32 %v8193, %v8289
    %v8291 = vpop.f32.mrf.mxu0
    %8292 = vmatprep.mubr.bf16.mxu0 %v3658
    %8293 = vmatmul.mubr.bf16.gmra.mxu0 %v3657
    %v8294 = vpop.f32.mrf.mxu0
    %v8295 = vadd.f32 %v8198, %v8294
    %v8296 = vpop.f32.mrf.mxu0
    %v8297 = vpop.f32.mrf.mxu0
    %v8298 = vadd.f32 %v8201, %v8297
    %v8299 = vpop.f32.mrf.mxu0
    %8300 = vmatprep.mubr.bf16.mxu0 %v3722
    %8301 = vmatmul.mubr.bf16.gmra.mxu0 %v3721
    %v8302 = vpop.f32.mrf.mxu0
    %v8303 = vadd.f32 %v8206, %v8302
    %v8304 = vpop.f32.mrf.mxu0
    %v8305 = vpop.f32.mrf.mxu0
    %v8306 = vadd.f32 %v8209, %v8305
    %v8307 = vpop.f32.mrf.mxu0
    %8308 = vmatprep.mubr.bf16.mxu0 %v3786
    %8309 = vmatmul.mubr.bf16.gmra.mxu0 %v3785
    %v8310 = vpop.f32.mrf.mxu0
    %v8311 = vadd.f32 %v8214, %v8310
    %v8312 = vpop.f32.mrf.mxu0
    %v8313 = vpop.f32.mrf.mxu0
    %v8314 = vadd.f32 %v8217, %v8313
    %v8315 = vpop.f32.mrf.mxu0
    %8316 = vmatprep.mubr.bf16.mxu0 %v3850
    %8317 = vmatmul.mubr.bf16.gmra.mxu0 %v3849
    %v8318 = vpop.f32.mrf.mxu0
    %v8319 = vadd.f32 %v8222, %v8318
    %v8320 = vpop.f32.mrf.mxu0
    %v8321 = vpop.f32.mrf.mxu0
    %v8322 = vadd.f32 %v8225, %v8321
    %v8323 = vpop.f32.mrf.mxu0
    %8324 = vdwg.mxu0
    %8325 = vmatprep.subr.bf16.mxu0 %v7692
    %8326 = vmatpush1.bf16.xpose.msra.mxu0 %v7691
    %8327 = vmatprep.subr.bf16.mxu0 %v7628
    %8328 = vmatpush1.bf16.xpose.msra.mxu0 %v7627
    %8329 = vmatprep.subr.bf16.mxu0 %v7564
    %8330 = vmatpush1.bf16.xpose.msra.mxu0 %v7563
    %8331 = vmatprep.subr.bf16.mxu0 %v7500
    %8332 = vmatpush1.bf16.xpose.msra.mxu0 %v7499
    %8333 = vmatprep.subr.bf16.mxu0 %v7436
    %8334 = vmatpush1.bf16.xpose.msra.mxu0 %v7435
    %8335 = vmatprep.subr.bf16.mxu0 %v7372
    %8336 = vmatpush1.bf16.xpose.msra.mxu0 %v7371
    %8337 = vmatprep.subr.bf16.mxu0 %v7308
    %8338 = vmatpush1.bf16.xpose.msra.mxu0 %v7307
    %8339 = vmatprep.subr.bf16.mxu0 %v7244
    %8340 = vmatpush1.bf16.xpose.msra.mxu0 %v7243
    %8341 = vmatprep.subr.bf16.mxu0 0
    %8342 = vmatpush2.bf16.xpose.msra.mxu0 0
    %8343 = vmatprep.subr.bf16.mxu0 0
    %8344 = vmatpush2.bf16.xpose.msra.mxu0 0
    %8345 = vmatprep.subr.bf16.mxu0 0
    %8346 = vmatpush2.bf16.xpose.msra.mxu0 0
    %8347 = vmatprep.subr.bf16.mxu0 0
    %8348 = vmatpush2.bf16.xpose.msra.mxu0 0
    %8349 = vmatprep.subr.bf16.mxu0 0
    %8350 = vmatpush2.bf16.xpose.msra.mxu0 0
    %8351 = vmatprep.subr.bf16.mxu0 0
    %8352 = vmatpush2.bf16.xpose.msra.mxu0 0
    %8353 = vmatprep.subr.bf16.mxu0 0
    %8354 = vmatpush2.bf16.xpose.msra.mxu0 0
    %8355 = vmatprep.subr.bf16.mxu0 0
    %8356 = vmatpush2.bf16.xpose.msra.mxu0 0
    %8357 = vmatprep.mubr.bf16.mxu0 %v3404
    %8358 = vmatmul.mubr.bf16.gmra.mxu0 %v3403
    %v8359 = vpop.f32.mrf.mxu0
    %v8360 = vadd.f32 %v8263, %v8359
    %v8361 = vpop.f32.mrf.mxu0
    %v8362 = vpop.f32.mrf.mxu0
    %v8363 = vadd.f32 %v8266, %v8362
    %v8364 = vpop.f32.mrf.mxu0
    %8365 = vmatprep.mubr.bf16.mxu0 %v3468
    %8366 = vmatmul.mubr.bf16.gmra.mxu0 %v3467
    %v8367 = vpop.f32.mrf.mxu0
    %v8368 = vadd.f32 %v8271, %v8367
    %v8369 = vpop.f32.mrf.mxu0
    %v8370 = vpop.f32.mrf.mxu0
    %v8371 = vadd.f32 %v8274, %v8370
    %v8372 = vpop.f32.mrf.mxu0
    %8373 = vmatprep.mubr.bf16.mxu0 %v3532
    %8374 = vmatmul.mubr.bf16.gmra.mxu0 %v3531
    %v8375 = vpop.f32.mrf.mxu0
    %v8376 = vadd.f32 %v8279, %v8375
    %v8377 = vpop.f32.mrf.mxu0
    %v8378 = vpop.f32.mrf.mxu0
    %v8379 = vadd.f32 %v8282, %v8378
    %v8380 = vpop.f32.mrf.mxu0
    %8381 = vmatprep.mubr.bf16.mxu0 %v3596
    %8382 = vmatmul.mubr.bf16.gmra.mxu0 %v3595
    %v8383 = vpop.f32.mrf.mxu0
    %v8384 = vadd.f32 %v8287, %v8383
    %v8385 = vpop.f32.mrf.mxu0
    %v8386 = vpop.f32.mrf.mxu0
    %v8387 = vadd.f32 %v8290, %v8386
    %v8388 = vpop.f32.mrf.mxu0
    %8389 = vmatprep.mubr.bf16.mxu0 %v3660
    %8390 = vmatmul.mubr.bf16.gmra.mxu0 %v3659
    %v8391 = vpop.f32.mrf.mxu0
    %v8392 = vadd.f32 %v8295, %v8391
    %v8393 = vpop.f32.mrf.mxu0
    %v8394 = vpop.f32.mrf.mxu0
    %v8395 = vadd.f32 %v8298, %v8394
    %v8396 = vpop.f32.mrf.mxu0
    %8397 = vmatprep.mubr.bf16.mxu0 %v3724
    %8398 = vmatmul.mubr.bf16.gmra.mxu0 %v3723
    %v8399 = vpop.f32.mrf.mxu0
    %v8400 = vadd.f32 %v8303, %v8399
    %v8401 = vpop.f32.mrf.mxu0
    %v8402 = vpop.f32.mrf.mxu0
    %v8403 = vadd.f32 %v8306, %v8402
    %v8404 = vpop.f32.mrf.mxu0
    %8405 = vmatprep.mubr.bf16.mxu0 %v3788
    %8406 = vmatmul.mubr.bf16.gmra.mxu0 %v3787
    %v8407 = vpop.f32.mrf.mxu0
    %v8408 = vadd.f32 %v8311, %v8407
    %v8409 = vpop.f32.mrf.mxu0
    %v8410 = vpop.f32.mrf.mxu0
    %v8411 = vadd.f32 %v8314, %v8410
    %v8412 = vpop.f32.mrf.mxu0
    %8413 = vmatprep.mubr.bf16.mxu0 %v3852
    %8414 = vmatmul.mubr.bf16.gmra.mxu0 %v3851
    %v8415 = vpop.f32.mrf.mxu0
    %v8416 = vadd.f32 %v8319, %v8415
    %v8417 = vpop.f32.mrf.mxu0
    %v8418 = vpop.f32.mrf.mxu0
    %v8419 = vadd.f32 %v8322, %v8418
    %v8420 = vpop.f32.mrf.mxu0
    %8421 = vdwg.mxu0
    %8422 = vmatprep.subr.bf16.mxu0 %v7694
    %8423 = vmatpush1.bf16.xpose.msra.mxu0 %v7693
    %8424 = vmatprep.subr.bf16.mxu0 %v7630
    %8425 = vmatpush1.bf16.xpose.msra.mxu0 %v7629
    %8426 = vmatprep.subr.bf16.mxu0 %v7566
    %8427 = vmatpush1.bf16.xpose.msra.mxu0 %v7565
    %8428 = vmatprep.subr.bf16.mxu0 %v7502
    %8429 = vmatpush1.bf16.xpose.msra.mxu0 %v7501
    %8430 = vmatprep.subr.bf16.mxu0 %v7438
    %8431 = vmatpush1.bf16.xpose.msra.mxu0 %v7437
    %8432 = vmatprep.subr.bf16.mxu0 %v7374
    %8433 = vmatpush1.bf16.xpose.msra.mxu0 %v7373
    %8434 = vmatprep.subr.bf16.mxu0 %v7310
    %8435 = vmatpush1.bf16.xpose.msra.mxu0 %v7309
    %8436 = vmatprep.subr.bf16.mxu0 %v7246
    %8437 = vmatpush1.bf16.xpose.msra.mxu0 %v7245
    %8438 = vmatprep.subr.bf16.mxu0 0
    %8439 = vmatpush2.bf16.xpose.msra.mxu0 0
    %8440 = vmatprep.subr.bf16.mxu0 0
    %8441 = vmatpush2.bf16.xpose.msra.mxu0 0
    %8442 = vmatprep.subr.bf16.mxu0 0
    %8443 = vmatpush2.bf16.xpose.msra.mxu0 0
    %8444 = vmatprep.subr.bf16.mxu0 0
    %8445 = vmatpush2.bf16.xpose.msra.mxu0 0
    %8446 = vmatprep.subr.bf16.mxu0 0
    %8447 = vmatpush2.bf16.xpose.msra.mxu0 0
    %8448 = vmatprep.subr.bf16.mxu0 0
    %8449 = vmatpush2.bf16.xpose.msra.mxu0 0
    %8450 = vmatprep.subr.bf16.mxu0 0
    %8451 = vmatpush2.bf16.xpose.msra.mxu0 0
    %8452 = vmatprep.subr.bf16.mxu0 0
    %8453 = vmatpush2.bf16.xpose.msra.mxu0 0
    %8454 = vmatprep.mubr.bf16.mxu0 %v3406
    %8455 = vmatmul.mubr.bf16.gmra.mxu0 %v3405
    %v8456 = vpop.f32.mrf.mxu0
    %v8457 = vadd.f32 %v8360, %v8456
    %v8458 = vpop.f32.mrf.mxu0
    %v8459 = vpop.f32.mrf.mxu0
    %v8460 = vadd.f32 %v8363, %v8459
    %v8461 = vpop.f32.mrf.mxu0
    %8462 = vmatprep.mubr.bf16.mxu0 %v3470
    %8463 = vmatmul.mubr.bf16.gmra.mxu0 %v3469
    %v8464 = vpop.f32.mrf.mxu0
    %v8465 = vadd.f32 %v8368, %v8464
    %v8466 = vpop.f32.mrf.mxu0
    %v8467 = vpop.f32.mrf.mxu0
    %v8468 = vadd.f32 %v8371, %v8467
    %v8469 = vpop.f32.mrf.mxu0
    %8470 = vmatprep.mubr.bf16.mxu0 %v3534
    %8471 = vmatmul.mubr.bf16.gmra.mxu0 %v3533
    %v8472 = vpop.f32.mrf.mxu0
    %v8473 = vadd.f32 %v8376, %v8472
    %v8474 = vpop.f32.mrf.mxu0
    %v8475 = vpop.f32.mrf.mxu0
    %v8476 = vadd.f32 %v8379, %v8475
    %v8477 = vpop.f32.mrf.mxu0
    %8478 = vmatprep.mubr.bf16.mxu0 %v3598
    %8479 = vmatmul.mubr.bf16.gmra.mxu0 %v3597
    %v8480 = vpop.f32.mrf.mxu0
    %v8481 = vadd.f32 %v8384, %v8480
    %v8482 = vpop.f32.mrf.mxu0
    %v8483 = vpop.f32.mrf.mxu0
    %v8484 = vadd.f32 %v8387, %v8483
    %v8485 = vpop.f32.mrf.mxu0
    %8486 = vmatprep.mubr.bf16.mxu0 %v3662
    %8487 = vmatmul.mubr.bf16.gmra.mxu0 %v3661
    %v8488 = vpop.f32.mrf.mxu0
    %v8489 = vadd.f32 %v8392, %v8488
    %v8490 = vpop.f32.mrf.mxu0
    %v8491 = vpop.f32.mrf.mxu0
    %v8492 = vadd.f32 %v8395, %v8491
    %v8493 = vpop.f32.mrf.mxu0
    %8494 = vmatprep.mubr.bf16.mxu0 %v3726
    %8495 = vmatmul.mubr.bf16.gmra.mxu0 %v3725
    %v8496 = vpop.f32.mrf.mxu0
    %v8497 = vadd.f32 %v8400, %v8496
    %v8498 = vpop.f32.mrf.mxu0
    %v8499 = vpop.f32.mrf.mxu0
    %v8500 = vadd.f32 %v8403, %v8499
    %v8501 = vpop.f32.mrf.mxu0
    %8502 = vmatprep.mubr.bf16.mxu0 %v3790
    %8503 = vmatmul.mubr.bf16.gmra.mxu0 %v3789
    %v8504 = vpop.f32.mrf.mxu0
    %v8505 = vadd.f32 %v8408, %v8504
    %v8506 = vpop.f32.mrf.mxu0
    %v8507 = vpop.f32.mrf.mxu0
    %v8508 = vadd.f32 %v8411, %v8507
    %v8509 = vpop.f32.mrf.mxu0
    %8510 = vmatprep.mubr.bf16.mxu0 %v3854
    %8511 = vmatmul.mubr.bf16.gmra.mxu0 %v3853
    %v8512 = vpop.f32.mrf.mxu0
    %v8513 = vadd.f32 %v8416, %v8512
    %v8514 = vpop.f32.mrf.mxu0
    %v8515 = vpop.f32.mrf.mxu0
    %v8516 = vadd.f32 %v8419, %v8515
    %v8517 = vpop.f32.mrf.mxu0
    %8518 = vdwg.mxu0
    %8519 = vmatprep.subr.bf16.mxu0 %v7696
    %8520 = vmatpush1.bf16.xpose.msra.mxu0 %v7695
    %8521 = vmatprep.subr.bf16.mxu0 %v7632
    %8522 = vmatpush1.bf16.xpose.msra.mxu0 %v7631
    %8523 = vmatprep.subr.bf16.mxu0 %v7568
    %8524 = vmatpush1.bf16.xpose.msra.mxu0 %v7567
    %8525 = vmatprep.subr.bf16.mxu0 %v7504
    %8526 = vmatpush1.bf16.xpose.msra.mxu0 %v7503
    %8527 = vmatprep.subr.bf16.mxu0 %v7440
    %8528 = vmatpush1.bf16.xpose.msra.mxu0 %v7439
    %8529 = vmatprep.subr.bf16.mxu0 %v7376
    %8530 = vmatpush1.bf16.xpose.msra.mxu0 %v7375
    %8531 = vmatprep.subr.bf16.mxu0 %v7312
    %8532 = vmatpush1.bf16.xpose.msra.mxu0 %v7311
    %8533 = vmatprep.subr.bf16.mxu0 %v7248
    %8534 = vmatpush1.bf16.xpose.msra.mxu0 %v7247
    %8535 = vmatprep.subr.bf16.mxu0 0
    %8536 = vmatpush2.bf16.xpose.msra.mxu0 0
    %8537 = vmatprep.subr.bf16.mxu0 0
    %8538 = vmatpush2.bf16.xpose.msra.mxu0 0
    %8539 = vmatprep.subr.bf16.mxu0 0
    %8540 = vmatpush2.bf16.xpose.msra.mxu0 0
    %8541 = vmatprep.subr.bf16.mxu0 0
    %8542 = vmatpush2.bf16.xpose.msra.mxu0 0
    %8543 = vmatprep.subr.bf16.mxu0 0
    %8544 = vmatpush2.bf16.xpose.msra.mxu0 0
    %8545 = vmatprep.subr.bf16.mxu0 0
    %8546 = vmatpush2.bf16.xpose.msra.mxu0 0
    %8547 = vmatprep.subr.bf16.mxu0 0
    %8548 = vmatpush2.bf16.xpose.msra.mxu0 0
    %8549 = vmatprep.subr.bf16.mxu0 0
    %8550 = vmatpush2.bf16.xpose.msra.mxu0 0
    %8551 = vmatprep.mubr.bf16.mxu0 %v3408
    %8552 = vmatmul.mubr.bf16.gmra.mxu0 %v3407
    %v8553 = vpop.f32.mrf.mxu0
    %v8554 = vadd.f32 %v8457, %v8553
    %v8555 = vpop.f32.mrf.mxu0
    %v8556 = vpop.f32.mrf.mxu0
    %v8557 = vadd.f32 %v8460, %v8556
    %v8558 = vpop.f32.mrf.mxu0
    %8559 = vmatprep.mubr.bf16.mxu0 %v3472
    %8560 = vmatmul.mubr.bf16.gmra.mxu0 %v3471
    %v8561 = vpop.f32.mrf.mxu0
    %v8562 = vadd.f32 %v8465, %v8561
    %v8563 = vpop.f32.mrf.mxu0
    %v8564 = vpop.f32.mrf.mxu0
    %v8565 = vadd.f32 %v8468, %v8564
    %v8566 = vpop.f32.mrf.mxu0
    %8567 = vmatprep.mubr.bf16.mxu0 %v3536
    %8568 = vmatmul.mubr.bf16.gmra.mxu0 %v3535
    %v8569 = vpop.f32.mrf.mxu0
    %v8570 = vadd.f32 %v8473, %v8569
    %v8571 = vpop.f32.mrf.mxu0
    %v8572 = vpop.f32.mrf.mxu0
    %v8573 = vadd.f32 %v8476, %v8572
    %v8574 = vpop.f32.mrf.mxu0
    %8575 = vmatprep.mubr.bf16.mxu0 %v3600
    %8576 = vmatmul.mubr.bf16.gmra.mxu0 %v3599
    %v8577 = vpop.f32.mrf.mxu0
    %v8578 = vadd.f32 %v8481, %v8577
    %v8579 = vpop.f32.mrf.mxu0
    %v8580 = vpop.f32.mrf.mxu0
    %v8581 = vadd.f32 %v8484, %v8580
    %v8582 = vpop.f32.mrf.mxu0
    %8583 = vmatprep.mubr.bf16.mxu0 %v3664
    %8584 = vmatmul.mubr.bf16.gmra.mxu0 %v3663
    %v8585 = vpop.f32.mrf.mxu0
    %v8586 = vadd.f32 %v8489, %v8585
    %v8587 = vpop.f32.mrf.mxu0
    %v8588 = vpop.f32.mrf.mxu0
    %v8589 = vadd.f32 %v8492, %v8588
    %v8590 = vpop.f32.mrf.mxu0
    %8591 = vmatprep.mubr.bf16.mxu0 %v3728
    %8592 = vmatmul.mubr.bf16.gmra.mxu0 %v3727
    %v8593 = vpop.f32.mrf.mxu0
    %v8594 = vadd.f32 %v8497, %v8593
    %v8595 = vpop.f32.mrf.mxu0
    %v8596 = vpop.f32.mrf.mxu0
    %v8597 = vadd.f32 %v8500, %v8596
    %v8598 = vpop.f32.mrf.mxu0
    %8599 = vmatprep.mubr.bf16.mxu0 %v3792
    %8600 = vmatmul.mubr.bf16.gmra.mxu0 %v3791
    %v8601 = vpop.f32.mrf.mxu0
    %v8602 = vadd.f32 %v8505, %v8601
    %v8603 = vpop.f32.mrf.mxu0
    %v8604 = vpop.f32.mrf.mxu0
    %v8605 = vadd.f32 %v8508, %v8604
    %v8606 = vpop.f32.mrf.mxu0
    %8607 = vmatprep.mubr.bf16.mxu0 %v3856
    %8608 = vmatmul.mubr.bf16.gmra.mxu0 %v3855
    %v8609 = vpop.f32.mrf.mxu0
    %v8610 = vadd.f32 %v8513, %v8609
    %v8611 = vpop.f32.mrf.mxu0
    %v8612 = vpop.f32.mrf.mxu0
    %v8613 = vadd.f32 %v8516, %v8612
    %v8614 = vpop.f32.mrf.mxu0
    %8615 = vdwg.mxu0
    %8616 = vmatprep.subr.bf16.mxu0 %v7698
    %8617 = vmatpush1.bf16.xpose.msra.mxu0 %v7697
    %8618 = vmatprep.subr.bf16.mxu0 %v7634
    %8619 = vmatpush1.bf16.xpose.msra.mxu0 %v7633
    %8620 = vmatprep.subr.bf16.mxu0 %v7570
    %8621 = vmatpush1.bf16.xpose.msra.mxu0 %v7569
    %8622 = vmatprep.subr.bf16.mxu0 %v7506
    %8623 = vmatpush1.bf16.xpose.msra.mxu0 %v7505
    %8624 = vmatprep.subr.bf16.mxu0 %v7442
    %8625 = vmatpush1.bf16.xpose.msra.mxu0 %v7441
    %8626 = vmatprep.subr.bf16.mxu0 %v7378
    %8627 = vmatpush1.bf16.xpose.msra.mxu0 %v7377
    %8628 = vmatprep.subr.bf16.mxu0 %v7314
    %8629 = vmatpush1.bf16.xpose.msra.mxu0 %v7313
    %8630 = vmatprep.subr.bf16.mxu0 %v7250
    %8631 = vmatpush1.bf16.xpose.msra.mxu0 %v7249
    %8632 = vmatprep.subr.bf16.mxu0 0
    %8633 = vmatpush2.bf16.xpose.msra.mxu0 0
    %8634 = vmatprep.subr.bf16.mxu0 0
    %8635 = vmatpush2.bf16.xpose.msra.mxu0 0
    %8636 = vmatprep.subr.bf16.mxu0 0
    %8637 = vmatpush2.bf16.xpose.msra.mxu0 0
    %8638 = vmatprep.subr.bf16.mxu0 0
    %8639 = vmatpush2.bf16.xpose.msra.mxu0 0
    %8640 = vmatprep.subr.bf16.mxu0 0
    %8641 = vmatpush2.bf16.xpose.msra.mxu0 0
    %8642 = vmatprep.subr.bf16.mxu0 0
    %8643 = vmatpush2.bf16.xpose.msra.mxu0 0
    %8644 = vmatprep.subr.bf16.mxu0 0
    %8645 = vmatpush2.bf16.xpose.msra.mxu0 0
    %8646 = vmatprep.subr.bf16.mxu0 0
    %8647 = vmatpush2.bf16.xpose.msra.mxu0 0
    %8648 = vmatprep.mubr.bf16.mxu0 %v3410
    %8649 = vmatmul.mubr.bf16.gmra.mxu0 %v3409
    %v8650 = vpop.f32.mrf.mxu0
    %v8651 = vadd.f32 %v8554, %v8650
    %v8652 = vpop.f32.mrf.mxu0
    %v8653 = vpop.f32.mrf.mxu0
    %v8654 = vadd.f32 %v8557, %v8653
    %v8655 = vpop.f32.mrf.mxu0
    %8656 = vmatprep.mubr.bf16.mxu0 %v3474
    %8657 = vmatmul.mubr.bf16.gmra.mxu0 %v3473
    %v8658 = vpop.f32.mrf.mxu0
    %v8659 = vadd.f32 %v8562, %v8658
    %v8660 = vpop.f32.mrf.mxu0
    %v8661 = vpop.f32.mrf.mxu0
    %v8662 = vadd.f32 %v8565, %v8661
    %v8663 = vpop.f32.mrf.mxu0
    %8664 = vmatprep.mubr.bf16.mxu0 %v3538
    %8665 = vmatmul.mubr.bf16.gmra.mxu0 %v3537
    %v8666 = vpop.f32.mrf.mxu0
    %v8667 = vadd.f32 %v8570, %v8666
    %v8668 = vpop.f32.mrf.mxu0
    %v8669 = vpop.f32.mrf.mxu0
    %v8670 = vadd.f32 %v8573, %v8669
    %v8671 = vpop.f32.mrf.mxu0
    %8672 = vmatprep.mubr.bf16.mxu0 %v3602
    %8673 = vmatmul.mubr.bf16.gmra.mxu0 %v3601
    %v8674 = vpop.f32.mrf.mxu0
    %v8675 = vadd.f32 %v8578, %v8674
    %v8676 = vpop.f32.mrf.mxu0
    %v8677 = vpop.f32.mrf.mxu0
    %v8678 = vadd.f32 %v8581, %v8677
    %v8679 = vpop.f32.mrf.mxu0
    %8680 = vmatprep.mubr.bf16.mxu0 %v3666
    %8681 = vmatmul.mubr.bf16.gmra.mxu0 %v3665
    %v8682 = vpop.f32.mrf.mxu0
    %v8683 = vadd.f32 %v8586, %v8682
    %v8684 = vpop.f32.mrf.mxu0
    %v8685 = vpop.f32.mrf.mxu0
    %v8686 = vadd.f32 %v8589, %v8685
    %v8687 = vpop.f32.mrf.mxu0
    %8688 = vmatprep.mubr.bf16.mxu0 %v3730
    %8689 = vmatmul.mubr.bf16.gmra.mxu0 %v3729
    %v8690 = vpop.f32.mrf.mxu0
    %v8691 = vadd.f32 %v8594, %v8690
    %v8692 = vpop.f32.mrf.mxu0
    %v8693 = vpop.f32.mrf.mxu0
    %v8694 = vadd.f32 %v8597, %v8693
    %v8695 = vpop.f32.mrf.mxu0
    %8696 = vmatprep.mubr.bf16.mxu0 %v3794
    %8697 = vmatmul.mubr.bf16.gmra.mxu0 %v3793
    %v8698 = vpop.f32.mrf.mxu0
    %v8699 = vadd.f32 %v8602, %v8698
    %v8700 = vpop.f32.mrf.mxu0
    %v8701 = vpop.f32.mrf.mxu0
    %v8702 = vadd.f32 %v8605, %v8701
    %v8703 = vpop.f32.mrf.mxu0
    %8704 = vmatprep.mubr.bf16.mxu0 %v3858
    %8705 = vmatmul.mubr.bf16.gmra.mxu0 %v3857
    %v8706 = vpop.f32.mrf.mxu0
    %v8707 = vadd.f32 %v8610, %v8706
    %v8708 = vpop.f32.mrf.mxu0
    %v8709 = vpop.f32.mrf.mxu0
    %v8710 = vadd.f32 %v8613, %v8709
    %v8711 = vpop.f32.mrf.mxu0
    %8712 = vdwg.mxu0
    %8713 = vmatprep.subr.bf16.mxu0 %v7700
    %8714 = vmatpush1.bf16.xpose.msra.mxu0 %v7699
    %8715 = vmatprep.subr.bf16.mxu0 %v7636
    %8716 = vmatpush1.bf16.xpose.msra.mxu0 %v7635
    %8717 = vmatprep.subr.bf16.mxu0 %v7572
    %8718 = vmatpush1.bf16.xpose.msra.mxu0 %v7571
    %8719 = vmatprep.subr.bf16.mxu0 %v7508
    %8720 = vmatpush1.bf16.xpose.msra.mxu0 %v7507
    %8721 = vmatprep.subr.bf16.mxu0 %v7444
    %8722 = vmatpush1.bf16.xpose.msra.mxu0 %v7443
    %8723 = vmatprep.subr.bf16.mxu0 %v7380
    %8724 = vmatpush1.bf16.xpose.msra.mxu0 %v7379
    %8725 = vmatprep.subr.bf16.mxu0 %v7316
    %8726 = vmatpush1.bf16.xpose.msra.mxu0 %v7315
    %8727 = vmatprep.subr.bf16.mxu0 %v7252
    %8728 = vmatpush1.bf16.xpose.msra.mxu0 %v7251
    %8729 = vmatprep.subr.bf16.mxu0 0
    %8730 = vmatpush2.bf16.xpose.msra.mxu0 0
    %8731 = vmatprep.subr.bf16.mxu0 0
    %8732 = vmatpush2.bf16.xpose.msra.mxu0 0
    %8733 = vmatprep.subr.bf16.mxu0 0
    %8734 = vmatpush2.bf16.xpose.msra.mxu0 0
    %8735 = vmatprep.subr.bf16.mxu0 0
    %8736 = vmatpush2.bf16.xpose.msra.mxu0 0
    %8737 = vmatprep.subr.bf16.mxu0 0
    %8738 = vmatpush2.bf16.xpose.msra.mxu0 0
    %8739 = vmatprep.subr.bf16.mxu0 0
    %8740 = vmatpush2.bf16.xpose.msra.mxu0 0
    %8741 = vmatprep.subr.bf16.mxu0 0
    %8742 = vmatpush2.bf16.xpose.msra.mxu0 0
    %8743 = vmatprep.subr.bf16.mxu0 0
    %8744 = vmatpush2.bf16.xpose.msra.mxu0 0
    %8745 = vmatprep.mubr.bf16.mxu0 %v3412
    %8746 = vmatmul.mubr.bf16.gmra.mxu0 %v3411
    %v8747 = vpop.f32.mrf.mxu0
    %v8748 = vadd.f32 %v8651, %v8747
    %v8749 = vpop.f32.mrf.mxu0
    %v8750 = vpop.f32.mrf.mxu0
    %v8751 = vadd.f32 %v8654, %v8750
    %v8752 = vpop.f32.mrf.mxu0
    %8753 = vmatprep.mubr.bf16.mxu0 %v3476
    %8754 = vmatmul.mubr.bf16.gmra.mxu0 %v3475
    %v8755 = vpop.f32.mrf.mxu0
    %v8756 = vadd.f32 %v8659, %v8755
    %v8757 = vpop.f32.mrf.mxu0
    %v8758 = vpop.f32.mrf.mxu0
    %v8759 = vadd.f32 %v8662, %v8758
    %v8760 = vpop.f32.mrf.mxu0
    %8761 = vmatprep.mubr.bf16.mxu0 %v3540
    %8762 = vmatmul.mubr.bf16.gmra.mxu0 %v3539
    %v8763 = vpop.f32.mrf.mxu0
    %v8764 = vadd.f32 %v8667, %v8763
    %v8765 = vpop.f32.mrf.mxu0
    %v8766 = vpop.f32.mrf.mxu0
    %v8767 = vadd.f32 %v8670, %v8766
    %v8768 = vpop.f32.mrf.mxu0
    %8769 = vmatprep.mubr.bf16.mxu0 %v3604
    %8770 = vmatmul.mubr.bf16.gmra.mxu0 %v3603
    %v8771 = vpop.f32.mrf.mxu0
    %v8772 = vadd.f32 %v8675, %v8771
    %v8773 = vpop.f32.mrf.mxu0
    %v8774 = vpop.f32.mrf.mxu0
    %v8775 = vadd.f32 %v8678, %v8774
    %v8776 = vpop.f32.mrf.mxu0
    %8777 = vmatprep.mubr.bf16.mxu0 %v3668
    %8778 = vmatmul.mubr.bf16.gmra.mxu0 %v3667
    %v8779 = vpop.f32.mrf.mxu0
    %v8780 = vadd.f32 %v8683, %v8779
    %v8781 = vpop.f32.mrf.mxu0
    %v8782 = vpop.f32.mrf.mxu0
    %v8783 = vadd.f32 %v8686, %v8782
    %v8784 = vpop.f32.mrf.mxu0
    %8785 = vmatprep.mubr.bf16.mxu0 %v3732
    %8786 = vmatmul.mubr.bf16.gmra.mxu0 %v3731
    %v8787 = vpop.f32.mrf.mxu0
    %v8788 = vadd.f32 %v8691, %v8787
    %v8789 = vpop.f32.mrf.mxu0
    %v8790 = vpop.f32.mrf.mxu0
    %v8791 = vadd.f32 %v8694, %v8790
    %v8792 = vpop.f32.mrf.mxu0
    %8793 = vmatprep.mubr.bf16.mxu0 %v3796
    %8794 = vmatmul.mubr.bf16.gmra.mxu0 %v3795
    %v8795 = vpop.f32.mrf.mxu0
    %v8796 = vadd.f32 %v8699, %v8795
    %v8797 = vpop.f32.mrf.mxu0
    %v8798 = vpop.f32.mrf.mxu0
    %v8799 = vadd.f32 %v8702, %v8798
    %v8800 = vpop.f32.mrf.mxu0
    %8801 = vmatprep.mubr.bf16.mxu0 %v3860
    %8802 = vmatmul.mubr.bf16.gmra.mxu0 %v3859
    %v8803 = vpop.f32.mrf.mxu0
    %v8804 = vadd.f32 %v8707, %v8803
    %v8805 = vpop.f32.mrf.mxu0
    %v8806 = vpop.f32.mrf.mxu0
    %v8807 = vadd.f32 %v8710, %v8806
    %v8808 = vpop.f32.mrf.mxu0
    %8809 = vdwg.mxu0
    %8810 = vmatprep.subr.bf16.mxu0 %v7702
    %8811 = vmatpush1.bf16.xpose.msra.mxu0 %v7701
    %8812 = vmatprep.subr.bf16.mxu0 %v7638
    %8813 = vmatpush1.bf16.xpose.msra.mxu0 %v7637
    %8814 = vmatprep.subr.bf16.mxu0 %v7574
    %8815 = vmatpush1.bf16.xpose.msra.mxu0 %v7573
    %8816 = vmatprep.subr.bf16.mxu0 %v7510
    %8817 = vmatpush1.bf16.xpose.msra.mxu0 %v7509
    %8818 = vmatprep.subr.bf16.mxu0 %v7446
    %8819 = vmatpush1.bf16.xpose.msra.mxu0 %v7445
    %8820 = vmatprep.subr.bf16.mxu0 %v7382
    %8821 = vmatpush1.bf16.xpose.msra.mxu0 %v7381
    %8822 = vmatprep.subr.bf16.mxu0 %v7318
    %8823 = vmatpush1.bf16.xpose.msra.mxu0 %v7317
    %8824 = vmatprep.subr.bf16.mxu0 %v7254
    %8825 = vmatpush1.bf16.xpose.msra.mxu0 %v7253
    %8826 = vmatprep.subr.bf16.mxu0 0
    %8827 = vmatpush2.bf16.xpose.msra.mxu0 0
    %8828 = vmatprep.subr.bf16.mxu0 0
    %8829 = vmatpush2.bf16.xpose.msra.mxu0 0
    %8830 = vmatprep.subr.bf16.mxu0 0
    %8831 = vmatpush2.bf16.xpose.msra.mxu0 0
    %8832 = vmatprep.subr.bf16.mxu0 0
    %8833 = vmatpush2.bf16.xpose.msra.mxu0 0
    %8834 = vmatprep.subr.bf16.mxu0 0
    %8835 = vmatpush2.bf16.xpose.msra.mxu0 0
    %8836 = vmatprep.subr.bf16.mxu0 0
    %8837 = vmatpush2.bf16.xpose.msra.mxu0 0
    %8838 = vmatprep.subr.bf16.mxu0 0
    %8839 = vmatpush2.bf16.xpose.msra.mxu0 0
    %8840 = vmatprep.subr.bf16.mxu0 0
    %8841 = vmatpush2.bf16.xpose.msra.mxu0 0
    %8842 = vmatprep.mubr.bf16.mxu0 %v3414
    %8843 = vmatmul.mubr.bf16.gmra.mxu0 %v3413
    %v8844 = vpop.f32.mrf.mxu0
    %v8845 = vadd.f32 %v8748, %v8844
    %v8846 = vpop.f32.mrf.mxu0
    %v8847 = vpop.f32.mrf.mxu0
    %v8848 = vadd.f32 %v8751, %v8847
    %v8849 = vpop.f32.mrf.mxu0
    %8850 = vmatprep.mubr.bf16.mxu0 %v3478
    %8851 = vmatmul.mubr.bf16.gmra.mxu0 %v3477
    %v8852 = vpop.f32.mrf.mxu0
    %v8853 = vadd.f32 %v8756, %v8852
    %v8854 = vpop.f32.mrf.mxu0
    %v8855 = vpop.f32.mrf.mxu0
    %v8856 = vadd.f32 %v8759, %v8855
    %v8857 = vpop.f32.mrf.mxu0
    %8858 = vmatprep.mubr.bf16.mxu0 %v3542
    %8859 = vmatmul.mubr.bf16.gmra.mxu0 %v3541
    %v8860 = vpop.f32.mrf.mxu0
    %v8861 = vadd.f32 %v8764, %v8860
    %v8862 = vpop.f32.mrf.mxu0
    %v8863 = vpop.f32.mrf.mxu0
    %v8864 = vadd.f32 %v8767, %v8863
    %v8865 = vpop.f32.mrf.mxu0
    %8866 = vmatprep.mubr.bf16.mxu0 %v3606
    %8867 = vmatmul.mubr.bf16.gmra.mxu0 %v3605
    %v8868 = vpop.f32.mrf.mxu0
    %v8869 = vadd.f32 %v8772, %v8868
    %v8870 = vpop.f32.mrf.mxu0
    %v8871 = vpop.f32.mrf.mxu0
    %v8872 = vadd.f32 %v8775, %v8871
    %v8873 = vpop.f32.mrf.mxu0
    %8874 = vmatprep.mubr.bf16.mxu0 %v3670
    %8875 = vmatmul.mubr.bf16.gmra.mxu0 %v3669
    %v8876 = vpop.f32.mrf.mxu0
    %v8877 = vadd.f32 %v8780, %v8876
    %v8878 = vpop.f32.mrf.mxu0
    %v8879 = vpop.f32.mrf.mxu0
    %v8880 = vadd.f32 %v8783, %v8879
    %v8881 = vpop.f32.mrf.mxu0
    %8882 = vmatprep.mubr.bf16.mxu0 %v3734
    %8883 = vmatmul.mubr.bf16.gmra.mxu0 %v3733
    %v8884 = vpop.f32.mrf.mxu0
    %v8885 = vadd.f32 %v8788, %v8884
    %v8886 = vpop.f32.mrf.mxu0
    %v8887 = vpop.f32.mrf.mxu0
    %v8888 = vadd.f32 %v8791, %v8887
    %v8889 = vpop.f32.mrf.mxu0
    %8890 = vmatprep.mubr.bf16.mxu0 %v3798
    %8891 = vmatmul.mubr.bf16.gmra.mxu0 %v3797
    %v8892 = vpop.f32.mrf.mxu0
    %v8893 = vadd.f32 %v8796, %v8892
    %v8894 = vpop.f32.mrf.mxu0
    %v8895 = vpop.f32.mrf.mxu0
    %v8896 = vadd.f32 %v8799, %v8895
    %v8897 = vpop.f32.mrf.mxu0
    %8898 = vmatprep.mubr.bf16.mxu0 %v3862
    %8899 = vmatmul.mubr.bf16.gmra.mxu0 %v3861
    %v8900 = vpop.f32.mrf.mxu0
    %v8901 = vadd.f32 %v8804, %v8900
    %v8902 = vpop.f32.mrf.mxu0
    %v8903 = vpop.f32.mrf.mxu0
    %v8904 = vadd.f32 %v8807, %v8903
    %v8905 = vpop.f32.mrf.mxu0
    %8906 = vdwg.mxu0
    %8907 = vmatprep.subr.bf16.mxu0 %v7704
    %8908 = vmatpush1.bf16.xpose.msra.mxu0 %v7703
    %8909 = vmatprep.subr.bf16.mxu0 %v7640
    %8910 = vmatpush1.bf16.xpose.msra.mxu0 %v7639
    %8911 = vmatprep.subr.bf16.mxu0 %v7576
    %8912 = vmatpush1.bf16.xpose.msra.mxu0 %v7575
    %8913 = vmatprep.subr.bf16.mxu0 %v7512
    %8914 = vmatpush1.bf16.xpose.msra.mxu0 %v7511
    %8915 = vmatprep.subr.bf16.mxu0 %v7448
    %8916 = vmatpush1.bf16.xpose.msra.mxu0 %v7447
    %8917 = vmatprep.subr.bf16.mxu0 %v7384
    %8918 = vmatpush1.bf16.xpose.msra.mxu0 %v7383
    %8919 = vmatprep.subr.bf16.mxu0 %v7320
    %8920 = vmatpush1.bf16.xpose.msra.mxu0 %v7319
    %8921 = vmatprep.subr.bf16.mxu0 %v7256
    %8922 = vmatpush1.bf16.xpose.msra.mxu0 %v7255
    %8923 = vmatprep.subr.bf16.mxu0 0
    %8924 = vmatpush2.bf16.xpose.msra.mxu0 0
    %8925 = vmatprep.subr.bf16.mxu0 0
    %8926 = vmatpush2.bf16.xpose.msra.mxu0 0
    %8927 = vmatprep.subr.bf16.mxu0 0
    %8928 = vmatpush2.bf16.xpose.msra.mxu0 0
    %8929 = vmatprep.subr.bf16.mxu0 0
    %8930 = vmatpush2.bf16.xpose.msra.mxu0 0
    %8931 = vmatprep.subr.bf16.mxu0 0
    %8932 = vmatpush2.bf16.xpose.msra.mxu0 0
    %8933 = vmatprep.subr.bf16.mxu0 0
    %8934 = vmatpush2.bf16.xpose.msra.mxu0 0
    %8935 = vmatprep.subr.bf16.mxu0 0
    %8936 = vmatpush2.bf16.xpose.msra.mxu0 0
    %8937 = vmatprep.subr.bf16.mxu0 0
    %8938 = vmatpush2.bf16.xpose.msra.mxu0 0
    %8939 = vmatprep.mubr.bf16.mxu0 %v3416
    %8940 = vmatmul.mubr.bf16.gmra.mxu0 %v3415
    %v8941 = vpop.f32.mrf.mxu0
    %v8942 = vadd.f32 %v8845, %v8941
    %v8943 = vpop.f32.mrf.mxu0
    %v8944 = vpop.f32.mrf.mxu0
    %v8945 = vadd.f32 %v8848, %v8944
    %v8946 = vpop.f32.mrf.mxu0
    %8947 = vmatprep.mubr.bf16.mxu0 %v3480
    %8948 = vmatmul.mubr.bf16.gmra.mxu0 %v3479
    %v8949 = vpop.f32.mrf.mxu0
    %v8950 = vadd.f32 %v8853, %v8949
    %v8951 = vpop.f32.mrf.mxu0
    %v8952 = vpop.f32.mrf.mxu0
    %v8953 = vadd.f32 %v8856, %v8952
    %v8954 = vpop.f32.mrf.mxu0
    %8955 = vmatprep.mubr.bf16.mxu0 %v3544
    %8956 = vmatmul.mubr.bf16.gmra.mxu0 %v3543
    %v8957 = vpop.f32.mrf.mxu0
    %v8958 = vadd.f32 %v8861, %v8957
    %v8959 = vpop.f32.mrf.mxu0
    %v8960 = vpop.f32.mrf.mxu0
    %v8961 = vadd.f32 %v8864, %v8960
    %v8962 = vpop.f32.mrf.mxu0
    %8963 = vmatprep.mubr.bf16.mxu0 %v3608
    %8964 = vmatmul.mubr.bf16.gmra.mxu0 %v3607
    %v8965 = vpop.f32.mrf.mxu0
    %v8966 = vadd.f32 %v8869, %v8965
    %v8967 = vpop.f32.mrf.mxu0
    %v8968 = vpop.f32.mrf.mxu0
    %v8969 = vadd.f32 %v8872, %v8968
    %v8970 = vpop.f32.mrf.mxu0
    %8971 = vmatprep.mubr.bf16.mxu0 %v3672
    %8972 = vmatmul.mubr.bf16.gmra.mxu0 %v3671
    %v8973 = vpop.f32.mrf.mxu0
    %v8974 = vadd.f32 %v8877, %v8973
    %v8975 = vpop.f32.mrf.mxu0
    %v8976 = vpop.f32.mrf.mxu0
    %v8977 = vadd.f32 %v8880, %v8976
    %v8978 = vpop.f32.mrf.mxu0
    %8979 = vmatprep.mubr.bf16.mxu0 %v3736
    %8980 = vmatmul.mubr.bf16.gmra.mxu0 %v3735
    %v8981 = vpop.f32.mrf.mxu0
    %v8982 = vadd.f32 %v8885, %v8981
    %v8983 = vpop.f32.mrf.mxu0
    %v8984 = vpop.f32.mrf.mxu0
    %v8985 = vadd.f32 %v8888, %v8984
    %v8986 = vpop.f32.mrf.mxu0
    %8987 = vmatprep.mubr.bf16.mxu0 %v3800
    %8988 = vmatmul.mubr.bf16.gmra.mxu0 %v3799
    %v8989 = vpop.f32.mrf.mxu0
    %v8990 = vadd.f32 %v8893, %v8989
    %v8991 = vpop.f32.mrf.mxu0
    %v8992 = vpop.f32.mrf.mxu0
    %v8993 = vadd.f32 %v8896, %v8992
    %v8994 = vpop.f32.mrf.mxu0
    %8995 = vmatprep.mubr.bf16.mxu0 %v3864
    %8996 = vmatmul.mubr.bf16.gmra.mxu0 %v3863
    %v8997 = vpop.f32.mrf.mxu0
    %v8998 = vadd.f32 %v8901, %v8997
    %v8999 = vpop.f32.mrf.mxu0
    %v9000 = vpop.f32.mrf.mxu0
    %v9001 = vadd.f32 %v8904, %v9000
    %v9002 = vpop.f32.mrf.mxu0
    %9003 = vdwg.mxu0
    %9004 = vmatprep.subr.bf16.mxu0 %v7706
    %9005 = vmatpush1.bf16.xpose.msra.mxu0 %v7705
    %9006 = vmatprep.subr.bf16.mxu0 %v7642
    %9007 = vmatpush1.bf16.xpose.msra.mxu0 %v7641
    %9008 = vmatprep.subr.bf16.mxu0 %v7578
    %9009 = vmatpush1.bf16.xpose.msra.mxu0 %v7577
    %9010 = vmatprep.subr.bf16.mxu0 %v7514
    %9011 = vmatpush1.bf16.xpose.msra.mxu0 %v7513
    %9012 = vmatprep.subr.bf16.mxu0 %v7450
    %9013 = vmatpush1.bf16.xpose.msra.mxu0 %v7449
    %9014 = vmatprep.subr.bf16.mxu0 %v7386
    %9015 = vmatpush1.bf16.xpose.msra.mxu0 %v7385
    %9016 = vmatprep.subr.bf16.mxu0 %v7322
    %9017 = vmatpush1.bf16.xpose.msra.mxu0 %v7321
    %9018 = vmatprep.subr.bf16.mxu0 %v7258
    %9019 = vmatpush1.bf16.xpose.msra.mxu0 %v7257
    %9020 = vmatprep.subr.bf16.mxu0 0
    %9021 = vmatpush2.bf16.xpose.msra.mxu0 0
    %9022 = vmatprep.subr.bf16.mxu0 0
    %9023 = vmatpush2.bf16.xpose.msra.mxu0 0
    %9024 = vmatprep.subr.bf16.mxu0 0
    %9025 = vmatpush2.bf16.xpose.msra.mxu0 0
    %9026 = vmatprep.subr.bf16.mxu0 0
    %9027 = vmatpush2.bf16.xpose.msra.mxu0 0
    %9028 = vmatprep.subr.bf16.mxu0 0
    %9029 = vmatpush2.bf16.xpose.msra.mxu0 0
    %9030 = vmatprep.subr.bf16.mxu0 0
    %9031 = vmatpush2.bf16.xpose.msra.mxu0 0
    %9032 = vmatprep.subr.bf16.mxu0 0
    %9033 = vmatpush2.bf16.xpose.msra.mxu0 0
    %9034 = vmatprep.subr.bf16.mxu0 0
    %9035 = vmatpush2.bf16.xpose.msra.mxu0 0
    %9036 = vmatprep.mubr.bf16.mxu0 %v3418
    %9037 = vmatmul.mubr.bf16.gmra.mxu0 %v3417
    %v9038 = vpop.f32.mrf.mxu0
    %v9039 = vadd.f32 %v8942, %v9038
    %v9040 = vpop.f32.mrf.mxu0
    %v9041 = vpop.f32.mrf.mxu0
    %v9042 = vadd.f32 %v8945, %v9041
    %v9043 = vpop.f32.mrf.mxu0
    %9044 = vmatprep.mubr.bf16.mxu0 %v3482
    %9045 = vmatmul.mubr.bf16.gmra.mxu0 %v3481
    %v9046 = vpop.f32.mrf.mxu0
    %v9047 = vadd.f32 %v8950, %v9046
    %v9048 = vpop.f32.mrf.mxu0
    %v9049 = vpop.f32.mrf.mxu0
    %v9050 = vadd.f32 %v8953, %v9049
    %v9051 = vpop.f32.mrf.mxu0
    %9052 = vmatprep.mubr.bf16.mxu0 %v3546
    %9053 = vmatmul.mubr.bf16.gmra.mxu0 %v3545
    %v9054 = vpop.f32.mrf.mxu0
    %v9055 = vadd.f32 %v8958, %v9054
    %v9056 = vpop.f32.mrf.mxu0
    %v9057 = vpop.f32.mrf.mxu0
    %v9058 = vadd.f32 %v8961, %v9057
    %v9059 = vpop.f32.mrf.mxu0
    %9060 = vmatprep.mubr.bf16.mxu0 %v3610
    %9061 = vmatmul.mubr.bf16.gmra.mxu0 %v3609
    %v9062 = vpop.f32.mrf.mxu0
    %v9063 = vadd.f32 %v8966, %v9062
    %v9064 = vpop.f32.mrf.mxu0
    %v9065 = vpop.f32.mrf.mxu0
    %v9066 = vadd.f32 %v8969, %v9065
    %v9067 = vpop.f32.mrf.mxu0
    %9068 = vmatprep.mubr.bf16.mxu0 %v3674
    %9069 = vmatmul.mubr.bf16.gmra.mxu0 %v3673
    %v9070 = vpop.f32.mrf.mxu0
    %v9071 = vadd.f32 %v8974, %v9070
    %v9072 = vpop.f32.mrf.mxu0
    %v9073 = vpop.f32.mrf.mxu0
    %v9074 = vadd.f32 %v8977, %v9073
    %v9075 = vpop.f32.mrf.mxu0
    %9076 = vmatprep.mubr.bf16.mxu0 %v3738
    %9077 = vmatmul.mubr.bf16.gmra.mxu0 %v3737
    %v9078 = vpop.f32.mrf.mxu0
    %v9079 = vadd.f32 %v8982, %v9078
    %v9080 = vpop.f32.mrf.mxu0
    %v9081 = vpop.f32.mrf.mxu0
    %v9082 = vadd.f32 %v8985, %v9081
    %v9083 = vpop.f32.mrf.mxu0
    %9084 = vmatprep.mubr.bf16.mxu0 %v3802
    %9085 = vmatmul.mubr.bf16.gmra.mxu0 %v3801
    %v9086 = vpop.f32.mrf.mxu0
    %v9087 = vadd.f32 %v8990, %v9086
    %v9088 = vpop.f32.mrf.mxu0
    %v9089 = vpop.f32.mrf.mxu0
    %v9090 = vadd.f32 %v8993, %v9089
    %v9091 = vpop.f32.mrf.mxu0
    %9092 = vmatprep.mubr.bf16.mxu0 %v3866
    %9093 = vmatmul.mubr.bf16.gmra.mxu0 %v3865
    %v9094 = vpop.f32.mrf.mxu0
    %v9095 = vadd.f32 %v8998, %v9094
    %v9096 = vpop.f32.mrf.mxu0
    %v9097 = vpop.f32.mrf.mxu0
    %v9098 = vadd.f32 %v9001, %v9097
    %v9099 = vpop.f32.mrf.mxu0
    %9100 = vdwg.mxu0
    %9101 = vmatprep.subr.bf16.mxu0 %v7708
    %9102 = vmatpush1.bf16.xpose.msra.mxu0 %v7707
    %9103 = vmatprep.subr.bf16.mxu0 %v7644
    %9104 = vmatpush1.bf16.xpose.msra.mxu0 %v7643
    %9105 = vmatprep.subr.bf16.mxu0 %v7580
    %9106 = vmatpush1.bf16.xpose.msra.mxu0 %v7579
    %9107 = vmatprep.subr.bf16.mxu0 %v7516
    %9108 = vmatpush1.bf16.xpose.msra.mxu0 %v7515
    %9109 = vmatprep.subr.bf16.mxu0 %v7452
    %9110 = vmatpush1.bf16.xpose.msra.mxu0 %v7451
    %9111 = vmatprep.subr.bf16.mxu0 %v7388
    %9112 = vmatpush1.bf16.xpose.msra.mxu0 %v7387
    %9113 = vmatprep.subr.bf16.mxu0 %v7324
    %9114 = vmatpush1.bf16.xpose.msra.mxu0 %v7323
    %9115 = vmatprep.subr.bf16.mxu0 %v7260
    %9116 = vmatpush1.bf16.xpose.msra.mxu0 %v7259
    %9117 = vmatprep.subr.bf16.mxu0 0
    %9118 = vmatpush2.bf16.xpose.msra.mxu0 0
    %9119 = vmatprep.subr.bf16.mxu0 0
    %9120 = vmatpush2.bf16.xpose.msra.mxu0 0
    %9121 = vmatprep.subr.bf16.mxu0 0
    %9122 = vmatpush2.bf16.xpose.msra.mxu0 0
    %9123 = vmatprep.subr.bf16.mxu0 0
    %9124 = vmatpush2.bf16.xpose.msra.mxu0 0
    %9125 = vmatprep.subr.bf16.mxu0 0
    %9126 = vmatpush2.bf16.xpose.msra.mxu0 0
    %9127 = vmatprep.subr.bf16.mxu0 0
    %9128 = vmatpush2.bf16.xpose.msra.mxu0 0
    %9129 = vmatprep.subr.bf16.mxu0 0
    %9130 = vmatpush2.bf16.xpose.msra.mxu0 0
    %9131 = vmatprep.subr.bf16.mxu0 0
    %9132 = vmatpush2.bf16.xpose.msra.mxu0 0
    %9133 = vmatprep.mubr.bf16.mxu0 %v3420
    %9134 = vmatmul.mubr.bf16.gmra.mxu0 %v3419
    %v9135 = vpop.f32.mrf.mxu0
    %v9136 = vadd.f32 %v9039, %v9135
    %v9137 = vpop.f32.mrf.mxu0
    %v9138 = vpop.f32.mrf.mxu0
    %v9139 = vadd.f32 %v9042, %v9138
    %v9140 = vpop.f32.mrf.mxu0
    %9141 = vmatprep.mubr.bf16.mxu0 %v3484
    %9142 = vmatmul.mubr.bf16.gmra.mxu0 %v3483
    %v9143 = vpop.f32.mrf.mxu0
    %v9144 = vadd.f32 %v9047, %v9143
    %v9145 = vpop.f32.mrf.mxu0
    %v9146 = vpop.f32.mrf.mxu0
    %v9147 = vadd.f32 %v9050, %v9146
    %v9148 = vpop.f32.mrf.mxu0
    %9149 = vmatprep.mubr.bf16.mxu0 %v3548
    %9150 = vmatmul.mubr.bf16.gmra.mxu0 %v3547
    %v9151 = vpop.f32.mrf.mxu0
    %v9152 = vadd.f32 %v9055, %v9151
    %v9153 = vpop.f32.mrf.mxu0
    %v9154 = vpop.f32.mrf.mxu0
    %v9155 = vadd.f32 %v9058, %v9154
    %v9156 = vpop.f32.mrf.mxu0
    %9157 = vmatprep.mubr.bf16.mxu0 %v3612
    %9158 = vmatmul.mubr.bf16.gmra.mxu0 %v3611
    %v9159 = vpop.f32.mrf.mxu0
    %v9160 = vadd.f32 %v9063, %v9159
    %v9161 = vpop.f32.mrf.mxu0
    %v9162 = vpop.f32.mrf.mxu0
    %v9163 = vadd.f32 %v9066, %v9162
    %v9164 = vpop.f32.mrf.mxu0
    %9165 = vmatprep.mubr.bf16.mxu0 %v3676
    %9166 = vmatmul.mubr.bf16.gmra.mxu0 %v3675
    %v9167 = vpop.f32.mrf.mxu0
    %v9168 = vadd.f32 %v9071, %v9167
    %v9169 = vpop.f32.mrf.mxu0
    %v9170 = vpop.f32.mrf.mxu0
    %v9171 = vadd.f32 %v9074, %v9170
    %v9172 = vpop.f32.mrf.mxu0
    %9173 = vmatprep.mubr.bf16.mxu0 %v3740
    %9174 = vmatmul.mubr.bf16.gmra.mxu0 %v3739
    %v9175 = vpop.f32.mrf.mxu0
    %v9176 = vadd.f32 %v9079, %v9175
    %v9177 = vpop.f32.mrf.mxu0
    %v9178 = vpop.f32.mrf.mxu0
    %v9179 = vadd.f32 %v9082, %v9178
    %v9180 = vpop.f32.mrf.mxu0
    %9181 = vmatprep.mubr.bf16.mxu0 %v3804
    %9182 = vmatmul.mubr.bf16.gmra.mxu0 %v3803
    %v9183 = vpop.f32.mrf.mxu0
    %v9184 = vadd.f32 %v9087, %v9183
    %v9185 = vpop.f32.mrf.mxu0
    %v9186 = vpop.f32.mrf.mxu0
    %v9187 = vadd.f32 %v9090, %v9186
    %v9188 = vpop.f32.mrf.mxu0
    %9189 = vmatprep.mubr.bf16.mxu0 %v3868
    %9190 = vmatmul.mubr.bf16.gmra.mxu0 %v3867
    %v9191 = vpop.f32.mrf.mxu0
    %v9192 = vadd.f32 %v9095, %v9191
    %v9193 = vpop.f32.mrf.mxu0
    %v9194 = vpop.f32.mrf.mxu0
    %v9195 = vadd.f32 %v9098, %v9194
    %v9196 = vpop.f32.mrf.mxu0
    %9197 = vdwg.mxu0
    %9198 = vmatprep.subr.bf16.mxu0 %v7710
    %9199 = vmatpush1.bf16.xpose.msra.mxu0 %v7709
    %9200 = vmatprep.subr.bf16.mxu0 %v7646
    %9201 = vmatpush1.bf16.xpose.msra.mxu0 %v7645
    %9202 = vmatprep.subr.bf16.mxu0 %v7582
    %9203 = vmatpush1.bf16.xpose.msra.mxu0 %v7581
    %9204 = vmatprep.subr.bf16.mxu0 %v7518
    %9205 = vmatpush1.bf16.xpose.msra.mxu0 %v7517
    %9206 = vmatprep.subr.bf16.mxu0 %v7454
    %9207 = vmatpush1.bf16.xpose.msra.mxu0 %v7453
    %9208 = vmatprep.subr.bf16.mxu0 %v7390
    %9209 = vmatpush1.bf16.xpose.msra.mxu0 %v7389
    %9210 = vmatprep.subr.bf16.mxu0 %v7326
    %9211 = vmatpush1.bf16.xpose.msra.mxu0 %v7325
    %9212 = vmatprep.subr.bf16.mxu0 %v7262
    %9213 = vmatpush1.bf16.xpose.msra.mxu0 %v7261
    %9214 = vmatprep.subr.bf16.mxu0 0
    %9215 = vmatpush2.bf16.xpose.msra.mxu0 0
    %9216 = vmatprep.subr.bf16.mxu0 0
    %9217 = vmatpush2.bf16.xpose.msra.mxu0 0
    %9218 = vmatprep.subr.bf16.mxu0 0
    %9219 = vmatpush2.bf16.xpose.msra.mxu0 0
    %9220 = vmatprep.subr.bf16.mxu0 0
    %9221 = vmatpush2.bf16.xpose.msra.mxu0 0
    %9222 = vmatprep.subr.bf16.mxu0 0
    %9223 = vmatpush2.bf16.xpose.msra.mxu0 0
    %9224 = vmatprep.subr.bf16.mxu0 0
    %9225 = vmatpush2.bf16.xpose.msra.mxu0 0
    %9226 = vmatprep.subr.bf16.mxu0 0
    %9227 = vmatpush2.bf16.xpose.msra.mxu0 0
    %9228 = vmatprep.subr.bf16.mxu0 0
    %9229 = vmatpush2.bf16.xpose.msra.mxu0 0
    %9230 = vmatprep.mubr.bf16.mxu0 %v3422
    %9231 = vmatmul.mubr.bf16.gmra.mxu0 %v3421
    %v9232 = vpop.f32.mrf.mxu0
    %v9233 = vadd.f32 %v9136, %v9232
    %v9234 = vpop.f32.mrf.mxu0
    %v9235 = vpop.f32.mrf.mxu0
    %v9236 = vadd.f32 %v9139, %v9235
    %v9237 = vpop.f32.mrf.mxu0
    %9238 = vmatprep.mubr.bf16.mxu0 %v3486
    %9239 = vmatmul.mubr.bf16.gmra.mxu0 %v3485
    %v9240 = vpop.f32.mrf.mxu0
    %v9241 = vadd.f32 %v9144, %v9240
    %v9242 = vpop.f32.mrf.mxu0
    %v9243 = vpop.f32.mrf.mxu0
    %v9244 = vadd.f32 %v9147, %v9243
    %v9245 = vpop.f32.mrf.mxu0
    %9246 = vmatprep.mubr.bf16.mxu0 %v3550
    %9247 = vmatmul.mubr.bf16.gmra.mxu0 %v3549
    %v9248 = vpop.f32.mrf.mxu0
    %v9249 = vadd.f32 %v9152, %v9248
    %v9250 = vpop.f32.mrf.mxu0
    %v9251 = vpop.f32.mrf.mxu0
    %v9252 = vadd.f32 %v9155, %v9251
    %v9253 = vpop.f32.mrf.mxu0
    %9254 = vmatprep.mubr.bf16.mxu0 %v3614
    %9255 = vmatmul.mubr.bf16.gmra.mxu0 %v3613
    %v9256 = vpop.f32.mrf.mxu0
    %v9257 = vadd.f32 %v9160, %v9256
    %v9258 = vpop.f32.mrf.mxu0
    %v9259 = vpop.f32.mrf.mxu0
    %v9260 = vadd.f32 %v9163, %v9259
    %v9261 = vpop.f32.mrf.mxu0
    %9262 = vmatprep.mubr.bf16.mxu0 %v3678
    %9263 = vmatmul.mubr.bf16.gmra.mxu0 %v3677
    %v9264 = vpop.f32.mrf.mxu0
    %v9265 = vadd.f32 %v9168, %v9264
    %v9266 = vpop.f32.mrf.mxu0
    %v9267 = vpop.f32.mrf.mxu0
    %v9268 = vadd.f32 %v9171, %v9267
    %v9269 = vpop.f32.mrf.mxu0
    %9270 = vmatprep.mubr.bf16.mxu0 %v3742
    %9271 = vmatmul.mubr.bf16.gmra.mxu0 %v3741
    %v9272 = vpop.f32.mrf.mxu0
    %v9273 = vadd.f32 %v9176, %v9272
    %v9274 = vpop.f32.mrf.mxu0
    %v9275 = vpop.f32.mrf.mxu0
    %v9276 = vadd.f32 %v9179, %v9275
    %v9277 = vpop.f32.mrf.mxu0
    %9278 = vmatprep.mubr.bf16.mxu0 %v3806
    %9279 = vmatmul.mubr.bf16.gmra.mxu0 %v3805
    %v9280 = vpop.f32.mrf.mxu0
    %v9281 = vadd.f32 %v9184, %v9280
    %v9282 = vpop.f32.mrf.mxu0
    %v9283 = vpop.f32.mrf.mxu0
    %v9284 = vadd.f32 %v9187, %v9283
    %v9285 = vpop.f32.mrf.mxu0
    %9286 = vmatprep.mubr.bf16.mxu0 %v3870
    %9287 = vmatmul.mubr.bf16.gmra.mxu0 %v3869
    %v9288 = vpop.f32.mrf.mxu0
    %v9289 = vadd.f32 %v9192, %v9288
    %v9290 = vpop.f32.mrf.mxu0
    %v9291 = vpop.f32.mrf.mxu0
    %v9292 = vadd.f32 %v9195, %v9291
    %v9293 = vpop.f32.mrf.mxu0
    %9294 = vdwg.mxu0
    %9295 = vmatprep.subr.bf16.mxu0 %v7712
    %9296 = vmatpush1.bf16.xpose.msra.mxu0 %v7711
    %9297 = vmatprep.subr.bf16.mxu0 %v7648
    %9298 = vmatpush1.bf16.xpose.msra.mxu0 %v7647
    %9299 = vmatprep.subr.bf16.mxu0 %v7584
    %9300 = vmatpush1.bf16.xpose.msra.mxu0 %v7583
    %9301 = vmatprep.subr.bf16.mxu0 %v7520
    %9302 = vmatpush1.bf16.xpose.msra.mxu0 %v7519
    %9303 = vmatprep.subr.bf16.mxu0 %v7456
    %9304 = vmatpush1.bf16.xpose.msra.mxu0 %v7455
    %9305 = vmatprep.subr.bf16.mxu0 %v7392
    %9306 = vmatpush1.bf16.xpose.msra.mxu0 %v7391
    %9307 = vmatprep.subr.bf16.mxu0 %v7328
    %9308 = vmatpush1.bf16.xpose.msra.mxu0 %v7327
    %9309 = vmatprep.subr.bf16.mxu0 %v7264
    %9310 = vmatpush1.bf16.xpose.msra.mxu0 %v7263
    %9311 = vmatprep.subr.bf16.mxu0 0
    %9312 = vmatpush2.bf16.xpose.msra.mxu0 0
    %9313 = vmatprep.subr.bf16.mxu0 0
    %9314 = vmatpush2.bf16.xpose.msra.mxu0 0
    %9315 = vmatprep.subr.bf16.mxu0 0
    %9316 = vmatpush2.bf16.xpose.msra.mxu0 0
    %9317 = vmatprep.subr.bf16.mxu0 0
    %9318 = vmatpush2.bf16.xpose.msra.mxu0 0
    %9319 = vmatprep.subr.bf16.mxu0 0
    %9320 = vmatpush2.bf16.xpose.msra.mxu0 0
    %9321 = vmatprep.subr.bf16.mxu0 0
    %9322 = vmatpush2.bf16.xpose.msra.mxu0 0
    %9323 = vmatprep.subr.bf16.mxu0 0
    %9324 = vmatpush2.bf16.xpose.msra.mxu0 0
    %9325 = vmatprep.subr.bf16.mxu0 0
    %9326 = vmatpush2.bf16.xpose.msra.mxu0 0
    %9327 = vmatprep.mubr.bf16.mxu0 %v3424
    %9328 = vmatmul.mubr.bf16.gmra.mxu0 %v3423
    %v9329 = vpop.f32.mrf.mxu0
    %v9330 = vadd.f32 %v9233, %v9329
    %v9331 = vpop.f32.mrf.mxu0
    %v9332 = vpop.f32.mrf.mxu0
    %v9333 = vadd.f32 %v9236, %v9332
    %v9334 = vpop.f32.mrf.mxu0
    %9335 = vmatprep.mubr.bf16.mxu0 %v3488
    %9336 = vmatmul.mubr.bf16.gmra.mxu0 %v3487
    %v9337 = vpop.f32.mrf.mxu0
    %v9338 = vadd.f32 %v9241, %v9337
    %v9339 = vpop.f32.mrf.mxu0
    %v9340 = vpop.f32.mrf.mxu0
    %v9341 = vadd.f32 %v9244, %v9340
    %v9342 = vpop.f32.mrf.mxu0
    %9343 = vmatprep.mubr.bf16.mxu0 %v3552
    %9344 = vmatmul.mubr.bf16.gmra.mxu0 %v3551
    %v9345 = vpop.f32.mrf.mxu0
    %v9346 = vadd.f32 %v9249, %v9345
    %v9347 = vpop.f32.mrf.mxu0
    %v9348 = vpop.f32.mrf.mxu0
    %v9349 = vadd.f32 %v9252, %v9348
    %v9350 = vpop.f32.mrf.mxu0
    %9351 = vmatprep.mubr.bf16.mxu0 %v3616
    %9352 = vmatmul.mubr.bf16.gmra.mxu0 %v3615
    %v9353 = vpop.f32.mrf.mxu0
    %v9354 = vadd.f32 %v9257, %v9353
    %v9355 = vpop.f32.mrf.mxu0
    %v9356 = vpop.f32.mrf.mxu0
    %v9357 = vadd.f32 %v9260, %v9356
    %v9358 = vpop.f32.mrf.mxu0
    %9359 = vmatprep.mubr.bf16.mxu0 %v3680
    %9360 = vmatmul.mubr.bf16.gmra.mxu0 %v3679
    %v9361 = vpop.f32.mrf.mxu0
    %v9362 = vadd.f32 %v9265, %v9361
    %v9363 = vpop.f32.mrf.mxu0
    %v9364 = vpop.f32.mrf.mxu0
    %v9365 = vadd.f32 %v9268, %v9364
    %v9366 = vpop.f32.mrf.mxu0
    %9367 = vmatprep.mubr.bf16.mxu0 %v3744
    %9368 = vmatmul.mubr.bf16.gmra.mxu0 %v3743
    %v9369 = vpop.f32.mrf.mxu0
    %v9370 = vadd.f32 %v9273, %v9369
    %v9371 = vpop.f32.mrf.mxu0
    %v9372 = vpop.f32.mrf.mxu0
    %v9373 = vadd.f32 %v9276, %v9372
    %v9374 = vpop.f32.mrf.mxu0
    %9375 = vmatprep.mubr.bf16.mxu0 %v3808
    %9376 = vmatmul.mubr.bf16.gmra.mxu0 %v3807
    %v9377 = vpop.f32.mrf.mxu0
    %v9378 = vadd.f32 %v9281, %v9377
    %v9379 = vpop.f32.mrf.mxu0
    %v9380 = vpop.f32.mrf.mxu0
    %v9381 = vadd.f32 %v9284, %v9380
    %v9382 = vpop.f32.mrf.mxu0
    %9383 = vmatprep.mubr.bf16.mxu0 %v3872
    %9384 = vmatmul.mubr.bf16.gmra.mxu0 %v3871
    %v9385 = vpop.f32.mrf.mxu0
    %v9386 = vadd.f32 %v9289, %v9385
    %v9387 = vpop.f32.mrf.mxu0
    %v9388 = vpop.f32.mrf.mxu0
    %v9389 = vadd.f32 %v9292, %v9388
    %v9390 = vpop.f32.mrf.mxu0
    %9391 = vdwg.mxu0
    %9392 = vmatprep.subr.bf16.mxu0 %v7714
    %9393 = vmatpush1.bf16.xpose.msra.mxu0 %v7713
    %9394 = vmatprep.subr.bf16.mxu0 %v7650
    %9395 = vmatpush1.bf16.xpose.msra.mxu0 %v7649
    %9396 = vmatprep.subr.bf16.mxu0 %v7586
    %9397 = vmatpush1.bf16.xpose.msra.mxu0 %v7585
    %9398 = vmatprep.subr.bf16.mxu0 %v7522
    %9399 = vmatpush1.bf16.xpose.msra.mxu0 %v7521
    %9400 = vmatprep.subr.bf16.mxu0 %v7458
    %9401 = vmatpush1.bf16.xpose.msra.mxu0 %v7457
    %9402 = vmatprep.subr.bf16.mxu0 %v7394
    %9403 = vmatpush1.bf16.xpose.msra.mxu0 %v7393
    %9404 = vmatprep.subr.bf16.mxu0 %v7330
    %9405 = vmatpush1.bf16.xpose.msra.mxu0 %v7329
    %9406 = vmatprep.subr.bf16.mxu0 %v7266
    %9407 = vmatpush1.bf16.xpose.msra.mxu0 %v7265
    %9408 = vmatprep.subr.bf16.mxu0 0
    %9409 = vmatpush2.bf16.xpose.msra.mxu0 0
    %9410 = vmatprep.subr.bf16.mxu0 0
    %9411 = vmatpush2.bf16.xpose.msra.mxu0 0
    %9412 = vmatprep.subr.bf16.mxu0 0
    %9413 = vmatpush2.bf16.xpose.msra.mxu0 0
    %9414 = vmatprep.subr.bf16.mxu0 0
    %9415 = vmatpush2.bf16.xpose.msra.mxu0 0
    %9416 = vmatprep.subr.bf16.mxu0 0
    %9417 = vmatpush2.bf16.xpose.msra.mxu0 0
    %9418 = vmatprep.subr.bf16.mxu0 0
    %9419 = vmatpush2.bf16.xpose.msra.mxu0 0
    %9420 = vmatprep.subr.bf16.mxu0 0
    %9421 = vmatpush2.bf16.xpose.msra.mxu0 0
    %9422 = vmatprep.subr.bf16.mxu0 0
    %9423 = vmatpush2.bf16.xpose.msra.mxu0 0
    %9424 = vmatprep.mubr.bf16.mxu0 %v3426
    %9425 = vmatmul.mubr.bf16.gmra.mxu0 %v3425
    %v9426 = vpop.f32.mrf.mxu0
    %v9427 = vadd.f32 %v9330, %v9426
    %v9428 = vpop.f32.mrf.mxu0
    %v9429 = vpop.f32.mrf.mxu0
    %v9430 = vadd.f32 %v9333, %v9429
    %v9431 = vpop.f32.mrf.mxu0
    %9432 = vmatprep.mubr.bf16.mxu0 %v3490
    %9433 = vmatmul.mubr.bf16.gmra.mxu0 %v3489
    %v9434 = vpop.f32.mrf.mxu0
    %v9435 = vadd.f32 %v9338, %v9434
    %v9436 = vpop.f32.mrf.mxu0
    %v9437 = vpop.f32.mrf.mxu0
    %v9438 = vadd.f32 %v9341, %v9437
    %v9439 = vpop.f32.mrf.mxu0
    %9440 = vmatprep.mubr.bf16.mxu0 %v3554
    %9441 = vmatmul.mubr.bf16.gmra.mxu0 %v3553
    %v9442 = vpop.f32.mrf.mxu0
    %v9443 = vadd.f32 %v9346, %v9442
    %v9444 = vpop.f32.mrf.mxu0
    %v9445 = vpop.f32.mrf.mxu0
    %v9446 = vadd.f32 %v9349, %v9445
    %v9447 = vpop.f32.mrf.mxu0
    %9448 = vmatprep.mubr.bf16.mxu0 %v3618
    %9449 = vmatmul.mubr.bf16.gmra.mxu0 %v3617
    %v9450 = vpop.f32.mrf.mxu0
    %v9451 = vadd.f32 %v9354, %v9450
    %v9452 = vpop.f32.mrf.mxu0
    %v9453 = vpop.f32.mrf.mxu0
    %v9454 = vadd.f32 %v9357, %v9453
    %v9455 = vpop.f32.mrf.mxu0
    %9456 = vmatprep.mubr.bf16.mxu0 %v3682
    %9457 = vmatmul.mubr.bf16.gmra.mxu0 %v3681
    %v9458 = vpop.f32.mrf.mxu0
    %v9459 = vadd.f32 %v9362, %v9458
    %v9460 = vpop.f32.mrf.mxu0
    %v9461 = vpop.f32.mrf.mxu0
    %v9462 = vadd.f32 %v9365, %v9461
    %v9463 = vpop.f32.mrf.mxu0
    %9464 = vmatprep.mubr.bf16.mxu0 %v3746
    %9465 = vmatmul.mubr.bf16.gmra.mxu0 %v3745
    %v9466 = vpop.f32.mrf.mxu0
    %v9467 = vadd.f32 %v9370, %v9466
    %v9468 = vpop.f32.mrf.mxu0
    %v9469 = vpop.f32.mrf.mxu0
    %v9470 = vadd.f32 %v9373, %v9469
    %v9471 = vpop.f32.mrf.mxu0
    %9472 = vmatprep.mubr.bf16.mxu0 %v3810
    %9473 = vmatmul.mubr.bf16.gmra.mxu0 %v3809
    %v9474 = vpop.f32.mrf.mxu0
    %v9475 = vadd.f32 %v9378, %v9474
    %v9476 = vpop.f32.mrf.mxu0
    %v9477 = vpop.f32.mrf.mxu0
    %v9478 = vadd.f32 %v9381, %v9477
    %v9479 = vpop.f32.mrf.mxu0
    %9480 = vmatprep.mubr.bf16.mxu0 %v3874
    %9481 = vmatmul.mubr.bf16.gmra.mxu0 %v3873
    %v9482 = vpop.f32.mrf.mxu0
    %v9483 = vadd.f32 %v9386, %v9482
    %v9484 = vpop.f32.mrf.mxu0
    %v9485 = vpop.f32.mrf.mxu0
    %v9486 = vadd.f32 %v9389, %v9485
    %v9487 = vpop.f32.mrf.mxu0
    %9488 = vdwg.mxu0
    %9489 = vmatprep.subr.bf16.mxu0 %v7716
    %9490 = vmatpush1.bf16.xpose.msra.mxu0 %v7715
    %9491 = vmatprep.subr.bf16.mxu0 %v7652
    %9492 = vmatpush1.bf16.xpose.msra.mxu0 %v7651
    %9493 = vmatprep.subr.bf16.mxu0 %v7588
    %9494 = vmatpush1.bf16.xpose.msra.mxu0 %v7587
    %9495 = vmatprep.subr.bf16.mxu0 %v7524
    %9496 = vmatpush1.bf16.xpose.msra.mxu0 %v7523
    %9497 = vmatprep.subr.bf16.mxu0 %v7460
    %9498 = vmatpush1.bf16.xpose.msra.mxu0 %v7459
    %9499 = vmatprep.subr.bf16.mxu0 %v7396
    %9500 = vmatpush1.bf16.xpose.msra.mxu0 %v7395
    %9501 = vmatprep.subr.bf16.mxu0 %v7332
    %9502 = vmatpush1.bf16.xpose.msra.mxu0 %v7331
    %9503 = vmatprep.subr.bf16.mxu0 %v7268
    %9504 = vmatpush1.bf16.xpose.msra.mxu0 %v7267
    %9505 = vmatprep.subr.bf16.mxu0 0
    %9506 = vmatpush2.bf16.xpose.msra.mxu0 0
    %9507 = vmatprep.subr.bf16.mxu0 0
    %9508 = vmatpush2.bf16.xpose.msra.mxu0 0
    %9509 = vmatprep.subr.bf16.mxu0 0
    %9510 = vmatpush2.bf16.xpose.msra.mxu0 0
    %9511 = vmatprep.subr.bf16.mxu0 0
    %9512 = vmatpush2.bf16.xpose.msra.mxu0 0
    %9513 = vmatprep.subr.bf16.mxu0 0
    %9514 = vmatpush2.bf16.xpose.msra.mxu0 0
    %9515 = vmatprep.subr.bf16.mxu0 0
    %9516 = vmatpush2.bf16.xpose.msra.mxu0 0
    %9517 = vmatprep.subr.bf16.mxu0 0
    %9518 = vmatpush2.bf16.xpose.msra.mxu0 0
    %9519 = vmatprep.subr.bf16.mxu0 0
    %9520 = vmatpush2.bf16.xpose.msra.mxu0 0
    %9521 = vmatprep.mubr.bf16.mxu0 %v3428
    %9522 = vmatmul.mubr.bf16.gmra.mxu0 %v3427
    %v9523 = vpop.f32.mrf.mxu0
    %v9524 = vadd.f32 %v9427, %v9523
    %v9525 = vpop.f32.mrf.mxu0
    %v9526 = vpop.f32.mrf.mxu0
    %v9527 = vadd.f32 %v9430, %v9526
    %v9528 = vpop.f32.mrf.mxu0
    %9529 = vmatprep.mubr.bf16.mxu0 %v3492
    %9530 = vmatmul.mubr.bf16.gmra.mxu0 %v3491
    %v9531 = vpop.f32.mrf.mxu0
    %v9532 = vadd.f32 %v9435, %v9531
    %v9533 = vpop.f32.mrf.mxu0
    %v9534 = vpop.f32.mrf.mxu0
    %v9535 = vadd.f32 %v9438, %v9534
    %v9536 = vpop.f32.mrf.mxu0
    %9537 = vmatprep.mubr.bf16.mxu0 %v3556
    %9538 = vmatmul.mubr.bf16.gmra.mxu0 %v3555
    %v9539 = vpop.f32.mrf.mxu0
    %v9540 = vadd.f32 %v9443, %v9539
    %v9541 = vpop.f32.mrf.mxu0
    %v9542 = vpop.f32.mrf.mxu0
    %v9543 = vadd.f32 %v9446, %v9542
    %v9544 = vpop.f32.mrf.mxu0
    %9545 = vmatprep.mubr.bf16.mxu0 %v3620
    %9546 = vmatmul.mubr.bf16.gmra.mxu0 %v3619
    %v9547 = vpop.f32.mrf.mxu0
    %v9548 = vadd.f32 %v9451, %v9547
    %v9549 = vpop.f32.mrf.mxu0
    %v9550 = vpop.f32.mrf.mxu0
    %v9551 = vadd.f32 %v9454, %v9550
    %v9552 = vpop.f32.mrf.mxu0
    %9553 = vmatprep.mubr.bf16.mxu0 %v3684
    %9554 = vmatmul.mubr.bf16.gmra.mxu0 %v3683
    %v9555 = vpop.f32.mrf.mxu0
    %v9556 = vadd.f32 %v9459, %v9555
    %v9557 = vpop.f32.mrf.mxu0
    %v9558 = vpop.f32.mrf.mxu0
    %v9559 = vadd.f32 %v9462, %v9558
    %v9560 = vpop.f32.mrf.mxu0
    %9561 = vmatprep.mubr.bf16.mxu0 %v3748
    %9562 = vmatmul.mubr.bf16.gmra.mxu0 %v3747
    %v9563 = vpop.f32.mrf.mxu0
    %v9564 = vadd.f32 %v9467, %v9563
    %v9565 = vpop.f32.mrf.mxu0
    %v9566 = vpop.f32.mrf.mxu0
    %v9567 = vadd.f32 %v9470, %v9566
    %v9568 = vpop.f32.mrf.mxu0
    %9569 = vmatprep.mubr.bf16.mxu0 %v3812
    %9570 = vmatmul.mubr.bf16.gmra.mxu0 %v3811
    %v9571 = vpop.f32.mrf.mxu0
    %v9572 = vadd.f32 %v9475, %v9571
    %v9573 = vpop.f32.mrf.mxu0
    %v9574 = vpop.f32.mrf.mxu0
    %v9575 = vadd.f32 %v9478, %v9574
    %v9576 = vpop.f32.mrf.mxu0
    %9577 = vmatprep.mubr.bf16.mxu0 %v3876
    %9578 = vmatmul.mubr.bf16.gmra.mxu0 %v3875
    %v9579 = vpop.f32.mrf.mxu0
    %v9580 = vadd.f32 %v9483, %v9579
    %v9581 = vpop.f32.mrf.mxu0
    %v9582 = vpop.f32.mrf.mxu0
    %v9583 = vadd.f32 %v9486, %v9582
    %v9584 = vpop.f32.mrf.mxu0
    %9585 = vdwg.mxu0
    %9586 = vmatprep.subr.bf16.mxu0 %v7718
    %9587 = vmatpush1.bf16.xpose.msra.mxu0 %v7717
    %9588 = vmatprep.subr.bf16.mxu0 %v7654
    %9589 = vmatpush1.bf16.xpose.msra.mxu0 %v7653
    %9590 = vmatprep.subr.bf16.mxu0 %v7590
    %9591 = vmatpush1.bf16.xpose.msra.mxu0 %v7589
    %9592 = vmatprep.subr.bf16.mxu0 %v7526
    %9593 = vmatpush1.bf16.xpose.msra.mxu0 %v7525
    %9594 = vmatprep.subr.bf16.mxu0 %v7462
    %9595 = vmatpush1.bf16.xpose.msra.mxu0 %v7461
    %9596 = vmatprep.subr.bf16.mxu0 %v7398
    %9597 = vmatpush1.bf16.xpose.msra.mxu0 %v7397
    %9598 = vmatprep.subr.bf16.mxu0 %v7334
    %9599 = vmatpush1.bf16.xpose.msra.mxu0 %v7333
    %9600 = vmatprep.subr.bf16.mxu0 %v7270
    %9601 = vmatpush1.bf16.xpose.msra.mxu0 %v7269
    %9602 = vmatprep.subr.bf16.mxu0 0
    %9603 = vmatpush2.bf16.xpose.msra.mxu0 0
    %9604 = vmatprep.subr.bf16.mxu0 0
    %9605 = vmatpush2.bf16.xpose.msra.mxu0 0
    %9606 = vmatprep.subr.bf16.mxu0 0
    %9607 = vmatpush2.bf16.xpose.msra.mxu0 0
    %9608 = vmatprep.subr.bf16.mxu0 0
    %9609 = vmatpush2.bf16.xpose.msra.mxu0 0
    %9610 = vmatprep.subr.bf16.mxu0 0
    %9611 = vmatpush2.bf16.xpose.msra.mxu0 0
    %9612 = vmatprep.subr.bf16.mxu0 0
    %9613 = vmatpush2.bf16.xpose.msra.mxu0 0
    %9614 = vmatprep.subr.bf16.mxu0 0
    %9615 = vmatpush2.bf16.xpose.msra.mxu0 0
    %9616 = vmatprep.subr.bf16.mxu0 0
    %9617 = vmatpush2.bf16.xpose.msra.mxu0 0
    %9618 = vmatprep.mubr.bf16.mxu0 %v3430
    %9619 = vmatmul.mubr.bf16.gmra.mxu0 %v3429
    %v9620 = vpop.f32.mrf.mxu0
    %v9621 = vadd.f32 %v9524, %v9620
    %v9622 = vpop.f32.mrf.mxu0
    %v9623 = vpop.f32.mrf.mxu0
    %v9624 = vadd.f32 %v9527, %v9623
    %v9625 = vpop.f32.mrf.mxu0
    %9626 = vmatprep.mubr.bf16.mxu0 %v3494
    %9627 = vmatmul.mubr.bf16.gmra.mxu0 %v3493
    %v9628 = vpop.f32.mrf.mxu0
    %v9629 = vadd.f32 %v9532, %v9628
    %v9630 = vpop.f32.mrf.mxu0
    %v9631 = vpop.f32.mrf.mxu0
    %v9632 = vadd.f32 %v9535, %v9631
    %v9633 = vpop.f32.mrf.mxu0
    %9634 = vmatprep.mubr.bf16.mxu0 %v3558
    %9635 = vmatmul.mubr.bf16.gmra.mxu0 %v3557
    %v9636 = vpop.f32.mrf.mxu0
    %v9637 = vadd.f32 %v9540, %v9636
    %v9638 = vpop.f32.mrf.mxu0
    %v9639 = vpop.f32.mrf.mxu0
    %v9640 = vadd.f32 %v9543, %v9639
    %v9641 = vpop.f32.mrf.mxu0
    %9642 = vmatprep.mubr.bf16.mxu0 %v3622
    %9643 = vmatmul.mubr.bf16.gmra.mxu0 %v3621
    %v9644 = vpop.f32.mrf.mxu0
    %v9645 = vadd.f32 %v9548, %v9644
    %v9646 = vpop.f32.mrf.mxu0
    %v9647 = vpop.f32.mrf.mxu0
    %v9648 = vadd.f32 %v9551, %v9647
    %v9649 = vpop.f32.mrf.mxu0
    %9650 = vmatprep.mubr.bf16.mxu0 %v3686
    %9651 = vmatmul.mubr.bf16.gmra.mxu0 %v3685
    %v9652 = vpop.f32.mrf.mxu0
    %v9653 = vadd.f32 %v9556, %v9652
    %v9654 = vpop.f32.mrf.mxu0
    %v9655 = vpop.f32.mrf.mxu0
    %v9656 = vadd.f32 %v9559, %v9655
    %v9657 = vpop.f32.mrf.mxu0
    %9658 = vmatprep.mubr.bf16.mxu0 %v3750
    %9659 = vmatmul.mubr.bf16.gmra.mxu0 %v3749
    %v9660 = vpop.f32.mrf.mxu0
    %v9661 = vadd.f32 %v9564, %v9660
    %v9662 = vpop.f32.mrf.mxu0
    %v9663 = vpop.f32.mrf.mxu0
    %v9664 = vadd.f32 %v9567, %v9663
    %v9665 = vpop.f32.mrf.mxu0
    %9666 = vmatprep.mubr.bf16.mxu0 %v3814
    %9667 = vmatmul.mubr.bf16.gmra.mxu0 %v3813
    %v9668 = vpop.f32.mrf.mxu0
    %v9669 = vadd.f32 %v9572, %v9668
    %v9670 = vpop.f32.mrf.mxu0
    %v9671 = vpop.f32.mrf.mxu0
    %v9672 = vadd.f32 %v9575, %v9671
    %v9673 = vpop.f32.mrf.mxu0
    %9674 = vmatprep.mubr.bf16.mxu0 %v3878
    %9675 = vmatmul.mubr.bf16.gmra.mxu0 %v3877
    %v9676 = vpop.f32.mrf.mxu0
    %v9677 = vadd.f32 %v9580, %v9676
    %v9678 = vpop.f32.mrf.mxu0
    %v9679 = vpop.f32.mrf.mxu0
    %v9680 = vadd.f32 %v9583, %v9679
    %v9681 = vpop.f32.mrf.mxu0
    %9682 = vdwg.mxu0
    %9683 = vmatprep.subr.bf16.mxu0 %v7720
    %9684 = vmatpush1.bf16.xpose.msra.mxu0 %v7719
    %9685 = vmatprep.subr.bf16.mxu0 %v7656
    %9686 = vmatpush1.bf16.xpose.msra.mxu0 %v7655
    %9687 = vmatprep.subr.bf16.mxu0 %v7592
    %9688 = vmatpush1.bf16.xpose.msra.mxu0 %v7591
    %9689 = vmatprep.subr.bf16.mxu0 %v7528
    %9690 = vmatpush1.bf16.xpose.msra.mxu0 %v7527
    %9691 = vmatprep.subr.bf16.mxu0 %v7464
    %9692 = vmatpush1.bf16.xpose.msra.mxu0 %v7463
    %9693 = vmatprep.subr.bf16.mxu0 %v7400
    %9694 = vmatpush1.bf16.xpose.msra.mxu0 %v7399
    %9695 = vmatprep.subr.bf16.mxu0 %v7336
    %9696 = vmatpush1.bf16.xpose.msra.mxu0 %v7335
    %9697 = vmatprep.subr.bf16.mxu0 %v7272
    %9698 = vmatpush1.bf16.xpose.msra.mxu0 %v7271
    %9699 = vmatprep.subr.bf16.mxu0 0
    %9700 = vmatpush2.bf16.xpose.msra.mxu0 0
    %9701 = vmatprep.subr.bf16.mxu0 0
    %9702 = vmatpush2.bf16.xpose.msra.mxu0 0
    %9703 = vmatprep.subr.bf16.mxu0 0
    %9704 = vmatpush2.bf16.xpose.msra.mxu0 0
    %9705 = vmatprep.subr.bf16.mxu0 0
    %9706 = vmatpush2.bf16.xpose.msra.mxu0 0
    %9707 = vmatprep.subr.bf16.mxu0 0
    %9708 = vmatpush2.bf16.xpose.msra.mxu0 0
    %9709 = vmatprep.subr.bf16.mxu0 0
    %9710 = vmatpush2.bf16.xpose.msra.mxu0 0
    %9711 = vmatprep.subr.bf16.mxu0 0
    %9712 = vmatpush2.bf16.xpose.msra.mxu0 0
    %9713 = vmatprep.subr.bf16.mxu0 0
    %9714 = vmatpush2.bf16.xpose.msra.mxu0 0
    %9715 = vmatprep.mubr.bf16.mxu0 %v3432
    %9716 = vmatmul.mubr.bf16.gmra.mxu0 %v3431
    %v9717 = vpop.f32.mrf.mxu0
    %v9718 = vadd.f32 %v9621, %v9717
    %v9719 = vpop.f32.mrf.mxu0
    %v9720 = vpop.f32.mrf.mxu0
    %v9721 = vadd.f32 %v9624, %v9720
    %v9722 = vpop.f32.mrf.mxu0
    %9723 = vmatprep.mubr.bf16.mxu0 %v3496
    %9724 = vmatmul.mubr.bf16.gmra.mxu0 %v3495
    %v9725 = vpop.f32.mrf.mxu0
    %v9726 = vadd.f32 %v9629, %v9725
    %v9727 = vpop.f32.mrf.mxu0
    %v9728 = vpop.f32.mrf.mxu0
    %v9729 = vadd.f32 %v9632, %v9728
    %v9730 = vpop.f32.mrf.mxu0
    %9731 = vmatprep.mubr.bf16.mxu0 %v3560
    %9732 = vmatmul.mubr.bf16.gmra.mxu0 %v3559
    %v9733 = vpop.f32.mrf.mxu0
    %v9734 = vadd.f32 %v9637, %v9733
    %v9735 = vpop.f32.mrf.mxu0
    %v9736 = vpop.f32.mrf.mxu0
    %v9737 = vadd.f32 %v9640, %v9736
    %v9738 = vpop.f32.mrf.mxu0
    %9739 = vmatprep.mubr.bf16.mxu0 %v3624
    %9740 = vmatmul.mubr.bf16.gmra.mxu0 %v3623
    %v9741 = vpop.f32.mrf.mxu0
    %v9742 = vadd.f32 %v9645, %v9741
    %v9743 = vpop.f32.mrf.mxu0
    %v9744 = vpop.f32.mrf.mxu0
    %v9745 = vadd.f32 %v9648, %v9744
    %v9746 = vpop.f32.mrf.mxu0
    %9747 = vmatprep.mubr.bf16.mxu0 %v3688
    %9748 = vmatmul.mubr.bf16.gmra.mxu0 %v3687
    %v9749 = vpop.f32.mrf.mxu0
    %v9750 = vadd.f32 %v9653, %v9749
    %v9751 = vpop.f32.mrf.mxu0
    %v9752 = vpop.f32.mrf.mxu0
    %v9753 = vadd.f32 %v9656, %v9752
    %v9754 = vpop.f32.mrf.mxu0
    %9755 = vmatprep.mubr.bf16.mxu0 %v3752
    %9756 = vmatmul.mubr.bf16.gmra.mxu0 %v3751
    %v9757 = vpop.f32.mrf.mxu0
    %v9758 = vadd.f32 %v9661, %v9757
    %v9759 = vpop.f32.mrf.mxu0
    %v9760 = vpop.f32.mrf.mxu0
    %v9761 = vadd.f32 %v9664, %v9760
    %v9762 = vpop.f32.mrf.mxu0
    %9763 = vmatprep.mubr.bf16.mxu0 %v3816
    %9764 = vmatmul.mubr.bf16.gmra.mxu0 %v3815
    %v9765 = vpop.f32.mrf.mxu0
    %v9766 = vadd.f32 %v9669, %v9765
    %v9767 = vpop.f32.mrf.mxu0
    %v9768 = vpop.f32.mrf.mxu0
    %v9769 = vadd.f32 %v9672, %v9768
    %v9770 = vpop.f32.mrf.mxu0
    %9771 = vmatprep.mubr.bf16.mxu0 %v3880
    %9772 = vmatmul.mubr.bf16.gmra.mxu0 %v3879
    %v9773 = vpop.f32.mrf.mxu0
    %v9774 = vadd.f32 %v9677, %v9773
    %v9775 = vpop.f32.mrf.mxu0
    %v9776 = vpop.f32.mrf.mxu0
    %v9777 = vadd.f32 %v9680, %v9776
    %v9778 = vpop.f32.mrf.mxu0
    %9779 = vdwg.mxu0
    %9780 = vmatprep.subr.bf16.mxu0 %v7722
    %9781 = vmatpush1.bf16.xpose.msra.mxu0 %v7721
    %9782 = vmatprep.subr.bf16.mxu0 %v7658
    %9783 = vmatpush1.bf16.xpose.msra.mxu0 %v7657
    %9784 = vmatprep.subr.bf16.mxu0 %v7594
    %9785 = vmatpush1.bf16.xpose.msra.mxu0 %v7593
    %9786 = vmatprep.subr.bf16.mxu0 %v7530
    %9787 = vmatpush1.bf16.xpose.msra.mxu0 %v7529
    %9788 = vmatprep.subr.bf16.mxu0 %v7466
    %9789 = vmatpush1.bf16.xpose.msra.mxu0 %v7465
    %9790 = vmatprep.subr.bf16.mxu0 %v7402
    %9791 = vmatpush1.bf16.xpose.msra.mxu0 %v7401
    %9792 = vmatprep.subr.bf16.mxu0 %v7338
    %9793 = vmatpush1.bf16.xpose.msra.mxu0 %v7337
    %9794 = vmatprep.subr.bf16.mxu0 %v7274
    %9795 = vmatpush1.bf16.xpose.msra.mxu0 %v7273
    %9796 = vmatprep.subr.bf16.mxu0 0
    %9797 = vmatpush2.bf16.xpose.msra.mxu0 0
    %9798 = vmatprep.subr.bf16.mxu0 0
    %9799 = vmatpush2.bf16.xpose.msra.mxu0 0
    %9800 = vmatprep.subr.bf16.mxu0 0
    %9801 = vmatpush2.bf16.xpose.msra.mxu0 0
    %9802 = vmatprep.subr.bf16.mxu0 0
    %9803 = vmatpush2.bf16.xpose.msra.mxu0 0
    %9804 = vmatprep.subr.bf16.mxu0 0
    %9805 = vmatpush2.bf16.xpose.msra.mxu0 0
    %9806 = vmatprep.subr.bf16.mxu0 0
    %9807 = vmatpush2.bf16.xpose.msra.mxu0 0
    %9808 = vmatprep.subr.bf16.mxu0 0
    %9809 = vmatpush2.bf16.xpose.msra.mxu0 0
    %9810 = vmatprep.subr.bf16.mxu0 0
    %9811 = vmatpush2.bf16.xpose.msra.mxu0 0
    %9812 = vmatprep.mubr.bf16.mxu0 %v3434
    %9813 = vmatmul.mubr.bf16.gmra.mxu0 %v3433
    %v9814 = vpop.f32.mrf.mxu0
    %v9815 = vadd.f32 %v9718, %v9814
    %v9816 = vpop.f32.mrf.mxu0
    %v9817 = vpop.f32.mrf.mxu0
    %v9818 = vadd.f32 %v9721, %v9817
    %v9819 = vpop.f32.mrf.mxu0
    %9820 = vmatprep.mubr.bf16.mxu0 %v3498
    %9821 = vmatmul.mubr.bf16.gmra.mxu0 %v3497
    %v9822 = vpop.f32.mrf.mxu0
    %v9823 = vadd.f32 %v9726, %v9822
    %v9824 = vpop.f32.mrf.mxu0
    %v9825 = vpop.f32.mrf.mxu0
    %v9826 = vadd.f32 %v9729, %v9825
    %v9827 = vpop.f32.mrf.mxu0
    %9828 = vmatprep.mubr.bf16.mxu0 %v3562
    %9829 = vmatmul.mubr.bf16.gmra.mxu0 %v3561
    %v9830 = vpop.f32.mrf.mxu0
    %v9831 = vadd.f32 %v9734, %v9830
    %v9832 = vpop.f32.mrf.mxu0
    %v9833 = vpop.f32.mrf.mxu0
    %v9834 = vadd.f32 %v9737, %v9833
    %v9835 = vpop.f32.mrf.mxu0
    %9836 = vmatprep.mubr.bf16.mxu0 %v3626
    %9837 = vmatmul.mubr.bf16.gmra.mxu0 %v3625
    %v9838 = vpop.f32.mrf.mxu0
    %v9839 = vadd.f32 %v9742, %v9838
    %v9840 = vpop.f32.mrf.mxu0
    %v9841 = vpop.f32.mrf.mxu0
    %v9842 = vadd.f32 %v9745, %v9841
    %v9843 = vpop.f32.mrf.mxu0
    %9844 = vmatprep.mubr.bf16.mxu0 %v3690
    %9845 = vmatmul.mubr.bf16.gmra.mxu0 %v3689
    %v9846 = vpop.f32.mrf.mxu0
    %v9847 = vadd.f32 %v9750, %v9846
    %v9848 = vpop.f32.mrf.mxu0
    %v9849 = vpop.f32.mrf.mxu0
    %v9850 = vadd.f32 %v9753, %v9849
    %v9851 = vpop.f32.mrf.mxu0
    %9852 = vmatprep.mubr.bf16.mxu0 %v3754
    %9853 = vmatmul.mubr.bf16.gmra.mxu0 %v3753
    %v9854 = vpop.f32.mrf.mxu0
    %v9855 = vadd.f32 %v9758, %v9854
    %v9856 = vpop.f32.mrf.mxu0
    %v9857 = vpop.f32.mrf.mxu0
    %v9858 = vadd.f32 %v9761, %v9857
    %v9859 = vpop.f32.mrf.mxu0
    %9860 = vmatprep.mubr.bf16.mxu0 %v3818
    %9861 = vmatmul.mubr.bf16.gmra.mxu0 %v3817
    %v9862 = vpop.f32.mrf.mxu0
    %v9863 = vadd.f32 %v9766, %v9862
    %v9864 = vpop.f32.mrf.mxu0
    %v9865 = vpop.f32.mrf.mxu0
    %v9866 = vadd.f32 %v9769, %v9865
    %v9867 = vpop.f32.mrf.mxu0
    %9868 = vmatprep.mubr.bf16.mxu0 %v3882
    %9869 = vmatmul.mubr.bf16.gmra.mxu0 %v3881
    %v9870 = vpop.f32.mrf.mxu0
    %v9871 = vadd.f32 %v9774, %v9870
    %v9872 = vpop.f32.mrf.mxu0
    %v9873 = vpop.f32.mrf.mxu0
    %v9874 = vadd.f32 %v9777, %v9873
    %v9875 = vpop.f32.mrf.mxu0
    %9876 = vdwg.mxu0
    %9877 = vmatprep.subr.bf16.mxu0 %v7724
    %9878 = vmatpush1.bf16.xpose.msra.mxu0 %v7723
    %9879 = vmatprep.subr.bf16.mxu0 %v7660
    %9880 = vmatpush1.bf16.xpose.msra.mxu0 %v7659
    %9881 = vmatprep.subr.bf16.mxu0 %v7596
    %9882 = vmatpush1.bf16.xpose.msra.mxu0 %v7595
    %9883 = vmatprep.subr.bf16.mxu0 %v7532
    %9884 = vmatpush1.bf16.xpose.msra.mxu0 %v7531
    %9885 = vmatprep.subr.bf16.mxu0 %v7468
    %9886 = vmatpush1.bf16.xpose.msra.mxu0 %v7467
    %9887 = vmatprep.subr.bf16.mxu0 %v7404
    %9888 = vmatpush1.bf16.xpose.msra.mxu0 %v7403
    %9889 = vmatprep.subr.bf16.mxu0 %v7340
    %9890 = vmatpush1.bf16.xpose.msra.mxu0 %v7339
    %9891 = vmatprep.subr.bf16.mxu0 %v7276
    %9892 = vmatpush1.bf16.xpose.msra.mxu0 %v7275
    %9893 = vmatprep.subr.bf16.mxu0 0
    %9894 = vmatpush2.bf16.xpose.msra.mxu0 0
    %9895 = vmatprep.subr.bf16.mxu0 0
    %9896 = vmatpush2.bf16.xpose.msra.mxu0 0
    %9897 = vmatprep.subr.bf16.mxu0 0
    %9898 = vmatpush2.bf16.xpose.msra.mxu0 0
    %9899 = vmatprep.subr.bf16.mxu0 0
    %9900 = vmatpush2.bf16.xpose.msra.mxu0 0
    %9901 = vmatprep.subr.bf16.mxu0 0
    %9902 = vmatpush2.bf16.xpose.msra.mxu0 0
    %9903 = vmatprep.subr.bf16.mxu0 0
    %9904 = vmatpush2.bf16.xpose.msra.mxu0 0
    %9905 = vmatprep.subr.bf16.mxu0 0
    %9906 = vmatpush2.bf16.xpose.msra.mxu0 0
    %9907 = vmatprep.subr.bf16.mxu0 0
    %9908 = vmatpush2.bf16.xpose.msra.mxu0 0
    %9909 = vmatprep.mubr.bf16.mxu0 %v3436
    %9910 = vmatmul.mubr.bf16.gmra.mxu0 %v3435
    %v9911 = vpop.f32.mrf.mxu0
    %v9912 = vadd.f32 %v9815, %v9911
    %v9913 = vpop.f32.mrf.mxu0
    %v9914 = vpop.f32.mrf.mxu0
    %v9915 = vadd.f32 %v9818, %v9914
    %v9916 = vpop.f32.mrf.mxu0
    %9917 = vmatprep.mubr.bf16.mxu0 %v3500
    %9918 = vmatmul.mubr.bf16.gmra.mxu0 %v3499
    %v9919 = vpop.f32.mrf.mxu0
    %v9920 = vadd.f32 %v9823, %v9919
    %v9921 = vpop.f32.mrf.mxu0
    %v9922 = vpop.f32.mrf.mxu0
    %v9923 = vadd.f32 %v9826, %v9922
    %v9924 = vpop.f32.mrf.mxu0
    %9925 = vmatprep.mubr.bf16.mxu0 %v3564
    %9926 = vmatmul.mubr.bf16.gmra.mxu0 %v3563
    %v9927 = vpop.f32.mrf.mxu0
    %v9928 = vadd.f32 %v9831, %v9927
    %v9929 = vpop.f32.mrf.mxu0
    %v9930 = vpop.f32.mrf.mxu0
    %v9931 = vadd.f32 %v9834, %v9930
    %v9932 = vpop.f32.mrf.mxu0
    %9933 = vmatprep.mubr.bf16.mxu0 %v3628
    %9934 = vmatmul.mubr.bf16.gmra.mxu0 %v3627
    %v9935 = vpop.f32.mrf.mxu0
    %v9936 = vadd.f32 %v9839, %v9935
    %v9937 = vpop.f32.mrf.mxu0
    %v9938 = vpop.f32.mrf.mxu0
    %v9939 = vadd.f32 %v9842, %v9938
    %v9940 = vpop.f32.mrf.mxu0
    %9941 = vmatprep.mubr.bf16.mxu0 %v3692
    %9942 = vmatmul.mubr.bf16.gmra.mxu0 %v3691
    %v9943 = vpop.f32.mrf.mxu0
    %v9944 = vadd.f32 %v9847, %v9943
    %v9945 = vpop.f32.mrf.mxu0
    %v9946 = vpop.f32.mrf.mxu0
    %v9947 = vadd.f32 %v9850, %v9946
    %v9948 = vpop.f32.mrf.mxu0
    %9949 = vmatprep.mubr.bf16.mxu0 %v3756
    %9950 = vmatmul.mubr.bf16.gmra.mxu0 %v3755
    %v9951 = vpop.f32.mrf.mxu0
    %v9952 = vadd.f32 %v9855, %v9951
    %v9953 = vpop.f32.mrf.mxu0
    %v9954 = vpop.f32.mrf.mxu0
    %v9955 = vadd.f32 %v9858, %v9954
    %v9956 = vpop.f32.mrf.mxu0
    %9957 = vmatprep.mubr.bf16.mxu0 %v3820
    %9958 = vmatmul.mubr.bf16.gmra.mxu0 %v3819
    %v9959 = vpop.f32.mrf.mxu0
    %v9960 = vadd.f32 %v9863, %v9959
    %v9961 = vpop.f32.mrf.mxu0
    %v9962 = vpop.f32.mrf.mxu0
    %v9963 = vadd.f32 %v9866, %v9962
    %v9964 = vpop.f32.mrf.mxu0
    %9965 = vmatprep.mubr.bf16.mxu0 %v3884
    %9966 = vmatmul.mubr.bf16.gmra.mxu0 %v3883
    %v9967 = vpop.f32.mrf.mxu0
    %v9968 = vadd.f32 %v9871, %v9967
    %v9969 = vpop.f32.mrf.mxu0
    %v9970 = vpop.f32.mrf.mxu0
    %v9971 = vadd.f32 %v9874, %v9970
    %v9972 = vpop.f32.mrf.mxu0
    %9973 = vdwg.mxu0
    %9974 = vmatprep.subr.bf16.mxu0 %v7726
    %9975 = vmatpush1.bf16.xpose.msra.mxu0 %v7725
    %9976 = vmatprep.subr.bf16.mxu0 %v7662
    %9977 = vmatpush1.bf16.xpose.msra.mxu0 %v7661
    %9978 = vmatprep.subr.bf16.mxu0 %v7598
    %9979 = vmatpush1.bf16.xpose.msra.mxu0 %v7597
    %9980 = vmatprep.subr.bf16.mxu0 %v7534
    %9981 = vmatpush1.bf16.xpose.msra.mxu0 %v7533
    %9982 = vmatprep.subr.bf16.mxu0 %v7470
    %9983 = vmatpush1.bf16.xpose.msra.mxu0 %v7469
    %9984 = vmatprep.subr.bf16.mxu0 %v7406
    %9985 = vmatpush1.bf16.xpose.msra.mxu0 %v7405
    %9986 = vmatprep.subr.bf16.mxu0 %v7342
    %9987 = vmatpush1.bf16.xpose.msra.mxu0 %v7341
    %9988 = vmatprep.subr.bf16.mxu0 %v7278
    %9989 = vmatpush1.bf16.xpose.msra.mxu0 %v7277
    %9990 = vmatprep.subr.bf16.mxu0 0
    %9991 = vmatpush2.bf16.xpose.msra.mxu0 0
    %9992 = vmatprep.subr.bf16.mxu0 0
    %9993 = vmatpush2.bf16.xpose.msra.mxu0 0
    %9994 = vmatprep.subr.bf16.mxu0 0
    %9995 = vmatpush2.bf16.xpose.msra.mxu0 0
    %9996 = vmatprep.subr.bf16.mxu0 0
    %9997 = vmatpush2.bf16.xpose.msra.mxu0 0
    %9998 = vmatprep.subr.bf16.mxu0 0
    %9999 = vmatpush2.bf16.xpose.msra.mxu0 0
    %10000 = vmatprep.subr.bf16.mxu0 0
    %10001 = vmatpush2.bf16.xpose.msra.mxu0 0
    %10002 = vmatprep.subr.bf16.mxu0 0
    %10003 = vmatpush2.bf16.xpose.msra.mxu0 0
    %10004 = vmatprep.subr.bf16.mxu0 0
    %10005 = vmatpush2.bf16.xpose.msra.mxu0 0
    %10006 = vmatprep.mubr.bf16.mxu0 %v3438
    %10007 = vmatmul.mubr.bf16.gmra.mxu0 %v3437
    %v10008 = vpop.f32.mrf.mxu0
    %v10009 = vadd.f32 %v9912, %v10008
    %v10010 = vpop.f32.mrf.mxu0
    %v10011 = vpop.f32.mrf.mxu0
    %v10012 = vadd.f32 %v9915, %v10011
    %v10013 = vpop.f32.mrf.mxu0
    %10014 = vmatprep.mubr.bf16.mxu0 %v3502
    %10015 = vmatmul.mubr.bf16.gmra.mxu0 %v3501
    %v10016 = vpop.f32.mrf.mxu0
    %v10017 = vadd.f32 %v9920, %v10016
    %v10018 = vpop.f32.mrf.mxu0
    %v10019 = vpop.f32.mrf.mxu0
    %v10020 = vadd.f32 %v9923, %v10019
    %v10021 = vpop.f32.mrf.mxu0
    %10022 = vmatprep.mubr.bf16.mxu0 %v3566
    %10023 = vmatmul.mubr.bf16.gmra.mxu0 %v3565
    %v10024 = vpop.f32.mrf.mxu0
    %v10025 = vadd.f32 %v9928, %v10024
    %v10026 = vpop.f32.mrf.mxu0
    %v10027 = vpop.f32.mrf.mxu0
    %v10028 = vadd.f32 %v9931, %v10027
    %v10029 = vpop.f32.mrf.mxu0
    %10030 = vmatprep.mubr.bf16.mxu0 %v3630
    %10031 = vmatmul.mubr.bf16.gmra.mxu0 %v3629
    %v10032 = vpop.f32.mrf.mxu0
    %v10033 = vadd.f32 %v9936, %v10032
    %v10034 = vpop.f32.mrf.mxu0
    %v10035 = vpop.f32.mrf.mxu0
    %v10036 = vadd.f32 %v9939, %v10035
    %v10037 = vpop.f32.mrf.mxu0
    %10038 = vmatprep.mubr.bf16.mxu0 %v3694
    %10039 = vmatmul.mubr.bf16.gmra.mxu0 %v3693
    %v10040 = vpop.f32.mrf.mxu0
    %v10041 = vadd.f32 %v9944, %v10040
    %v10042 = vpop.f32.mrf.mxu0
    %v10043 = vpop.f32.mrf.mxu0
    %v10044 = vadd.f32 %v9947, %v10043
    %v10045 = vpop.f32.mrf.mxu0
    %10046 = vmatprep.mubr.bf16.mxu0 %v3758
    %10047 = vmatmul.mubr.bf16.gmra.mxu0 %v3757
    %v10048 = vpop.f32.mrf.mxu0
    %v10049 = vadd.f32 %v9952, %v10048
    %v10050 = vpop.f32.mrf.mxu0
    %v10051 = vpop.f32.mrf.mxu0
    %v10052 = vadd.f32 %v9955, %v10051
    %v10053 = vpop.f32.mrf.mxu0
    %10054 = vmatprep.mubr.bf16.mxu0 %v3822
    %10055 = vmatmul.mubr.bf16.gmra.mxu0 %v3821
    %v10056 = vpop.f32.mrf.mxu0
    %v10057 = vadd.f32 %v9960, %v10056
    %v10058 = vpop.f32.mrf.mxu0
    %v10059 = vpop.f32.mrf.mxu0
    %v10060 = vadd.f32 %v9963, %v10059
    %v10061 = vpop.f32.mrf.mxu0
    %10062 = vmatprep.mubr.bf16.mxu0 %v3886
    %10063 = vmatmul.mubr.bf16.gmra.mxu0 %v3885
    %v10064 = vpop.f32.mrf.mxu0
    %v10065 = vadd.f32 %v9968, %v10064
    %v10066 = vpop.f32.mrf.mxu0
    %v10067 = vpop.f32.mrf.mxu0
    %v10068 = vadd.f32 %v9971, %v10067
    %v10069 = vpop.f32.mrf.mxu0
    %10070 = vdwg.mxu0
    %10071 = vmatprep.subr.bf16.mxu0 %v7728
    %10072 = vmatpush1.bf16.xpose.msra.mxu0 %v7727
    %10073 = vmatprep.subr.bf16.mxu0 %v7664
    %10074 = vmatpush1.bf16.xpose.msra.mxu0 %v7663
    %10075 = vmatprep.subr.bf16.mxu0 %v7600
    %10076 = vmatpush1.bf16.xpose.msra.mxu0 %v7599
    %10077 = vmatprep.subr.bf16.mxu0 %v7536
    %10078 = vmatpush1.bf16.xpose.msra.mxu0 %v7535
    %10079 = vmatprep.subr.bf16.mxu0 %v7472
    %10080 = vmatpush1.bf16.xpose.msra.mxu0 %v7471
    %10081 = vmatprep.subr.bf16.mxu0 %v7408
    %10082 = vmatpush1.bf16.xpose.msra.mxu0 %v7407
    %10083 = vmatprep.subr.bf16.mxu0 %v7344
    %10084 = vmatpush1.bf16.xpose.msra.mxu0 %v7343
    %10085 = vmatprep.subr.bf16.mxu0 %v7280
    %10086 = vmatpush1.bf16.xpose.msra.mxu0 %v7279
    %10087 = vmatprep.subr.bf16.mxu0 0
    %10088 = vmatpush2.bf16.xpose.msra.mxu0 0
    %10089 = vmatprep.subr.bf16.mxu0 0
    %10090 = vmatpush2.bf16.xpose.msra.mxu0 0
    %10091 = vmatprep.subr.bf16.mxu0 0
    %10092 = vmatpush2.bf16.xpose.msra.mxu0 0
    %10093 = vmatprep.subr.bf16.mxu0 0
    %10094 = vmatpush2.bf16.xpose.msra.mxu0 0
    %10095 = vmatprep.subr.bf16.mxu0 0
    %10096 = vmatpush2.bf16.xpose.msra.mxu0 0
    %10097 = vmatprep.subr.bf16.mxu0 0
    %10098 = vmatpush2.bf16.xpose.msra.mxu0 0
    %10099 = vmatprep.subr.bf16.mxu0 0
    %10100 = vmatpush2.bf16.xpose.msra.mxu0 0
    %10101 = vmatprep.subr.bf16.mxu0 0
    %10102 = vmatpush2.bf16.xpose.msra.mxu0 0
    %10103 = vmatprep.mubr.bf16.mxu0 %v3440
    %10104 = vmatmul.mubr.bf16.gmra.mxu0 %v3439
    %v10105 = vpop.f32.mrf.mxu0
    %v10106 = vadd.f32 %v10009, %v10105
    %v10107 = vpop.f32.mrf.mxu0
    %v10108 = vpop.f32.mrf.mxu0
    %v10109 = vadd.f32 %v10012, %v10108
    %v10110 = vpop.f32.mrf.mxu0
    %10111 = vmatprep.mubr.bf16.mxu0 %v3504
    %10112 = vmatmul.mubr.bf16.gmra.mxu0 %v3503
    %v10113 = vpop.f32.mrf.mxu0
    %v10114 = vadd.f32 %v10017, %v10113
    %v10115 = vpop.f32.mrf.mxu0
    %v10116 = vpop.f32.mrf.mxu0
    %v10117 = vadd.f32 %v10020, %v10116
    %v10118 = vpop.f32.mrf.mxu0
    %10119 = vmatprep.mubr.bf16.mxu0 %v3568
    %10120 = vmatmul.mubr.bf16.gmra.mxu0 %v3567
    %v10121 = vpop.f32.mrf.mxu0
    %v10122 = vadd.f32 %v10025, %v10121
    %v10123 = vpop.f32.mrf.mxu0
    %v10124 = vpop.f32.mrf.mxu0
    %v10125 = vadd.f32 %v10028, %v10124
    %v10126 = vpop.f32.mrf.mxu0
    %10127 = vmatprep.mubr.bf16.mxu0 %v3632
    %10128 = vmatmul.mubr.bf16.gmra.mxu0 %v3631
    %v10129 = vpop.f32.mrf.mxu0
    %v10130 = vadd.f32 %v10033, %v10129
    %v10131 = vpop.f32.mrf.mxu0
    %v10132 = vpop.f32.mrf.mxu0
    %v10133 = vadd.f32 %v10036, %v10132
    %v10134 = vpop.f32.mrf.mxu0
    %10135 = vmatprep.mubr.bf16.mxu0 %v3696
    %10136 = vmatmul.mubr.bf16.gmra.mxu0 %v3695
    %v10137 = vpop.f32.mrf.mxu0
    %v10138 = vadd.f32 %v10041, %v10137
    %v10139 = vpop.f32.mrf.mxu0
    %v10140 = vpop.f32.mrf.mxu0
    %v10141 = vadd.f32 %v10044, %v10140
    %v10142 = vpop.f32.mrf.mxu0
    %10143 = vmatprep.mubr.bf16.mxu0 %v3760
    %10144 = vmatmul.mubr.bf16.gmra.mxu0 %v3759
    %v10145 = vpop.f32.mrf.mxu0
    %v10146 = vadd.f32 %v10049, %v10145
    %v10147 = vpop.f32.mrf.mxu0
    %v10148 = vpop.f32.mrf.mxu0
    %v10149 = vadd.f32 %v10052, %v10148
    %v10150 = vpop.f32.mrf.mxu0
    %10151 = vmatprep.mubr.bf16.mxu0 %v3824
    %10152 = vmatmul.mubr.bf16.gmra.mxu0 %v3823
    %v10153 = vpop.f32.mrf.mxu0
    %v10154 = vadd.f32 %v10057, %v10153
    %v10155 = vpop.f32.mrf.mxu0
    %v10156 = vpop.f32.mrf.mxu0
    %v10157 = vadd.f32 %v10060, %v10156
    %v10158 = vpop.f32.mrf.mxu0
    %10159 = vmatprep.mubr.bf16.mxu0 %v3888
    %10160 = vmatmul.mubr.bf16.gmra.mxu0 %v3887
    %v10161 = vpop.f32.mrf.mxu0
    %v10162 = vadd.f32 %v10065, %v10161
    %v10163 = vpop.f32.mrf.mxu0
    %v10164 = vpop.f32.mrf.mxu0
    %v10165 = vadd.f32 %v10068, %v10164
    %v10166 = vpop.f32.mrf.mxu0
    %10167 = vdwg.mxu0
    %10168 = vmatprep.subr.bf16.mxu0 %v7730
    %10169 = vmatpush1.bf16.xpose.msra.mxu0 %v7729
    %10170 = vmatprep.subr.bf16.mxu0 %v7666
    %10171 = vmatpush1.bf16.xpose.msra.mxu0 %v7665
    %10172 = vmatprep.subr.bf16.mxu0 %v7602
    %10173 = vmatpush1.bf16.xpose.msra.mxu0 %v7601
    %10174 = vmatprep.subr.bf16.mxu0 %v7538
    %10175 = vmatpush1.bf16.xpose.msra.mxu0 %v7537
    %10176 = vmatprep.subr.bf16.mxu0 %v7474
    %10177 = vmatpush1.bf16.xpose.msra.mxu0 %v7473
    %10178 = vmatprep.subr.bf16.mxu0 %v7410
    %10179 = vmatpush1.bf16.xpose.msra.mxu0 %v7409
    %10180 = vmatprep.subr.bf16.mxu0 %v7346
    %10181 = vmatpush1.bf16.xpose.msra.mxu0 %v7345
    %10182 = vmatprep.subr.bf16.mxu0 %v7282
    %10183 = vmatpush1.bf16.xpose.msra.mxu0 %v7281
    %10184 = vmatprep.subr.bf16.mxu0 0
    %10185 = vmatpush2.bf16.xpose.msra.mxu0 0
    %10186 = vmatprep.subr.bf16.mxu0 0
    %10187 = vmatpush2.bf16.xpose.msra.mxu0 0
    %10188 = vmatprep.subr.bf16.mxu0 0
    %10189 = vmatpush2.bf16.xpose.msra.mxu0 0
    %10190 = vmatprep.subr.bf16.mxu0 0
    %10191 = vmatpush2.bf16.xpose.msra.mxu0 0
    %10192 = vmatprep.subr.bf16.mxu0 0
    %10193 = vmatpush2.bf16.xpose.msra.mxu0 0
    %10194 = vmatprep.subr.bf16.mxu0 0
    %10195 = vmatpush2.bf16.xpose.msra.mxu0 0
    %10196 = vmatprep.subr.bf16.mxu0 0
    %10197 = vmatpush2.bf16.xpose.msra.mxu0 0
    %10198 = vmatprep.subr.bf16.mxu0 0
    %10199 = vmatpush2.bf16.xpose.msra.mxu0 0
    %10200 = vmatprep.mubr.bf16.mxu0 %v3442
    %10201 = vmatmul.mubr.bf16.gmra.mxu0 %v3441
    %v10202 = vpop.f32.mrf.mxu0
    %v10203 = vadd.f32 %v10106, %v10202
    %v10204 = vpop.f32.mrf.mxu0
    %v10205 = vpop.f32.mrf.mxu0
    %v10206 = vadd.f32 %v10109, %v10205
    %v10207 = vpop.f32.mrf.mxu0
    %10208 = vmatprep.mubr.bf16.mxu0 %v3506
    %10209 = vmatmul.mubr.bf16.gmra.mxu0 %v3505
    %v10210 = vpop.f32.mrf.mxu0
    %v10211 = vadd.f32 %v10114, %v10210
    %v10212 = vpop.f32.mrf.mxu0
    %v10213 = vpop.f32.mrf.mxu0
    %v10214 = vadd.f32 %v10117, %v10213
    %v10215 = vpop.f32.mrf.mxu0
    %10216 = vmatprep.mubr.bf16.mxu0 %v3570
    %10217 = vmatmul.mubr.bf16.gmra.mxu0 %v3569
    %v10218 = vpop.f32.mrf.mxu0
    %v10219 = vadd.f32 %v10122, %v10218
    %v10220 = vpop.f32.mrf.mxu0
    %v10221 = vpop.f32.mrf.mxu0
    %v10222 = vadd.f32 %v10125, %v10221
    %v10223 = vpop.f32.mrf.mxu0
    %10224 = vmatprep.mubr.bf16.mxu0 %v3634
    %10225 = vmatmul.mubr.bf16.gmra.mxu0 %v3633
    %v10226 = vpop.f32.mrf.mxu0
    %v10227 = vadd.f32 %v10130, %v10226
    %v10228 = vpop.f32.mrf.mxu0
    %v10229 = vpop.f32.mrf.mxu0
    %v10230 = vadd.f32 %v10133, %v10229
    %v10231 = vpop.f32.mrf.mxu0
    %10232 = vmatprep.mubr.bf16.mxu0 %v3698
    %10233 = vmatmul.mubr.bf16.gmra.mxu0 %v3697
    %v10234 = vpop.f32.mrf.mxu0
    %v10235 = vadd.f32 %v10138, %v10234
    %v10236 = vpop.f32.mrf.mxu0
    %v10237 = vpop.f32.mrf.mxu0
    %v10238 = vadd.f32 %v10141, %v10237
    %v10239 = vpop.f32.mrf.mxu0
    %10240 = vmatprep.mubr.bf16.mxu0 %v3762
    %10241 = vmatmul.mubr.bf16.gmra.mxu0 %v3761
    %v10242 = vpop.f32.mrf.mxu0
    %v10243 = vadd.f32 %v10146, %v10242
    %v10244 = vpop.f32.mrf.mxu0
    %v10245 = vpop.f32.mrf.mxu0
    %v10246 = vadd.f32 %v10149, %v10245
    %v10247 = vpop.f32.mrf.mxu0
    %10248 = vmatprep.mubr.bf16.mxu0 %v3826
    %10249 = vmatmul.mubr.bf16.gmra.mxu0 %v3825
    %v10250 = vpop.f32.mrf.mxu0
    %v10251 = vadd.f32 %v10154, %v10250
    %v10252 = vpop.f32.mrf.mxu0
    %v10253 = vpop.f32.mrf.mxu0
    %v10254 = vadd.f32 %v10157, %v10253
    %v10255 = vpop.f32.mrf.mxu0
    %10256 = vmatprep.mubr.bf16.mxu0 %v3890
    %10257 = vmatmul.mubr.bf16.gmra.mxu0 %v3889
    %v10258 = vpop.f32.mrf.mxu0
    %v10259 = vadd.f32 %v10162, %v10258
    %v10260 = vpop.f32.mrf.mxu0
    %v10261 = vpop.f32.mrf.mxu0
    %v10262 = vadd.f32 %v10165, %v10261
    %v10263 = vpop.f32.mrf.mxu0
    %10264 = vdwg.mxu0
    %10265 = vmatprep.subr.bf16.mxu0 %v7732
    %10266 = vmatpush1.bf16.xpose.msra.mxu0 %v7731
    %10267 = vmatprep.subr.bf16.mxu0 %v7668
    %10268 = vmatpush1.bf16.xpose.msra.mxu0 %v7667
    %10269 = vmatprep.subr.bf16.mxu0 %v7604
    %10270 = vmatpush1.bf16.xpose.msra.mxu0 %v7603
    %10271 = vmatprep.subr.bf16.mxu0 %v7540
    %10272 = vmatpush1.bf16.xpose.msra.mxu0 %v7539
    %10273 = vmatprep.subr.bf16.mxu0 %v7476
    %10274 = vmatpush1.bf16.xpose.msra.mxu0 %v7475
    %10275 = vmatprep.subr.bf16.mxu0 %v7412
    %10276 = vmatpush1.bf16.xpose.msra.mxu0 %v7411
    %10277 = vmatprep.subr.bf16.mxu0 %v7348
    %10278 = vmatpush1.bf16.xpose.msra.mxu0 %v7347
    %10279 = vmatprep.subr.bf16.mxu0 %v7284
    %10280 = vmatpush1.bf16.xpose.msra.mxu0 %v7283
    %10281 = vmatprep.subr.bf16.mxu0 0
    %10282 = vmatpush2.bf16.xpose.msra.mxu0 0
    %10283 = vmatprep.subr.bf16.mxu0 0
    %10284 = vmatpush2.bf16.xpose.msra.mxu0 0
    %10285 = vmatprep.subr.bf16.mxu0 0
    %10286 = vmatpush2.bf16.xpose.msra.mxu0 0
    %10287 = vmatprep.subr.bf16.mxu0 0
    %10288 = vmatpush2.bf16.xpose.msra.mxu0 0
    %10289 = vmatprep.subr.bf16.mxu0 0
    %10290 = vmatpush2.bf16.xpose.msra.mxu0 0
    %10291 = vmatprep.subr.bf16.mxu0 0
    %10292 = vmatpush2.bf16.xpose.msra.mxu0 0
    %10293 = vmatprep.subr.bf16.mxu0 0
    %10294 = vmatpush2.bf16.xpose.msra.mxu0 0
    %10295 = vmatprep.subr.bf16.mxu0 0
    %10296 = vmatpush2.bf16.xpose.msra.mxu0 0
    %10297 = vmatprep.mubr.bf16.mxu0 %v3444
    %10298 = vmatmul.mubr.bf16.gmra.mxu0 %v3443
    %v10299 = vpop.f32.mrf.mxu0
    %v10300 = vadd.f32 %v10203, %v10299
    %v10301 = vpop.f32.mrf.mxu0
    %v10302 = vpop.f32.mrf.mxu0
    %v10303 = vadd.f32 %v10206, %v10302
    %v10304 = vpop.f32.mrf.mxu0
    %10305 = vmatprep.mubr.bf16.mxu0 %v3508
    %10306 = vmatmul.mubr.bf16.gmra.mxu0 %v3507
    %v10307 = vpop.f32.mrf.mxu0
    %v10308 = vadd.f32 %v10211, %v10307
    %v10309 = vpop.f32.mrf.mxu0
    %v10310 = vpop.f32.mrf.mxu0
    %v10311 = vadd.f32 %v10214, %v10310
    %v10312 = vpop.f32.mrf.mxu0
    %10313 = vmatprep.mubr.bf16.mxu0 %v3572
    %10314 = vmatmul.mubr.bf16.gmra.mxu0 %v3571
    %v10315 = vpop.f32.mrf.mxu0
    %v10316 = vadd.f32 %v10219, %v10315
    %v10317 = vpop.f32.mrf.mxu0
    %v10318 = vpop.f32.mrf.mxu0
    %v10319 = vadd.f32 %v10222, %v10318
    %v10320 = vpop.f32.mrf.mxu0
    %10321 = vmatprep.mubr.bf16.mxu0 %v3636
    %10322 = vmatmul.mubr.bf16.gmra.mxu0 %v3635
    %v10323 = vpop.f32.mrf.mxu0
    %v10324 = vadd.f32 %v10227, %v10323
    %v10325 = vpop.f32.mrf.mxu0
    %v10326 = vpop.f32.mrf.mxu0
    %v10327 = vadd.f32 %v10230, %v10326
    %v10328 = vpop.f32.mrf.mxu0
    %10329 = vmatprep.mubr.bf16.mxu0 %v3700
    %10330 = vmatmul.mubr.bf16.gmra.mxu0 %v3699
    %v10331 = vpop.f32.mrf.mxu0
    %v10332 = vadd.f32 %v10235, %v10331
    %v10333 = vpop.f32.mrf.mxu0
    %v10334 = vpop.f32.mrf.mxu0
    %v10335 = vadd.f32 %v10238, %v10334
    %v10336 = vpop.f32.mrf.mxu0
    %10337 = vmatprep.mubr.bf16.mxu0 %v3764
    %10338 = vmatmul.mubr.bf16.gmra.mxu0 %v3763
    %v10339 = vpop.f32.mrf.mxu0
    %v10340 = vadd.f32 %v10243, %v10339
    %v10341 = vpop.f32.mrf.mxu0
    %v10342 = vpop.f32.mrf.mxu0
    %v10343 = vadd.f32 %v10246, %v10342
    %v10344 = vpop.f32.mrf.mxu0
    %10345 = vmatprep.mubr.bf16.mxu0 %v3828
    %10346 = vmatmul.mubr.bf16.gmra.mxu0 %v3827
    %v10347 = vpop.f32.mrf.mxu0
    %v10348 = vadd.f32 %v10251, %v10347
    %v10349 = vpop.f32.mrf.mxu0
    %v10350 = vpop.f32.mrf.mxu0
    %v10351 = vadd.f32 %v10254, %v10350
    %v10352 = vpop.f32.mrf.mxu0
    %10353 = vmatprep.mubr.bf16.mxu0 %v3892
    %10354 = vmatmul.mubr.bf16.gmra.mxu0 %v3891
    %v10355 = vpop.f32.mrf.mxu0
    %v10356 = vadd.f32 %v10259, %v10355
    %v10357 = vpop.f32.mrf.mxu0
    %v10358 = vpop.f32.mrf.mxu0
    %v10359 = vadd.f32 %v10262, %v10358
    %v10360 = vpop.f32.mrf.mxu0
    %10361 = vdwg.mxu0
    %10362 = vmatprep.subr.bf16.mxu0 %v7734
    %10363 = vmatpush1.bf16.xpose.msra.mxu0 %v7733
    %10364 = vmatprep.subr.bf16.mxu0 %v7670
    %10365 = vmatpush1.bf16.xpose.msra.mxu0 %v7669
    %10366 = vmatprep.subr.bf16.mxu0 %v7606
    %10367 = vmatpush1.bf16.xpose.msra.mxu0 %v7605
    %10368 = vmatprep.subr.bf16.mxu0 %v7542
    %10369 = vmatpush1.bf16.xpose.msra.mxu0 %v7541
    %10370 = vmatprep.subr.bf16.mxu0 %v7478
    %10371 = vmatpush1.bf16.xpose.msra.mxu0 %v7477
    %10372 = vmatprep.subr.bf16.mxu0 %v7414
    %10373 = vmatpush1.bf16.xpose.msra.mxu0 %v7413
    %10374 = vmatprep.subr.bf16.mxu0 %v7350
    %10375 = vmatpush1.bf16.xpose.msra.mxu0 %v7349
    %10376 = vmatprep.subr.bf16.mxu0 %v7286
    %10377 = vmatpush1.bf16.xpose.msra.mxu0 %v7285
    %10378 = vmatprep.subr.bf16.mxu0 0
    %10379 = vmatpush2.bf16.xpose.msra.mxu0 0
    %10380 = vmatprep.subr.bf16.mxu0 0
    %10381 = vmatpush2.bf16.xpose.msra.mxu0 0
    %10382 = vmatprep.subr.bf16.mxu0 0
    %10383 = vmatpush2.bf16.xpose.msra.mxu0 0
    %10384 = vmatprep.subr.bf16.mxu0 0
    %10385 = vmatpush2.bf16.xpose.msra.mxu0 0
    %10386 = vmatprep.subr.bf16.mxu0 0
    %10387 = vmatpush2.bf16.xpose.msra.mxu0 0
    %10388 = vmatprep.subr.bf16.mxu0 0
    %10389 = vmatpush2.bf16.xpose.msra.mxu0 0
    %10390 = vmatprep.subr.bf16.mxu0 0
    %10391 = vmatpush2.bf16.xpose.msra.mxu0 0
    %10392 = vmatprep.subr.bf16.mxu0 0
    %10393 = vmatpush2.bf16.xpose.msra.mxu0 0
    %10394 = vmatprep.mubr.bf16.mxu0 %v3446
    %10395 = vmatmul.mubr.bf16.gmra.mxu0 %v3445
    %v10396 = vpop.f32.mrf.mxu0
    %v10397 = vadd.f32 %v10300, %v10396
    %v10398 = vpop.f32.mrf.mxu0
    %v10399 = vpop.f32.mrf.mxu0
    %v10400 = vadd.f32 %v10303, %v10399
    %v10401 = vpop.f32.mrf.mxu0
    %10402 = vmatprep.mubr.bf16.mxu0 %v3510
    %10403 = vmatmul.mubr.bf16.gmra.mxu0 %v3509
    %v10404 = vpop.f32.mrf.mxu0
    %v10405 = vadd.f32 %v10308, %v10404
    %v10406 = vpop.f32.mrf.mxu0
    %v10407 = vpop.f32.mrf.mxu0
    %v10408 = vadd.f32 %v10311, %v10407
    %v10409 = vpop.f32.mrf.mxu0
    %10410 = vmatprep.mubr.bf16.mxu0 %v3574
    %10411 = vmatmul.mubr.bf16.gmra.mxu0 %v3573
    %v10412 = vpop.f32.mrf.mxu0
    %v10413 = vadd.f32 %v10316, %v10412
    %v10414 = vpop.f32.mrf.mxu0
    %v10415 = vpop.f32.mrf.mxu0
    %v10416 = vadd.f32 %v10319, %v10415
    %v10417 = vpop.f32.mrf.mxu0
    %10418 = vmatprep.mubr.bf16.mxu0 %v3638
    %10419 = vmatmul.mubr.bf16.gmra.mxu0 %v3637
    %v10420 = vpop.f32.mrf.mxu0
    %v10421 = vadd.f32 %v10324, %v10420
    %v10422 = vpop.f32.mrf.mxu0
    %v10423 = vpop.f32.mrf.mxu0
    %v10424 = vadd.f32 %v10327, %v10423
    %v10425 = vpop.f32.mrf.mxu0
    %10426 = vmatprep.mubr.bf16.mxu0 %v3702
    %10427 = vmatmul.mubr.bf16.gmra.mxu0 %v3701
    %v10428 = vpop.f32.mrf.mxu0
    %v10429 = vadd.f32 %v10332, %v10428
    %v10430 = vpop.f32.mrf.mxu0
    %v10431 = vpop.f32.mrf.mxu0
    %v10432 = vadd.f32 %v10335, %v10431
    %v10433 = vpop.f32.mrf.mxu0
    %10434 = vmatprep.mubr.bf16.mxu0 %v3766
    %10435 = vmatmul.mubr.bf16.gmra.mxu0 %v3765
    %v10436 = vpop.f32.mrf.mxu0
    %v10437 = vadd.f32 %v10340, %v10436
    %v10438 = vpop.f32.mrf.mxu0
    %v10439 = vpop.f32.mrf.mxu0
    %v10440 = vadd.f32 %v10343, %v10439
    %v10441 = vpop.f32.mrf.mxu0
    %10442 = vmatprep.mubr.bf16.mxu0 %v3830
    %10443 = vmatmul.mubr.bf16.gmra.mxu0 %v3829
    %v10444 = vpop.f32.mrf.mxu0
    %v10445 = vadd.f32 %v10348, %v10444
    %v10446 = vpop.f32.mrf.mxu0
    %v10447 = vpop.f32.mrf.mxu0
    %v10448 = vadd.f32 %v10351, %v10447
    %v10449 = vpop.f32.mrf.mxu0
    %10450 = vmatprep.mubr.bf16.mxu0 %v3894
    %10451 = vmatmul.mubr.bf16.gmra.mxu0 %v3893
    %v10452 = vpop.f32.mrf.mxu0
    %v10453 = vadd.f32 %v10356, %v10452
    %v10454 = vpop.f32.mrf.mxu0
    %v10455 = vpop.f32.mrf.mxu0
    %v10456 = vadd.f32 %v10359, %v10455
    %v10457 = vpop.f32.mrf.mxu0
    %10458 = vdwg.mxu0
    %10459 = vmatprep.subr.bf16.mxu0 %v7736
    %10460 = vmatpush1.bf16.xpose.msra.mxu0 %v7735
    %10461 = vmatprep.subr.bf16.mxu0 %v7672
    %10462 = vmatpush1.bf16.xpose.msra.mxu0 %v7671
    %10463 = vmatprep.subr.bf16.mxu0 %v7608
    %10464 = vmatpush1.bf16.xpose.msra.mxu0 %v7607
    %10465 = vmatprep.subr.bf16.mxu0 %v7544
    %10466 = vmatpush1.bf16.xpose.msra.mxu0 %v7543
    %10467 = vmatprep.subr.bf16.mxu0 %v7480
    %10468 = vmatpush1.bf16.xpose.msra.mxu0 %v7479
    %10469 = vmatprep.subr.bf16.mxu0 %v7416
    %10470 = vmatpush1.bf16.xpose.msra.mxu0 %v7415
    %10471 = vmatprep.subr.bf16.mxu0 %v7352
    %10472 = vmatpush1.bf16.xpose.msra.mxu0 %v7351
    %10473 = vmatprep.subr.bf16.mxu0 %v7288
    %10474 = vmatpush1.bf16.xpose.msra.mxu0 %v7287
    %10475 = vmatprep.subr.bf16.mxu0 0
    %10476 = vmatpush2.bf16.xpose.msra.mxu0 0
    %10477 = vmatprep.subr.bf16.mxu0 0
    %10478 = vmatpush2.bf16.xpose.msra.mxu0 0
    %10479 = vmatprep.subr.bf16.mxu0 0
    %10480 = vmatpush2.bf16.xpose.msra.mxu0 0
    %10481 = vmatprep.subr.bf16.mxu0 0
    %10482 = vmatpush2.bf16.xpose.msra.mxu0 0
    %10483 = vmatprep.subr.bf16.mxu0 0
    %10484 = vmatpush2.bf16.xpose.msra.mxu0 0
    %10485 = vmatprep.subr.bf16.mxu0 0
    %10486 = vmatpush2.bf16.xpose.msra.mxu0 0
    %10487 = vmatprep.subr.bf16.mxu0 0
    %10488 = vmatpush2.bf16.xpose.msra.mxu0 0
    %10489 = vmatprep.subr.bf16.mxu0 0
    %10490 = vmatpush2.bf16.xpose.msra.mxu0 0
    %10491 = vmatprep.mubr.bf16.mxu0 %v3448
    %10492 = vmatmul.mubr.bf16.gmra.mxu0 %v3447
    %v10493 = vpop.f32.mrf.mxu0
    %v10494 = vadd.f32 %v10397, %v10493
    %v10495 = vpop.f32.mrf.mxu0
    %v10496 = vpop.f32.mrf.mxu0
    %v10497 = vadd.f32 %v10400, %v10496
    %v10498 = vpop.f32.mrf.mxu0
    %10499 = vmatprep.mubr.bf16.mxu0 %v3512
    %10500 = vmatmul.mubr.bf16.gmra.mxu0 %v3511
    %v10501 = vpop.f32.mrf.mxu0
    %v10502 = vadd.f32 %v10405, %v10501
    %v10503 = vpop.f32.mrf.mxu0
    %v10504 = vpop.f32.mrf.mxu0
    %v10505 = vadd.f32 %v10408, %v10504
    %v10506 = vpop.f32.mrf.mxu0
    %10507 = vmatprep.mubr.bf16.mxu0 %v3576
    %10508 = vmatmul.mubr.bf16.gmra.mxu0 %v3575
    %v10509 = vpop.f32.mrf.mxu0
    %v10510 = vadd.f32 %v10413, %v10509
    %v10511 = vpop.f32.mrf.mxu0
    %v10512 = vpop.f32.mrf.mxu0
    %v10513 = vadd.f32 %v10416, %v10512
    %v10514 = vpop.f32.mrf.mxu0
    %10515 = vmatprep.mubr.bf16.mxu0 %v3640
    %10516 = vmatmul.mubr.bf16.gmra.mxu0 %v3639
    %v10517 = vpop.f32.mrf.mxu0
    %v10518 = vadd.f32 %v10421, %v10517
    %v10519 = vpop.f32.mrf.mxu0
    %v10520 = vpop.f32.mrf.mxu0
    %v10521 = vadd.f32 %v10424, %v10520
    %v10522 = vpop.f32.mrf.mxu0
    %10523 = vmatprep.mubr.bf16.mxu0 %v3704
    %10524 = vmatmul.mubr.bf16.gmra.mxu0 %v3703
    %v10525 = vpop.f32.mrf.mxu0
    %v10526 = vadd.f32 %v10429, %v10525
    %v10527 = vpop.f32.mrf.mxu0
    %v10528 = vpop.f32.mrf.mxu0
    %v10529 = vadd.f32 %v10432, %v10528
    %v10530 = vpop.f32.mrf.mxu0
    %10531 = vmatprep.mubr.bf16.mxu0 %v3768
    %10532 = vmatmul.mubr.bf16.gmra.mxu0 %v3767
    %v10533 = vpop.f32.mrf.mxu0
    %v10534 = vadd.f32 %v10437, %v10533
    %v10535 = vpop.f32.mrf.mxu0
    %v10536 = vpop.f32.mrf.mxu0
    %v10537 = vadd.f32 %v10440, %v10536
    %v10538 = vpop.f32.mrf.mxu0
    %10539 = vmatprep.mubr.bf16.mxu0 %v3832
    %10540 = vmatmul.mubr.bf16.gmra.mxu0 %v3831
    %v10541 = vpop.f32.mrf.mxu0
    %v10542 = vadd.f32 %v10445, %v10541
    %v10543 = vpop.f32.mrf.mxu0
    %v10544 = vpop.f32.mrf.mxu0
    %v10545 = vadd.f32 %v10448, %v10544
    %v10546 = vpop.f32.mrf.mxu0
    %10547 = vmatprep.mubr.bf16.mxu0 %v3896
    %10548 = vmatmul.mubr.bf16.gmra.mxu0 %v3895
    %v10549 = vpop.f32.mrf.mxu0
    %v10550 = vadd.f32 %v10453, %v10549
    %v10551 = vpop.f32.mrf.mxu0
    %v10552 = vpop.f32.mrf.mxu0
    %v10553 = vadd.f32 %v10456, %v10552
    %v10554 = vpop.f32.mrf.mxu0
    %10555 = vdwg.mxu0
    %10556 = vmatprep.subr.bf16.mxu0 %v7738
    %10557 = vmatpush1.bf16.xpose.msra.mxu0 %v7737
    %10558 = vmatprep.subr.bf16.mxu0 %v7674
    %10559 = vmatpush1.bf16.xpose.msra.mxu0 %v7673
    %10560 = vmatprep.subr.bf16.mxu0 %v7610
    %10561 = vmatpush1.bf16.xpose.msra.mxu0 %v7609
    %10562 = vmatprep.subr.bf16.mxu0 %v7546
    %10563 = vmatpush1.bf16.xpose.msra.mxu0 %v7545
    %10564 = vmatprep.subr.bf16.mxu0 %v7482
    %10565 = vmatpush1.bf16.xpose.msra.mxu0 %v7481
    %10566 = vmatprep.subr.bf16.mxu0 %v7418
    %10567 = vmatpush1.bf16.xpose.msra.mxu0 %v7417
    %10568 = vmatprep.subr.bf16.mxu0 %v7354
    %10569 = vmatpush1.bf16.xpose.msra.mxu0 %v7353
    %10570 = vmatprep.subr.bf16.mxu0 %v7290
    %10571 = vmatpush1.bf16.xpose.msra.mxu0 %v7289
    %10572 = vmatprep.subr.bf16.mxu0 0
    %10573 = vmatpush2.bf16.xpose.msra.mxu0 0
    %10574 = vmatprep.subr.bf16.mxu0 0
    %10575 = vmatpush2.bf16.xpose.msra.mxu0 0
    %10576 = vmatprep.subr.bf16.mxu0 0
    %10577 = vmatpush2.bf16.xpose.msra.mxu0 0
    %10578 = vmatprep.subr.bf16.mxu0 0
    %10579 = vmatpush2.bf16.xpose.msra.mxu0 0
    %10580 = vmatprep.subr.bf16.mxu0 0
    %10581 = vmatpush2.bf16.xpose.msra.mxu0 0
    %10582 = vmatprep.subr.bf16.mxu0 0
    %10583 = vmatpush2.bf16.xpose.msra.mxu0 0
    %10584 = vmatprep.subr.bf16.mxu0 0
    %10585 = vmatpush2.bf16.xpose.msra.mxu0 0
    %10586 = vmatprep.subr.bf16.mxu0 0
    %10587 = vmatpush2.bf16.xpose.msra.mxu0 0
    %10588 = vmatprep.mubr.bf16.mxu0 %v3450
    %10589 = vmatmul.mubr.bf16.gmra.mxu0 %v3449
    %v10590 = vpop.f32.mrf.mxu0
    %v10591 = vadd.f32 %v10494, %v10590
    %v10592 = vpop.f32.mrf.mxu0
    %v10593 = vpop.f32.mrf.mxu0
    %v10594 = vadd.f32 %v10497, %v10593
    %v10595 = vpop.f32.mrf.mxu0
    %10596 = vmatprep.mubr.bf16.mxu0 %v3514
    %10597 = vmatmul.mubr.bf16.gmra.mxu0 %v3513
    %v10598 = vpop.f32.mrf.mxu0
    %v10599 = vadd.f32 %v10502, %v10598
    %v10600 = vpop.f32.mrf.mxu0
    %v10601 = vpop.f32.mrf.mxu0
    %v10602 = vadd.f32 %v10505, %v10601
    %v10603 = vpop.f32.mrf.mxu0
    %10604 = vmatprep.mubr.bf16.mxu0 %v3578
    %10605 = vmatmul.mubr.bf16.gmra.mxu0 %v3577
    %v10606 = vpop.f32.mrf.mxu0
    %v10607 = vadd.f32 %v10510, %v10606
    %v10608 = vpop.f32.mrf.mxu0
    %v10609 = vpop.f32.mrf.mxu0
    %v10610 = vadd.f32 %v10513, %v10609
    %v10611 = vpop.f32.mrf.mxu0
    %10612 = vmatprep.mubr.bf16.mxu0 %v3642
    %10613 = vmatmul.mubr.bf16.gmra.mxu0 %v3641
    %v10614 = vpop.f32.mrf.mxu0
    %v10615 = vadd.f32 %v10518, %v10614
    %v10616 = vpop.f32.mrf.mxu0
    %v10617 = vpop.f32.mrf.mxu0
    %v10618 = vadd.f32 %v10521, %v10617
    %v10619 = vpop.f32.mrf.mxu0
    %10620 = vmatprep.mubr.bf16.mxu0 %v3706
    %10621 = vmatmul.mubr.bf16.gmra.mxu0 %v3705
    %v10622 = vpop.f32.mrf.mxu0
    %v10623 = vadd.f32 %v10526, %v10622
    %v10624 = vpop.f32.mrf.mxu0
    %v10625 = vpop.f32.mrf.mxu0
    %v10626 = vadd.f32 %v10529, %v10625
    %v10627 = vpop.f32.mrf.mxu0
    %10628 = vmatprep.mubr.bf16.mxu0 %v3770
    %10629 = vmatmul.mubr.bf16.gmra.mxu0 %v3769
    %v10630 = vpop.f32.mrf.mxu0
    %v10631 = vadd.f32 %v10534, %v10630
    %v10632 = vpop.f32.mrf.mxu0
    %v10633 = vpop.f32.mrf.mxu0
    %v10634 = vadd.f32 %v10537, %v10633
    %v10635 = vpop.f32.mrf.mxu0
    %10636 = vmatprep.mubr.bf16.mxu0 %v3834
    %10637 = vmatmul.mubr.bf16.gmra.mxu0 %v3833
    %v10638 = vpop.f32.mrf.mxu0
    %v10639 = vadd.f32 %v10542, %v10638
    %v10640 = vpop.f32.mrf.mxu0
    %v10641 = vpop.f32.mrf.mxu0
    %v10642 = vadd.f32 %v10545, %v10641
    %v10643 = vpop.f32.mrf.mxu0
    %10644 = vmatprep.mubr.bf16.mxu0 %v3898
    %10645 = vmatmul.mubr.bf16.gmra.mxu0 %v3897
    %v10646 = vpop.f32.mrf.mxu0
    %v10647 = vadd.f32 %v10550, %v10646
    %v10648 = vpop.f32.mrf.mxu0
    %v10649 = vpop.f32.mrf.mxu0
    %v10650 = vadd.f32 %v10553, %v10649
    %v10651 = vpop.f32.mrf.mxu0
    %10652 = vdwg.mxu0
    %10653 = vmatprep.subr.bf16.mxu0 %v7740
    %10654 = vmatpush1.bf16.xpose.msra.mxu0 %v7739
    %10655 = vmatprep.subr.bf16.mxu0 %v7676
    %10656 = vmatpush1.bf16.xpose.msra.mxu0 %v7675
    %10657 = vmatprep.subr.bf16.mxu0 %v7612
    %10658 = vmatpush1.bf16.xpose.msra.mxu0 %v7611
    %10659 = vmatprep.subr.bf16.mxu0 %v7548
    %10660 = vmatpush1.bf16.xpose.msra.mxu0 %v7547
    %10661 = vmatprep.subr.bf16.mxu0 %v7484
    %10662 = vmatpush1.bf16.xpose.msra.mxu0 %v7483
    %10663 = vmatprep.subr.bf16.mxu0 %v7420
    %10664 = vmatpush1.bf16.xpose.msra.mxu0 %v7419
    %10665 = vmatprep.subr.bf16.mxu0 %v7356
    %10666 = vmatpush1.bf16.xpose.msra.mxu0 %v7355
    %10667 = vmatprep.subr.bf16.mxu0 %v7292
    %10668 = vmatpush1.bf16.xpose.msra.mxu0 %v7291
    %10669 = vmatprep.subr.bf16.mxu0 0
    %10670 = vmatpush2.bf16.xpose.msra.mxu0 0
    %10671 = vmatprep.subr.bf16.mxu0 0
    %10672 = vmatpush2.bf16.xpose.msra.mxu0 0
    %10673 = vmatprep.subr.bf16.mxu0 0
    %10674 = vmatpush2.bf16.xpose.msra.mxu0 0
    %10675 = vmatprep.subr.bf16.mxu0 0
    %10676 = vmatpush2.bf16.xpose.msra.mxu0 0
    %10677 = vmatprep.subr.bf16.mxu0 0
    %10678 = vmatpush2.bf16.xpose.msra.mxu0 0
    %10679 = vmatprep.subr.bf16.mxu0 0
    %10680 = vmatpush2.bf16.xpose.msra.mxu0 0
    %10681 = vmatprep.subr.bf16.mxu0 0
    %10682 = vmatpush2.bf16.xpose.msra.mxu0 0
    %10683 = vmatprep.subr.bf16.mxu0 0
    %10684 = vmatpush2.bf16.xpose.msra.mxu0 0
    %10685 = vmatprep.mubr.bf16.mxu0 %v3452
    %10686 = vmatmul.mubr.bf16.gmra.mxu0 %v3451
    %v10687 = vpop.f32.mrf.mxu0
    %v10688 = vadd.f32 %v10591, %v10687
    %v10689 = vpop.f32.mrf.mxu0
    %v10690 = vpop.f32.mrf.mxu0
    %v10691 = vadd.f32 %v10594, %v10690
    %v10692 = vpop.f32.mrf.mxu0
    %10693 = vmatprep.mubr.bf16.mxu0 %v3516
    %10694 = vmatmul.mubr.bf16.gmra.mxu0 %v3515
    %v10695 = vpop.f32.mrf.mxu0
    %v10696 = vadd.f32 %v10599, %v10695
    %v10697 = vpop.f32.mrf.mxu0
    %v10698 = vpop.f32.mrf.mxu0
    %v10699 = vadd.f32 %v10602, %v10698
    %v10700 = vpop.f32.mrf.mxu0
    %10701 = vmatprep.mubr.bf16.mxu0 %v3580
    %10702 = vmatmul.mubr.bf16.gmra.mxu0 %v3579
    %v10703 = vpop.f32.mrf.mxu0
    %v10704 = vadd.f32 %v10607, %v10703
    %v10705 = vpop.f32.mrf.mxu0
    %v10706 = vpop.f32.mrf.mxu0
    %v10707 = vadd.f32 %v10610, %v10706
    %v10708 = vpop.f32.mrf.mxu0
    %10709 = vmatprep.mubr.bf16.mxu0 %v3644
    %10710 = vmatmul.mubr.bf16.gmra.mxu0 %v3643
    %v10711 = vpop.f32.mrf.mxu0
    %v10712 = vadd.f32 %v10615, %v10711
    %v10713 = vpop.f32.mrf.mxu0
    %v10714 = vpop.f32.mrf.mxu0
    %v10715 = vadd.f32 %v10618, %v10714
    %v10716 = vpop.f32.mrf.mxu0
    %10717 = vmatprep.mubr.bf16.mxu0 %v3708
    %10718 = vmatmul.mubr.bf16.gmra.mxu0 %v3707
    %v10719 = vpop.f32.mrf.mxu0
    %v10720 = vadd.f32 %v10623, %v10719
    %v10721 = vpop.f32.mrf.mxu0
    %v10722 = vpop.f32.mrf.mxu0
    %v10723 = vadd.f32 %v10626, %v10722
    %v10724 = vpop.f32.mrf.mxu0
    %10725 = vmatprep.mubr.bf16.mxu0 %v3772
    %10726 = vmatmul.mubr.bf16.gmra.mxu0 %v3771
    %v10727 = vpop.f32.mrf.mxu0
    %v10728 = vadd.f32 %v10631, %v10727
    %v10729 = vpop.f32.mrf.mxu0
    %v10730 = vpop.f32.mrf.mxu0
    %v10731 = vadd.f32 %v10634, %v10730
    %v10732 = vpop.f32.mrf.mxu0
    %10733 = vmatprep.mubr.bf16.mxu0 %v3836
    %10734 = vmatmul.mubr.bf16.gmra.mxu0 %v3835
    %v10735 = vpop.f32.mrf.mxu0
    %v10736 = vadd.f32 %v10639, %v10735
    %v10737 = vpop.f32.mrf.mxu0
    %v10738 = vpop.f32.mrf.mxu0
    %v10739 = vadd.f32 %v10642, %v10738
    %v10740 = vpop.f32.mrf.mxu0
    %10741 = vmatprep.mubr.bf16.mxu0 %v3900
    %10742 = vmatmul.mubr.bf16.gmra.mxu0 %v3899
    %v10743 = vpop.f32.mrf.mxu0
    %v10744 = vadd.f32 %v10647, %v10743
    %v10745 = vpop.f32.mrf.mxu0
    %v10746 = vpop.f32.mrf.mxu0
    %v10747 = vadd.f32 %v10650, %v10746
    %v10748 = vpop.f32.mrf.mxu0
    %10749 = vdwg.mxu0
    %10750 = vmatprep.subr.bf16.mxu0 %v7742
    %10751 = vmatpush1.bf16.xpose.msra.mxu0 %v7741
    %10752 = vmatprep.subr.bf16.mxu0 %v7678
    %10753 = vmatpush1.bf16.xpose.msra.mxu0 %v7677
    %10754 = vmatprep.subr.bf16.mxu0 %v7614
    %10755 = vmatpush1.bf16.xpose.msra.mxu0 %v7613
    %10756 = vmatprep.subr.bf16.mxu0 %v7550
    %10757 = vmatpush1.bf16.xpose.msra.mxu0 %v7549
    %10758 = vmatprep.subr.bf16.mxu0 %v7486
    %10759 = vmatpush1.bf16.xpose.msra.mxu0 %v7485
    %10760 = vmatprep.subr.bf16.mxu0 %v7422
    %10761 = vmatpush1.bf16.xpose.msra.mxu0 %v7421
    %10762 = vmatprep.subr.bf16.mxu0 %v7358
    %10763 = vmatpush1.bf16.xpose.msra.mxu0 %v7357
    %10764 = vmatprep.subr.bf16.mxu0 %v7294
    %10765 = vmatpush1.bf16.xpose.msra.mxu0 %v7293
    %10766 = vmatprep.subr.bf16.mxu0 0
    %10767 = vmatpush2.bf16.xpose.msra.mxu0 0
    %10768 = vmatprep.subr.bf16.mxu0 0
    %10769 = vmatpush2.bf16.xpose.msra.mxu0 0
    %10770 = vmatprep.subr.bf16.mxu0 0
    %10771 = vmatpush2.bf16.xpose.msra.mxu0 0
    %10772 = vmatprep.subr.bf16.mxu0 0
    %10773 = vmatpush2.bf16.xpose.msra.mxu0 0
    %10774 = vmatprep.subr.bf16.mxu0 0
    %10775 = vmatpush2.bf16.xpose.msra.mxu0 0
    %10776 = vmatprep.subr.bf16.mxu0 0
    %10777 = vmatpush2.bf16.xpose.msra.mxu0 0
    %10778 = vmatprep.subr.bf16.mxu0 0
    %10779 = vmatpush2.bf16.xpose.msra.mxu0 0
    %10780 = vmatprep.subr.bf16.mxu0 0
    %10781 = vmatpush2.bf16.xpose.msra.mxu0 0
    %10782 = vmatprep.mubr.bf16.mxu0 %v3454
    %10783 = vmatmul.mubr.bf16.gmra.mxu0 %v3453
    %v10784 = vpop.f32.mrf.mxu0
    %v10785 = vadd.f32 %v10688, %v10784
    %v10786 = vpop.f32.mrf.mxu0
    %v10787 = vpop.f32.mrf.mxu0
    %v10788 = vadd.f32 %v10691, %v10787
    %v10789 = vpop.f32.mrf.mxu0
    %10790 = vmatprep.mubr.bf16.mxu0 %v3518
    %10791 = vmatmul.mubr.bf16.gmra.mxu0 %v3517
    %v10792 = vpop.f32.mrf.mxu0
    %v10793 = vadd.f32 %v10696, %v10792
    %v10794 = vpop.f32.mrf.mxu0
    %v10795 = vpop.f32.mrf.mxu0
    %v10796 = vadd.f32 %v10699, %v10795
    %v10797 = vpop.f32.mrf.mxu0
    %10798 = vmatprep.mubr.bf16.mxu0 %v3582
    %10799 = vmatmul.mubr.bf16.gmra.mxu0 %v3581
    %v10800 = vpop.f32.mrf.mxu0
    %v10801 = vadd.f32 %v10704, %v10800
    %v10802 = vpop.f32.mrf.mxu0
    %v10803 = vpop.f32.mrf.mxu0
    %v10804 = vadd.f32 %v10707, %v10803
    %v10805 = vpop.f32.mrf.mxu0
    %10806 = vmatprep.mubr.bf16.mxu0 %v3646
    %10807 = vmatmul.mubr.bf16.gmra.mxu0 %v3645
    %v10808 = vpop.f32.mrf.mxu0
    %v10809 = vadd.f32 %v10712, %v10808
    %v10810 = vpop.f32.mrf.mxu0
    %v10811 = vpop.f32.mrf.mxu0
    %v10812 = vadd.f32 %v10715, %v10811
    %v10813 = vpop.f32.mrf.mxu0
    %10814 = vmatprep.mubr.bf16.mxu0 %v3710
    %10815 = vmatmul.mubr.bf16.gmra.mxu0 %v3709
    %v10816 = vpop.f32.mrf.mxu0
    %v10817 = vadd.f32 %v10720, %v10816
    %v10818 = vpop.f32.mrf.mxu0
    %v10819 = vpop.f32.mrf.mxu0
    %v10820 = vadd.f32 %v10723, %v10819
    %v10821 = vpop.f32.mrf.mxu0
    %10822 = vmatprep.mubr.bf16.mxu0 %v3774
    %10823 = vmatmul.mubr.bf16.gmra.mxu0 %v3773
    %v10824 = vpop.f32.mrf.mxu0
    %v10825 = vadd.f32 %v10728, %v10824
    %v10826 = vpop.f32.mrf.mxu0
    %v10827 = vpop.f32.mrf.mxu0
    %v10828 = vadd.f32 %v10731, %v10827
    %v10829 = vpop.f32.mrf.mxu0
    %10830 = vmatprep.mubr.bf16.mxu0 %v3838
    %10831 = vmatmul.mubr.bf16.gmra.mxu0 %v3837
    %v10832 = vpop.f32.mrf.mxu0
    %v10833 = vadd.f32 %v10736, %v10832
    %v10834 = vpop.f32.mrf.mxu0
    %v10835 = vpop.f32.mrf.mxu0
    %v10836 = vadd.f32 %v10739, %v10835
    %v10837 = vpop.f32.mrf.mxu0
    %10838 = vmatprep.mubr.bf16.mxu0 %v3902
    %10839 = vmatmul.mubr.bf16.gmra.mxu0 %v3901
    %v10840 = vpop.f32.mrf.mxu0
    %v10841 = vadd.f32 %v10744, %v10840
    %v10842 = vpop.f32.mrf.mxu0
    %v10843 = vpop.f32.mrf.mxu0
    %v10844 = vadd.f32 %v10747, %v10843
    %v10845 = vpop.f32.mrf.mxu0
    %10846 = vdwg.mxu0
    %v10847 = vmul.f32 %v10785, %v10785
    %v10848 = vmul.f32 %v10788, %v10788
    %v10849 = vmul.f32 %v10793, %v10793
    %v10850 = vmul.f32 %v10796, %v10796
    %v10851 = vmul.f32 %v10801, %v10801
    %v10852 = vmul.f32 %v10804, %v10804
    %v10853 = vmul.f32 %v10809, %v10809
    %v10854 = vmul.f32 %v10812, %v10812
    %v10855 = vmul.f32 %v10817, %v10817
    %v10856 = vmul.f32 %v10820, %v10820
    %v10857 = vmul.f32 %v10825, %v10825
    %v10858 = vmul.f32 %v10828, %v10828
    %v10859 = vmul.f32 %v10833, %v10833
    %v10860 = vmul.f32 %v10836, %v10836
    %v10861 = vmul.f32 %v10841, %v10841
    %v10862 = vmul.f32 %v10844, %v10844
    %v10863 = vshra.s32 %v47, 2
    %v10864 = vshra.s32 %v48, 2
    %v10865 = vshra.s32 %v49, 2
    %v10866 = vshra.s32 %v50, 2
    %v10867 = vshra.s32 %v51, 2
    %v10868 = vshra.s32 %v52, 2
    %v10869 = vshra.s32 %v53, 2
    %v10870 = vshra.s32 %v54, 2
    %v10871 = vshra.s32 %v55, 2
    %v10872 = vshra.s32 %v56, 2
    %v10873 = vshra.s32 %v57, 2
    %v10874 = vshra.s32 %v58, 2
    %v10875 = vshra.s32 %v59, 2
    %v10876 = vshra.s32 %v60, 2
    %v10877 = vshra.s32 %v61, 2
    %v10878 = vshra.s32 %v62, 2
    %v10879 = vlaneseq
    %v10880 = vand.u32 %v10879, 127
    %v10881 = vshra.s32 %v10880, 2
    %vm10882 = vcmp.eq.s32.totalorder %v10863, %v10881
    %vm10883 = vcmp.eq.s32.totalorder %v10864, %v10881
    %vm10884 = vcmp.eq.s32.totalorder %v10865, %v10881
    %vm10885 = vcmp.eq.s32.totalorder %v10866, %v10881
    %vm10886 = vcmp.eq.s32.totalorder %v10867, %v10881
    %vm10887 = vcmp.eq.s32.totalorder %v10868, %v10881
    %vm10888 = vcmp.eq.s32.totalorder %v10869, %v10881
    %vm10889 = vcmp.eq.s32.totalorder %v10870, %v10881
    %vm10890 = vcmp.eq.s32.totalorder %v10871, %v10881
    %vm10891 = vcmp.eq.s32.totalorder %v10872, %v10881
    %vm10892 = vcmp.eq.s32.totalorder %v10873, %v10881
    %vm10893 = vcmp.eq.s32.totalorder %v10874, %v10881
    %vm10894 = vcmp.eq.s32.totalorder %v10875, %v10881
    %vm10895 = vcmp.eq.s32.totalorder %v10876, %v10881
    %vm10896 = vcmp.eq.s32.totalorder %v10877, %v10881
    %vm10897 = vcmp.eq.s32.totalorder %v10878, %v10881
    %v10898 = vsel %vm10882, 1, 0
    %v10899 = vsel %vm10883, 1, 0
    %v10900 = vsel %vm10884, 1, 0
    %v10901 = vsel %vm10885, 1, 0
    %v10902 = vsel %vm10886, 1, 0
    %v10903 = vsel %vm10887, 1, 0
    %v10904 = vsel %vm10888, 1, 0
    %v10905 = vsel %vm10889, 1, 0
    %v10906 = vsel %vm10890, 1, 0
    %v10907 = vsel %vm10891, 1, 0
    %v10908 = vsel %vm10892, 1, 0
    %v10909 = vsel %vm10893, 1, 0
    %v10910 = vsel %vm10894, 1, 0
    %v10911 = vsel %vm10895, 1, 0
    %v10912 = vsel %vm10896, 1, 0
    %v10913 = vsel %vm10897, 1, 0
    %v10914 = vcvt.s32.f32 %v10898
    %v10915 = vcvt.s32.f32 %v10899
    %v10916 = vcvt.s32.f32 %v10900
    %v10917 = vcvt.s32.f32 %v10901
    %v10918 = vcvt.s32.f32 %v10902
    %v10919 = vcvt.s32.f32 %v10903
    %v10920 = vcvt.s32.f32 %v10904
    %v10921 = vcvt.s32.f32 %v10905
    %v10922 = vcvt.s32.f32 %v10906
    %v10923 = vcvt.s32.f32 %v10907
    %v10924 = vcvt.s32.f32 %v10908
    %v10925 = vcvt.s32.f32 %v10909
    %v10926 = vcvt.s32.f32 %v10910
    %v10927 = vcvt.s32.f32 %v10911
    %v10928 = vcvt.s32.f32 %v10912
    %v10929 = vcvt.s32.f32 %v10913
    %10930 = vmatprep.subr.mxu0 0.0
    %v10931 = vand.u32 %v10862, 4294901760
    %10932 = vmatpush1.msra.mxu0 %v10931
    %10933 = vmatprep.subr.mxu0 0.0
    %v10934 = vand.u32 %v10861, 4294901760
    %10935 = vmatpush1.msra.mxu0 %v10934
    %10936 = vmatprep.subr.mxu0 0.0
    %v10937 = vand.u32 %v10860, 4294901760
    %10938 = vmatpush1.msra.mxu0 %v10937
    %10939 = vmatprep.subr.mxu0 0.0
    %v10940 = vand.u32 %v10859, 4294901760
    %10941 = vmatpush1.msra.mxu0 %v10940
    %10942 = vmatprep.subr.mxu0 0.0
    %v10943 = vand.u32 %v10858, 4294901760
    %10944 = vmatpush1.msra.mxu0 %v10943
    %10945 = vmatprep.subr.mxu0 0.0
    %v10946 = vand.u32 %v10857, 4294901760
    %10947 = vmatpush1.msra.mxu0 %v10946
    %10948 = vmatprep.subr.mxu0 0.0
    %v10949 = vand.u32 %v10856, 4294901760
    %10950 = vmatpush1.msra.mxu0 %v10949
    %10951 = vmatprep.subr.mxu0 0.0
    %v10952 = vand.u32 %v10855, 4294901760
    %10953 = vmatpush1.msra.mxu0 %v10952
    %10954 = vmatprep.subr.mxu0 0.0
    %v10955 = vand.u32 %v10854, 4294901760
    %10956 = vmatpush1.msra.mxu0 %v10955
    %10957 = vmatprep.subr.mxu0 0.0
    %v10958 = vand.u32 %v10853, 4294901760
    %10959 = vmatpush1.msra.mxu0 %v10958
    %10960 = vmatprep.subr.mxu0 0.0
    %v10961 = vand.u32 %v10852, 4294901760
    %10962 = vmatpush1.msra.mxu0 %v10961
    %10963 = vmatprep.subr.mxu0 0.0
    %v10964 = vand.u32 %v10851, 4294901760
    %10965 = vmatpush1.msra.mxu0 %v10964
    %10966 = vmatprep.subr.mxu0 0.0
    %v10967 = vand.u32 %v10850, 4294901760
    %10968 = vmatpush1.msra.mxu0 %v10967
    %10969 = vmatprep.subr.mxu0 0.0
    %v10970 = vand.u32 %v10849, 4294901760
    %10971 = vmatpush1.msra.mxu0 %v10970
    %10972 = vmatprep.subr.mxu0 0.0
    %v10973 = vand.u32 %v10848, 4294901760
    %10974 = vmatpush1.msra.mxu0 %v10973
    %10975 = vmatprep.subr.mxu0 0.0
    %v10976 = vand.u32 %v10847, 4294901760
    %10977 = vmatpush1.msra.mxu0 %v10976
    %10978 = vmatprep.subr.mxu0 0.0
    %10979 = vmatpush2.msra.mxu0 0.0
    %10980 = vmatprep.subr.mxu0 0.0
    %10981 = vmatpush2.msra.mxu0 0.0
    %10982 = vmatprep.subr.mxu0 0.0
    %10983 = vmatpush2.msra.mxu0 0.0
    %10984 = vmatprep.subr.mxu0 0.0
    %10985 = vmatpush2.msra.mxu0 0.0
    %10986 = vmatprep.subr.mxu0 0.0
    %10987 = vmatpush2.msra.mxu0 0.0
    %10988 = vmatprep.subr.mxu0 0.0
    %10989 = vmatpush2.msra.mxu0 0.0
    %10990 = vmatprep.subr.mxu0 0.0
    %10991 = vmatpush2.msra.mxu0 0.0
    %10992 = vmatprep.subr.mxu0 0.0
    %10993 = vmatpush2.msra.mxu0 0.0
    %10994 = vmatprep.subr.mxu0 0.0
    %10995 = vmatpush2.msra.mxu0 0.0
    %10996 = vmatprep.subr.mxu0 0.0
    %10997 = vmatpush2.msra.mxu0 0.0
    %10998 = vmatprep.subr.mxu0 0.0
    %10999 = vmatpush2.msra.mxu0 0.0
    %11000 = vmatprep.subr.mxu0 0.0
    %11001 = vmatpush2.msra.mxu0 0.0
    %11002 = vmatprep.subr.mxu0 0.0
    %11003 = vmatpush2.msra.mxu0 0.0
    %11004 = vmatprep.subr.mxu0 0.0
    %11005 = vmatpush2.msra.mxu0 0.0
    %11006 = vmatprep.subr.mxu0 0.0
    %11007 = vmatpush2.msra.mxu0 0.0
    %11008 = vmatprep.subr.mxu0 0.0
    %11009 = vmatpush2.msra.mxu0 0.0
    %11010 = vmatprep.mubr.f32.mxu0 0.0
    %v11011 = vand.u32 %v10914, 4294901760
    %v11012 = vsub.f32 %v10914, %v11011
    %v11013 = vand.u32 %v11012, 4294901760
    %v11014 = vsub.f32 %v11012, %v11013
    %v11015 = vand.u32 %v11014, 4294901760
    %11016 = vmatmul.mubr.f32.gmra.mxu0 %v11015
    %v11017 = vpop.f32.mrf.mxu0
    %v11018 = vadd.f32 0.0, %v11017
    %v11019 = vpop.f32.mrf.mxu0
    %11020 = vmatprep.mubr.f32.mxu0 0.0
    %v11021 = vand.u32 %v10915, 4294901760
    %v11022 = vsub.f32 %v10915, %v11021
    %v11023 = vand.u32 %v11022, 4294901760
    %v11024 = vsub.f32 %v11022, %v11023
    %v11025 = vand.u32 %v11024, 4294901760
    %11026 = vmatmul.mubr.f32.gmra.mxu0 %v11025
    %v11027 = vpop.f32.mrf.mxu0
    %v11028 = vadd.f32 0.0, %v11027
    %v11029 = vpop.f32.mrf.mxu0
    %11030 = vmatprep.mubr.f32.mxu0 0.0
    %v11031 = vand.u32 %v10916, 4294901760
    %v11032 = vsub.f32 %v10916, %v11031
    %v11033 = vand.u32 %v11032, 4294901760
    %v11034 = vsub.f32 %v11032, %v11033
    %v11035 = vand.u32 %v11034, 4294901760
    %11036 = vmatmul.mubr.f32.gmra.mxu0 %v11035
    %v11037 = vpop.f32.mrf.mxu0
    %v11038 = vadd.f32 0.0, %v11037
    %v11039 = vpop.f32.mrf.mxu0
    %11040 = vmatprep.mubr.f32.mxu0 0.0
    %v11041 = vand.u32 %v10917, 4294901760
    %v11042 = vsub.f32 %v10917, %v11041
    %v11043 = vand.u32 %v11042, 4294901760
    %v11044 = vsub.f32 %v11042, %v11043
    %v11045 = vand.u32 %v11044, 4294901760
    %11046 = vmatmul.mubr.f32.gmra.mxu0 %v11045
    %v11047 = vpop.f32.mrf.mxu0
    %v11048 = vadd.f32 0.0, %v11047
    %v11049 = vpop.f32.mrf.mxu0
    %11050 = vmatprep.mubr.f32.mxu0 0.0
    %v11051 = vand.u32 %v10918, 4294901760
    %v11052 = vsub.f32 %v10918, %v11051
    %v11053 = vand.u32 %v11052, 4294901760
    %v11054 = vsub.f32 %v11052, %v11053
    %v11055 = vand.u32 %v11054, 4294901760
    %11056 = vmatmul.mubr.f32.gmra.mxu0 %v11055
    %v11057 = vpop.f32.mrf.mxu0
    %v11058 = vadd.f32 0.0, %v11057
    %v11059 = vpop.f32.mrf.mxu0
    %11060 = vmatprep.mubr.f32.mxu0 0.0
    %v11061 = vand.u32 %v10919, 4294901760
    %v11062 = vsub.f32 %v10919, %v11061
    %v11063 = vand.u32 %v11062, 4294901760
    %v11064 = vsub.f32 %v11062, %v11063
    %v11065 = vand.u32 %v11064, 4294901760
    %11066 = vmatmul.mubr.f32.gmra.mxu0 %v11065
    %v11067 = vpop.f32.mrf.mxu0
    %v11068 = vadd.f32 0.0, %v11067
    %v11069 = vpop.f32.mrf.mxu0
    %11070 = vmatprep.mubr.f32.mxu0 0.0
    %v11071 = vand.u32 %v10920, 4294901760
    %v11072 = vsub.f32 %v10920, %v11071
    %v11073 = vand.u32 %v11072, 4294901760
    %v11074 = vsub.f32 %v11072, %v11073
    %v11075 = vand.u32 %v11074, 4294901760
    %11076 = vmatmul.mubr.f32.gmra.mxu0 %v11075
    %v11077 = vpop.f32.mrf.mxu0
    %v11078 = vadd.f32 0.0, %v11077
    %v11079 = vpop.f32.mrf.mxu0
    %11080 = vmatprep.mubr.f32.mxu0 0.0
    %v11081 = vand.u32 %v10921, 4294901760
    %v11082 = vsub.f32 %v10921, %v11081
    %v11083 = vand.u32 %v11082, 4294901760
    %v11084 = vsub.f32 %v11082, %v11083
    %v11085 = vand.u32 %v11084, 4294901760
    %11086 = vmatmul.mubr.f32.gmra.mxu0 %v11085
    %v11087 = vpop.f32.mrf.mxu0
    %v11088 = vadd.f32 0.0, %v11087
    %v11089 = vpop.f32.mrf.mxu0
    %11090 = vmatprep.mubr.f32.mxu0 0.0
    %v11091 = vand.u32 %v10922, 4294901760
    %v11092 = vsub.f32 %v10922, %v11091
    %v11093 = vand.u32 %v11092, 4294901760
    %v11094 = vsub.f32 %v11092, %v11093
    %v11095 = vand.u32 %v11094, 4294901760
    %11096 = vmatmul.mubr.f32.gmra.mxu0 %v11095
    %v11097 = vpop.f32.mrf.mxu0
    %v11098 = vadd.f32 0.0, %v11097
    %v11099 = vpop.f32.mrf.mxu0
    %11100 = vmatprep.mubr.f32.mxu0 0.0
    %v11101 = vand.u32 %v10923, 4294901760
    %v11102 = vsub.f32 %v10923, %v11101
    %v11103 = vand.u32 %v11102, 4294901760
    %v11104 = vsub.f32 %v11102, %v11103
    %v11105 = vand.u32 %v11104, 4294901760
    %11106 = vmatmul.mubr.f32.gmra.mxu0 %v11105
    %v11107 = vpop.f32.mrf.mxu0
    %v11108 = vadd.f32 0.0, %v11107
    %v11109 = vpop.f32.mrf.mxu0
    %11110 = vmatprep.mubr.f32.mxu0 0.0
    %v11111 = vand.u32 %v10924, 4294901760
    %v11112 = vsub.f32 %v10924, %v11111
    %v11113 = vand.u32 %v11112, 4294901760
    %v11114 = vsub.f32 %v11112, %v11113
    %v11115 = vand.u32 %v11114, 4294901760
    %11116 = vmatmul.mubr.f32.gmra.mxu0 %v11115
    %v11117 = vpop.f32.mrf.mxu0
    %v11118 = vadd.f32 0.0, %v11117
    %v11119 = vpop.f32.mrf.mxu0
    %11120 = vmatprep.mubr.f32.mxu0 0.0
    %v11121 = vand.u32 %v10925, 4294901760
    %v11122 = vsub.f32 %v10925, %v11121
    %v11123 = vand.u32 %v11122, 4294901760
    %v11124 = vsub.f32 %v11122, %v11123
    %v11125 = vand.u32 %v11124, 4294901760
    %11126 = vmatmul.mubr.f32.gmra.mxu0 %v11125
    %v11127 = vpop.f32.mrf.mxu0
    %v11128 = vadd.f32 0.0, %v11127
    %v11129 = vpop.f32.mrf.mxu0
    %11130 = vmatprep.mubr.f32.mxu0 0.0
    %v11131 = vand.u32 %v10926, 4294901760
    %v11132 = vsub.f32 %v10926, %v11131
    %v11133 = vand.u32 %v11132, 4294901760
    %v11134 = vsub.f32 %v11132, %v11133
    %v11135 = vand.u32 %v11134, 4294901760
    %11136 = vmatmul.mubr.f32.gmra.mxu0 %v11135
    %v11137 = vpop.f32.mrf.mxu0
    %v11138 = vadd.f32 0.0, %v11137
    %v11139 = vpop.f32.mrf.mxu0
    %11140 = vmatprep.mubr.f32.mxu0 0.0
    %v11141 = vand.u32 %v10927, 4294901760
    %v11142 = vsub.f32 %v10927, %v11141
    %v11143 = vand.u32 %v11142, 4294901760
    %v11144 = vsub.f32 %v11142, %v11143
    %v11145 = vand.u32 %v11144, 4294901760
    %11146 = vmatmul.mubr.f32.gmra.mxu0 %v11145
    %v11147 = vpop.f32.mrf.mxu0
    %v11148 = vadd.f32 0.0, %v11147
    %v11149 = vpop.f32.mrf.mxu0
    %11150 = vmatprep.mubr.f32.mxu0 0.0
    %v11151 = vand.u32 %v10928, 4294901760
    %v11152 = vsub.f32 %v10928, %v11151
    %v11153 = vand.u32 %v11152, 4294901760
    %v11154 = vsub.f32 %v11152, %v11153
    %v11155 = vand.u32 %v11154, 4294901760
    %11156 = vmatmul.mubr.f32.gmra.mxu0 %v11155
    %v11157 = vpop.f32.mrf.mxu0
    %v11158 = vadd.f32 0.0, %v11157
    %v11159 = vpop.f32.mrf.mxu0
    %11160 = vmatprep.mubr.f32.mxu0 0.0
    %v11161 = vand.u32 %v10929, 4294901760
    %v11162 = vsub.f32 %v10929, %v11161
    %v11163 = vand.u32 %v11162, 4294901760
    %v11164 = vsub.f32 %v11162, %v11163
    %v11165 = vand.u32 %v11164, 4294901760
    %11166 = vmatmul.mubr.f32.gmra.mxu0 %v11165
    %v11167 = vpop.f32.mrf.mxu0
    %v11168 = vadd.f32 0.0, %v11167
    %v11169 = vpop.f32.mrf.mxu0
    %11170 = vdwg.mxu0
    %11171 = vmatprep.subr.mxu0 0.0
    %v11172 = vand.u32 %v10862, 4294901760
    %v11173 = vsub.f32 %v10862, %v11172
    %v11174 = vand.u32 %v11173, 4294901760
    %v11175 = vsub.f32 %v11173, %v11174
    %v11176 = vand.u32 %v11175, 4294901760
    %11177 = vmatpush1.msra.mxu0 %v11176
    %11178 = vmatprep.subr.mxu0 0.0
    %v11179 = vand.u32 %v10861, 4294901760
    %v11180 = vsub.f32 %v10861, %v11179
    %v11181 = vand.u32 %v11180, 4294901760
    %v11182 = vsub.f32 %v11180, %v11181
    %v11183 = vand.u32 %v11182, 4294901760
    %11184 = vmatpush1.msra.mxu0 %v11183
    %11185 = vmatprep.subr.mxu0 0.0
    %v11186 = vand.u32 %v10860, 4294901760
    %v11187 = vsub.f32 %v10860, %v11186
    %v11188 = vand.u32 %v11187, 4294901760
    %v11189 = vsub.f32 %v11187, %v11188
    %v11190 = vand.u32 %v11189, 4294901760
    %11191 = vmatpush1.msra.mxu0 %v11190
    %11192 = vmatprep.subr.mxu0 0.0
    %v11193 = vand.u32 %v10859, 4294901760
    %v11194 = vsub.f32 %v10859, %v11193
    %v11195 = vand.u32 %v11194, 4294901760
    %v11196 = vsub.f32 %v11194, %v11195
    %v11197 = vand.u32 %v11196, 4294901760
    %11198 = vmatpush1.msra.mxu0 %v11197
    %11199 = vmatprep.subr.mxu0 0.0
    %v11200 = vand.u32 %v10858, 4294901760
    %v11201 = vsub.f32 %v10858, %v11200
    %v11202 = vand.u32 %v11201, 4294901760
    %v11203 = vsub.f32 %v11201, %v11202
    %v11204 = vand.u32 %v11203, 4294901760
    %11205 = vmatpush1.msra.mxu0 %v11204
    %11206 = vmatprep.subr.mxu0 0.0
    %v11207 = vand.u32 %v10857, 4294901760
    %v11208 = vsub.f32 %v10857, %v11207
    %v11209 = vand.u32 %v11208, 4294901760
    %v11210 = vsub.f32 %v11208, %v11209
    %v11211 = vand.u32 %v11210, 4294901760
    %11212 = vmatpush1.msra.mxu0 %v11211
    %11213 = vmatprep.subr.mxu0 0.0
    %v11214 = vand.u32 %v10856, 4294901760
    %v11215 = vsub.f32 %v10856, %v11214
    %v11216 = vand.u32 %v11215, 4294901760
    %v11217 = vsub.f32 %v11215, %v11216
    %v11218 = vand.u32 %v11217, 4294901760
    %11219 = vmatpush1.msra.mxu0 %v11218
    %11220 = vmatprep.subr.mxu0 0.0
    %v11221 = vand.u32 %v10855, 4294901760
    %v11222 = vsub.f32 %v10855, %v11221
    %v11223 = vand.u32 %v11222, 4294901760
    %v11224 = vsub.f32 %v11222, %v11223
    %v11225 = vand.u32 %v11224, 4294901760
    %11226 = vmatpush1.msra.mxu0 %v11225
    %11227 = vmatprep.subr.mxu0 0.0
    %v11228 = vand.u32 %v10854, 4294901760
    %v11229 = vsub.f32 %v10854, %v11228
    %v11230 = vand.u32 %v11229, 4294901760
    %v11231 = vsub.f32 %v11229, %v11230
    %v11232 = vand.u32 %v11231, 4294901760
    %11233 = vmatpush1.msra.mxu0 %v11232
    %11234 = vmatprep.subr.mxu0 0.0
    %v11235 = vand.u32 %v10853, 4294901760
    %v11236 = vsub.f32 %v10853, %v11235
    %v11237 = vand.u32 %v11236, 4294901760
    %v11238 = vsub.f32 %v11236, %v11237
    %v11239 = vand.u32 %v11238, 4294901760
    %11240 = vmatpush1.msra.mxu0 %v11239
    %11241 = vmatprep.subr.mxu0 0.0
    %v11242 = vand.u32 %v10852, 4294901760
    %v11243 = vsub.f32 %v10852, %v11242
    %v11244 = vand.u32 %v11243, 4294901760
    %v11245 = vsub.f32 %v11243, %v11244
    %v11246 = vand.u32 %v11245, 4294901760
    %11247 = vmatpush1.msra.mxu0 %v11246
    %11248 = vmatprep.subr.mxu0 0.0
    %v11249 = vand.u32 %v10851, 4294901760
    %v11250 = vsub.f32 %v10851, %v11249
    %v11251 = vand.u32 %v11250, 4294901760
    %v11252 = vsub.f32 %v11250, %v11251
    %v11253 = vand.u32 %v11252, 4294901760
    %11254 = vmatpush1.msra.mxu0 %v11253
    %11255 = vmatprep.subr.mxu0 0.0
    %v11256 = vand.u32 %v10850, 4294901760
    %v11257 = vsub.f32 %v10850, %v11256
    %v11258 = vand.u32 %v11257, 4294901760
    %v11259 = vsub.f32 %v11257, %v11258
    %v11260 = vand.u32 %v11259, 4294901760
    %11261 = vmatpush1.msra.mxu0 %v11260
    %11262 = vmatprep.subr.mxu0 0.0
    %v11263 = vand.u32 %v10849, 4294901760
    %v11264 = vsub.f32 %v10849, %v11263
    %v11265 = vand.u32 %v11264, 4294901760
    %v11266 = vsub.f32 %v11264, %v11265
    %v11267 = vand.u32 %v11266, 4294901760
    %11268 = vmatpush1.msra.mxu0 %v11267
    %11269 = vmatprep.subr.mxu0 0.0
    %v11270 = vand.u32 %v10848, 4294901760
    %v11271 = vsub.f32 %v10848, %v11270
    %v11272 = vand.u32 %v11271, 4294901760
    %v11273 = vsub.f32 %v11271, %v11272
    %v11274 = vand.u32 %v11273, 4294901760
    %11275 = vmatpush1.msra.mxu0 %v11274
    %11276 = vmatprep.subr.mxu0 0.0
    %v11277 = vand.u32 %v10847, 4294901760
    %v11278 = vsub.f32 %v10847, %v11277
    %v11279 = vand.u32 %v11278, 4294901760
    %v11280 = vsub.f32 %v11278, %v11279
    %v11281 = vand.u32 %v11280, 4294901760
    %11282 = vmatpush1.msra.mxu0 %v11281
    %11283 = vmatprep.subr.mxu0 0.0
    %11284 = vmatpush2.msra.mxu0 0.0
    %11285 = vmatprep.subr.mxu0 0.0
    %11286 = vmatpush2.msra.mxu0 0.0
    %11287 = vmatprep.subr.mxu0 0.0
    %11288 = vmatpush2.msra.mxu0 0.0
    %11289 = vmatprep.subr.mxu0 0.0
    %11290 = vmatpush2.msra.mxu0 0.0
    %11291 = vmatprep.subr.mxu0 0.0
    %11292 = vmatpush2.msra.mxu0 0.0
    %11293 = vmatprep.subr.mxu0 0.0
    %11294 = vmatpush2.msra.mxu0 0.0
    %11295 = vmatprep.subr.mxu0 0.0
    %11296 = vmatpush2.msra.mxu0 0.0
    %11297 = vmatprep.subr.mxu0 0.0
    %11298 = vmatpush2.msra.mxu0 0.0
    %11299 = vmatprep.subr.mxu0 0.0
    %11300 = vmatpush2.msra.mxu0 0.0
    %11301 = vmatprep.subr.mxu0 0.0
    %11302 = vmatpush2.msra.mxu0 0.0
    %11303 = vmatprep.subr.mxu0 0.0
    %11304 = vmatpush2.msra.mxu0 0.0
    %11305 = vmatprep.subr.mxu0 0.0
    %11306 = vmatpush2.msra.mxu0 0.0
    %11307 = vmatprep.subr.mxu0 0.0
    %11308 = vmatpush2.msra.mxu0 0.0
    %11309 = vmatprep.subr.mxu0 0.0
    %11310 = vmatpush2.msra.mxu0 0.0
    %11311 = vmatprep.subr.mxu0 0.0
    %11312 = vmatpush2.msra.mxu0 0.0
    %11313 = vmatprep.subr.mxu0 0.0
    %11314 = vmatpush2.msra.mxu0 0.0
    %11315 = vmatprep.mubr.f32.mxu0 0.0
    %v11316 = vand.u32 %v10914, 4294901760
    %11317 = vmatmul.mubr.f32.gmra.mxu0 %v11316
    %v11318 = vpop.f32.mrf.mxu0
    %v11319 = vadd.f32 %v11018, %v11318
    %v11320 = vpop.f32.mrf.mxu0
    %11321 = vmatprep.mubr.f32.mxu0 0.0
    %v11322 = vand.u32 %v10915, 4294901760
    %11323 = vmatmul.mubr.f32.gmra.mxu0 %v11322
    %v11324 = vpop.f32.mrf.mxu0
    %v11325 = vadd.f32 %v11028, %v11324
    %v11326 = vpop.f32.mrf.mxu0
    %11327 = vmatprep.mubr.f32.mxu0 0.0
    %v11328 = vand.u32 %v10916, 4294901760
    %11329 = vmatmul.mubr.f32.gmra.mxu0 %v11328
    %v11330 = vpop.f32.mrf.mxu0
    %v11331 = vadd.f32 %v11038, %v11330
    %v11332 = vpop.f32.mrf.mxu0
    %11333 = vmatprep.mubr.f32.mxu0 0.0
    %v11334 = vand.u32 %v10917, 4294901760
    %11335 = vmatmul.mubr.f32.gmra.mxu0 %v11334
    %v11336 = vpop.f32.mrf.mxu0
    %v11337 = vadd.f32 %v11048, %v11336
    %v11338 = vpop.f32.mrf.mxu0
    %11339 = vmatprep.mubr.f32.mxu0 0.0
    %v11340 = vand.u32 %v10918, 4294901760
    %11341 = vmatmul.mubr.f32.gmra.mxu0 %v11340
    %v11342 = vpop.f32.mrf.mxu0
    %v11343 = vadd.f32 %v11058, %v11342
    %v11344 = vpop.f32.mrf.mxu0
    %11345 = vmatprep.mubr.f32.mxu0 0.0
    %v11346 = vand.u32 %v10919, 4294901760
    %11347 = vmatmul.mubr.f32.gmra.mxu0 %v11346
    %v11348 = vpop.f32.mrf.mxu0
    %v11349 = vadd.f32 %v11068, %v11348
    %v11350 = vpop.f32.mrf.mxu0
    %11351 = vmatprep.mubr.f32.mxu0 0.0
    %v11352 = vand.u32 %v10920, 4294901760
    %11353 = vmatmul.mubr.f32.gmra.mxu0 %v11352
    %v11354 = vpop.f32.mrf.mxu0
    %v11355 = vadd.f32 %v11078, %v11354
    %v11356 = vpop.f32.mrf.mxu0
    %11357 = vmatprep.mubr.f32.mxu0 0.0
    %v11358 = vand.u32 %v10921, 4294901760
    %11359 = vmatmul.mubr.f32.gmra.mxu0 %v11358
    %v11360 = vpop.f32.mrf.mxu0
    %v11361 = vadd.f32 %v11088, %v11360
    %v11362 = vpop.f32.mrf.mxu0
    %11363 = vmatprep.mubr.f32.mxu0 0.0
    %v11364 = vand.u32 %v10922, 4294901760
    %11365 = vmatmul.mubr.f32.gmra.mxu0 %v11364
    %v11366 = vpop.f32.mrf.mxu0
    %v11367 = vadd.f32 %v11098, %v11366
    %v11368 = vpop.f32.mrf.mxu0
    %11369 = vmatprep.mubr.f32.mxu0 0.0
    %v11370 = vand.u32 %v10923, 4294901760
    %11371 = vmatmul.mubr.f32.gmra.mxu0 %v11370
    %v11372 = vpop.f32.mrf.mxu0
    %v11373 = vadd.f32 %v11108, %v11372
    %v11374 = vpop.f32.mrf.mxu0
    %11375 = vmatprep.mubr.f32.mxu0 0.0
    %v11376 = vand.u32 %v10924, 4294901760
    %11377 = vmatmul.mubr.f32.gmra.mxu0 %v11376
    %v11378 = vpop.f32.mrf.mxu0
    %v11379 = vadd.f32 %v11118, %v11378
    %v11380 = vpop.f32.mrf.mxu0
    %11381 = vmatprep.mubr.f32.mxu0 0.0
    %v11382 = vand.u32 %v10925, 4294901760
    %11383 = vmatmul.mubr.f32.gmra.mxu0 %v11382
    %v11384 = vpop.f32.mrf.mxu0
    %v11385 = vadd.f32 %v11128, %v11384
    %v11386 = vpop.f32.mrf.mxu0
    %11387 = vmatprep.mubr.f32.mxu0 0.0
    %v11388 = vand.u32 %v10926, 4294901760
    %11389 = vmatmul.mubr.f32.gmra.mxu0 %v11388
    %v11390 = vpop.f32.mrf.mxu0
    %v11391 = vadd.f32 %v11138, %v11390
    %v11392 = vpop.f32.mrf.mxu0
    %11393 = vmatprep.mubr.f32.mxu0 0.0
    %v11394 = vand.u32 %v10927, 4294901760
    %11395 = vmatmul.mubr.f32.gmra.mxu0 %v11394
    %v11396 = vpop.f32.mrf.mxu0
    %v11397 = vadd.f32 %v11148, %v11396
    %v11398 = vpop.f32.mrf.mxu0
    %11399 = vmatprep.mubr.f32.mxu0 0.0
    %v11400 = vand.u32 %v10928, 4294901760
    %11401 = vmatmul.mubr.f32.gmra.mxu0 %v11400
    %v11402 = vpop.f32.mrf.mxu0
    %v11403 = vadd.f32 %v11158, %v11402
    %v11404 = vpop.f32.mrf.mxu0
    %11405 = vmatprep.mubr.f32.mxu0 0.0
    %v11406 = vand.u32 %v10929, 4294901760
    %11407 = vmatmul.mubr.f32.gmra.mxu0 %v11406
    %v11408 = vpop.f32.mrf.mxu0
    %v11409 = vadd.f32 %v11168, %v11408
    %v11410 = vpop.f32.mrf.mxu0
    %11411 = vdwg.mxu0
    %11412 = vmatprep.subr.mxu0 0.0
    %v11413 = vand.u32 %v10862, 4294901760
    %v11414 = vsub.f32 %v10862, %v11413
    %11415 = vmatpush1.msra.mxu0 %v11414
    %11416 = vmatprep.subr.mxu0 0.0
    %v11417 = vand.u32 %v10861, 4294901760
    %v11418 = vsub.f32 %v10861, %v11417
    %11419 = vmatpush1.msra.mxu0 %v11418
    %11420 = vmatprep.subr.mxu0 0.0
    %v11421 = vand.u32 %v10860, 4294901760
    %v11422 = vsub.f32 %v10860, %v11421
    %11423 = vmatpush1.msra.mxu0 %v11422
    %11424 = vmatprep.subr.mxu0 0.0
    %v11425 = vand.u32 %v10859, 4294901760
    %v11426 = vsub.f32 %v10859, %v11425
    %11427 = vmatpush1.msra.mxu0 %v11426
    %11428 = vmatprep.subr.mxu0 0.0
    %v11429 = vand.u32 %v10858, 4294901760
    %v11430 = vsub.f32 %v10858, %v11429
    %11431 = vmatpush1.msra.mxu0 %v11430
    %11432 = vmatprep.subr.mxu0 0.0
    %v11433 = vand.u32 %v10857, 4294901760
    %v11434 = vsub.f32 %v10857, %v11433
    %11435 = vmatpush1.msra.mxu0 %v11434
    %11436 = vmatprep.subr.mxu0 0.0
    %v11437 = vand.u32 %v10856, 4294901760
    %v11438 = vsub.f32 %v10856, %v11437
    %11439 = vmatpush1.msra.mxu0 %v11438
    %11440 = vmatprep.subr.mxu0 0.0
    %v11441 = vand.u32 %v10855, 4294901760
    %v11442 = vsub.f32 %v10855, %v11441
    %11443 = vmatpush1.msra.mxu0 %v11442
    %11444 = vmatprep.subr.mxu0 0.0
    %v11445 = vand.u32 %v10854, 4294901760
    %v11446 = vsub.f32 %v10854, %v11445
    %11447 = vmatpush1.msra.mxu0 %v11446
    %11448 = vmatprep.subr.mxu0 0.0
    %v11449 = vand.u32 %v10853, 4294901760
    %v11450 = vsub.f32 %v10853, %v11449
    %11451 = vmatpush1.msra.mxu0 %v11450
    %11452 = vmatprep.subr.mxu0 0.0
    %v11453 = vand.u32 %v10852, 4294901760
    %v11454 = vsub.f32 %v10852, %v11453
    %11455 = vmatpush1.msra.mxu0 %v11454
    %11456 = vmatprep.subr.mxu0 0.0
    %v11457 = vand.u32 %v10851, 4294901760
    %v11458 = vsub.f32 %v10851, %v11457
    %11459 = vmatpush1.msra.mxu0 %v11458
    %11460 = vmatprep.subr.mxu0 0.0
    %v11461 = vand.u32 %v10850, 4294901760
    %v11462 = vsub.f32 %v10850, %v11461
    %11463 = vmatpush1.msra.mxu0 %v11462
    %11464 = vmatprep.subr.mxu0 0.0
    %v11465 = vand.u32 %v10849, 4294901760
    %v11466 = vsub.f32 %v10849, %v11465
    %11467 = vmatpush1.msra.mxu0 %v11466
    %11468 = vmatprep.subr.mxu0 0.0
    %v11469 = vand.u32 %v10848, 4294901760
    %v11470 = vsub.f32 %v10848, %v11469
    %11471 = vmatpush1.msra.mxu0 %v11470
    %11472 = vmatprep.subr.mxu0 0.0
    %v11473 = vand.u32 %v10847, 4294901760
    %v11474 = vsub.f32 %v10847, %v11473
    %11475 = vmatpush1.msra.mxu0 %v11474
    %11476 = vmatprep.subr.mxu0 0.0
    %11477 = vmatpush2.msra.mxu0 0.0
    %11478 = vmatprep.subr.mxu0 0.0
    %11479 = vmatpush2.msra.mxu0 0.0
    %11480 = vmatprep.subr.mxu0 0.0
    %11481 = vmatpush2.msra.mxu0 0.0
    %11482 = vmatprep.subr.mxu0 0.0
    %11483 = vmatpush2.msra.mxu0 0.0
    %11484 = vmatprep.subr.mxu0 0.0
    %11485 = vmatpush2.msra.mxu0 0.0
    %11486 = vmatprep.subr.mxu0 0.0
    %11487 = vmatpush2.msra.mxu0 0.0
    %11488 = vmatprep.subr.mxu0 0.0
    %11489 = vmatpush2.msra.mxu0 0.0
    %11490 = vmatprep.subr.mxu0 0.0
    %11491 = vmatpush2.msra.mxu0 0.0
    %11492 = vmatprep.subr.mxu0 0.0
    %11493 = vmatpush2.msra.mxu0 0.0
    %11494 = vmatprep.subr.mxu0 0.0
    %11495 = vmatpush2.msra.mxu0 0.0
    %11496 = vmatprep.subr.mxu0 0.0
    %11497 = vmatpush2.msra.mxu0 0.0
    %11498 = vmatprep.subr.mxu0 0.0
    %11499 = vmatpush2.msra.mxu0 0.0
    %11500 = vmatprep.subr.mxu0 0.0
    %11501 = vmatpush2.msra.mxu0 0.0
    %11502 = vmatprep.subr.mxu0 0.0
    %11503 = vmatpush2.msra.mxu0 0.0
    %11504 = vmatprep.subr.mxu0 0.0
    %11505 = vmatpush2.msra.mxu0 0.0
    %11506 = vmatprep.subr.mxu0 0.0
    %11507 = vmatpush2.msra.mxu0 0.0
    %11508 = vmatprep.mubr.f32.mxu0 0.0
    %v11509 = vand.u32 %v10914, 4294901760
    %v11510 = vsub.f32 %v10914, %v11509
    %11511 = vmatmul.mubr.f32.gmra.mxu0 %v11510
    %v11512 = vpop.f32.mrf.mxu0
    %v11513 = vadd.f32 %v11319, %v11512
    %v11514 = vpop.f32.mrf.mxu0
    %11515 = vmatprep.mubr.f32.mxu0 0.0
    %v11516 = vand.u32 %v10915, 4294901760
    %v11517 = vsub.f32 %v10915, %v11516
    %11518 = vmatmul.mubr.f32.gmra.mxu0 %v11517
    %v11519 = vpop.f32.mrf.mxu0
    %v11520 = vadd.f32 %v11325, %v11519
    %v11521 = vpop.f32.mrf.mxu0
    %11522 = vmatprep.mubr.f32.mxu0 0.0
    %v11523 = vand.u32 %v10916, 4294901760
    %v11524 = vsub.f32 %v10916, %v11523
    %11525 = vmatmul.mubr.f32.gmra.mxu0 %v11524
    %v11526 = vpop.f32.mrf.mxu0
    %v11527 = vadd.f32 %v11331, %v11526
    %v11528 = vpop.f32.mrf.mxu0
    %11529 = vmatprep.mubr.f32.mxu0 0.0
    %v11530 = vand.u32 %v10917, 4294901760
    %v11531 = vsub.f32 %v10917, %v11530
    %11532 = vmatmul.mubr.f32.gmra.mxu0 %v11531
    %v11533 = vpop.f32.mrf.mxu0
    %v11534 = vadd.f32 %v11337, %v11533
    %v11535 = vpop.f32.mrf.mxu0
    %11536 = vmatprep.mubr.f32.mxu0 0.0
    %v11537 = vand.u32 %v10918, 4294901760
    %v11538 = vsub.f32 %v10918, %v11537
    %11539 = vmatmul.mubr.f32.gmra.mxu0 %v11538
    %v11540 = vpop.f32.mrf.mxu0
    %v11541 = vadd.f32 %v11343, %v11540
    %v11542 = vpop.f32.mrf.mxu0
    %11543 = vmatprep.mubr.f32.mxu0 0.0
    %v11544 = vand.u32 %v10919, 4294901760
    %v11545 = vsub.f32 %v10919, %v11544
    %11546 = vmatmul.mubr.f32.gmra.mxu0 %v11545
    %v11547 = vpop.f32.mrf.mxu0
    %v11548 = vadd.f32 %v11349, %v11547
    %v11549 = vpop.f32.mrf.mxu0
    %11550 = vmatprep.mubr.f32.mxu0 0.0
    %v11551 = vand.u32 %v10920, 4294901760
    %v11552 = vsub.f32 %v10920, %v11551
    %11553 = vmatmul.mubr.f32.gmra.mxu0 %v11552
    %v11554 = vpop.f32.mrf.mxu0
    %v11555 = vadd.f32 %v11355, %v11554
    %v11556 = vpop.f32.mrf.mxu0
    %11557 = vmatprep.mubr.f32.mxu0 0.0
    %v11558 = vand.u32 %v10921, 4294901760
    %v11559 = vsub.f32 %v10921, %v11558
    %11560 = vmatmul.mubr.f32.gmra.mxu0 %v11559
    %v11561 = vpop.f32.mrf.mxu0
    %v11562 = vadd.f32 %v11361, %v11561
    %v11563 = vpop.f32.mrf.mxu0
    %11564 = vmatprep.mubr.f32.mxu0 0.0
    %v11565 = vand.u32 %v10922, 4294901760
    %v11566 = vsub.f32 %v10922, %v11565
    %11567 = vmatmul.mubr.f32.gmra.mxu0 %v11566
    %v11568 = vpop.f32.mrf.mxu0
    %v11569 = vadd.f32 %v11367, %v11568
    %v11570 = vpop.f32.mrf.mxu0
    %11571 = vmatprep.mubr.f32.mxu0 0.0
    %v11572 = vand.u32 %v10923, 4294901760
    %v11573 = vsub.f32 %v10923, %v11572
    %11574 = vmatmul.mubr.f32.gmra.mxu0 %v11573
    %v11575 = vpop.f32.mrf.mxu0
    %v11576 = vadd.f32 %v11373, %v11575
    %v11577 = vpop.f32.mrf.mxu0
    %11578 = vmatprep.mubr.f32.mxu0 0.0
    %v11579 = vand.u32 %v10924, 4294901760
    %v11580 = vsub.f32 %v10924, %v11579
    %11581 = vmatmul.mubr.f32.gmra.mxu0 %v11580
    %v11582 = vpop.f32.mrf.mxu0
    %v11583 = vadd.f32 %v11379, %v11582
    %v11584 = vpop.f32.mrf.mxu0
    %11585 = vmatprep.mubr.f32.mxu0 0.0
    %v11586 = vand.u32 %v10925, 4294901760
    %v11587 = vsub.f32 %v10925, %v11586
    %11588 = vmatmul.mubr.f32.gmra.mxu0 %v11587
    %v11589 = vpop.f32.mrf.mxu0
    %v11590 = vadd.f32 %v11385, %v11589
    %v11591 = vpop.f32.mrf.mxu0
    %11592 = vmatprep.mubr.f32.mxu0 0.0
    %v11593 = vand.u32 %v10926, 4294901760
    %v11594 = vsub.f32 %v10926, %v11593
    %11595 = vmatmul.mubr.f32.gmra.mxu0 %v11594
    %v11596 = vpop.f32.mrf.mxu0
    %v11597 = vadd.f32 %v11391, %v11596
    %v11598 = vpop.f32.mrf.mxu0
    %11599 = vmatprep.mubr.f32.mxu0 0.0
    %v11600 = vand.u32 %v10927, 4294901760
    %v11601 = vsub.f32 %v10927, %v11600
    %11602 = vmatmul.mubr.f32.gmra.mxu0 %v11601
    %v11603 = vpop.f32.mrf.mxu0
    %v11604 = vadd.f32 %v11397, %v11603
    %v11605 = vpop.f32.mrf.mxu0
    %11606 = vmatprep.mubr.f32.mxu0 0.0
    %v11607 = vand.u32 %v10928, 4294901760
    %v11608 = vsub.f32 %v10928, %v11607
    %11609 = vmatmul.mubr.f32.gmra.mxu0 %v11608
    %v11610 = vpop.f32.mrf.mxu0
    %v11611 = vadd.f32 %v11403, %v11610
    %v11612 = vpop.f32.mrf.mxu0
    %11613 = vmatprep.mubr.f32.mxu0 0.0
    %v11614 = vand.u32 %v10929, 4294901760
    %v11615 = vsub.f32 %v10929, %v11614
    %11616 = vmatmul.mubr.f32.gmra.mxu0 %v11615
    %v11617 = vpop.f32.mrf.mxu0
    %v11618 = vadd.f32 %v11409, %v11617
    %v11619 = vpop.f32.mrf.mxu0
    %11620 = vdwg.mxu0
    %11621 = vmatprep.subr.mxu0 0.0
    %v11622 = vand.u32 %v10862, 4294901760
    %11623 = vmatpush1.msra.mxu0 %v11622
    %11624 = vmatprep.subr.mxu0 0.0
    %v11625 = vand.u32 %v10861, 4294901760
    %11626 = vmatpush1.msra.mxu0 %v11625
    %11627 = vmatprep.subr.mxu0 0.0
    %v11628 = vand.u32 %v10860, 4294901760
    %11629 = vmatpush1.msra.mxu0 %v11628
    %11630 = vmatprep.subr.mxu0 0.0
    %v11631 = vand.u32 %v10859, 4294901760
    %11632 = vmatpush1.msra.mxu0 %v11631
    %11633 = vmatprep.subr.mxu0 0.0
    %v11634 = vand.u32 %v10858, 4294901760
    %11635 = vmatpush1.msra.mxu0 %v11634
    %11636 = vmatprep.subr.mxu0 0.0
    %v11637 = vand.u32 %v10857, 4294901760
    %11638 = vmatpush1.msra.mxu0 %v11637
    %11639 = vmatprep.subr.mxu0 0.0
    %v11640 = vand.u32 %v10856, 4294901760
    %11641 = vmatpush1.msra.mxu0 %v11640
    %11642 = vmatprep.subr.mxu0 0.0
    %v11643 = vand.u32 %v10855, 4294901760
    %11644 = vmatpush1.msra.mxu0 %v11643
    %11645 = vmatprep.subr.mxu0 0.0
    %v11646 = vand.u32 %v10854, 4294901760
    %11647 = vmatpush1.msra.mxu0 %v11646
    %11648 = vmatprep.subr.mxu0 0.0
    %v11649 = vand.u32 %v10853, 4294901760
    %11650 = vmatpush1.msra.mxu0 %v11649
    %11651 = vmatprep.subr.mxu0 0.0
    %v11652 = vand.u32 %v10852, 4294901760
    %11653 = vmatpush1.msra.mxu0 %v11652
    %11654 = vmatprep.subr.mxu0 0.0
    %v11655 = vand.u32 %v10851, 4294901760
    %11656 = vmatpush1.msra.mxu0 %v11655
    %11657 = vmatprep.subr.mxu0 0.0
    %v11658 = vand.u32 %v10850, 4294901760
    %11659 = vmatpush1.msra.mxu0 %v11658
    %11660 = vmatprep.subr.mxu0 0.0
    %v11661 = vand.u32 %v10849, 4294901760
    %11662 = vmatpush1.msra.mxu0 %v11661
    %11663 = vmatprep.subr.mxu0 0.0
    %v11664 = vand.u32 %v10848, 4294901760
    %11665 = vmatpush1.msra.mxu0 %v11664
    %11666 = vmatprep.subr.mxu0 0.0
    %v11667 = vand.u32 %v10847, 4294901760
    %11668 = vmatpush1.msra.mxu0 %v11667
    %11669 = vmatprep.subr.mxu0 0.0
    %11670 = vmatpush2.msra.mxu0 0.0
    %11671 = vmatprep.subr.mxu0 0.0
    %11672 = vmatpush2.msra.mxu0 0.0
    %11673 = vmatprep.subr.mxu0 0.0
    %11674 = vmatpush2.msra.mxu0 0.0
    %11675 = vmatprep.subr.mxu0 0.0
    %11676 = vmatpush2.msra.mxu0 0.0
    %11677 = vmatprep.subr.mxu0 0.0
    %11678 = vmatpush2.msra.mxu0 0.0
    %11679 = vmatprep.subr.mxu0 0.0
    %11680 = vmatpush2.msra.mxu0 0.0
    %11681 = vmatprep.subr.mxu0 0.0
    %11682 = vmatpush2.msra.mxu0 0.0
    %11683 = vmatprep.subr.mxu0 0.0
    %11684 = vmatpush2.msra.mxu0 0.0
    %11685 = vmatprep.subr.mxu0 0.0
    %11686 = vmatpush2.msra.mxu0 0.0
    %11687 = vmatprep.subr.mxu0 0.0
    %11688 = vmatpush2.msra.mxu0 0.0
    %11689 = vmatprep.subr.mxu0 0.0
    %11690 = vmatpush2.msra.mxu0 0.0
    %11691 = vmatprep.subr.mxu0 0.0
    %11692 = vmatpush2.msra.mxu0 0.0
    %11693 = vmatprep.subr.mxu0 0.0
    %11694 = vmatpush2.msra.mxu0 0.0
    %11695 = vmatprep.subr.mxu0 0.0
    %11696 = vmatpush2.msra.mxu0 0.0
    %11697 = vmatprep.subr.mxu0 0.0
    %11698 = vmatpush2.msra.mxu0 0.0
    %11699 = vmatprep.subr.mxu0 0.0
    %11700 = vmatpush2.msra.mxu0 0.0
    %11701 = vmatprep.mubr.f32.mxu0 0.0
    %v11702 = vand.u32 %v10914, 4294901760
    %v11703 = vsub.f32 %v10914, %v11702
    %v11704 = vand.u32 %v11703, 4294901760
    %11705 = vmatmul.mubr.f32.gmra.mxu0 %v11704
    %v11706 = vpop.f32.mrf.mxu0
    %v11707 = vadd.f32 %v11513, %v11706
    %v11708 = vpop.f32.mrf.mxu0
    %11709 = vmatprep.mubr.f32.mxu0 0.0
    %v11710 = vand.u32 %v10915, 4294901760
    %v11711 = vsub.f32 %v10915, %v11710
    %v11712 = vand.u32 %v11711, 4294901760
    %11713 = vmatmul.mubr.f32.gmra.mxu0 %v11712
    %v11714 = vpop.f32.mrf.mxu0
    %v11715 = vadd.f32 %v11520, %v11714
    %v11716 = vpop.f32.mrf.mxu0
    %11717 = vmatprep.mubr.f32.mxu0 0.0
    %v11718 = vand.u32 %v10916, 4294901760
    %v11719 = vsub.f32 %v10916, %v11718
    %v11720 = vand.u32 %v11719, 4294901760
    %11721 = vmatmul.mubr.f32.gmra.mxu0 %v11720
    %v11722 = vpop.f32.mrf.mxu0
    %v11723 = vadd.f32 %v11527, %v11722
    %v11724 = vpop.f32.mrf.mxu0
    %11725 = vmatprep.mubr.f32.mxu0 0.0
    %v11726 = vand.u32 %v10917, 4294901760
    %v11727 = vsub.f32 %v10917, %v11726
    %v11728 = vand.u32 %v11727, 4294901760
    %11729 = vmatmul.mubr.f32.gmra.mxu0 %v11728
    %v11730 = vpop.f32.mrf.mxu0
    %v11731 = vadd.f32 %v11534, %v11730
    %v11732 = vpop.f32.mrf.mxu0
    %11733 = vmatprep.mubr.f32.mxu0 0.0
    %v11734 = vand.u32 %v10918, 4294901760
    %v11735 = vsub.f32 %v10918, %v11734
    %v11736 = vand.u32 %v11735, 4294901760
    %11737 = vmatmul.mubr.f32.gmra.mxu0 %v11736
    %v11738 = vpop.f32.mrf.mxu0
    %v11739 = vadd.f32 %v11541, %v11738
    %v11740 = vpop.f32.mrf.mxu0
    %11741 = vmatprep.mubr.f32.mxu0 0.0
    %v11742 = vand.u32 %v10919, 4294901760
    %v11743 = vsub.f32 %v10919, %v11742
    %v11744 = vand.u32 %v11743, 4294901760
    %11745 = vmatmul.mubr.f32.gmra.mxu0 %v11744
    %v11746 = vpop.f32.mrf.mxu0
    %v11747 = vadd.f32 %v11548, %v11746
    %v11748 = vpop.f32.mrf.mxu0
    %11749 = vmatprep.mubr.f32.mxu0 0.0
    %v11750 = vand.u32 %v10920, 4294901760
    %v11751 = vsub.f32 %v10920, %v11750
    %v11752 = vand.u32 %v11751, 4294901760
    %11753 = vmatmul.mubr.f32.gmra.mxu0 %v11752
    %v11754 = vpop.f32.mrf.mxu0
    %v11755 = vadd.f32 %v11555, %v11754
    %v11756 = vpop.f32.mrf.mxu0
    %11757 = vmatprep.mubr.f32.mxu0 0.0
    %v11758 = vand.u32 %v10921, 4294901760
    %v11759 = vsub.f32 %v10921, %v11758
    %v11760 = vand.u32 %v11759, 4294901760
    %11761 = vmatmul.mubr.f32.gmra.mxu0 %v11760
    %v11762 = vpop.f32.mrf.mxu0
    %v11763 = vadd.f32 %v11562, %v11762
    %v11764 = vpop.f32.mrf.mxu0
    %11765 = vmatprep.mubr.f32.mxu0 0.0
    %v11766 = vand.u32 %v10922, 4294901760
    %v11767 = vsub.f32 %v10922, %v11766
    %v11768 = vand.u32 %v11767, 4294901760
    %11769 = vmatmul.mubr.f32.gmra.mxu0 %v11768
    %v11770 = vpop.f32.mrf.mxu0
    %v11771 = vadd.f32 %v11569, %v11770
    %v11772 = vpop.f32.mrf.mxu0
    %11773 = vmatprep.mubr.f32.mxu0 0.0
    %v11774 = vand.u32 %v10923, 4294901760
    %v11775 = vsub.f32 %v10923, %v11774
    %v11776 = vand.u32 %v11775, 4294901760
    %11777 = vmatmul.mubr.f32.gmra.mxu0 %v11776
    %v11778 = vpop.f32.mrf.mxu0
    %v11779 = vadd.f32 %v11576, %v11778
    %v11780 = vpop.f32.mrf.mxu0
    %11781 = vmatprep.mubr.f32.mxu0 0.0
    %v11782 = vand.u32 %v10924, 4294901760
    %v11783 = vsub.f32 %v10924, %v11782
    %v11784 = vand.u32 %v11783, 4294901760
    %11785 = vmatmul.mubr.f32.gmra.mxu0 %v11784
    %v11786 = vpop.f32.mrf.mxu0
    %v11787 = vadd.f32 %v11583, %v11786
    %v11788 = vpop.f32.mrf.mxu0
    %11789 = vmatprep.mubr.f32.mxu0 0.0
    %v11790 = vand.u32 %v10925, 4294901760
    %v11791 = vsub.f32 %v10925, %v11790
    %v11792 = vand.u32 %v11791, 4294901760
    %11793 = vmatmul.mubr.f32.gmra.mxu0 %v11792
    %v11794 = vpop.f32.mrf.mxu0
    %v11795 = vadd.f32 %v11590, %v11794
    %v11796 = vpop.f32.mrf.mxu0
    %11797 = vmatprep.mubr.f32.mxu0 0.0
    %v11798 = vand.u32 %v10926, 4294901760
    %v11799 = vsub.f32 %v10926, %v11798
    %v11800 = vand.u32 %v11799, 4294901760
    %11801 = vmatmul.mubr.f32.gmra.mxu0 %v11800
    %v11802 = vpop.f32.mrf.mxu0
    %v11803 = vadd.f32 %v11597, %v11802
    %v11804 = vpop.f32.mrf.mxu0
    %11805 = vmatprep.mubr.f32.mxu0 0.0
    %v11806 = vand.u32 %v10927, 4294901760
    %v11807 = vsub.f32 %v10927, %v11806
    %v11808 = vand.u32 %v11807, 4294901760
    %11809 = vmatmul.mubr.f32.gmra.mxu0 %v11808
    %v11810 = vpop.f32.mrf.mxu0
    %v11811 = vadd.f32 %v11604, %v11810
    %v11812 = vpop.f32.mrf.mxu0
    %11813 = vmatprep.mubr.f32.mxu0 0.0
    %v11814 = vand.u32 %v10928, 4294901760
    %v11815 = vsub.f32 %v10928, %v11814
    %v11816 = vand.u32 %v11815, 4294901760
    %11817 = vmatmul.mubr.f32.gmra.mxu0 %v11816
    %v11818 = vpop.f32.mrf.mxu0
    %v11819 = vadd.f32 %v11611, %v11818
    %v11820 = vpop.f32.mrf.mxu0
    %11821 = vmatprep.mubr.f32.mxu0 0.0
    %v11822 = vand.u32 %v10929, 4294901760
    %v11823 = vsub.f32 %v10929, %v11822
    %v11824 = vand.u32 %v11823, 4294901760
    %11825 = vmatmul.mubr.f32.gmra.mxu0 %v11824
    %v11826 = vpop.f32.mrf.mxu0
    %v11827 = vadd.f32 %v11618, %v11826
    %v11828 = vpop.f32.mrf.mxu0
    %11829 = vdwg.mxu0
    %11830 = vmatprep.subr.mxu0 0.0
    %v11831 = vand.u32 %v10862, 4294901760
    %v11832 = vsub.f32 %v10862, %v11831
    %v11833 = vand.u32 %v11832, 4294901760
    %11834 = vmatpush1.msra.mxu0 %v11833
    %11835 = vmatprep.subr.mxu0 0.0
    %v11836 = vand.u32 %v10861, 4294901760
    %v11837 = vsub.f32 %v10861, %v11836
    %v11838 = vand.u32 %v11837, 4294901760
    %11839 = vmatpush1.msra.mxu0 %v11838
    %11840 = vmatprep.subr.mxu0 0.0
    %v11841 = vand.u32 %v10860, 4294901760
    %v11842 = vsub.f32 %v10860, %v11841
    %v11843 = vand.u32 %v11842, 4294901760
    %11844 = vmatpush1.msra.mxu0 %v11843
    %11845 = vmatprep.subr.mxu0 0.0
    %v11846 = vand.u32 %v10859, 4294901760
    %v11847 = vsub.f32 %v10859, %v11846
    %v11848 = vand.u32 %v11847, 4294901760
    %11849 = vmatpush1.msra.mxu0 %v11848
    %11850 = vmatprep.subr.mxu0 0.0
    %v11851 = vand.u32 %v10858, 4294901760
    %v11852 = vsub.f32 %v10858, %v11851
    %v11853 = vand.u32 %v11852, 4294901760
    %11854 = vmatpush1.msra.mxu0 %v11853
    %11855 = vmatprep.subr.mxu0 0.0
    %v11856 = vand.u32 %v10857, 4294901760
    %v11857 = vsub.f32 %v10857, %v11856
    %v11858 = vand.u32 %v11857, 4294901760
    %11859 = vmatpush1.msra.mxu0 %v11858
    %11860 = vmatprep.subr.mxu0 0.0
    %v11861 = vand.u32 %v10856, 4294901760
    %v11862 = vsub.f32 %v10856, %v11861
    %v11863 = vand.u32 %v11862, 4294901760
    %11864 = vmatpush1.msra.mxu0 %v11863
    %11865 = vmatprep.subr.mxu0 0.0
    %v11866 = vand.u32 %v10855, 4294901760
    %v11867 = vsub.f32 %v10855, %v11866
    %v11868 = vand.u32 %v11867, 4294901760
    %11869 = vmatpush1.msra.mxu0 %v11868
    %11870 = vmatprep.subr.mxu0 0.0
    %v11871 = vand.u32 %v10854, 4294901760
    %v11872 = vsub.f32 %v10854, %v11871
    %v11873 = vand.u32 %v11872, 4294901760
    %11874 = vmatpush1.msra.mxu0 %v11873
    %11875 = vmatprep.subr.mxu0 0.0
    %v11876 = vand.u32 %v10853, 4294901760
    %v11877 = vsub.f32 %v10853, %v11876
    %v11878 = vand.u32 %v11877, 4294901760
    %11879 = vmatpush1.msra.mxu0 %v11878
    %11880 = vmatprep.subr.mxu0 0.0
    %v11881 = vand.u32 %v10852, 4294901760
    %v11882 = vsub.f32 %v10852, %v11881
    %v11883 = vand.u32 %v11882, 4294901760
    %11884 = vmatpush1.msra.mxu0 %v11883
    %11885 = vmatprep.subr.mxu0 0.0
    %v11886 = vand.u32 %v10851, 4294901760
    %v11887 = vsub.f32 %v10851, %v11886
    %v11888 = vand.u32 %v11887, 4294901760
    %11889 = vmatpush1.msra.mxu0 %v11888
    %11890 = vmatprep.subr.mxu0 0.0
    %v11891 = vand.u32 %v10850, 4294901760
    %v11892 = vsub.f32 %v10850, %v11891
    %v11893 = vand.u32 %v11892, 4294901760
    %11894 = vmatpush1.msra.mxu0 %v11893
    %11895 = vmatprep.subr.mxu0 0.0
    %v11896 = vand.u32 %v10849, 4294901760
    %v11897 = vsub.f32 %v10849, %v11896
    %v11898 = vand.u32 %v11897, 4294901760
    %11899 = vmatpush1.msra.mxu0 %v11898
    %11900 = vmatprep.subr.mxu0 0.0
    %v11901 = vand.u32 %v10848, 4294901760
    %v11902 = vsub.f32 %v10848, %v11901
    %v11903 = vand.u32 %v11902, 4294901760
    %11904 = vmatpush1.msra.mxu0 %v11903
    %11905 = vmatprep.subr.mxu0 0.0
    %v11906 = vand.u32 %v10847, 4294901760
    %v11907 = vsub.f32 %v10847, %v11906
    %v11908 = vand.u32 %v11907, 4294901760
    %11909 = vmatpush1.msra.mxu0 %v11908
    %11910 = vmatprep.subr.mxu0 0.0
    %11911 = vmatpush2.msra.mxu0 0.0
    %11912 = vmatprep.subr.mxu0 0.0
    %11913 = vmatpush2.msra.mxu0 0.0
    %11914 = vmatprep.subr.mxu0 0.0
    %11915 = vmatpush2.msra.mxu0 0.0
    %11916 = vmatprep.subr.mxu0 0.0
    %11917 = vmatpush2.msra.mxu0 0.0
    %11918 = vmatprep.subr.mxu0 0.0
    %11919 = vmatpush2.msra.mxu0 0.0
    %11920 = vmatprep.subr.mxu0 0.0
    %11921 = vmatpush2.msra.mxu0 0.0
    %11922 = vmatprep.subr.mxu0 0.0
    %11923 = vmatpush2.msra.mxu0 0.0
    %11924 = vmatprep.subr.mxu0 0.0
    %11925 = vmatpush2.msra.mxu0 0.0
    %11926 = vmatprep.subr.mxu0 0.0
    %11927 = vmatpush2.msra.mxu0 0.0
    %11928 = vmatprep.subr.mxu0 0.0
    %11929 = vmatpush2.msra.mxu0 0.0
    %11930 = vmatprep.subr.mxu0 0.0
    %11931 = vmatpush2.msra.mxu0 0.0
    %11932 = vmatprep.subr.mxu0 0.0
    %11933 = vmatpush2.msra.mxu0 0.0
    %11934 = vmatprep.subr.mxu0 0.0
    %11935 = vmatpush2.msra.mxu0 0.0
    %11936 = vmatprep.subr.mxu0 0.0
    %11937 = vmatpush2.msra.mxu0 0.0
    %11938 = vmatprep.subr.mxu0 0.0
    %11939 = vmatpush2.msra.mxu0 0.0
    %11940 = vmatprep.subr.mxu0 0.0
    %11941 = vmatpush2.msra.mxu0 0.0
    %11942 = vmatprep.mubr.f32.mxu0 0.0
    %v11943 = vand.u32 %v10914, 4294901760
    %11944 = vmatmul.mubr.f32.gmra.mxu0 %v11943
    %v11945 = vpop.f32.mrf.mxu0
    %v11946 = vadd.f32 %v11707, %v11945
    %v11947 = vpop.f32.mrf.mxu0
    %11948 = vmatprep.mubr.f32.mxu0 0.0
    %v11949 = vand.u32 %v10915, 4294901760
    %11950 = vmatmul.mubr.f32.gmra.mxu0 %v11949
    %v11951 = vpop.f32.mrf.mxu0
    %v11952 = vadd.f32 %v11715, %v11951
    %v11953 = vpop.f32.mrf.mxu0
    %11954 = vmatprep.mubr.f32.mxu0 0.0
    %v11955 = vand.u32 %v10916, 4294901760
    %11956 = vmatmul.mubr.f32.gmra.mxu0 %v11955
    %v11957 = vpop.f32.mrf.mxu0
    %v11958 = vadd.f32 %v11723, %v11957
    %v11959 = vpop.f32.mrf.mxu0
    %11960 = vmatprep.mubr.f32.mxu0 0.0
    %v11961 = vand.u32 %v10917, 4294901760
    %11962 = vmatmul.mubr.f32.gmra.mxu0 %v11961
    %v11963 = vpop.f32.mrf.mxu0
    %v11964 = vadd.f32 %v11731, %v11963
    %v11965 = vpop.f32.mrf.mxu0
    %11966 = vmatprep.mubr.f32.mxu0 0.0
    %v11967 = vand.u32 %v10918, 4294901760
    %11968 = vmatmul.mubr.f32.gmra.mxu0 %v11967
    %v11969 = vpop.f32.mrf.mxu0
    %v11970 = vadd.f32 %v11739, %v11969
    %v11971 = vpop.f32.mrf.mxu0
    %11972 = vmatprep.mubr.f32.mxu0 0.0
    %v11973 = vand.u32 %v10919, 4294901760
    %11974 = vmatmul.mubr.f32.gmra.mxu0 %v11973
    %v11975 = vpop.f32.mrf.mxu0
    %v11976 = vadd.f32 %v11747, %v11975
    %v11977 = vpop.f32.mrf.mxu0
    %11978 = vmatprep.mubr.f32.mxu0 0.0
    %v11979 = vand.u32 %v10920, 4294901760
    %11980 = vmatmul.mubr.f32.gmra.mxu0 %v11979
    %v11981 = vpop.f32.mrf.mxu0
    %v11982 = vadd.f32 %v11755, %v11981
    %v11983 = vpop.f32.mrf.mxu0
    %11984 = vmatprep.mubr.f32.mxu0 0.0
    %v11985 = vand.u32 %v10921, 4294901760
    %11986 = vmatmul.mubr.f32.gmra.mxu0 %v11985
    %v11987 = vpop.f32.mrf.mxu0
    %v11988 = vadd.f32 %v11763, %v11987
    %v11989 = vpop.f32.mrf.mxu0
    %11990 = vmatprep.mubr.f32.mxu0 0.0
    %v11991 = vand.u32 %v10922, 4294901760
    %11992 = vmatmul.mubr.f32.gmra.mxu0 %v11991
    %v11993 = vpop.f32.mrf.mxu0
    %v11994 = vadd.f32 %v11771, %v11993
    %v11995 = vpop.f32.mrf.mxu0
    %11996 = vmatprep.mubr.f32.mxu0 0.0
    %v11997 = vand.u32 %v10923, 4294901760
    %11998 = vmatmul.mubr.f32.gmra.mxu0 %v11997
    %v11999 = vpop.f32.mrf.mxu0
    %v12000 = vadd.f32 %v11779, %v11999
    %v12001 = vpop.f32.mrf.mxu0
    %12002 = vmatprep.mubr.f32.mxu0 0.0
    %v12003 = vand.u32 %v10924, 4294901760
    %12004 = vmatmul.mubr.f32.gmra.mxu0 %v12003
    %v12005 = vpop.f32.mrf.mxu0
    %v12006 = vadd.f32 %v11787, %v12005
    %v12007 = vpop.f32.mrf.mxu0
    %12008 = vmatprep.mubr.f32.mxu0 0.0
    %v12009 = vand.u32 %v10925, 4294901760
    %12010 = vmatmul.mubr.f32.gmra.mxu0 %v12009
    %v12011 = vpop.f32.mrf.mxu0
    %v12012 = vadd.f32 %v11795, %v12011
    %v12013 = vpop.f32.mrf.mxu0
    %12014 = vmatprep.mubr.f32.mxu0 0.0
    %v12015 = vand.u32 %v10926, 4294901760
    %12016 = vmatmul.mubr.f32.gmra.mxu0 %v12015
    %v12017 = vpop.f32.mrf.mxu0
    %v12018 = vadd.f32 %v11803, %v12017
    %v12019 = vpop.f32.mrf.mxu0
    %12020 = vmatprep.mubr.f32.mxu0 0.0
    %v12021 = vand.u32 %v10927, 4294901760
    %12022 = vmatmul.mubr.f32.gmra.mxu0 %v12021
    %v12023 = vpop.f32.mrf.mxu0
    %v12024 = vadd.f32 %v11811, %v12023
    %v12025 = vpop.f32.mrf.mxu0
    %12026 = vmatprep.mubr.f32.mxu0 0.0
    %v12027 = vand.u32 %v10928, 4294901760
    %12028 = vmatmul.mubr.f32.gmra.mxu0 %v12027
    %v12029 = vpop.f32.mrf.mxu0
    %v12030 = vadd.f32 %v11819, %v12029
    %v12031 = vpop.f32.mrf.mxu0
    %12032 = vmatprep.mubr.f32.mxu0 0.0
    %v12033 = vand.u32 %v10929, 4294901760
    %12034 = vmatmul.mubr.f32.gmra.mxu0 %v12033
    %v12035 = vpop.f32.mrf.mxu0
    %v12036 = vadd.f32 %v11827, %v12035
    %v12037 = vpop.f32.mrf.mxu0
    %12038 = vdwg.mxu0
    %12039 = vmatprep.subr.mxu0 0.0
    %v12040 = vand.u32 %v10862, 4294901760
    %12041 = vmatpush1.msra.mxu0 %v12040
    %12042 = vmatprep.subr.mxu0 0.0
    %v12043 = vand.u32 %v10861, 4294901760
    %12044 = vmatpush1.msra.mxu0 %v12043
    %12045 = vmatprep.subr.mxu0 0.0
    %v12046 = vand.u32 %v10860, 4294901760
    %12047 = vmatpush1.msra.mxu0 %v12046
    %12048 = vmatprep.subr.mxu0 0.0
    %v12049 = vand.u32 %v10859, 4294901760
    %12050 = vmatpush1.msra.mxu0 %v12049
    %12051 = vmatprep.subr.mxu0 0.0
    %v12052 = vand.u32 %v10858, 4294901760
    %12053 = vmatpush1.msra.mxu0 %v12052
    %12054 = vmatprep.subr.mxu0 0.0
    %v12055 = vand.u32 %v10857, 4294901760
    %12056 = vmatpush1.msra.mxu0 %v12055
    %12057 = vmatprep.subr.mxu0 0.0
    %v12058 = vand.u32 %v10856, 4294901760
    %12059 = vmatpush1.msra.mxu0 %v12058
    %12060 = vmatprep.subr.mxu0 0.0
    %v12061 = vand.u32 %v10855, 4294901760
    %12062 = vmatpush1.msra.mxu0 %v12061
    %12063 = vmatprep.subr.mxu0 0.0
    %v12064 = vand.u32 %v10854, 4294901760
    %12065 = vmatpush1.msra.mxu0 %v12064
    %12066 = vmatprep.subr.mxu0 0.0
    %v12067 = vand.u32 %v10853, 4294901760
    %12068 = vmatpush1.msra.mxu0 %v12067
    %12069 = vmatprep.subr.mxu0 0.0
    %v12070 = vand.u32 %v10852, 4294901760
    %12071 = vmatpush1.msra.mxu0 %v12070
    %12072 = vmatprep.subr.mxu0 0.0
    %v12073 = vand.u32 %v10851, 4294901760
    %12074 = vmatpush1.msra.mxu0 %v12073
    %12075 = vmatprep.subr.mxu0 0.0
    %v12076 = vand.u32 %v10850, 4294901760
    %12077 = vmatpush1.msra.mxu0 %v12076
    %12078 = vmatprep.subr.mxu0 0.0
    %v12079 = vand.u32 %v10849, 4294901760
    %12080 = vmatpush1.msra.mxu0 %v12079
    %12081 = vmatprep.subr.mxu0 0.0
    %v12082 = vand.u32 %v10848, 4294901760
    %12083 = vmatpush1.msra.mxu0 %v12082
    %12084 = vmatprep.subr.mxu0 0.0
    %v12085 = vand.u32 %v10847, 4294901760
    %12086 = vmatpush1.msra.mxu0 %v12085
    %12087 = vmatprep.subr.mxu0 0.0
    %12088 = vmatpush2.msra.mxu0 0.0
    %12089 = vmatprep.subr.mxu0 0.0
    %12090 = vmatpush2.msra.mxu0 0.0
    %12091 = vmatprep.subr.mxu0 0.0
    %12092 = vmatpush2.msra.mxu0 0.0
    %12093 = vmatprep.subr.mxu0 0.0
    %12094 = vmatpush2.msra.mxu0 0.0
    %12095 = vmatprep.subr.mxu0 0.0
    %12096 = vmatpush2.msra.mxu0 0.0
    %12097 = vmatprep.subr.mxu0 0.0
    %12098 = vmatpush2.msra.mxu0 0.0
    %12099 = vmatprep.subr.mxu0 0.0
    %12100 = vmatpush2.msra.mxu0 0.0
    %12101 = vmatprep.subr.mxu0 0.0
    %12102 = vmatpush2.msra.mxu0 0.0
    %12103 = vmatprep.subr.mxu0 0.0
    %12104 = vmatpush2.msra.mxu0 0.0
    %12105 = vmatprep.subr.mxu0 0.0
    %12106 = vmatpush2.msra.mxu0 0.0
    %12107 = vmatprep.subr.mxu0 0.0
    %12108 = vmatpush2.msra.mxu0 0.0
    %12109 = vmatprep.subr.mxu0 0.0
    %12110 = vmatpush2.msra.mxu0 0.0
    %12111 = vmatprep.subr.mxu0 0.0
    %12112 = vmatpush2.msra.mxu0 0.0
    %12113 = vmatprep.subr.mxu0 0.0
    %12114 = vmatpush2.msra.mxu0 0.0
    %12115 = vmatprep.subr.mxu0 0.0
    %12116 = vmatpush2.msra.mxu0 0.0
    %12117 = vmatprep.subr.mxu0 0.0
    %12118 = vmatpush2.msra.mxu0 0.0
    %12119 = vmatprep.mubr.f32.mxu0 0.0
    %v12120 = vand.u32 %v10914, 4294901760
    %12121 = vmatmul.mubr.f32.gmra.mxu0 %v12120
    %v12122 = vpop.f32.mrf.mxu0
    %v12123 = vadd.f32 %v11946, %v12122
    %v12124 = vpop.f32.mrf.mxu0
    %12125 = vmatprep.mubr.f32.mxu0 0.0
    %v12126 = vand.u32 %v10915, 4294901760
    %12127 = vmatmul.mubr.f32.gmra.mxu0 %v12126
    %v12128 = vpop.f32.mrf.mxu0
    %v12129 = vadd.f32 %v11952, %v12128
    %v12130 = vpop.f32.mrf.mxu0
    %12131 = vmatprep.mubr.f32.mxu0 0.0
    %v12132 = vand.u32 %v10916, 4294901760
    %12133 = vmatmul.mubr.f32.gmra.mxu0 %v12132
    %v12134 = vpop.f32.mrf.mxu0
    %v12135 = vadd.f32 %v11958, %v12134
    %v12136 = vpop.f32.mrf.mxu0
    %12137 = vmatprep.mubr.f32.mxu0 0.0
    %v12138 = vand.u32 %v10917, 4294901760
    %12139 = vmatmul.mubr.f32.gmra.mxu0 %v12138
    %v12140 = vpop.f32.mrf.mxu0
    %v12141 = vadd.f32 %v11964, %v12140
    %v12142 = vpop.f32.mrf.mxu0
    %12143 = vmatprep.mubr.f32.mxu0 0.0
    %v12144 = vand.u32 %v10918, 4294901760
    %12145 = vmatmul.mubr.f32.gmra.mxu0 %v12144
    %v12146 = vpop.f32.mrf.mxu0
    %v12147 = vadd.f32 %v11970, %v12146
    %v12148 = vpop.f32.mrf.mxu0
    %12149 = vmatprep.mubr.f32.mxu0 0.0
    %v12150 = vand.u32 %v10919, 4294901760
    %12151 = vmatmul.mubr.f32.gmra.mxu0 %v12150
    %v12152 = vpop.f32.mrf.mxu0
    %v12153 = vadd.f32 %v11976, %v12152
    %v12154 = vpop.f32.mrf.mxu0
    %12155 = vmatprep.mubr.f32.mxu0 0.0
    %v12156 = vand.u32 %v10920, 4294901760
    %12157 = vmatmul.mubr.f32.gmra.mxu0 %v12156
    %v12158 = vpop.f32.mrf.mxu0
    %v12159 = vadd.f32 %v11982, %v12158
    %v12160 = vpop.f32.mrf.mxu0
    %12161 = vmatprep.mubr.f32.mxu0 0.0
    %v12162 = vand.u32 %v10921, 4294901760
    %12163 = vmatmul.mubr.f32.gmra.mxu0 %v12162
    %v12164 = vpop.f32.mrf.mxu0
    %v12165 = vadd.f32 %v11988, %v12164
    %v12166 = vpop.f32.mrf.mxu0
    %12167 = vmatprep.mubr.f32.mxu0 0.0
    %v12168 = vand.u32 %v10922, 4294901760
    %12169 = vmatmul.mubr.f32.gmra.mxu0 %v12168
    %v12170 = vpop.f32.mrf.mxu0
    %v12171 = vadd.f32 %v11994, %v12170
    %v12172 = vpop.f32.mrf.mxu0
    %12173 = vmatprep.mubr.f32.mxu0 0.0
    %v12174 = vand.u32 %v10923, 4294901760
    %12175 = vmatmul.mubr.f32.gmra.mxu0 %v12174
    %v12176 = vpop.f32.mrf.mxu0
    %v12177 = vadd.f32 %v12000, %v12176
    %v12178 = vpop.f32.mrf.mxu0
    %12179 = vmatprep.mubr.f32.mxu0 0.0
    %v12180 = vand.u32 %v10924, 4294901760
    %12181 = vmatmul.mubr.f32.gmra.mxu0 %v12180
    %v12182 = vpop.f32.mrf.mxu0
    %v12183 = vadd.f32 %v12006, %v12182
    %v12184 = vpop.f32.mrf.mxu0
    %12185 = vmatprep.mubr.f32.mxu0 0.0
    %v12186 = vand.u32 %v10925, 4294901760
    %12187 = vmatmul.mubr.f32.gmra.mxu0 %v12186
    %v12188 = vpop.f32.mrf.mxu0
    %v12189 = vadd.f32 %v12012, %v12188
    %v12190 = vpop.f32.mrf.mxu0
    %12191 = vmatprep.mubr.f32.mxu0 0.0
    %v12192 = vand.u32 %v10926, 4294901760
    %12193 = vmatmul.mubr.f32.gmra.mxu0 %v12192
    %v12194 = vpop.f32.mrf.mxu0
    %v12195 = vadd.f32 %v12018, %v12194
    %v12196 = vpop.f32.mrf.mxu0
    %12197 = vmatprep.mubr.f32.mxu0 0.0
    %v12198 = vand.u32 %v10927, 4294901760
    %12199 = vmatmul.mubr.f32.gmra.mxu0 %v12198
    %v12200 = vpop.f32.mrf.mxu0
    %v12201 = vadd.f32 %v12024, %v12200
    %v12202 = vpop.f32.mrf.mxu0
    %12203 = vmatprep.mubr.f32.mxu0 0.0
    %v12204 = vand.u32 %v10928, 4294901760
    %12205 = vmatmul.mubr.f32.gmra.mxu0 %v12204
    %v12206 = vpop.f32.mrf.mxu0
    %v12207 = vadd.f32 %v12030, %v12206
    %v12208 = vpop.f32.mrf.mxu0
    %12209 = vmatprep.mubr.f32.mxu0 0.0
    %v12210 = vand.u32 %v10929, 4294901760
    %12211 = vmatmul.mubr.f32.gmra.mxu0 %v12210
    %v12212 = vpop.f32.mrf.mxu0
    %v12213 = vadd.f32 %v12036, %v12212
    %v12214 = vpop.f32.mrf.mxu0
    %12215 = vdwg.mxu0
    %12216 = vadd.xlane.f32.xlu0 %v12123
    %v12217 = vpop.xlane.xlu0 %12216
    %12218 = vadd.xlane.f32.xlu0 %v12129
    %v12219 = vpop.xlane.xlu0 %12218
    %12220 = vadd.xlane.f32.xlu0 %v12135
    %v12221 = vpop.xlane.xlu0 %12220
    %12222 = vadd.xlane.f32.xlu0 %v12141
    %v12223 = vpop.xlane.xlu0 %12222
    %12224 = vadd.xlane.f32.xlu0 %v12147
    %v12225 = vpop.xlane.xlu0 %12224
    %12226 = vadd.xlane.f32.xlu0 %v12153
    %v12227 = vpop.xlane.xlu0 %12226
    %12228 = vadd.xlane.f32.xlu0 %v12159
    %v12229 = vpop.xlane.xlu0 %12228
    %12230 = vadd.xlane.f32.xlu0 %v12165
    %v12231 = vpop.xlane.xlu0 %12230
    %12232 = vadd.xlane.f32.xlu0 %v12171
    %v12233 = vpop.xlane.xlu0 %12232
    %12234 = vadd.xlane.f32.xlu0 %v12177
    %v12235 = vpop.xlane.xlu0 %12234
    %12236 = vadd.xlane.f32.xlu0 %v12183
    %v12237 = vpop.xlane.xlu0 %12236
    %12238 = vadd.xlane.f32.xlu0 %v12189
    %v12239 = vpop.xlane.xlu0 %12238
    %12240 = vadd.xlane.f32.xlu0 %v12195
    %v12241 = vpop.xlane.xlu0 %12240
    %12242 = vadd.xlane.f32.xlu0 %v12201
    %v12243 = vpop.xlane.xlu0 %12242
    %12244 = vadd.xlane.f32.xlu0 %v12207
    %v12245 = vpop.xlane.xlu0 %12244
    %12246 = vadd.xlane.f32.xlu0 %v12213
    %v12247 = vpop.xlane.xlu0 %12246
    %v12248 = vmax.f32 %v12217, 1e-24
    %v12249 = vmax.f32 %v12219, 1e-24
    %v12250 = vmax.f32 %v12221, 1e-24
    %v12251 = vmax.f32 %v12223, 1e-24
    %v12252 = vmax.f32 %v12225, 1e-24
    %v12253 = vmax.f32 %v12227, 1e-24
    %v12254 = vmax.f32 %v12229, 1e-24
    %v12255 = vmax.f32 %v12231, 1e-24
    %v12256 = vmax.f32 %v12233, 1e-24
    %v12257 = vmax.f32 %v12235, 1e-24
    %v12258 = vmax.f32 %v12237, 1e-24
    %v12259 = vmax.f32 %v12239, 1e-24
    %v12260 = vmax.f32 %v12241, 1e-24
    %v12261 = vmax.f32 %v12243, 1e-24
    %v12262 = vmax.f32 %v12245, 1e-24
    %v12263 = vmax.f32 %v12247, 1e-24
    %v12264 = vrsqrt.pop %v12248
    %v12265 = vrsqrt.pop %v12249
    %v12266 = vrsqrt.pop %v12250
    %v12267 = vrsqrt.pop %v12251
    %v12268 = vrsqrt.pop %v12252
    %v12269 = vrsqrt.pop %v12253
    %v12270 = vrsqrt.pop %v12254
    %v12271 = vrsqrt.pop %v12255
    %v12272 = vrsqrt.pop %v12256
    %v12273 = vrsqrt.pop %v12257
    %v12274 = vrsqrt.pop %v12258
    %v12275 = vrsqrt.pop %v12259
    %v12276 = vrsqrt.pop %v12260
    %v12277 = vrsqrt.pop %v12261
    %v12278 = vrsqrt.pop %v12262
    %v12279 = vrsqrt.pop %v12263
    %v12280 = vmul.f32 %v10785, %v12264
    %v12281 = vmul.f32 %v10788, %v12265
    %v12282 = vmul.f32 %v10793, %v12266
    %v12283 = vmul.f32 %v10796, %v12267
    %v12284 = vmul.f32 %v10801, %v12268
    %v12285 = vmul.f32 %v10804, %v12269
    %v12286 = vmul.f32 %v10809, %v12270
    %v12287 = vmul.f32 %v10812, %v12271
    %v12288 = vmul.f32 %v10817, %v12272
    %v12289 = vmul.f32 %v10820, %v12273
    %v12290 = vmul.f32 %v10825, %v12274
    %v12291 = vmul.f32 %v10828, %v12275
    %v12292 = vmul.f32 %v10833, %v12276
    %v12293 = vmul.f32 %v10836, %v12277
    %v12294 = vmul.f32 %v10841, %v12278
    %v12295 = vmul.f32 %v10844, %v12279
    %12296 = vst [vmem:[#allocation5] sm:$0xff] %v12280
    %12297 = vst [vmem:[#allocation5 + $0x8] sm:$0xff] %v12281
    %12298 = vst [vmem:[#allocation5 + $0x10] sm:$0xff] %v12282
    %12299 = vst [vmem:[#allocation5 + $0x18] sm:$0xff] %v12283
    %12300 = vst [vmem:[#allocation5 + $0x20] sm:$0xff] %v12284
    %12301 = vst [vmem:[#allocation5 + $0x28] sm:$0xff] %v12285
    %12302 = vst [vmem:[#allocation5 + $0x30] sm:$0xff] %v12286
    %12303 = vst [vmem:[#allocation5 + $0x38] sm:$0xff] %v12287
    %12304 = vst [vmem:[#allocation5 + $0x40] sm:$0xff] %v12288
    %12305 = vst [vmem:[#allocation5 + $0x48] sm:$0xff] %v12289
    %12306 = vst [vmem:[#allocation5 + $0x50] sm:$0xff] %v12290
    %12307 = vst [vmem:[#allocation5 + $0x58] sm:$0xff] %v12291
    %12308 = vst [vmem:[#allocation5 + $0x60] sm:$0xff] %v12292
    %12309 = vst [vmem:[#allocation5 + $0x68] sm:$0xff] %v12293
    %12310 = vst [vmem:[#allocation5 + $0x70] sm:$0xff] %v12294
    %12311 = vst [vmem:[#allocation5 + $0x78] sm:$0xff] %v12295
    // Predicated region
    $region10: #{tpu_custom_call.1} parent=1 // pred_check
      _
    $region11: #{tpu_custom_call.1} parent=1 // pred_check_branch
      %12313 = sbr.rel (0) target = $region13
    $region12: #{tpu_custom_call.1} parent=1 // pred_region
      %s12315 = ssub.s32 2048, 2048
      %12316 = vsyncadd [#allocation4], %s12315
      %s12317 = sshll.u32 [#allocation5], 4
      %s12318 = int_to_ptr.vmem [resolvable:$true] %s12317
      %12323 = dma.vmem_to_hbm [thread:$0]  %s12318, 2048, %s1, [#allocation4], 128, 128, 8
    $region13: #{tpu_custom_call.1} parent=1 // pred_fallthru
      _
    // Predicated region
    $region14: #{tpu_custom_call.1} parent=1 // pred_check
      _
    $region15: #{tpu_custom_call.1} parent=1 // pred_check_branch
      %12325 = sbr.rel (0) target = $region17
    $region16: #{tpu_custom_call.1} parent=1 // pred_region
      %12326 = dma.done [#allocation4], 2048
    $region17: #{tpu_custom_call.1} parent=1 // pred_fallthru
      _
    %12327 = vsyncpa [#allocation3], 1
    %12328 = vsyncpa [#allocation4], 1

</llo_original>
